<compile_context>
chip_gen: v7x
topology: tpu7x:2x2x1
jax: 0.10.0
libtpu: 0.0.40
codegen_flags: <defaults>
</compile_context>

<pallas_src>
import numpy as np

import jax
import jax.numpy as jnp
from jax.experimental import pallas as pl
from jax.experimental.pallas import tpu as pltpu

KSIZE = 5          # conv kernel size (fixed to 5 in the module)
PAD = 2            # ZeroPad2d / ConvTranspose2d padding for kernel_size=5
BN_EPS = 1e-5
LANE = 128
ENC_STRIDES = [2, 2, 1, 1, 1]
DEC_STRIDES = [1, 1, 1, 2, 2]


# ----------------------------------------------------------------------------
# Fused whole-network Pallas kernel (one grid step == B_TILE images)
# ----------------------------------------------------------------------------
def _make_kernel(meta):
    """meta: tuple of (kind, Ho, WoCout) per layer, kind in {"slice5", "s5"}.

    Layer ref layout (flat, after x_ref and alphas_ref):
      "slice5": [Wcat (5*Win*Cin, Wo*Cout) bf16, scale (1, Wo*Cout) f32, bias]
      "s5":     [S (5, B*Ho, B*Hin) bf16, Wcat, scale, bias]
    """
    n_layers = len(meta)

    def kernel(*refs):
        x_ref, alphas_ref, out_ref = refs[0], refs[1], refs[-1]
        layer_refs = refs[2:-1]

        a = x_ref[...]                                   # (B, H0, W0*C0) f32
        ri = 0
        for l, (kind, ho, wocout) in enumerate(meta):    # statically unrolled
            b, hin, wc = a.shape
            if kind == "slice5":
                # stride-1 conv / deconv: taps are contiguous row slices of the
                # zero-row-padded activation (kh ordering folded into Wcat).
                w_ref, sc_ref, bi_ref = layer_refs[ri:ri + 3]
                ri += 3
                zrow = jnp.zeros((b, PAD, wc), jnp.float32)
                a_pad = jnp.concatenate([zrow, a, zrow], axis=1)   # (B, Hin+4, WC)
                taps = [a_pad[:, j:j + ho, :] for j in range(KSIZE)]
                g = jnp.concatenate(taps, axis=-1).reshape(b * ho, KSIZE * wc)
            else:
                # stride-2 conv / deconv: per-tap row selection (or scatter) as a
                # batched block-diagonal 0/1 matmul (exact in bf16).
                s_ref, w_ref, sc_ref, bi_ref = layer_refs[ri:ri + 4]
                ri += 4
                a2 = a.reshape(b * hin, wc).astype(jnp.bfloat16)
                taps = [jnp.dot(s_ref[j], a2, preferred_element_type=jnp.float32)
                        for j in range(KSIZE)]
                g = jnp.concatenate(taps, axis=-1)                 # (B*Ho, 5*WC)

            # One fused MXU matmul per layer (bf16 operands, f32 accumulation).
            y = jnp.dot(g.astype(jnp.bfloat16), w_ref[...],
                        preferred_element_type=jnp.float32)        # (B*Ho, WoCout)
            y = y * sc_ref[...] + bi_ref[...]                      # conv-bias + folded BN

            if l == n_layers - 1:
                y = jax.nn.sigmoid(y)                              # final layer
            else:
                alpha = alphas_ref[0, l]                           # shared PReLU alpha
                y = jnp.where(y > 0, y, alpha * y)
            a = y.reshape(b, ho, wocout)

        out_ref[...] = a.astype(out_ref.dtype)

    return kernel


# ----------------------------------------------------------------------------
# One-time plan construction: banded weights, row-selection, folded BN
# ----------------------------------------------------------------------------
def _rowsel_conv(Ho, Hin, s):
    """S[kh, ho, hi] = 1  iff  hi == ho*s + kh - PAD   (zero-padded conv)."""
    kh = np.arange(KSIZE)[:, None, None]
    ho = np.arange(Ho)[None, :, None]
    hi = np.arange(Hin)[None, None, :]
    return (hi == ho * s + kh - PAD).astype(np.float32)


def _rowsel_deconv(Ho, Hin, s):
    """S[kh, ho, hi] = 1  iff  hi*s == ho + PAD - kh   (ConvTranspose scatter)."""
    kh = np.arange(KSIZE)[:, None, None]
    ho = np.arange(Ho)[None, :, None]
    hi = np.arange(Hin)[None, None, :]
    return (hi * s == ho + PAD - kh).astype(np.float32)


def _blockdiag(S, b):
    """kron(I_b, S[kh]) for each kh:  (5, Ho, Hin) -> (5, b*Ho, b*Hin) bf16."""
    eye = np.eye(b, dtype=np.float32)
    k, ho, hi = S.shape
    blk = np.einsum("pq,khi->kphqi", eye, S).reshape(k, b * ho, b * hi)
    return jnp.asarray(blk, jnp.bfloat16)


def _band_weights(w_kkio, Win, Wo, kw_map):
    """w_kkio: (5, 5, Cin, Cout); kw_map: (Win, Wo) kernel-column index.

    Returns (5, Win*Cin, Wo*Cout) banded weights (kw/stride/padding folded)."""
    valid = (kw_map >= 0) & (kw_map < KSIZE)
    kwc = np.clip(kw_map, 0, KSIZE - 1)
    Cin, Cout = w_kkio.shape[2], w_kkio.shape[3]
    g = w_kkio[:, kwc, :, :]                                   # (5, Win, Wo, Cin, Cout)
    g = jnp.where(jnp.asarray(valid)[None, :, :, None, None], g, 0.0)
    g = jnp.transpose(g, (0, 1, 3, 2, 4))                      # (5, Win, Cin, Wo, Cout)
    return g.reshape(KSIZE, Win * Cin, Wo * Cout)


def _conv_layer_mats(w_oihw, Hin, Win, s):
    """ZeroPad2d([2,2,2,2]) + Conv2d(k=5, stride=s)."""
    Ho = (Hin - 1) // s + 1
    Wo = (Win - 1) // s + 1
    S = _rowsel_conv(Ho, Hin, s)
    wi = np.arange(Win)[:, None]
    wo = np.arange(Wo)[None, :]
    kw_map = wi - wo * s + PAD
    Wb = _band_weights(jnp.transpose(w_oihw, (2, 3, 1, 0)), Win, Wo, kw_map)
    return S, Wb, Ho, Wo, w_oihw.shape[0]


def _deconv_layer_mats(w_iohw, Hin, Win, s):
    """ConvTranspose2d(k=5, stride=s, padding=2, output_padding=s-1)."""
    Ho = Hin * s
    Wo = Win * s
    S = _rowsel_deconv(Ho, Hin, s)
    wi = np.arange(Win)[:, None]
    wo = np.arange(Wo)[None, :]
    kw_map = wo - wi * s + PAD
    Wb = _band_weights(jnp.transpose(w_iohw, (2, 3, 0, 1)), Win, Wo, kw_map)
    return S, Wb, Ho, Wo, w_iohw.shape[1]


def build_plan(params, H0, W0, in_channels, b_tile):
    """Precompute everything the kernel needs (once per parameter set)."""
    arrays, meta, alphas = [], [], []
    Hin, Win = H0, W0
    n_dec = len(params["dec"])
    out_dims = None

    def add_layer(kind, Ho, WoCout, arrs):
        meta.append((kind, int(Ho), int(WoCout)))
        arrays.extend(arrs)

    # ---- encoder: ZeroPad + Conv2d + BN + PReLU ----
    for i, lp in enumerate(params["enc"]):
        s = ENC_STRIDES[i]
        Cin = lp["w"].shape[1]
        S, Wb, Ho, Wo, Cout = _conv_layer_mats(lp["w"], Hin, Win, s)
        scale = lp["gamma"] / jnp.sqrt(lp["var"] + BN_EPS)
        bias = (lp["b"] - lp["mean"]) * scale + lp["beta"]
        wcat = Wb.reshape(KSIZE * Win * Cin, Wo * Cout).astype(jnp.bfloat16)
        sc = jnp.tile(scale, Wo).reshape(1, -1).astype(jnp.float32)
        bi = jnp.tile(bias, Wo).reshape(1, -1).astype(jnp.float32)
        if s == 1:
            add_layer("slice5", Ho, Wo * Cout, [wcat, sc, bi])
        else:
            add_layer("s5", Ho, Wo * Cout, [_blockdiag(S, b_tile), wcat, sc, bi])
        alphas.append(jnp.asarray(lp["alpha"], jnp.float32))
        Hin, Win = Ho, Wo

    # ---- decoder: ConvTranspose2d (+ BN + PReLU, last layer: Sigmoid) ----
    for i, lp in enumerate(params["dec"]):
        s = DEC_STRIDES[i]
        last = i == n_dec - 1
        Cin = lp["w"].shape[0]
        S, Wb, Ho, Wo, Cout = _deconv_layer_mats(lp["w"], Hin, Win, s)
        if last:
            scale = jnp.ones((Cout,), jnp.float32)
            bias = jnp.asarray(lp["b"], jnp.float32)
            alphas.append(jnp.float32(0.0))            # unused slot
        else:
            scale = lp["gamma"] / jnp.sqrt(lp["var"] + BN_EPS)
            bias = (lp["b"] - lp["mean"]) * scale + lp["beta"]
            alphas.append(jnp.asarray(lp["alpha"], jnp.float32))
        sc = jnp.tile(scale, Wo).reshape(1, -1).astype(jnp.float32)
        bi = jnp.tile(bias, Wo).reshape(1, -1).astype(jnp.float32)
        if s == 1:
            # tap j (padded-row offset j) corresponds to kh = 4 - j for deconv
            wcat = Wb[::-1].reshape(KSIZE * Win * Cin, Wo * Cout).astype(jnp.bfloat16)
            add_layer("slice5", Ho, Wo * Cout, [wcat, sc, bi])
        else:
            wcat = Wb.reshape(KSIZE * Win * Cin, Wo * Cout).astype(jnp.bfloat16)
            add_layer("s5", Ho, Wo * Cout, [_blockdiag(S, b_tile), wcat, sc, bi])
        if last:
            out_dims = (int(Cout), int(Ho), int(Wo))
        Hin, Win = Ho, Wo

    # ---- lane-dense output: pad last layer's columns up to a multiple of 128 ----
    kind, Ho_l, woc = meta[-1]
    woc_pad = max(LANE, ((woc + LANE - 1) // LANE) * LANE)
    if woc_pad != woc:
        padw = woc_pad - woc
        arrays[-3] = jnp.pad(arrays[-3], ((0, 0), (0, padw)))                       # Wcat
        arrays[-2] = jnp.pad(arrays[-2], ((0, 0), (0, padw)), constant_values=1.0)  # scale
        arrays[-1] = jnp.pad(arrays[-1], ((0, 0), (0, padw)))                       # bias
        meta[-1] = (kind, Ho_l, woc_pad)

    alphas_arr = jnp.stack(alphas).reshape(1, -1).astype(jnp.float32)
    return dict(
        arrays=tuple(arrays),
        alphas=alphas_arr,
        meta=tuple(meta),
        b_tile=int(b_tile),
        in_shape=(int(in_channels), int(H0), int(W0)),
        out_shape=out_dims,          # (C_out, H_out, W_out)
        out_cols=int(woc_pad),
    )


# ----------------------------------------------------------------------------
# Forward: NCHW in, one fused pallas_call, NCHW out
# ----------------------------------------------------------------------------
def autoencoder_forward(x_nchw, plan):
    """forward(x) == decode(encode(x))  (snr<=0 path, self.channel is None)."""
    arrays, alphas, meta = plan["arrays"], plan["alphas"], plan["meta"]
    b_tile = plan["b_tile"]
    C0, H0, W0 = plan["in_shape"]
    C_out, H_out, W_out = plan["out_shape"]
    out_cols = plan["out_cols"]

    N = x_nchw.shape[0]
    assert x_nchw.shape[1:] == (C0, H0, W0), x_nchw.shape

    # NCHW -> (N, H, W*C): channel-fastest column layout used by the plan.
    x3d = jnp.transpose(x_nchw, (0, 2, 3, 1)).reshape(N, H0, W0 * C0)

    # Pad batch to a multiple of the per-step image tile.
    n_pad = -(-N // b_tile) * b_tile
    if n_pad != N:
        x3d = jnp.pad(x3d, ((0, n_pad - N), (0, 0), (0, 0)))
    grid = (n_pad // b_tile,)

    in_specs = [
        pl.BlockSpec((b_tile, H0, W0 * C0), lambda n: (n, 0, 0)),                    # B_TILE images / step
        pl.BlockSpec(alphas.shape, lambda n: (0, 0), memory_space=pltpu.SMEM),       # PReLU alphas
    ]
    for arr in arrays:                                                               # grid-invariant weights
        if arr.ndim == 3:
            in_specs.append(pl.BlockSpec(arr.shape, lambda n: (0, 0, 0)))
        else:
            in_specs.append(pl.BlockSpec(arr.shape, lambda n: (0, 0)))

    out = pl.pallas_call(
        _make_kernel(meta),
        out_shape=jax.ShapeDtypeStruct((n_pad, H_out, out_cols), jnp.float32),
        grid=grid,
        in_specs=in_specs,
        out_specs=pl.BlockSpec((b_tile, H_out, out_cols), lambda n: (n, 0, 0)),
        compiler_params=pltpu.CompilerParams(
            dimension_semantics=("parallel",),
            vmem_limit_bytes=32 * 1024 * 1024,
        ),
    )(x3d, alphas, *arrays)

    out = out[:N, :, :W_out * C_out]                        # drop batch + lane padding
    return jnp.transpose(out.reshape(N, H_out, W_out, C_out), (0, 3, 1, 2))


# ----------------------------------------------------------------------------
# Parameters (deterministic synthetic init, PyTorch layout)
# ----------------------------------------------------------------------------
def init_params(key, in_channels=3, c=8):
    hidden = [16, 32, 32, 32, c]
    keys = iter(jax.random.split(key, 128))
    nk = lambda: next(keys)

    def bn(h):
        return dict(
            gamma=1.0 + 0.1 * jax.random.normal(nk(), (h,), jnp.float32),
            beta=0.1 * jax.random.normal(nk(), (h,), jnp.float32),
            mean=0.01 * jax.random.normal(nk(), (h,), jnp.float32),
            var=0.5 + jnp.abs(jax.random.normal(nk(), (h,), jnp.float32)),
        )

    params = {"enc": [], "dec": []}
    ic = in_channels
    for h in hidden:
        layer = dict(
            w=0.05 * jax.random.normal(nk(), (h, ic, KSIZE, KSIZE), jnp.float32),
            b=0.01 * jax.random.normal(nk(), (h,), jnp.float32),
            alpha=jnp.float32(0.25),
        )
        layer.update(bn(h))
        params["enc"].append(layer)
        ic = h

    hid_r = list(reversed(hidden))              # [c, 32, 32, 32, 16]
    for i in range(len(hid_r) - 1):
        layer = dict(
            w=0.05 * jax.random.normal(nk(), (hid_r[i], hid_r[i + 1], KSIZE, KSIZE), jnp.float32),
            b=0.01 * jax.random.normal(nk(), (hid_r[i + 1],), jnp.float32),
            alpha=jnp.float32(0.25),
        )
        layer.update(bn(hid_r[i + 1]))
        params["dec"].append(layer)
    # final ConvTranspose2d(16, in_channels, stride=2) + Sigmoid (no BN / PReLU)
    params["dec"].append(dict(
        w=0.05 * jax.random.normal(nk(), (hid_r[-1], in_channels, KSIZE, KSIZE), jnp.float32),
        b=0.01 * jax.random.normal(nk(), (in_channels,), jnp.float32),
    ))
    return params


# ----------------------------------------------------------------------------
# Pure-JAX reference (f32 lax convs) for correctness checking
# ----------------------------------------------------------------------------
def _ref_bn_prelu(y, lp):
    y = (y - lp["mean"]) / jnp.sqrt(lp["var"] + BN_EPS) * lp["gamma"] + lp["beta"]
    return jnp.where(y > 0, y, lp["alpha"] * y)


def autoencoder_reference(x_nchw, params):
    hp = jax.lax.Precision.HIGHEST
    x = jnp.transpose(x_nchw, (0, 2, 3, 1))
    for lp, s in zip(params["enc"], ENC_STRIDES):
        w = jnp.transpose(lp["w"], (2, 3, 1, 0))                      # OIHW -> HWIO
        y = jax.lax.conv_general_dilated(
            x, w, (s, s), [(PAD, PAD), (PAD, PAD)],
            dimension_numbers=("NHWC", "HWIO", "NHWC"), precision=hp) + lp["b"]
        x = _ref_bn_prelu(y, lp)
    n_dec = len(params["dec"])
    for i, (lp, s) in enumerate(zip(params["dec"], DEC_STRIDES)):
        w = jnp.transpose(lp["w"][:, :, ::-1, ::-1], (2, 3, 0, 1))    # flip, IOHW -> HWIO
        lo, hi = KSIZE - 1 - PAD, KSIZE - 1 - PAD + (s - 1)
        y = jax.lax.conv_general_dilated(
            x, w, (1, 1), [(lo, hi), (lo, hi)], lhs_dilation=(s, s),
            dimension_numbers=("NHWC", "HWIO", "NHWC"), precision=hp) + lp["b"]
        if i == n_dec - 1:
            x = jax.nn.sigmoid(y)
        else:
            x = _ref_bn_prelu(y, lp)
    return jnp.transpose(x, (0, 3, 1, 2))


if __name__ == "__main__":
    key = jax.random.PRNGKey(0)
    k_x, k_p = jax.random.split(key)
    in_channels, c = 3, 8
    N, H, W = 16, 16, 16
    B_TILE = 8                      # 8 images per grid step -> grid=(2,): keeps both v7x TCs busy

    x = jax.random.normal(k_x, (N, in_channels, H, W), jnp.float32)
    params = init_params(k_p, in_channels=in_channels, c=c)

    # Plan (banded/K-concatenated weights, folded BN, block-diag S, bf16 casts,
    # lane-padded head) is built ONCE, outside jit.
    plan = build_plan(params, H, W, in_channels, B_TILE)

    fwd = jax.jit(lambda inp: autoencoder_forward(inp, plan))
    y = fwd(x)
    jax.block_until_ready(y)

    assert y.shape == (N, in_channels, H, W), y.shape
    assert bool(jnp.all(jnp.isfinite(y)))
    assert bool(jnp.all((y >= 0.0) & (y <= 1.0)))            # sigmoid output

    y_ref = autoencoder_reference(x, params)
    err = float(jnp.max(jnp.abs(y - y_ref)))
    assert err < 5e-2, f"max abs err vs reference: {err}"

    print("KERNEL_OK")
</pallas_src>

<mosaic_0001>
module attributes {stable_mosaic.version = 11 : i64} {
  func.func @kernel(%arg0: i32, %arg1: memref<8x16x48xf32, #tpu.memory_space<vmem>>, %arg2: memref<1x10xf32, #tpu.memory_space<smem>>, %arg3: memref<5x64x128xbf16, #tpu.memory_space<vmem>>, %arg4: memref<240x128xbf16, #tpu.memory_space<vmem>>, %arg5: memref<1x128xf32, #tpu.memory_space<vmem>>, %arg6: memref<1x128xf32, #tpu.memory_space<vmem>>, %arg7: memref<5x32x64xbf16, #tpu.memory_space<vmem>>, %arg8: memref<640x128xbf16, #tpu.memory_space<vmem>>, %arg9: memref<1x128xf32, #tpu.memory_space<vmem>>, %arg10: memref<1x128xf32, #tpu.memory_space<vmem>>, %arg11: memref<640x128xbf16, #tpu.memory_space<vmem>>, %arg12: memref<1x128xf32, #tpu.memory_space<vmem>>, %arg13: memref<1x128xf32, #tpu.memory_space<vmem>>, %arg14: memref<640x128xbf16, #tpu.memory_space<vmem>>, %arg15: memref<1x128xf32, #tpu.memory_space<vmem>>, %arg16: memref<1x128xf32, #tpu.memory_space<vmem>>, %arg17: memref<640x32xbf16, #tpu.memory_space<vmem>>, %arg18: memref<1x32xf32, #tpu.memory_space<vmem>>, %arg19: memref<1x32xf32, #tpu.memory_space<vmem>>, %arg20: memref<160x128xbf16, #tpu.memory_space<vmem>>, %arg21: memref<1x128xf32, #tpu.memory_space<vmem>>, %arg22: memref<1x128xf32, #tpu.memory_space<vmem>>, %arg23: memref<640x128xbf16, #tpu.memory_space<vmem>>, %arg24: memref<1x128xf32, #tpu.memory_space<vmem>>, %arg25: memref<1x128xf32, #tpu.memory_space<vmem>>, %arg26: memref<640x128xbf16, #tpu.memory_space<vmem>>, %arg27: memref<1x128xf32, #tpu.memory_space<vmem>>, %arg28: memref<1x128xf32, #tpu.memory_space<vmem>>, %arg29: memref<5x64x32xbf16, #tpu.memory_space<vmem>>, %arg30: memref<640x128xbf16, #tpu.memory_space<vmem>>, %arg31: memref<1x128xf32, #tpu.memory_space<vmem>>, %arg32: memref<1x128xf32, #tpu.memory_space<vmem>>, %arg33: memref<5x128x64xbf16, #tpu.memory_space<vmem>>, %arg34: memref<640x128xbf16, #tpu.memory_space<vmem>>, %arg35: memref<1x128xf32, #tpu.memory_space<vmem>>, %arg36: memref<1x128xf32, #tpu.memory_space<vmem>>, %arg37: memref<8x16x128xf32, #tpu.memory_space<vmem>>) attributes {dimension_semantics = [#tpu.dimension_semantics<parallel>], iteration_bounds = array<i64: 2>, scalar_prefetch = 0 : i64, scratch_operands = 0 : i64, tpu.core_type = #tpu.core_type<tc>, window_params = [{transform_indices = @transform_0, window_bounds = array<i64: 8, 16, 48>}, {transform_indices = @transform_1, window_bounds = array<i64: 1, 10>}, {pipeline_mode = #tpu.pipeline_mode<synchronous>, transform_indices = @transform_2, window_bounds = array<i64: 5, 64, 128>}, {pipeline_mode = #tpu.pipeline_mode<synchronous>, transform_indices = @transform_3, window_bounds = array<i64: 240, 128>}, {pipeline_mode = #tpu.pipeline_mode<synchronous>, transform_indices = @transform_4, window_bounds = array<i64: 1, 128>}, {pipeline_mode = #tpu.pipeline_mode<synchronous>, transform_indices = @transform_5, window_bounds = array<i64: 1, 128>}, {pipeline_mode = #tpu.pipeline_mode<synchronous>, transform_indices = @transform_6, window_bounds = array<i64: 5, 32, 64>}, {pipeline_mode = #tpu.pipeline_mode<synchronous>, transform_indices = @transform_7, window_bounds = array<i64: 640, 128>}, {pipeline_mode = #tpu.pipeline_mode<synchronous>, transform_indices = @transform_8, window_bounds = array<i64: 1, 128>}, {pipeline_mode = #tpu.pipeline_mode<synchronous>, transform_indices = @transform_9, window_bounds = array<i64: 1, 128>}, {pipeline_mode = #tpu.pipeline_mode<synchronous>, transform_indices = @transform_10, window_bounds = array<i64: 640, 128>}, {pipeline_mode = #tpu.pipeline_mode<synchronous>, transform_indices = @transform_11, window_bounds = array<i64: 1, 128>}, {pipeline_mode = #tpu.pipeline_mode<synchronous>, transform_indices = @transform_12, window_bounds = array<i64: 1, 128>}, {pipeline_mode = #tpu.pipeline_mode<synchronous>, transform_indices = @transform_13, window_bounds = array<i64: 640, 128>}, {pipeline_mode = #tpu.pipeline_mode<synchronous>, transform_indices = @transform_14, window_bounds = array<i64: 1, 128>}, {pipeline_mode = #tpu.pipeline_mode<synchronous>, transform_indices = @transform_15, window_bounds = array<i64: 1, 128>}, {pipeline_mode = #tpu.pipeline_mode<synchronous>, transform_indices = @transform_16, window_bounds = array<i64: 640, 32>}, {pipeline_mode = #tpu.pipeline_mode<synchronous>, transform_indices = @transform_17, window_bounds = array<i64: 1, 32>}, {pipeline_mode = #tpu.pipeline_mode<synchronous>, transform_indices = @transform_18, window_bounds = array<i64: 1, 32>}, {pipeline_mode = #tpu.pipeline_mode<synchronous>, transform_indices = @transform_19, window_bounds = array<i64: 160, 128>}, {pipeline_mode = #tpu.pipeline_mode<synchronous>, transform_indices = @transform_20, window_bounds = array<i64: 1, 128>}, {pipeline_mode = #tpu.pipeline_mode<synchronous>, transform_indices = @transform_21, window_bounds = array<i64: 1, 128>}, {pipeline_mode = #tpu.pipeline_mode<synchronous>, transform_indices = @transform_22, window_bounds = array<i64: 640, 128>}, {pipeline_mode = #tpu.pipeline_mode<synchronous>, transform_indices = @transform_23, window_bounds = array<i64: 1, 128>}, {pipeline_mode = #tpu.pipeline_mode<synchronous>, transform_indices = @transform_24, window_bounds = array<i64: 1, 128>}, {pipeline_mode = #tpu.pipeline_mode<synchronous>, transform_indices = @transform_25, window_bounds = array<i64: 640, 128>}, {pipeline_mode = #tpu.pipeline_mode<synchronous>, transform_indices = @transform_26, window_bounds = array<i64: 1, 128>}, {pipeline_mode = #tpu.pipeline_mode<synchronous>, transform_indices = @transform_27, window_bounds = array<i64: 1, 128>}, {pipeline_mode = #tpu.pipeline_mode<synchronous>, transform_indices = @transform_28, window_bounds = array<i64: 5, 64, 32>}, {pipeline_mode = #tpu.pipeline_mode<synchronous>, transform_indices = @transform_29, window_bounds = array<i64: 640, 128>}, {pipeline_mode = #tpu.pipeline_mode<synchronous>, transform_indices = @transform_30, window_bounds = array<i64: 1, 128>}, {pipeline_mode = #tpu.pipeline_mode<synchronous>, transform_indices = @transform_31, window_bounds = array<i64: 1, 128>}, {pipeline_mode = #tpu.pipeline_mode<synchronous>, transform_indices = @transform_32, window_bounds = array<i64: 5, 128, 64>}, {pipeline_mode = #tpu.pipeline_mode<synchronous>, transform_indices = @transform_33, window_bounds = array<i64: 640, 128>}, {pipeline_mode = #tpu.pipeline_mode<synchronous>, transform_indices = @transform_34, window_bounds = array<i64: 1, 128>}, {pipeline_mode = #tpu.pipeline_mode<synchronous>, transform_indices = @transform_35, window_bounds = array<i64: 1, 128>}, {transform_indices = @transform_36, window_bounds = array<i64: 8, 16, 128>}]} {
    %c0 = arith.constant 0 : index
    %c0_0 = arith.constant 0 : index
    %c0_1 = arith.constant 0 : index
    %0 = vector.load %arg1[%c0, %c0_0, %c0_1] : memref<8x16x48xf32, #tpu.memory_space<vmem>>, vector<8x16x48xf32>
    %1 = vector.shape_cast %0 : vector<8x16x48xf32> to vector<128x48xf32>
    %2 = arith.truncf %1 : vector<128x48xf32> to vector<128x48xbf16>
    %c0_2 = arith.constant 0 : index
    %c0_3 = arith.constant 0 : index
    %c0_4 = arith.constant 0 : index
    %3 = vector.load %arg3[%c0_2, %c0_3, %c0_4] : memref<5x64x128xbf16, #tpu.memory_space<vmem>>, vector<1x64x128xbf16>
    %4 = vector.shape_cast %3 : vector<1x64x128xbf16> to vector<64x128xbf16>
    %cst = arith.constant dense<0.000000e+00> : vector<64x48xf32>
    %5 = tpu.matmul %4, %2, %cst {dimension_numbers = #tpu.dot_dimension_numbers<[1], [0], [0], [1], [0, 0, 1, 1], [], []>} : vector<64x128xbf16>, vector<128x48xbf16>, vector<64x48xf32> -> vector<64x48xf32>
    %c1 = arith.constant 1 : index
    %c0_5 = arith.constant 0 : index
    %c0_6 = arith.constant 0 : index
    %6 = vector.load %arg3[%c1, %c0_5, %c0_6] : memref<5x64x128xbf16, #tpu.memory_space<vmem>>, vector<1x64x128xbf16>
    %7 = vector.shape_cast %6 : vector<1x64x128xbf16> to vector<64x128xbf16>
    %cst_7 = arith.constant dense<0.000000e+00> : vector<64x48xf32>
    %8 = tpu.matmul %7, %2, %cst_7 {dimension_numbers = #tpu.dot_dimension_numbers<[1], [0], [0], [1], [0, 0, 1, 1], [], []>} : vector<64x128xbf16>, vector<128x48xbf16>, vector<64x48xf32> -> vector<64x48xf32>
    %c2 = arith.constant 2 : index
    %c0_8 = arith.constant 0 : index
    %c0_9 = arith.constant 0 : index
    %9 = vector.load %arg3[%c2, %c0_8, %c0_9] : memref<5x64x128xbf16, #tpu.memory_space<vmem>>, vector<1x64x128xbf16>
    %10 = vector.shape_cast %9 : vector<1x64x128xbf16> to vector<64x128xbf16>
    %cst_10 = arith.constant dense<0.000000e+00> : vector<64x48xf32>
    %11 = tpu.matmul %10, %2, %cst_10 {dimension_numbers = #tpu.dot_dimension_numbers<[1], [0], [0], [1], [0, 0, 1, 1], [], []>} : vector<64x128xbf16>, vector<128x48xbf16>, vector<64x48xf32> -> vector<64x48xf32>
    %c3 = arith.constant 3 : index
    %c0_11 = arith.constant 0 : index
    %c0_12 = arith.constant 0 : index
    %12 = vector.load %arg3[%c3, %c0_11, %c0_12] : memref<5x64x128xbf16, #tpu.memory_space<vmem>>, vector<1x64x128xbf16>
    %13 = vector.shape_cast %12 : vector<1x64x128xbf16> to vector<64x128xbf16>
    %cst_13 = arith.constant dense<0.000000e+00> : vector<64x48xf32>
    %14 = tpu.matmul %13, %2, %cst_13 {dimension_numbers = #tpu.dot_dimension_numbers<[1], [0], [0], [1], [0, 0, 1, 1], [], []>} : vector<64x128xbf16>, vector<128x48xbf16>, vector<64x48xf32> -> vector<64x48xf32>
    %c4 = arith.constant 4 : index
    %c0_14 = arith.constant 0 : index
    %c0_15 = arith.constant 0 : index
    %15 = vector.load %arg3[%c4, %c0_14, %c0_15] : memref<5x64x128xbf16, #tpu.memory_space<vmem>>, vector<1x64x128xbf16>
    %16 = vector.shape_cast %15 : vector<1x64x128xbf16> to vector<64x128xbf16>
    %cst_16 = arith.constant dense<0.000000e+00> : vector<64x48xf32>
    %17 = tpu.matmul %16, %2, %cst_16 {dimension_numbers = #tpu.dot_dimension_numbers<[1], [0], [0], [1], [0, 0, 1, 1], [], []>} : vector<64x128xbf16>, vector<128x48xbf16>, vector<64x48xf32> -> vector<64x48xf32>
    %18 = tpu.concatenate %5, %8, %11, %14, %17 in 1 : vector<64x48xf32>, vector<64x48xf32>, vector<64x48xf32>, vector<64x48xf32>, vector<64x48xf32> -> vector<64x240xf32>
    %19 = arith.truncf %18 : vector<64x240xf32> to vector<64x240xbf16>
    %c0_17 = arith.constant 0 : index
    %c0_18 = arith.constant 0 : index
    %20 = vector.load %arg4[%c0_17, %c0_18] : memref<240x128xbf16, #tpu.memory_space<vmem>>, vector<240x128xbf16>
    %cst_19 = arith.constant dense<0.000000e+00> : vector<64x128xf32>
    %21 = tpu.matmul %19, %20, %cst_19 {dimension_numbers = #tpu.dot_dimension_numbers<[1], [0], [0], [1], [0, 0, 1, 1], [], []>} : vector<64x240xbf16>, vector<240x128xbf16>, vector<64x128xf32> -> vector<64x128xf32>
    %c0_20 = arith.constant 0 : index
    %c0_21 = arith.constant 0 : index
    %22 = vector.load %arg5[%c0_20, %c0_21] : memref<1x128xf32, #tpu.memory_space<vmem>>, vector<1x128xf32>
    %23 = vector.broadcast %22 : vector<1x128xf32> to vector<64x128xf32>
    %24 = arith.mulf %21, %23 : vector<64x128xf32>
    %c0_22 = arith.constant 0 : index
    %c0_23 = arith.constant 0 : index
    %25 = vector.load %arg6[%c0_22, %c0_23] : memref<1x128xf32, #tpu.memory_space<vmem>>, vector<1x128xf32>
    %26 = vector.broadcast %25 : vector<1x128xf32> to vector<64x128xf32>
    %27 = arith.addf %24, %26 : vector<64x128xf32>
    %c0_24 = arith.constant 0 : index
    %c0_25 = arith.constant 0 : index
    %28 = memref.load %arg2[%c0_24, %c0_25] : memref<1x10xf32, #tpu.memory_space<smem>>
    %cst_26 = arith.constant 0.000000e+00 : f32
    %29 = vector.broadcast %cst_26 : f32 to vector<64x128xf32>
    %30 = arith.cmpf ogt, %27, %29 : vector<64x128xf32>
    %31 = vector.broadcast %28 : f32 to vector<64x128xf32>
    %32 = arith.mulf %31, %27 : vector<64x128xf32>
    %33 = arith.select %30, %27, %32 : vector<64x128xi1>, vector<64x128xf32>
    %34 = vector.shape_cast %33 : vector<64x128xf32> to vector<8x8x128xf32>
    %35 = vector.shape_cast %34 : vector<8x8x128xf32> to vector<64x128xf32>
    %36 = arith.truncf %35 : vector<64x128xf32> to vector<64x128xbf16>
    %c0_27 = arith.constant 0 : index
    %c0_28 = arith.constant 0 : index
    %c0_29 = arith.constant 0 : index
    %37 = vector.load %arg7[%c0_27, %c0_28, %c0_29] : memref<5x32x64xbf16, #tpu.memory_space<vmem>>, vector<1x32x64xbf16>
    %38 = vector.shape_cast %37 : vector<1x32x64xbf16> to vector<32x64xbf16>
    %cst_30 = arith.constant dense<0.000000e+00> : vector<32x128xf32>
    %39 = tpu.matmul %38, %36, %cst_30 {dimension_numbers = #tpu.dot_dimension_numbers<[1], [0], [0], [1], [0, 0, 1, 1], [], []>} : vector<32x64xbf16>, vector<64x128xbf16>, vector<32x128xf32> -> vector<32x128xf32>
    %c1_31 = arith.constant 1 : index
    %c0_32 = arith.constant 0 : index
    %c0_33 = arith.constant 0 : index
    %40 = vector.load %arg7[%c1_31, %c0_32, %c0_33] : memref<5x32x64xbf16, #tpu.memory_space<vmem>>, vector<1x32x64xbf16>
    %41 = vector.shape_cast %40 : vector<1x32x64xbf16> to vector<32x64xbf16>
    %cst_34 = arith.constant dense<0.000000e+00> : vector<32x128xf32>
    %42 = tpu.matmul %41, %36, %cst_34 {dimension_numbers = #tpu.dot_dimension_numbers<[1], [0], [0], [1], [0, 0, 1, 1], [], []>} : vector<32x64xbf16>, vector<64x128xbf16>, vector<32x128xf32> -> vector<32x128xf32>
    %c2_35 = arith.constant 2 : index
    %c0_36 = arith.constant 0 : index
    %c0_37 = arith.constant 0 : index
    %43 = vector.load %arg7[%c2_35, %c0_36, %c0_37] : memref<5x32x64xbf16, #tpu.memory_space<vmem>>, vector<1x32x64xbf16>
    %44 = vector.shape_cast %43 : vector<1x32x64xbf16> to vector<32x64xbf16>
    %cst_38 = arith.constant dense<0.000000e+00> : vector<32x128xf32>
    %45 = tpu.matmul %44, %36, %cst_38 {dimension_numbers = #tpu.dot_dimension_numbers<[1], [0], [0], [1], [0, 0, 1, 1], [], []>} : vector<32x64xbf16>, vector<64x128xbf16>, vector<32x128xf32> -> vector<32x128xf32>
    %c3_39 = arith.constant 3 : index
    %c0_40 = arith.constant 0 : index
    %c0_41 = arith.constant 0 : index
    %46 = vector.load %arg7[%c3_39, %c0_40, %c0_41] : memref<5x32x64xbf16, #tpu.memory_space<vmem>>, vector<1x32x64xbf16>
    %47 = vector.shape_cast %46 : vector<1x32x64xbf16> to vector<32x64xbf16>
    %cst_42 = arith.constant dense<0.000000e+00> : vector<32x128xf32>
    %48 = tpu.matmul %47, %36, %cst_42 {dimension_numbers = #tpu.dot_dimension_numbers<[1], [0], [0], [1], [0, 0, 1, 1], [], []>} : vector<32x64xbf16>, vector<64x128xbf16>, vector<32x128xf32> -> vector<32x128xf32>
    %c4_43 = arith.constant 4 : index
    %c0_44 = arith.constant 0 : index
    %c0_45 = arith.constant 0 : index
    %49 = vector.load %arg7[%c4_43, %c0_44, %c0_45] : memref<5x32x64xbf16, #tpu.memory_space<vmem>>, vector<1x32x64xbf16>
    %50 = vector.shape_cast %49 : vector<1x32x64xbf16> to vector<32x64xbf16>
    %cst_46 = arith.constant dense<0.000000e+00> : vector<32x128xf32>
    %51 = tpu.matmul %50, %36, %cst_46 {dimension_numbers = #tpu.dot_dimension_numbers<[1], [0], [0], [1], [0, 0, 1, 1], [], []>} : vector<32x64xbf16>, vector<64x128xbf16>, vector<32x128xf32> -> vector<32x128xf32>
    %52 = tpu.concatenate %39, %42, %45, %48, %51 in 1 : vector<32x128xf32>, vector<32x128xf32>, vector<32x128xf32>, vector<32x128xf32>, vector<32x128xf32> -> vector<32x640xf32>
    %53 = arith.truncf %52 : vector<32x640xf32> to vector<32x640xbf16>
    %c0_47 = arith.constant 0 : index
    %c0_48 = arith.constant 0 : index
    %54 = vector.load %arg8[%c0_47, %c0_48] : memref<640x128xbf16, #tpu.memory_space<vmem>>, vector<640x128xbf16>
    %cst_49 = arith.constant dense<0.000000e+00> : vector<32x128xf32>
    %55 = tpu.matmul %53, %54, %cst_49 {dimension_numbers = #tpu.dot_dimension_numbers<[1], [0], [0], [1], [0, 0, 1, 1], [], []>} : vector<32x640xbf16>, vector<640x128xbf16>, vector<32x128xf32> -> vector<32x128xf32>
    %c0_50 = arith.constant 0 : index
    %c0_51 = arith.constant 0 : index
    %56 = vector.load %arg9[%c0_50, %c0_51] : memref<1x128xf32, #tpu.memory_space<vmem>>, vector<1x128xf32>
    %57 = vector.broadcast %56 : vector<1x128xf32> to vector<32x128xf32>
    %58 = arith.mulf %55, %57 : vector<32x128xf32>
    %c0_52 = arith.constant 0 : index
    %c0_53 = arith.constant 0 : index
    %59 = vector.load %arg10[%c0_52, %c0_53] : memref<1x128xf32, #tpu.memory_space<vmem>>, vector<1x128xf32>
    %60 = vector.broadcast %59 : vector<1x128xf32> to vector<32x128xf32>
    %61 = arith.addf %58, %60 : vector<32x128xf32>
    %c0_54 = arith.constant 0 : index
    %c1_55 = arith.constant 1 : index
    %62 = memref.load %arg2[%c0_54, %c1_55] : memref<1x10xf32, #tpu.memory_space<smem>>
    %cst_56 = arith.constant 0.000000e+00 : f32
    %63 = vector.broadcast %cst_56 : f32 to vector<32x128xf32>
    %64 = arith.cmpf ogt, %61, %63 : vector<32x128xf32>
    %65 = vector.broadcast %62 : f32 to vector<32x128xf32>
    %66 = arith.mulf %65, %61 : vector<32x128xf32>
    %67 = arith.select %64, %61, %66 : vector<32x128xi1>, vector<32x128xf32>
    %68 = vector.shape_cast %67 : vector<32x128xf32> to vector<8x4x128xf32>
    %cst_57 = arith.constant 0.000000e+00 : f32
    %69 = vector.broadcast %cst_57 : f32 to vector<8x2x128xf32>
    %70 = tpu.concatenate %69, %68, %69 in 1 : vector<8x2x128xf32>, vector<8x4x128xf32>, vector<8x2x128xf32> -> vector<8x8x128xf32>
    %71 = vector.extract_strided_slice %70 {offsets = [0, 0, 0], sizes = [8, 4, 128], strides = [1, 1, 1]} : vector<8x8x128xf32> to vector<8x4x128xf32>
    %72 = vector.extract_strided_slice %70 {offsets = [0, 1, 0], sizes = [8, 4, 128], strides = [1, 1, 1]} : vector<8x8x128xf32> to vector<8x4x128xf32>
    %73 = vector.extract_strided_slice %70 {offsets = [0, 2, 0], sizes = [8, 4, 128], strides = [1, 1, 1]} : vector<8x8x128xf32> to vector<8x4x128xf32>
    %74 = vector.extract_strided_slice %70 {offsets = [0, 3, 0], sizes = [8, 4, 128], strides = [1, 1, 1]} : vector<8x8x128xf32> to vector<8x4x128xf32>
    %75 = vector.extract_strided_slice %70 {offsets = [0, 4, 0], sizes = [8, 4, 128], strides = [1, 1, 1]} : vector<8x8x128xf32> to vector<8x4x128xf32>
    %76 = tpu.concatenate %71, %72, %73, %74, %75 in 2 : vector<8x4x128xf32>, vector<8x4x128xf32>, vector<8x4x128xf32>, vector<8x4x128xf32>, vector<8x4x128xf32> -> vector<8x4x640xf32>
    %77 = vector.shape_cast %76 : vector<8x4x640xf32> to vector<32x640xf32>
    %78 = arith.truncf %77 : vector<32x640xf32> to vector<32x640xbf16>
    %c0_58 = arith.constant 0 : index
    %c0_59 = arith.constant 0 : index
    %79 = vector.load %arg11[%c0_58, %c0_59] : memref<640x128xbf16, #tpu.memory_space<vmem>>, vector<640x128xbf16>
    %cst_60 = arith.constant dense<0.000000e+00> : vector<32x128xf32>
    %80 = tpu.matmul %78, %79, %cst_60 {dimension_numbers = #tpu.dot_dimension_numbers<[1], [0], [0], [1], [0, 0, 1, 1], [], []>} : vector<32x640xbf16>, vector<640x128xbf16>, vector<32x128xf32> -> vector<32x128xf32>
    %c0_61 = arith.constant 0 : index
    %c0_62 = arith.constant 0 : index
    %81 = vector.load %arg12[%c0_61, %c0_62] : memref<1x128xf32, #tpu.memory_space<vmem>>, vector<1x128xf32>
    %82 = vector.broadcast %81 : vector<1x128xf32> to vector<32x128xf32>
    %83 = arith.mulf %80, %82 : vector<32x128xf32>
    %c0_63 = arith.constant 0 : index
    %c0_64 = arith.constant 0 : index
    %84 = vector.load %arg13[%c0_63, %c0_64] : memref<1x128xf32, #tpu.memory_space<vmem>>, vector<1x128xf32>
    %85 = vector.broadcast %84 : vector<1x128xf32> to vector<32x128xf32>
    %86 = arith.addf %83, %85 : vector<32x128xf32>
    %c0_65 = arith.constant 0 : index
    %c2_66 = arith.constant 2 : index
    %87 = memref.load %arg2[%c0_65, %c2_66] : memref<1x10xf32, #tpu.memory_space<smem>>
    %cst_67 = arith.constant 0.000000e+00 : f32
    %88 = vector.broadcast %cst_67 : f32 to vector<32x128xf32>
    %89 = arith.cmpf ogt, %86, %88 : vector<32x128xf32>
    %90 = vector.broadcast %87 : f32 to vector<32x128xf32>
    %91 = arith.mulf %90, %86 : vector<32x128xf32>
    %92 = arith.select %89, %86, %91 : vector<32x128xi1>, vector<32x128xf32>
    %93 = vector.shape_cast %92 : vector<32x128xf32> to vector<8x4x128xf32>
    %cst_68 = arith.constant 0.000000e+00 : f32
    %94 = vector.broadcast %cst_68 : f32 to vector<8x2x128xf32>
    %95 = tpu.concatenate %94, %93, %94 in 1 : vector<8x2x128xf32>, vector<8x4x128xf32>, vector<8x2x128xf32> -> vector<8x8x128xf32>
    %96 = vector.extract_strided_slice %95 {offsets = [0, 0, 0], sizes = [8, 4, 128], strides = [1, 1, 1]} : vector<8x8x128xf32> to vector<8x4x128xf32>
    %97 = vector.extract_strided_slice %95 {offsets = [0, 1, 0], sizes = [8, 4, 128], strides = [1, 1, 1]} : vector<8x8x128xf32> to vector<8x4x128xf32>
    %98 = vector.extract_strided_slice %95 {offsets = [0, 2, 0], sizes = [8, 4, 128], strides = [1, 1, 1]} : vector<8x8x128xf32> to vector<8x4x128xf32>
    %99 = vector.extract_strided_slice %95 {offsets = [0, 3, 0], sizes = [8, 4, 128], strides = [1, 1, 1]} : vector<8x8x128xf32> to vector<8x4x128xf32>
    %100 = vector.extract_strided_slice %95 {offsets = [0, 4, 0], sizes = [8, 4, 128], strides = [1, 1, 1]} : vector<8x8x128xf32> to vector<8x4x128xf32>
    %101 = tpu.concatenate %96, %97, %98, %99, %100 in 2 : vector<8x4x128xf32>, vector<8x4x128xf32>, vector<8x4x128xf32>, vector<8x4x128xf32>, vector<8x4x128xf32> -> vector<8x4x640xf32>
    %102 = vector.shape_cast %101 : vector<8x4x640xf32> to vector<32x640xf32>
    %103 = arith.truncf %102 : vector<32x640xf32> to vector<32x640xbf16>
    %c0_69 = arith.constant 0 : index
    %c0_70 = arith.constant 0 : index
    %104 = vector.load %arg14[%c0_69, %c0_70] : memref<640x128xbf16, #tpu.memory_space<vmem>>, vector<640x128xbf16>
    %cst_71 = arith.constant dense<0.000000e+00> : vector<32x128xf32>
    %105 = tpu.matmul %103, %104, %cst_71 {dimension_numbers = #tpu.dot_dimension_numbers<[1], [0], [0], [1], [0, 0, 1, 1], [], []>} : vector<32x640xbf16>, vector<640x128xbf16>, vector<32x128xf32> -> vector<32x128xf32>
    %c0_72 = arith.constant 0 : index
    %c0_73 = arith.constant 0 : index
    %106 = vector.load %arg15[%c0_72, %c0_73] : memref<1x128xf32, #tpu.memory_space<vmem>>, vector<1x128xf32>
    %107 = vector.broadcast %106 : vector<1x128xf32> to vector<32x128xf32>
    %108 = arith.mulf %105, %107 : vector<32x128xf32>
    %c0_74 = arith.constant 0 : index
    %c0_75 = arith.constant 0 : index
    %109 = vector.load %arg16[%c0_74, %c0_75] : memref<1x128xf32, #tpu.memory_space<vmem>>, vector<1x128xf32>
    %110 = vector.broadcast %109 : vector<1x128xf32> to vector<32x128xf32>
    %111 = arith.addf %108, %110 : vector<32x128xf32>
    %c0_76 = arith.constant 0 : index
    %c3_77 = arith.constant 3 : index
    %112 = memref.load %arg2[%c0_76, %c3_77] : memref<1x10xf32, #tpu.memory_space<smem>>
    %cst_78 = arith.constant 0.000000e+00 : f32
    %113 = vector.broadcast %cst_78 : f32 to vector<32x128xf32>
    %114 = arith.cmpf ogt, %111, %113 : vector<32x128xf32>
    %115 = vector.broadcast %112 : f32 to vector<32x128xf32>
    %116 = arith.mulf %115, %111 : vector<32x128xf32>
    %117 = arith.select %114, %111, %116 : vector<32x128xi1>, vector<32x128xf32>
    %118 = vector.shape_cast %117 : vector<32x128xf32> to vector<8x4x128xf32>
    %cst_79 = arith.constant 0.000000e+00 : f32
    %119 = vector.broadcast %cst_79 : f32 to vector<8x2x128xf32>
    %120 = tpu.concatenate %119, %118, %119 in 1 : vector<8x2x128xf32>, vector<8x4x128xf32>, vector<8x2x128xf32> -> vector<8x8x128xf32>
    %121 = vector.extract_strided_slice %120 {offsets = [0, 0, 0], sizes = [8, 4, 128], strides = [1, 1, 1]} : vector<8x8x128xf32> to vector<8x4x128xf32>
    %122 = vector.extract_strided_slice %120 {offsets = [0, 1, 0], sizes = [8, 4, 128], strides = [1, 1, 1]} : vector<8x8x128xf32> to vector<8x4x128xf32>
    %123 = vector.extract_strided_slice %120 {offsets = [0, 2, 0], sizes = [8, 4, 128], strides = [1, 1, 1]} : vector<8x8x128xf32> to vector<8x4x128xf32>
    %124 = vector.extract_strided_slice %120 {offsets = [0, 3, 0], sizes = [8, 4, 128], strides = [1, 1, 1]} : vector<8x8x128xf32> to vector<8x4x128xf32>
    %125 = vector.extract_strided_slice %120 {offsets = [0, 4, 0], sizes = [8, 4, 128], strides = [1, 1, 1]} : vector<8x8x128xf32> to vector<8x4x128xf32>
    %126 = tpu.concatenate %121, %122, %123, %124, %125 in 2 : vector<8x4x128xf32>, vector<8x4x128xf32>, vector<8x4x128xf32>, vector<8x4x128xf32>, vector<8x4x128xf32> -> vector<8x4x640xf32>
    %127 = vector.shape_cast %126 : vector<8x4x640xf32> to vector<32x640xf32>
    %128 = arith.truncf %127 : vector<32x640xf32> to vector<32x640xbf16>
    %c0_80 = arith.constant 0 : index
    %c0_81 = arith.constant 0 : index
    %129 = vector.load %arg17[%c0_80, %c0_81] : memref<640x32xbf16, #tpu.memory_space<vmem>>, vector<640x32xbf16>
    %cst_82 = arith.constant dense<0.000000e+00> : vector<32x32xf32>
    %130 = tpu.matmul %128, %129, %cst_82 {dimension_numbers = #tpu.dot_dimension_numbers<[1], [0], [0], [1], [0, 0, 1, 1], [], []>} : vector<32x640xbf16>, vector<640x32xbf16>, vector<32x32xf32> -> vector<32x32xf32>
    %c0_83 = arith.constant 0 : index
    %c0_84 = arith.constant 0 : index
    %131 = vector.load %arg18[%c0_83, %c0_84] : memref<1x32xf32, #tpu.memory_space<vmem>>, vector<1x32xf32>
    %132 = vector.broadcast %131 : vector<1x32xf32> to vector<32x32xf32>
    %133 = arith.mulf %130, %132 : vector<32x32xf32>
    %c0_85 = arith.constant 0 : index
    %c0_86 = arith.constant 0 : index
    %134 = vector.load %arg19[%c0_85, %c0_86] : memref<1x32xf32, #tpu.memory_space<vmem>>, vector<1x32xf32>
    %135 = vector.broadcast %134 : vector<1x32xf32> to vector<32x32xf32>
    %136 = arith.addf %133, %135 : vector<32x32xf32>
    %c0_87 = arith.constant 0 : index
    %c4_88 = arith.constant 4 : index
    %137 = memref.load %arg2[%c0_87, %c4_88] : memref<1x10xf32, #tpu.memory_space<smem>>
    %cst_89 = arith.constant 0.000000e+00 : f32
    %138 = vector.broadcast %cst_89 : f32 to vector<32x32xf32>
    %139 = arith.cmpf ogt, %136, %138 : vector<32x32xf32>
    %140 = vector.broadcast %137 : f32 to vector<32x32xf32>
    %141 = arith.mulf %140, %136 : vector<32x32xf32>
    %142 = arith.select %139, %136, %141 : vector<32x32xi1>, vector<32x32xf32>
    %143 = vector.shape_cast %142 : vector<32x32xf32> to vector<8x4x32xf32>
    %cst_90 = arith.constant 0.000000e+00 : f32
    %144 = vector.broadcast %cst_90 : f32 to vector<8x2x32xf32>
    %145 = tpu.concatenate %144, %143, %144 in 1 : vector<8x2x32xf32>, vector<8x4x32xf32>, vector<8x2x32xf32> -> vector<8x8x32xf32>
    %146 = vector.extract_strided_slice %145 {offsets = [0, 0, 0], sizes = [8, 4, 32], strides = [1, 1, 1]} : vector<8x8x32xf32> to vector<8x4x32xf32>
    %147 = vector.extract_strided_slice %145 {offsets = [0, 1, 0], sizes = [8, 4, 32], strides = [1, 1, 1]} : vector<8x8x32xf32> to vector<8x4x32xf32>
    %148 = vector.extract_strided_slice %145 {offsets = [0, 2, 0], sizes = [8, 4, 32], strides = [1, 1, 1]} : vector<8x8x32xf32> to vector<8x4x32xf32>
    %149 = vector.extract_strided_slice %145 {offsets = [0, 3, 0], sizes = [8, 4, 32], strides = [1, 1, 1]} : vector<8x8x32xf32> to vector<8x4x32xf32>
    %150 = vector.extract_strided_slice %145 {offsets = [0, 4, 0], sizes = [8, 4, 32], strides = [1, 1, 1]} : vector<8x8x32xf32> to vector<8x4x32xf32>
    %151 = tpu.concatenate %146, %147, %148, %149, %150 in 2 : vector<8x4x32xf32>, vector<8x4x32xf32>, vector<8x4x32xf32>, vector<8x4x32xf32>, vector<8x4x32xf32> -> vector<8x4x160xf32>
    %152 = vector.shape_cast %151 : vector<8x4x160xf32> to vector<32x160xf32>
    %153 = arith.truncf %152 : vector<32x160xf32> to vector<32x160xbf16>
    %c0_91 = arith.constant 0 : index
    %c0_92 = arith.constant 0 : index
    %154 = vector.load %arg20[%c0_91, %c0_92] : memref<160x128xbf16, #tpu.memory_space<vmem>>, vector<160x128xbf16>
    %cst_93 = arith.constant dense<0.000000e+00> : vector<32x128xf32>
    %155 = tpu.matmul %153, %154, %cst_93 {dimension_numbers = #tpu.dot_dimension_numbers<[1], [0], [0], [1], [0, 0, 1, 1], [], []>} : vector<32x160xbf16>, vector<160x128xbf16>, vector<32x128xf32> -> vector<32x128xf32>
    %c0_94 = arith.constant 0 : index
    %c0_95 = arith.constant 0 : index
    %156 = vector.load %arg21[%c0_94, %c0_95] : memref<1x128xf32, #tpu.memory_space<vmem>>, vector<1x128xf32>
    %157 = vector.broadcast %156 : vector<1x128xf32> to vector<32x128xf32>
    %158 = arith.mulf %155, %157 : vector<32x128xf32>
    %c0_96 = arith.constant 0 : index
    %c0_97 = arith.constant 0 : index
    %159 = vector.load %arg22[%c0_96, %c0_97] : memref<1x128xf32, #tpu.memory_space<vmem>>, vector<1x128xf32>
    %160 = vector.broadcast %159 : vector<1x128xf32> to vector<32x128xf32>
    %161 = arith.addf %158, %160 : vector<32x128xf32>
    %c0_98 = arith.constant 0 : index
    %c5 = arith.constant 5 : index
    %162 = memref.load %arg2[%c0_98, %c5] : memref<1x10xf32, #tpu.memory_space<smem>>
    %cst_99 = arith.constant 0.000000e+00 : f32
    %163 = vector.broadcast %cst_99 : f32 to vector<32x128xf32>
    %164 = arith.cmpf ogt, %161, %163 : vector<32x128xf32>
    %165 = vector.broadcast %162 : f32 to vector<32x128xf32>
    %166 = arith.mulf %165, %161 : vector<32x128xf32>
    %167 = arith.select %164, %161, %166 : vector<32x128xi1>, vector<32x128xf32>
    %168 = vector.shape_cast %167 : vector<32x128xf32> to vector<8x4x128xf32>
    %cst_100 = arith.constant 0.000000e+00 : f32
    %169 = vector.broadcast %cst_100 : f32 to vector<8x2x128xf32>
    %170 = tpu.concatenate %169, %168, %169 in 1 : vector<8x2x128xf32>, vector<8x4x128xf32>, vector<8x2x128xf32> -> vector<8x8x128xf32>
    %171 = vector.extract_strided_slice %170 {offsets = [0, 0, 0], sizes = [8, 4, 128], strides = [1, 1, 1]} : vector<8x8x128xf32> to vector<8x4x128xf32>
    %172 = vector.extract_strided_slice %170 {offsets = [0, 1, 0], sizes = [8, 4, 128], strides = [1, 1, 1]} : vector<8x8x128xf32> to vector<8x4x128xf32>
    %173 = vector.extract_strided_slice %170 {offsets = [0, 2, 0], sizes = [8, 4, 128], strides = [1, 1, 1]} : vector<8x8x128xf32> to vector<8x4x128xf32>
    %174 = vector.extract_strided_slice %170 {offsets = [0, 3, 0], sizes = [8, 4, 128], strides = [1, 1, 1]} : vector<8x8x128xf32> to vector<8x4x128xf32>
    %175 = vector.extract_strided_slice %170 {offsets = [0, 4, 0], sizes = [8, 4, 128], strides = [1, 1, 1]} : vector<8x8x128xf32> to vector<8x4x128xf32>
    %176 = tpu.concatenate %171, %172, %173, %174, %175 in 2 : vector<8x4x128xf32>, vector<8x4x128xf32>, vector<8x4x128xf32>, vector<8x4x128xf32>, vector<8x4x128xf32> -> vector<8x4x640xf32>
    %177 = vector.shape_cast %176 : vector<8x4x640xf32> to vector<32x640xf32>
    %178 = arith.truncf %177 : vector<32x640xf32> to vector<32x640xbf16>
    %c0_101 = arith.constant 0 : index
    %c0_102 = arith.constant 0 : index
    %179 = vector.load %arg23[%c0_101, %c0_102] : memref<640x128xbf16, #tpu.memory_space<vmem>>, vector<640x128xbf16>
    %cst_103 = arith.constant dense<0.000000e+00> : vector<32x128xf32>
    %180 = tpu.matmul %178, %179, %cst_103 {dimension_numbers = #tpu.dot_dimension_numbers<[1], [0], [0], [1], [0, 0, 1, 1], [], []>} : vector<32x640xbf16>, vector<640x128xbf16>, vector<32x128xf32> -> vector<32x128xf32>
    %c0_104 = arith.constant 0 : index
    %c0_105 = arith.constant 0 : index
    %181 = vector.load %arg24[%c0_104, %c0_105] : memref<1x128xf32, #tpu.memory_space<vmem>>, vector<1x128xf32>
    %182 = vector.broadcast %181 : vector<1x128xf32> to vector<32x128xf32>
    %183 = arith.mulf %180, %182 : vector<32x128xf32>
    %c0_106 = arith.constant 0 : index
    %c0_107 = arith.constant 0 : index
    %184 = vector.load %arg25[%c0_106, %c0_107] : memref<1x128xf32, #tpu.memory_space<vmem>>, vector<1x128xf32>
    %185 = vector.broadcast %184 : vector<1x128xf32> to vector<32x128xf32>
    %186 = arith.addf %183, %185 : vector<32x128xf32>
    %c0_108 = arith.constant 0 : index
    %c6 = arith.constant 6 : index
    %187 = memref.load %arg2[%c0_108, %c6] : memref<1x10xf32, #tpu.memory_space<smem>>
    %cst_109 = arith.constant 0.000000e+00 : f32
    %188 = vector.broadcast %cst_109 : f32 to vector<32x128xf32>
    %189 = arith.cmpf ogt, %186, %188 : vector<32x128xf32>
    %190 = vector.broadcast %187 : f32 to vector<32x128xf32>
    %191 = arith.mulf %190, %186 : vector<32x128xf32>
    %192 = arith.select %189, %186, %191 : vector<32x128xi1>, vector<32x128xf32>
    %193 = vector.shape_cast %192 : vector<32x128xf32> to vector<8x4x128xf32>
    %cst_110 = arith.constant 0.000000e+00 : f32
    %194 = vector.broadcast %cst_110 : f32 to vector<8x2x128xf32>
    %195 = tpu.concatenate %194, %193, %194 in 1 : vector<8x2x128xf32>, vector<8x4x128xf32>, vector<8x2x128xf32> -> vector<8x8x128xf32>
    %196 = vector.extract_strided_slice %195 {offsets = [0, 0, 0], sizes = [8, 4, 128], strides = [1, 1, 1]} : vector<8x8x128xf32> to vector<8x4x128xf32>
    %197 = vector.extract_strided_slice %195 {offsets = [0, 1, 0], sizes = [8, 4, 128], strides = [1, 1, 1]} : vector<8x8x128xf32> to vector<8x4x128xf32>
    %198 = vector.extract_strided_slice %195 {offsets = [0, 2, 0], sizes = [8, 4, 128], strides = [1, 1, 1]} : vector<8x8x128xf32> to vector<8x4x128xf32>
    %199 = vector.extract_strided_slice %195 {offsets = [0, 3, 0], sizes = [8, 4, 128], strides = [1, 1, 1]} : vector<8x8x128xf32> to vector<8x4x128xf32>
    %200 = vector.extract_strided_slice %195 {offsets = [0, 4, 0], sizes = [8, 4, 128], strides = [1, 1, 1]} : vector<8x8x128xf32> to vector<8x4x128xf32>
    %201 = tpu.concatenate %196, %197, %198, %199, %200 in 2 : vector<8x4x128xf32>, vector<8x4x128xf32>, vector<8x4x128xf32>, vector<8x4x128xf32>, vector<8x4x128xf32> -> vector<8x4x640xf32>
    %202 = vector.shape_cast %201 : vector<8x4x640xf32> to vector<32x640xf32>
    %203 = arith.truncf %202 : vector<32x640xf32> to vector<32x640xbf16>
    %c0_111 = arith.constant 0 : index
    %c0_112 = arith.constant 0 : index
    %204 = vector.load %arg26[%c0_111, %c0_112] : memref<640x128xbf16, #tpu.memory_space<vmem>>, vector<640x128xbf16>
    %cst_113 = arith.constant dense<0.000000e+00> : vector<32x128xf32>
    %205 = tpu.matmul %203, %204, %cst_113 {dimension_numbers = #tpu.dot_dimension_numbers<[1], [0], [0], [1], [0, 0, 1, 1], [], []>} : vector<32x640xbf16>, vector<640x128xbf16>, vector<32x128xf32> -> vector<32x128xf32>
    %c0_114 = arith.constant 0 : index
    %c0_115 = arith.constant 0 : index
    %206 = vector.load %arg27[%c0_114, %c0_115] : memref<1x128xf32, #tpu.memory_space<vmem>>, vector<1x128xf32>
    %207 = vector.broadcast %206 : vector<1x128xf32> to vector<32x128xf32>
    %208 = arith.mulf %205, %207 : vector<32x128xf32>
    %c0_116 = arith.constant 0 : index
    %c0_117 = arith.constant 0 : index
    %209 = vector.load %arg28[%c0_116, %c0_117] : memref<1x128xf32, #tpu.memory_space<vmem>>, vector<1x128xf32>
    %210 = vector.broadcast %209 : vector<1x128xf32> to vector<32x128xf32>
    %211 = arith.addf %208, %210 : vector<32x128xf32>
    %c0_118 = arith.constant 0 : index
    %c7 = arith.constant 7 : index
    %212 = memref.load %arg2[%c0_118, %c7] : memref<1x10xf32, #tpu.memory_space<smem>>
    %cst_119 = arith.constant 0.000000e+00 : f32
    %213 = vector.broadcast %cst_119 : f32 to vector<32x128xf32>
    %214 = arith.cmpf ogt, %211, %213 : vector<32x128xf32>
    %215 = vector.broadcast %212 : f32 to vector<32x128xf32>
    %216 = arith.mulf %215, %211 : vector<32x128xf32>
    %217 = arith.select %214, %211, %216 : vector<32x128xi1>, vector<32x128xf32>
    %218 = vector.shape_cast %217 : vector<32x128xf32> to vector<8x4x128xf32>
    %219 = vector.shape_cast %218 : vector<8x4x128xf32> to vector<32x128xf32>
    %220 = arith.truncf %219 : vector<32x128xf32> to vector<32x128xbf16>
    %c0_120 = arith.constant 0 : index
    %c0_121 = arith.constant 0 : index
    %c0_122 = arith.constant 0 : index
    %221 = vector.load %arg29[%c0_120, %c0_121, %c0_122] : memref<5x64x32xbf16, #tpu.memory_space<vmem>>, vector<1x64x32xbf16>
    %222 = vector.shape_cast %221 : vector<1x64x32xbf16> to vector<64x32xbf16>
    %cst_123 = arith.constant dense<0.000000e+00> : vector<64x128xf32>
    %223 = tpu.matmul %222, %220, %cst_123 {dimension_numbers = #tpu.dot_dimension_numbers<[1], [0], [0], [1], [0, 0, 1, 1], [], []>} : vector<64x32xbf16>, vector<32x128xbf16>, vector<64x128xf32> -> vector<64x128xf32>
    %c1_124 = arith.constant 1 : index
    %c0_125 = arith.constant 0 : index
    %c0_126 = arith.constant 0 : index
    %224 = vector.load %arg29[%c1_124, %c0_125, %c0_126] : memref<5x64x32xbf16, #tpu.memory_space<vmem>>, vector<1x64x32xbf16>
    %225 = vector.shape_cast %224 : vector<1x64x32xbf16> to vector<64x32xbf16>
    %cst_127 = arith.constant dense<0.000000e+00> : vector<64x128xf32>
    %226 = tpu.matmul %225, %220, %cst_127 {dimension_numbers = #tpu.dot_dimension_numbers<[1], [0], [0], [1], [0, 0, 1, 1], [], []>} : vector<64x32xbf16>, vector<32x128xbf16>, vector<64x128xf32> -> vector<64x128xf32>
    %c2_128 = arith.constant 2 : index
    %c0_129 = arith.constant 0 : index
    %c0_130 = arith.constant 0 : index
    %227 = vector.load %arg29[%c2_128, %c0_129, %c0_130] : memref<5x64x32xbf16, #tpu.memory_space<vmem>>, vector<1x64x32xbf16>
    %228 = vector.shape_cast %227 : vector<1x64x32xbf16> to vector<64x32xbf16>
    %cst_131 = arith.constant dense<0.000000e+00> : vector<64x128xf32>
    %229 = tpu.matmul %228, %220, %cst_131 {dimension_numbers = #tpu.dot_dimension_numbers<[1], [0], [0], [1], [0, 0, 1, 1], [], []>} : vector<64x32xbf16>, vector<32x128xbf16>, vector<64x128xf32> -> vector<64x128xf32>
    %c3_132 = arith.constant 3 : index
    %c0_133 = arith.constant 0 : index
    %c0_134 = arith.constant 0 : index
    %230 = vector.load %arg29[%c3_132, %c0_133, %c0_134] : memref<5x64x32xbf16, #tpu.memory_space<vmem>>, vector<1x64x32xbf16>
    %231 = vector.shape_cast %230 : vector<1x64x32xbf16> to vector<64x32xbf16>
    %cst_135 = arith.constant dense<0.000000e+00> : vector<64x128xf32>
    %232 = tpu.matmul %231, %220, %cst_135 {dimension_numbers = #tpu.dot_dimension_numbers<[1], [0], [0], [1], [0, 0, 1, 1], [], []>} : vector<64x32xbf16>, vector<32x128xbf16>, vector<64x128xf32> -> vector<64x128xf32>
    %c4_136 = arith.constant 4 : index
    %c0_137 = arith.constant 0 : index
    %c0_138 = arith.constant 0 : index
    %233 = vector.load %arg29[%c4_136, %c0_137, %c0_138] : memref<5x64x32xbf16, #tpu.memory_space<vmem>>, vector<1x64x32xbf16>
    %234 = vector.shape_cast %233 : vector<1x64x32xbf16> to vector<64x32xbf16>
    %cst_139 = arith.constant dense<0.000000e+00> : vector<64x128xf32>
    %235 = tpu.matmul %234, %220, %cst_139 {dimension_numbers = #tpu.dot_dimension_numbers<[1], [0], [0], [1], [0, 0, 1, 1], [], []>} : vector<64x32xbf16>, vector<32x128xbf16>, vector<64x128xf32> -> vector<64x128xf32>
    %236 = tpu.concatenate %223, %226, %229, %232, %235 in 1 : vector<64x128xf32>, vector<64x128xf32>, vector<64x128xf32>, vector<64x128xf32>, vector<64x128xf32> -> vector<64x640xf32>
    %237 = arith.truncf %236 : vector<64x640xf32> to vector<64x640xbf16>
    %c0_140 = arith.constant 0 : index
    %c0_141 = arith.constant 0 : index
    %238 = vector.load %arg30[%c0_140, %c0_141] : memref<640x128xbf16, #tpu.memory_space<vmem>>, vector<640x128xbf16>
    %cst_142 = arith.constant dense<0.000000e+00> : vector<64x128xf32>
    %239 = tpu.matmul %237, %238, %cst_142 {dimension_numbers = #tpu.dot_dimension_numbers<[1], [0], [0], [1], [0, 0, 1, 1], [], []>} : vector<64x640xbf16>, vector<640x128xbf16>, vector<64x128xf32> -> vector<64x128xf32>
    %c0_143 = arith.constant 0 : index
    %c0_144 = arith.constant 0 : index
    %240 = vector.load %arg31[%c0_143, %c0_144] : memref<1x128xf32, #tpu.memory_space<vmem>>, vector<1x128xf32>
    %241 = vector.broadcast %240 : vector<1x128xf32> to vector<64x128xf32>
    %242 = arith.mulf %239, %241 : vector<64x128xf32>
    %c0_145 = arith.constant 0 : index
    %c0_146 = arith.constant 0 : index
    %243 = vector.load %arg32[%c0_145, %c0_146] : memref<1x128xf32, #tpu.memory_space<vmem>>, vector<1x128xf32>
    %244 = vector.broadcast %243 : vector<1x128xf32> to vector<64x128xf32>
    %245 = arith.addf %242, %244 : vector<64x128xf32>
    %c0_147 = arith.constant 0 : index
    %c8 = arith.constant 8 : index
    %246 = memref.load %arg2[%c0_147, %c8] : memref<1x10xf32, #tpu.memory_space<smem>>
    %cst_148 = arith.constant 0.000000e+00 : f32
    %247 = vector.broadcast %cst_148 : f32 to vector<64x128xf32>
    %248 = arith.cmpf ogt, %245, %247 : vector<64x128xf32>
    %249 = vector.broadcast %246 : f32 to vector<64x128xf32>
    %250 = arith.mulf %249, %245 : vector<64x128xf32>
    %251 = arith.select %248, %245, %250 : vector<64x128xi1>, vector<64x128xf32>
    %252 = vector.shape_cast %251 : vector<64x128xf32> to vector<8x8x128xf32>
    %253 = vector.shape_cast %252 : vector<8x8x128xf32> to vector<64x128xf32>
    %254 = arith.truncf %253 : vector<64x128xf32> to vector<64x128xbf16>
    %c0_149 = arith.constant 0 : index
    %c0_150 = arith.constant 0 : index
    %c0_151 = arith.constant 0 : index
    %255 = vector.load %arg33[%c0_149, %c0_150, %c0_151] : memref<5x128x64xbf16, #tpu.memory_space<vmem>>, vector<1x128x64xbf16>
    %256 = vector.shape_cast %255 : vector<1x128x64xbf16> to vector<128x64xbf16>
    %cst_152 = arith.constant dense<0.000000e+00> : vector<128x128xf32>
    %257 = tpu.matmul %256, %254, %cst_152 {dimension_numbers = #tpu.dot_dimension_numbers<[1], [0], [0], [1], [0, 0, 1, 1], [], []>} : vector<128x64xbf16>, vector<64x128xbf16>, vector<128x128xf32> -> vector<128x128xf32>
    %c1_153 = arith.constant 1 : index
    %c0_154 = arith.constant 0 : index
    %c0_155 = arith.constant 0 : index
    %258 = vector.load %arg33[%c1_153, %c0_154, %c0_155] : memref<5x128x64xbf16, #tpu.memory_space<vmem>>, vector<1x128x64xbf16>
    %259 = vector.shape_cast %258 : vector<1x128x64xbf16> to vector<128x64xbf16>
    %cst_156 = arith.constant dense<0.000000e+00> : vector<128x128xf32>
    %260 = tpu.matmul %259, %254, %cst_156 {dimension_numbers = #tpu.dot_dimension_numbers<[1], [0], [0], [1], [0, 0, 1, 1], [], []>} : vector<128x64xbf16>, vector<64x128xbf16>, vector<128x128xf32> -> vector<128x128xf32>
    %c2_157 = arith.constant 2 : index
    %c0_158 = arith.constant 0 : index
    %c0_159 = arith.constant 0 : index
    %261 = vector.load %arg33[%c2_157, %c0_158, %c0_159] : memref<5x128x64xbf16, #tpu.memory_space<vmem>>, vector<1x128x64xbf16>
    %262 = vector.shape_cast %261 : vector<1x128x64xbf16> to vector<128x64xbf16>
    %cst_160 = arith.constant dense<0.000000e+00> : vector<128x128xf32>
    %263 = tpu.matmul %262, %254, %cst_160 {dimension_numbers = #tpu.dot_dimension_numbers<[1], [0], [0], [1], [0, 0, 1, 1], [], []>} : vector<128x64xbf16>, vector<64x128xbf16>, vector<128x128xf32> -> vector<128x128xf32>
    %c3_161 = arith.constant 3 : index
    %c0_162 = arith.constant 0 : index
    %c0_163 = arith.constant 0 : index
    %264 = vector.load %arg33[%c3_161, %c0_162, %c0_163] : memref<5x128x64xbf16, #tpu.memory_space<vmem>>, vector<1x128x64xbf16>
    %265 = vector.shape_cast %264 : vector<1x128x64xbf16> to vector<128x64xbf16>
    %cst_164 = arith.constant dense<0.000000e+00> : vector<128x128xf32>
    %266 = tpu.matmul %265, %254, %cst_164 {dimension_numbers = #tpu.dot_dimension_numbers<[1], [0], [0], [1], [0, 0, 1, 1], [], []>} : vector<128x64xbf16>, vector<64x128xbf16>, vector<128x128xf32> -> vector<128x128xf32>
    %c4_165 = arith.constant 4 : index
    %c0_166 = arith.constant 0 : index
    %c0_167 = arith.constant 0 : index
    %267 = vector.load %arg33[%c4_165, %c0_166, %c0_167] : memref<5x128x64xbf16, #tpu.memory_space<vmem>>, vector<1x128x64xbf16>
    %268 = vector.shape_cast %267 : vector<1x128x64xbf16> to vector<128x64xbf16>
    %cst_168 = arith.constant dense<0.000000e+00> : vector<128x128xf32>
    %269 = tpu.matmul %268, %254, %cst_168 {dimension_numbers = #tpu.dot_dimension_numbers<[1], [0], [0], [1], [0, 0, 1, 1], [], []>} : vector<128x64xbf16>, vector<64x128xbf16>, vector<128x128xf32> -> vector<128x128xf32>
    %270 = tpu.concatenate %257, %260, %263, %266, %269 in 1 : vector<128x128xf32>, vector<128x128xf32>, vector<128x128xf32>, vector<128x128xf32>, vector<128x128xf32> -> vector<128x640xf32>
    %271 = arith.truncf %270 : vector<128x640xf32> to vector<128x640xbf16>
    %c0_169 = arith.constant 0 : index
    %c0_170 = arith.constant 0 : index
    %272 = vector.load %arg34[%c0_169, %c0_170] : memref<640x128xbf16, #tpu.memory_space<vmem>>, vector<640x128xbf16>
    %cst_171 = arith.constant dense<0.000000e+00> : vector<128x128xf32>
    %273 = tpu.matmul %271, %272, %cst_171 {dimension_numbers = #tpu.dot_dimension_numbers<[1], [0], [0], [1], [0, 0, 1, 1], [], []>} : vector<128x640xbf16>, vector<640x128xbf16>, vector<128x128xf32> -> vector<128x128xf32>
    %c0_172 = arith.constant 0 : index
    %c0_173 = arith.constant 0 : index
    %274 = vector.load %arg35[%c0_172, %c0_173] : memref<1x128xf32, #tpu.memory_space<vmem>>, vector<1x128xf32>
    %275 = vector.broadcast %274 : vector<1x128xf32> to vector<128x128xf32>
    %276 = arith.mulf %273, %275 : vector<128x128xf32>
    %c0_174 = arith.constant 0 : index
    %c0_175 = arith.constant 0 : index
    %277 = vector.load %arg36[%c0_174, %c0_175] : memref<1x128xf32, #tpu.memory_space<vmem>>, vector<1x128xf32>
    %278 = vector.broadcast %277 : vector<1x128xf32> to vector<128x128xf32>
    %279 = arith.addf %276, %278 : vector<128x128xf32>
    %280 = arith.negf %279 : vector<128x128xf32>
    %281 = math.exp %280 : vector<128x128xf32>
    %cst_176 = arith.constant 1.000000e+00 : f32
    %282 = vector.broadcast %cst_176 : f32 to vector<128x128xf32>
    %283 = arith.addf %282, %281 : vector<128x128xf32>
    %284 = arith.divf %282, %283 : vector<128x128xf32>
    %285 = vector.shape_cast %284 : vector<128x128xf32> to vector<8x16x128xf32>
    %c0_177 = arith.constant 0 : index
    %c0_178 = arith.constant 0 : index
    %c0_179 = arith.constant 0 : index
    %286 = vector.load %arg37[%c0_177, %c0_178, %c0_179] : memref<8x16x128xf32, #tpu.memory_space<vmem>>, vector<8x16x128xf32>
    tpu.vector_store %arg37[%c0_177, %c0_178, %c0_179], %285 {strides = array<i32>} : memref<8x16x128xf32, #tpu.memory_space<vmem>>, vector<8x16x128xf32>,
    return
  }
  func.func @transform_0(%arg0: i32) -> (i32, i32, i32) {
    %c0_i32 = arith.constant 0 : i32
    %c0_i32_0 = arith.constant 0 : i32
    %c0_i32_1 = arith.constant 0 : i32
    return %arg0, %c0_i32, %c0_i32_0 : i32, i32, i32
  }
  func.func @transform_1(%arg0: i32) -> (i32, i32) {
    %c0_i32 = arith.constant 0 : i32
    %c0_i32_0 = arith.constant 0 : i32
    %c0_i32_1 = arith.constant 0 : i32
    return %c0_i32, %c0_i32_0 : i32, i32
  }
  func.func @transform_2(%arg0: i32) -> (i32, i32, i32) {
    %c0_i32 = arith.constant 0 : i32
    %c0_i32_0 = arith.constant 0 : i32
    %c0_i32_1 = arith.constant 0 : i32
    %c0_i32_2 = arith.constant 0 : i32
    return %c0_i32, %c0_i32_0, %c0_i32_1 : i32, i32, i32
  }
  func.func @transform_3(%arg0: i32) -> (i32, i32) {
    %c0_i32 = arith.constant 0 : i32
    %c0_i32_0 = arith.constant 0 : i32
    %c0_i32_1 = arith.constant 0 : i32
    return %c0_i32, %c0_i32_0 : i32, i32
  }
  func.func @transform_4(%arg0: i32) -> (i32, i32) {
    %c0_i32 = arith.constant 0 : i32
    %c0_i32_0 = arith.constant 0 : i32
    %c0_i32_1 = arith.constant 0 : i32
    return %c0_i32, %c0_i32_0 : i32, i32
  }
  func.func @transform_5(%arg0: i32) -> (i32, i32) {
    %c0_i32 = arith.constant 0 : i32
    %c0_i32_0 = arith.constant 0 : i32
    %c0_i32_1 = arith.constant 0 : i32
    return %c0_i32, %c0_i32_0 : i32, i32
  }
  func.func @transform_6(%arg0: i32) -> (i32, i32, i32) {
    %c0_i32 = arith.constant 0 : i32
    %c0_i32_0 = arith.constant 0 : i32
    %c0_i32_1 = arith.constant 0 : i32
    %c0_i32_2 = arith.constant 0 : i32
    return %c0_i32, %c0_i32_0, %c0_i32_1 : i32, i32, i32
  }
  func.func @transform_7(%arg0: i32) -> (i32, i32) {
    %c0_i32 = arith.constant 0 : i32
    %c0_i32_0 = arith.constant 0 : i32
    %c0_i32_1 = arith.constant 0 : i32
    return %c0_i32, %c0_i32_0 : i32, i32
  }
  func.func @transform_8(%arg0: i32) -> (i32, i32) {
    %c0_i32 = arith.constant 0 : i32
    %c0_i32_0 = arith.constant 0 : i32
    %c0_i32_1 = arith.constant 0 : i32
    return %c0_i32, %c0_i32_0 : i32, i32
  }
  func.func @transform_9(%arg0: i32) -> (i32, i32) {
    %c0_i32 = arith.constant 0 : i32
    %c0_i32_0 = arith.constant 0 : i32
    %c0_i32_1 = arith.constant 0 : i32
    return %c0_i32, %c0_i32_0 : i32, i32
  }
  func.func @transform_10(%arg0: i32) -> (i32, i32) {
    %c0_i32 = arith.constant 0 : i32
    %c0_i32_0 = arith.constant 0 : i32
    %c0_i32_1 = arith.constant 0 : i32
    return %c0_i32, %c0_i32_0 : i32, i32
  }
  func.func @transform_11(%arg0: i32) -> (i32, i32) {
    %c0_i32 = arith.constant 0 : i32
    %c0_i32_0 = arith.constant 0 : i32
    %c0_i32_1 = arith.constant 0 : i32
    return %c0_i32, %c0_i32_0 : i32, i32
  }
  func.func @transform_12(%arg0: i32) -> (i32, i32) {
    %c0_i32 = arith.constant 0 : i32
    %c0_i32_0 = arith.constant 0 : i32
    %c0_i32_1 = arith.constant 0 : i32
    return %c0_i32, %c0_i32_0 : i32, i32
  }
  func.func @transform_13(%arg0: i32) -> (i32, i32) {
    %c0_i32 = arith.constant 0 : i32
    %c0_i32_0 = arith.constant 0 : i32
    %c0_i32_1 = arith.constant 0 : i32
    return %c0_i32, %c0_i32_0 : i32, i32
  }
  func.func @transform_14(%arg0: i32) -> (i32, i32) {
    %c0_i32 = arith.constant 0 : i32
    %c0_i32_0 = arith.constant 0 : i32
    %c0_i32_1 = arith.constant 0 : i32
    return %c0_i32, %c0_i32_0 : i32, i32
  }
  func.func @transform_15(%arg0: i32) -> (i32, i32) {
    %c0_i32 = arith.constant 0 : i32
    %c0_i32_0 = arith.constant 0 : i32
    %c0_i32_1 = arith.constant 0 : i32
    return %c0_i32, %c0_i32_0 : i32, i32
  }
  func.func @transform_16(%arg0: i32) -> (i32, i32) {
    %c0_i32 = arith.constant 0 : i32
    %c0_i32_0 = arith.constant 0 : i32
    %c0_i32_1 = arith.constant 0 : i32
    return %c0_i32, %c0_i32_0 : i32, i32
  }
  func.func @transform_17(%arg0: i32) -> (i32, i32) {
    %c0_i32 = arith.constant 0 : i32
    %c0_i32_0 = arith.constant 0 : i32
    %c0_i32_1 = arith.constant 0 : i32
    return %c0_i32, %c0_i32_0 : i32, i32
  }
  func.func @transform_18(%arg0: i32) -> (i32, i32) {
    %c0_i32 = arith.constant 0 : i32
    %c0_i32_0 = arith.constant 0 : i32
    %c0_i32_1 = arith.constant 0 : i32
    return %c0_i32, %c0_i32_0 : i32, i32
  }
  func.func @transform_19(%arg0: i32) -> (i32, i32) {
    %c0_i32 = arith.constant 0 : i32
    %c0_i32_0 = arith.constant 0 : i32
    %c0_i32_1 = arith.constant 0 : i32
    return %c0_i32, %c0_i32_0 : i32, i32
  }
  func.func @transform_20(%arg0: i32) -> (i32, i32) {
    %c0_i32 = arith.constant 0 : i32
    %c0_i32_0 = arith.constant 0 : i32
    %c0_i32_1 = arith.constant 0 : i32
    return %c0_i32, %c0_i32_0 : i32, i32
  }
  func.func @transform_21(%arg0: i32) -> (i32, i32) {
    %c0_i32 = arith.constant 0 : i32
    %c0_i32_0 = arith.constant 0 : i32
    %c0_i32_1 = arith.constant 0 : i32
    return %c0_i32, %c0_i32_0 : i32, i32
  }
  func.func @transform_22(%arg0: i32) -> (i32, i32) {
    %c0_i32 = arith.constant 0 : i32
    %c0_i32_0 = arith.constant 0 : i32
    %c0_i32_1 = arith.constant 0 : i32
    return %c0_i32, %c0_i32_0 : i32, i32
  }
  func.func @transform_23(%arg0: i32) -> (i32, i32) {
    %c0_i32 = arith.constant 0 : i32
    %c0_i32_0 = arith.constant 0 : i32
    %c0_i32_1 = arith.constant 0 : i32
    return %c0_i32, %c0_i32_0 : i32, i32
  }
  func.func @transform_24(%arg0: i32) -> (i32, i32) {
    %c0_i32 = arith.constant 0 : i32
    %c0_i32_0 = arith.constant 0 : i32
    %c0_i32_1 = arith.constant 0 : i32
    return %c0_i32, %c0_i32_0 : i32, i32
  }
  func.func @transform_25(%arg0: i32) -> (i32, i32) {
    %c0_i32 = arith.constant 0 : i32
    %c0_i32_0 = arith.constant 0 : i32
    %c0_i32_1 = arith.constant 0 : i32
    return %c0_i32, %c0_i32_0 : i32, i32
  }
  func.func @transform_26(%arg0: i32) -> (i32, i32) {
    %c0_i32 = arith.constant 0 : i32
    %c0_i32_0 = arith.constant 0 : i32
    %c0_i32_1 = arith.constant 0 : i32
    return %c0_i32, %c0_i32_0 : i32, i32
  }
  func.func @transform_27(%arg0: i32) -> (i32, i32) {
    %c0_i32 = arith.constant 0 : i32
    %c0_i32_0 = arith.constant 0 : i32
    %c0_i32_1 = arith.constant 0 : i32
    return %c0_i32, %c0_i32_0 : i32, i32
  }
  func.func @transform_28(%arg0: i32) -> (i32, i32, i32) {
    %c0_i32 = arith.constant 0 : i32
    %c0_i32_0 = arith.constant 0 : i32
    %c0_i32_1 = arith.constant 0 : i32
    %c0_i32_2 = arith.constant 0 : i32
    return %c0_i32, %c0_i32_0, %c0_i32_1 : i32, i32, i32
  }
  func.func @transform_29(%arg0: i32) -> (i32, i32) {
    %c0_i32 = arith.constant 0 : i32
    %c0_i32_0 = arith.constant 0 : i32
    %c0_i32_1 = arith.constant 0 : i32
    return %c0_i32, %c0_i32_0 : i32, i32
  }
  func.func @transform_30(%arg0: i32) -> (i32, i32) {
    %c0_i32 = arith.constant 0 : i32
    %c0_i32_0 = arith.constant 0 : i32
    %c0_i32_1 = arith.constant 0 : i32
    return %c0_i32, %c0_i32_0 : i32, i32
  }
  func.func @transform_31(%arg0: i32) -> (i32, i32) {
    %c0_i32 = arith.constant 0 : i32
    %c0_i32_0 = arith.constant 0 : i32
    %c0_i32_1 = arith.constant 0 : i32
    return %c0_i32, %c0_i32_0 : i32, i32
  }
  func.func @transform_32(%arg0: i32) -> (i32, i32, i32) {
    %c0_i32 = arith.constant 0 : i32
    %c0_i32_0 = arith.constant 0 : i32
    %c0_i32_1 = arith.constant 0 : i32
    %c0_i32_2 = arith.constant 0 : i32
    return %c0_i32, %c0_i32_0, %c0_i32_1 : i32, i32, i32
  }
  func.func @transform_33(%arg0: i32) -> (i32, i32) {
    %c0_i32 = arith.constant 0 : i32
    %c0_i32_0 = arith.constant 0 : i32
    %c0_i32_1 = arith.constant 0 : i32
    return %c0_i32, %c0_i32_0 : i32, i32
  }
  func.func @transform_34(%arg0: i32) -> (i32, i32) {
    %c0_i32 = arith.constant 0 : i32
    %c0_i32_0 = arith.constant 0 : i32
    %c0_i32_1 = arith.constant 0 : i32
    return %c0_i32, %c0_i32_0 : i32, i32
  }
  func.func @transform_35(%arg0: i32) -> (i32, i32) {
    %c0_i32 = arith.constant 0 : i32
    %c0_i32_0 = arith.constant 0 : i32
    %c0_i32_1 = arith.constant 0 : i32
    return %c0_i32, %c0_i32_0 : i32, i32
  }
  func.func @transform_36(%arg0: i32) -> (i32, i32, i32) {
    %c0_i32 = arith.constant 0 : i32
    %c0_i32_0 = arith.constant 0 : i32
    %c0_i32_1 = arith.constant 0 : i32
    return %arg0, %c0_i32, %c0_i32_0 : i32, i32, i32
  }
}

</mosaic_0001>

<llo_original>
// kernel: _lambda_.1
$region0: #{_lambda_.1}
  #allocation0 [shape = 'u32[]', space=smem, size = 0x4, offset = 0x4, fixed_abs, tag = 'smem constant byte address 0x4 - core index']
  #allocation1 [shape = 'u32[144,128]{1,0:T(1,128)}', space=vmem, size = 0x12000, scoped, tag = 'internal scratch']
  %s0 = inlined_call_operand.smem [shape: u32[37], index: -1, kind: input, shape index: {}]
  %s1 = sld [smem:[%s0]]
  %s2 = scalar_lea.smem %s0, 1
  %s3 = sld [smem:[%s2]]
  %s4 = scalar_lea.smem %s0, 2
  %s5 = sld [smem:[%s4]]
  %s6 = scalar_lea.smem %s0, 3
  %s7 = sld [smem:[%s6]]
  %s8 = scalar_lea.smem %s0, 4
  %s9 = sld [smem:[%s8]]
  %s10 = scalar_lea.smem %s0, 5
  %s11 = sld [smem:[%s10]]
  %s12 = scalar_lea.smem %s0, 6
  %s13 = sld [smem:[%s12]]
  %s14 = scalar_lea.smem %s0, 7
  %s15 = sld [smem:[%s14]]
  %s16 = scalar_lea.smem %s0, 8
  %s17 = sld [smem:[%s16]]
  %s18 = scalar_lea.smem %s0, 9
  %s19 = sld [smem:[%s18]]
  %s20 = scalar_lea.smem %s0, 10
  %s21 = sld [smem:[%s20]]
  %s22 = scalar_lea.smem %s0, 11
  %s23 = sld [smem:[%s22]]
  %s24 = scalar_lea.smem %s0, 12
  %s25 = sld [smem:[%s24]]
  %s26 = scalar_lea.smem %s0, 13
  %s27 = sld [smem:[%s26]]
  %s28 = scalar_lea.smem %s0, 14
  %s29 = sld [smem:[%s28]]
  %s30 = scalar_lea.smem %s0, 15
  %s31 = sld [smem:[%s30]]
  %s32 = scalar_lea.smem %s0, 16
  %s33 = sld [smem:[%s32]]
  %s34 = scalar_lea.smem %s0, 17
  %s35 = sld [smem:[%s34]]
  %s36 = scalar_lea.smem %s0, 18
  %s37 = sld [smem:[%s36]]
  %s38 = scalar_lea.smem %s0, 19
  %s39 = sld [smem:[%s38]]
  %s40 = scalar_lea.smem %s0, 20
  %s41 = sld [smem:[%s40]]
  %s42 = scalar_lea.smem %s0, 21
  %s43 = sld [smem:[%s42]]
  %s44 = scalar_lea.smem %s0, 22
  %s45 = sld [smem:[%s44]]
  %s46 = scalar_lea.smem %s0, 23
  %s47 = sld [smem:[%s46]]
  %s48 = scalar_lea.smem %s0, 24
  %s49 = sld [smem:[%s48]]
  %s50 = scalar_lea.smem %s0, 25
  %s51 = sld [smem:[%s50]]
  %s52 = scalar_lea.smem %s0, 26
  %s53 = sld [smem:[%s52]]
  %s54 = scalar_lea.smem %s0, 27
  %s55 = sld [smem:[%s54]]
  %s56 = scalar_lea.smem %s0, 28
  %s57 = sld [smem:[%s56]]
  %s58 = scalar_lea.smem %s0, 29
  %s59 = sld [smem:[%s58]]
  %s60 = scalar_lea.smem %s0, 30
  %s61 = sld [smem:[%s60]]
  %s62 = scalar_lea.smem %s0, 31
  %s63 = sld [smem:[%s62]]
  %s64 = scalar_lea.smem %s0, 32
  %s65 = sld [smem:[%s64]]
  %s66 = scalar_lea.smem %s0, 33
  %s67 = sld [smem:[%s66]]
  %s68 = scalar_lea.smem %s0, 34
  %s69 = sld [smem:[%s68]]
  %s70 = scalar_lea.smem %s0, 35
  %s71 = sld [smem:[%s70]]
  %s72 = scalar_lea.smem %s0, 36
  %s73 = sld [smem:[%s72]]
  %s74 = sld [smem:[#allocation0]]
  $region245: #{_lambda_.1} parent=0
    _
  %s76 = ssub.s32 1, %s74
  %s77 = scalar_select 0, %s76, %s74
  $region1: #{_lambda_.1} parent=0
    #allocation2 [shape = 'u8[512]{0}', space=smem, size = 0x200, scoped, tag = 'input window, operand 1, single buffered']
    #allocation3 [shape = 's32[2]{0}', space=sflag, size = 0x8, scoped, tag = 'scoped memory for _lambda_.1']
    #allocation4 [shape = 's32[2]{0}', space=sflag, size = 0x8, scoped, tag = 'scoped memory for _lambda_.1']
    #allocation5 [shape = 'u8[81920]{0}', space=vmem, size = 0x14000, scoped, tag = 'input window, operand 2, single buffered']
    #allocation6 [shape = 'u8[512]{0}', space=vmem, size = 0x400, scoped, tag = 'input window, operand 4, single buffered']
    #allocation7 [shape = 's32[1]{0}', space=sflag, size = 0x4, scoped, tag = 'scoped memory for _lambda_.1']
    #allocation8 [shape = 'u8[512]{0}', space=vmem, size = 0x400, scoped, tag = 'input window, operand 5, single buffered']
    #allocation9 [shape = 'u8[40960]{0}', space=vmem, size = 0xa000, scoped, tag = 'input window, operand 6, single buffered']
    #allocation10 [shape = 's32[1]{0}', space=sflag, size = 0x4, scoped, tag = 'scoped memory for _lambda_.1']
    #allocation11 [shape = 'u8[163840]{0}', space=vmem, size = 0x28000, scoped, tag = 'input window, operand 7, single buffered']
    #allocation12 [shape = 'u8[512]{0}', space=vmem, size = 0x400, scoped, tag = 'input window, operand 8, single buffered']
    #allocation13 [shape = 's32[1]{0}', space=sflag, size = 0x4, scoped, tag = 'scoped memory for _lambda_.1']
    #allocation14 [shape = 'u8[512]{0}', space=vmem, size = 0x400, scoped, tag = 'input window, operand 9, single buffered']
    #allocation15 [shape = 'u8[512]{0}', space=vmem, size = 0x400, scoped, tag = 'input window, operand 11, single buffered']
    #allocation16 [shape = 's32[1]{0}', space=sflag, size = 0x4, scoped, tag = 'scoped memory for _lambda_.1']
    #allocation17 [shape = 'u8[512]{0}', space=vmem, size = 0x400, scoped, tag = 'input window, operand 12, single buffered']
    #allocation18 [shape = 'u8[512]{0}', space=vmem, size = 0x400, scoped, tag = 'input window, operand 14, single buffered']
    #allocation19 [shape = 's32[1]{0}', space=sflag, size = 0x4, scoped, tag = 'scoped memory for _lambda_.1']
    #allocation20 [shape = 'u8[512]{0}', space=vmem, size = 0x400, scoped, tag = 'input window, operand 15, single buffered']
    #allocation21 [shape = 'u8[512]{0}', space=vmem, size = 0x400, scoped, tag = 'input window, operand 17, single buffered']
    #allocation22 [shape = 's32[1]{0}', space=sflag, size = 0x4, scoped, tag = 'scoped memory for _lambda_.1']
    #allocation23 [shape = 'u8[512]{0}', space=vmem, size = 0x400, scoped, tag = 'input window, operand 18, single buffered']
    #allocation24 [shape = 'u8[40960]{0}', space=vmem, size = 0xa000, scoped, tag = 'input window, operand 19, single buffered']
    #allocation25 [shape = 's32[1]{0}', space=sflag, size = 0x4, scoped, tag = 'scoped memory for _lambda_.1']
    #allocation26 [shape = 'u8[512]{0}', space=vmem, size = 0x400, scoped, tag = 'input window, operand 20, single buffered']
    #allocation27 [shape = 'u8[81920]{0}', space=vmem, size = 0x14000, scoped, tag = 'input window, operand 28, single buffered']
    #allocation28 [shape = 's32[1]{0}', space=sflag, size = 0x4, scoped, tag = 'scoped memory for _lambda_.1']
    %78 = vsyncpa [#allocation4], 0
    %79 = vsyncpa [#allocation3], 0
    %80 = vsyncpa [#allocation7], 0
    %81 = vsyncpa [#allocation10], 0
    %82 = vsyncpa [#allocation13], 0
    %83 = vsyncpa [#allocation16], 0
    %84 = vsyncpa [#allocation19], 0
    %85 = vsyncpa [#allocation22], 0
    %86 = vsyncpa [#allocation25], 0
    %87 = vsyncpa [#allocation28], 0
    loop: start=0, step=1, limit=4
    $region2: #{_lambda_.1} parent=1 // loop_pre_header
      _
    $region3: #{_lambda_.1} parent=1 // loop_header
      %s89 = sphi 0, %s93
      %p90 = scmp.ge.s32.totalorder %s89, 4
      %s99 = sphi 0, %s101
      %s102 = sphi 0, %s99
      %s103 = sphi 0, %s102
      %s119 = sphi 0, %s103
      %s123 = sphi 0, %s123
      %s125 = sphi 0, %s123
      %s126 = sphi 0, %s125
      %s140 = sphi 0, %s126
      %s144 = sphi 0, %s144
      %s146 = sphi 0, %s144
      %s147 = sphi 0, %s146
      %s161 = sphi 0, %s147
      %s165 = sphi 0, %s165
      %s167 = sphi 0, %s165
      %s168 = sphi 0, %s167
      %s182 = sphi 0, %s168
      %s186 = sphi 0, %s186
      %s188 = sphi 0, %s186
      %s189 = sphi 0, %s188
      %s203 = sphi 0, %s189
      %s207 = sphi 0, %s207
      %s209 = sphi 0, %s207
      %s210 = sphi 0, %s209
      %s224 = sphi 0, %s210
      %s228 = sphi 0, %s228
      %s230 = sphi 0, %s228
      %s231 = sphi 0, %s230
      %s245 = sphi 0, %s231
      %s249 = sphi 0, %s249
      %s251 = sphi 0, %s249
      %s252 = sphi 0, %s251
      %s266 = sphi 0, %s252
      %s270 = sphi 0, %s270
      %s272 = sphi 0, %s270
      %s273 = sphi 0, %s272
      %s287 = sphi 0, %s273
      %s291 = sphi 0, %s291
      %s293 = sphi 0, %s291
      %s294 = sphi 0, %s293
      %s308 = sphi 0, %s294
      %s312 = sphi 0, %s312
      %s314 = sphi 0, %s312
      %s315 = sphi 0, %s314
      %s329 = sphi 0, %s315
      %s333 = sphi 0, %s333
      %s335 = sphi 0, %s333
      %s336 = sphi 0, %s335
      %s350 = sphi 0, %s336
      %s354 = sphi 0, %s354
      %s356 = sphi 0, %s354
      %s357 = sphi 0, %s356
      %s371 = sphi 0, %s357
      %s375 = sphi 0, %s375
      %s377 = sphi 0, %s375
      %s378 = sphi 0, %s377
      %s392 = sphi 0, %s378
      %s396 = sphi 0, %s396
      %s398 = sphi 0, %s396
      %s399 = sphi 0, %s398
      %s413 = sphi 0, %s399
      %s417 = sphi 0, %s417
      %s419 = sphi 0, %s417
      %s420 = sphi 0, %s419
      %s434 = sphi 0, %s420
      %s438 = sphi 0, %s438
      %s440 = sphi 0, %s438
      %s441 = sphi 0, %s440
      %s455 = sphi 0, %s441
      %s459 = sphi 0, %s459
      %s461 = sphi 0, %s459
      %s462 = sphi 0, %s461
      %s476 = sphi 0, %s462
      %s480 = sphi 0, %s480
      %s482 = sphi 0, %s480
      %s483 = sphi 0, %s482
      %s497 = sphi 0, %s483
      %s501 = sphi 0, %s501
      %s503 = sphi 0, %s501
      %s504 = sphi 0, %s503
      %s518 = sphi 0, %s504
      %s522 = sphi 0, %s522
      %s524 = sphi 0, %s522
      %s525 = sphi 0, %s524
      %s539 = sphi 0, %s525
      %s543 = sphi 0, %s543
      %s545 = sphi 0, %s543
      %s546 = sphi 0, %s545
      %s560 = sphi 0, %s546
      %s564 = sphi 0, %s564
      %s566 = sphi 0, %s564
      %s567 = sphi 0, %s566
      %s581 = sphi 0, %s567
      %s585 = sphi 0, %s585
      %s587 = sphi 0, %s585
      %s588 = sphi 0, %s587
      %s602 = sphi 0, %s588
      %s606 = sphi 0, %s606
      %s608 = sphi 0, %s606
      %s609 = sphi 0, %s608
      %s623 = sphi 0, %s609
      %s627 = sphi 0, %s627
      %s629 = sphi 0, %s627
      %s630 = sphi 0, %s629
      %s644 = sphi 0, %s630
      %s648 = sphi 0, %s648
      %s650 = sphi 0, %s648
      %s651 = sphi 0, %s650
      %s665 = sphi 0, %s651
      %s669 = sphi 0, %s669
      %s671 = sphi 0, %s669
      %s672 = sphi 0, %s671
      %s686 = sphi 0, %s672
      %s690 = sphi 0, %s690
      %s692 = sphi 0, %s690
      %s693 = sphi 0, %s692
      %s707 = sphi 0, %s693
      %s711 = sphi 0, %s711
      %s713 = sphi 0, %s711
      %s714 = sphi 0, %s713
      %s728 = sphi 0, %s714
      %s732 = sphi 0, %s732
      %s734 = sphi 0, %s732
      %s735 = sphi 0, %s734
      %s749 = sphi 0, %s735
      %s753 = sphi 0, %s753
      %s755 = sphi 0, %s753
      %s756 = sphi 0, %s755
      %s770 = sphi 0, %s756
      %s774 = sphi 0, %s774
      %s776 = sphi 0, %s774
      %s777 = sphi 0, %s776
      %s791 = sphi 0, %s777
      %s795 = sphi 0, %s795
      %s797 = sphi 0, %s795
      %s798 = sphi 0, %s797
      %s812 = sphi 0, %s798
      %s816 = sphi 0, %s816
      %s818 = sphi 0, %s816
      %s819 = sphi 0, %s818
      %s833 = sphi 0, %s819
      %s837 = sphi 0, %s837
      %s839 = sphi 0, %s837
      %s840 = sphi 0, %s839
      %s854 = sphi 0, %s840
      %s860 = sphi 0, %s862
      %s863 = sphi 0, %s860
      %s864 = sphi 0, %s863
      %s880 = sphi 0, %s864
    $region4: #{_lambda_.1} parent=1 // loop_header_branch
      %92 = sbr.rel (%p90) target = $region8
    $region5: #{_lambda_.1} parent=1 // loop_body
      %s94 = ssub.s32 %s89, 1
      %s95 = ssub.s32 %s89, 2
      %s96 = sadd.s32 %s89, 1
      %s97 = ssub.s32 %s89, %s96
      %p98 = scmp.eq.s32.totalorder %s97, 0
      %s100 = sadd.s32 %s99, 1
      %s101 = scalar_select %p98, %s99, %s100
      %p104 = pneg %p98
      %p105 = scmp.eq.s32.totalorder %s89, 1
      %p106 = por %p104, %p105
      %p107 = scmp.ne.s32.totalorder %s99, %s102
      %p108 = scmp.eq.s32.totalorder %s89, 0
      %p109 = por %p107, %p108
      %p110 = scmp.ne.s32.totalorder %s99, %s102
      %p111 = scmp.eq.s32.totalorder %s94, 1
      %p112 = por %p110, %p111
      %p113 = scmp.ne.s32.totalorder %s102, %s103
      %p114 = scmp.eq.s32.totalorder %s94, 0
      %p115 = por %p113, %p114
      %p116 = scmp.ne.s32.totalorder %s102, %s103
      %p117 = scmp.eq.s32.totalorder %s95, 1
      %p118 = por %p116, %p117
      %p120 = scmp.ne.s32.totalorder %s103, %s119
      %p121 = scmp.eq.s32.totalorder %s95, 0
      %p122 = por %p120, %p121
      %s124 = sadd.s32 %s123, 1
      %p127 = scmp.eq.s32.totalorder %s89, 1
      %p128 = scmp.ne.s32.totalorder %s123, %s125
      %p129 = scmp.eq.s32.totalorder %s89, 0
      %p130 = por %p128, %p129
      %p131 = scmp.ne.s32.totalorder %s123, %s125
      %p132 = scmp.eq.s32.totalorder %s94, 1
      %p133 = por %p131, %p132
      %p134 = scmp.ne.s32.totalorder %s125, %s126
      %p135 = scmp.eq.s32.totalorder %s94, 0
      %p136 = por %p134, %p135
      %p137 = scmp.ne.s32.totalorder %s125, %s126
      %p138 = scmp.eq.s32.totalorder %s95, 1
      %p139 = por %p137, %p138
      %p141 = scmp.ne.s32.totalorder %s126, %s140
      %p142 = scmp.eq.s32.totalorder %s95, 0
      %p143 = por %p141, %p142
      %s145 = sadd.s32 %s144, 1
      %p148 = scmp.eq.s32.totalorder %s89, 1
      %p149 = scmp.ne.s32.totalorder %s144, %s146
      %p150 = scmp.eq.s32.totalorder %s89, 0
      %p151 = por %p149, %p150
      %p152 = scmp.ne.s32.totalorder %s144, %s146
      %p153 = scmp.eq.s32.totalorder %s94, 1
      %p154 = por %p152, %p153
      %p155 = scmp.ne.s32.totalorder %s146, %s147
      %p156 = scmp.eq.s32.totalorder %s94, 0
      %p157 = por %p155, %p156
      %p158 = scmp.ne.s32.totalorder %s146, %s147
      %p159 = scmp.eq.s32.totalorder %s95, 1
      %p160 = por %p158, %p159
      %p162 = scmp.ne.s32.totalorder %s147, %s161
      %p163 = scmp.eq.s32.totalorder %s95, 0
      %p164 = por %p162, %p163
      %s166 = sadd.s32 %s165, 1
      %p169 = scmp.eq.s32.totalorder %s89, 1
      %p170 = scmp.ne.s32.totalorder %s165, %s167
      %p171 = scmp.eq.s32.totalorder %s89, 0
      %p172 = por %p170, %p171
      %p173 = scmp.ne.s32.totalorder %s165, %s167
      %p174 = scmp.eq.s32.totalorder %s94, 1
      %p175 = por %p173, %p174
      %p176 = scmp.ne.s32.totalorder %s167, %s168
      %p177 = scmp.eq.s32.totalorder %s94, 0
      %p178 = por %p176, %p177
      %p179 = scmp.ne.s32.totalorder %s167, %s168
      %p180 = scmp.eq.s32.totalorder %s95, 1
      %p181 = por %p179, %p180
      %p183 = scmp.ne.s32.totalorder %s168, %s182
      %p184 = scmp.eq.s32.totalorder %s95, 0
      %p185 = por %p183, %p184
      %s187 = sadd.s32 %s186, 1
      %p190 = scmp.eq.s32.totalorder %s89, 1
      %p191 = scmp.ne.s32.totalorder %s186, %s188
      %p192 = scmp.eq.s32.totalorder %s89, 0
      %p193 = por %p191, %p192
      %p194 = scmp.ne.s32.totalorder %s186, %s188
      %p195 = scmp.eq.s32.totalorder %s94, 1
      %p196 = por %p194, %p195
      %p197 = scmp.ne.s32.totalorder %s188, %s189
      %p198 = scmp.eq.s32.totalorder %s94, 0
      %p199 = por %p197, %p198
      %p200 = scmp.ne.s32.totalorder %s188, %s189
      %p201 = scmp.eq.s32.totalorder %s95, 1
      %p202 = por %p200, %p201
      %p204 = scmp.ne.s32.totalorder %s189, %s203
      %p205 = scmp.eq.s32.totalorder %s95, 0
      %p206 = por %p204, %p205
      %s208 = sadd.s32 %s207, 1
      %p211 = scmp.eq.s32.totalorder %s89, 1
      %p212 = scmp.ne.s32.totalorder %s207, %s209
      %p213 = scmp.eq.s32.totalorder %s89, 0
      %p214 = por %p212, %p213
      %p215 = scmp.ne.s32.totalorder %s207, %s209
      %p216 = scmp.eq.s32.totalorder %s94, 1
      %p217 = por %p215, %p216
      %p218 = scmp.ne.s32.totalorder %s209, %s210
      %p219 = scmp.eq.s32.totalorder %s94, 0
      %p220 = por %p218, %p219
      %p221 = scmp.ne.s32.totalorder %s209, %s210
      %p222 = scmp.eq.s32.totalorder %s95, 1
      %p223 = por %p221, %p222
      %p225 = scmp.ne.s32.totalorder %s210, %s224
      %p226 = scmp.eq.s32.totalorder %s95, 0
      %p227 = por %p225, %p226
      %s229 = sadd.s32 %s228, 1
      %p232 = scmp.eq.s32.totalorder %s89, 1
      %p233 = scmp.ne.s32.totalorder %s228, %s230
      %p234 = scmp.eq.s32.totalorder %s89, 0
      %p235 = por %p233, %p234
      %p236 = scmp.ne.s32.totalorder %s228, %s230
      %p237 = scmp.eq.s32.totalorder %s94, 1
      %p238 = por %p236, %p237
      %p239 = scmp.ne.s32.totalorder %s230, %s231
      %p240 = scmp.eq.s32.totalorder %s94, 0
      %p241 = por %p239, %p240
      %p242 = scmp.ne.s32.totalorder %s230, %s231
      %p243 = scmp.eq.s32.totalorder %s95, 1
      %p244 = por %p242, %p243
      %p246 = scmp.ne.s32.totalorder %s231, %s245
      %p247 = scmp.eq.s32.totalorder %s95, 0
      %p248 = por %p246, %p247
      %s250 = sadd.s32 %s249, 1
      %p253 = scmp.eq.s32.totalorder %s89, 1
      %p254 = scmp.ne.s32.totalorder %s249, %s251
      %p255 = scmp.eq.s32.totalorder %s89, 0
      %p256 = por %p254, %p255
      %p257 = scmp.ne.s32.totalorder %s249, %s251
      %p258 = scmp.eq.s32.totalorder %s94, 1
      %p259 = por %p257, %p258
      %p260 = scmp.ne.s32.totalorder %s251, %s252
      %p261 = scmp.eq.s32.totalorder %s94, 0
      %p262 = por %p260, %p261
      %p263 = scmp.ne.s32.totalorder %s251, %s252
      %p264 = scmp.eq.s32.totalorder %s95, 1
      %p265 = por %p263, %p264
      %p267 = scmp.ne.s32.totalorder %s252, %s266
      %p268 = scmp.eq.s32.totalorder %s95, 0
      %p269 = por %p267, %p268
      %s271 = sadd.s32 %s270, 1
      %p274 = scmp.eq.s32.totalorder %s89, 1
      %p275 = scmp.ne.s32.totalorder %s270, %s272
      %p276 = scmp.eq.s32.totalorder %s89, 0
      %p277 = por %p275, %p276
      %p278 = scmp.ne.s32.totalorder %s270, %s272
      %p279 = scmp.eq.s32.totalorder %s94, 1
      %p280 = por %p278, %p279
      %p281 = scmp.ne.s32.totalorder %s272, %s273
      %p282 = scmp.eq.s32.totalorder %s94, 0
      %p283 = por %p281, %p282
      %p284 = scmp.ne.s32.totalorder %s272, %s273
      %p285 = scmp.eq.s32.totalorder %s95, 1
      %p286 = por %p284, %p285
      %p288 = scmp.ne.s32.totalorder %s273, %s287
      %p289 = scmp.eq.s32.totalorder %s95, 0
      %p290 = por %p288, %p289
      %s292 = sadd.s32 %s291, 1
      %p295 = scmp.eq.s32.totalorder %s89, 1
      %p296 = scmp.ne.s32.totalorder %s291, %s293
      %p297 = scmp.eq.s32.totalorder %s89, 0
      %p298 = por %p296, %p297
      %p299 = scmp.ne.s32.totalorder %s291, %s293
      %p300 = scmp.eq.s32.totalorder %s94, 1
      %p301 = por %p299, %p300
      %p302 = scmp.ne.s32.totalorder %s293, %s294
      %p303 = scmp.eq.s32.totalorder %s94, 0
      %p304 = por %p302, %p303
      %p305 = scmp.ne.s32.totalorder %s293, %s294
      %p306 = scmp.eq.s32.totalorder %s95, 1
      %p307 = por %p305, %p306
      %p309 = scmp.ne.s32.totalorder %s294, %s308
      %p310 = scmp.eq.s32.totalorder %s95, 0
      %p311 = por %p309, %p310
      %s313 = sadd.s32 %s312, 1
      %p316 = scmp.eq.s32.totalorder %s89, 1
      %p317 = scmp.ne.s32.totalorder %s312, %s314
      %p318 = scmp.eq.s32.totalorder %s89, 0
      %p319 = por %p317, %p318
      %p320 = scmp.ne.s32.totalorder %s312, %s314
      %p321 = scmp.eq.s32.totalorder %s94, 1
      %p322 = por %p320, %p321
      %p323 = scmp.ne.s32.totalorder %s314, %s315
      %p324 = scmp.eq.s32.totalorder %s94, 0
      %p325 = por %p323, %p324
      %p326 = scmp.ne.s32.totalorder %s314, %s315
      %p327 = scmp.eq.s32.totalorder %s95, 1
      %p328 = por %p326, %p327
      %p330 = scmp.ne.s32.totalorder %s315, %s329
      %p331 = scmp.eq.s32.totalorder %s95, 0
      %p332 = por %p330, %p331
      %s334 = sadd.s32 %s333, 1
      %p337 = scmp.eq.s32.totalorder %s89, 1
      %p338 = scmp.ne.s32.totalorder %s333, %s335
      %p339 = scmp.eq.s32.totalorder %s89, 0
      %p340 = por %p338, %p339
      %p341 = scmp.ne.s32.totalorder %s333, %s335
      %p342 = scmp.eq.s32.totalorder %s94, 1
      %p343 = por %p341, %p342
      %p344 = scmp.ne.s32.totalorder %s335, %s336
      %p345 = scmp.eq.s32.totalorder %s94, 0
      %p346 = por %p344, %p345
      %p347 = scmp.ne.s32.totalorder %s335, %s336
      %p348 = scmp.eq.s32.totalorder %s95, 1
      %p349 = por %p347, %p348
      %p351 = scmp.ne.s32.totalorder %s336, %s350
      %p352 = scmp.eq.s32.totalorder %s95, 0
      %p353 = por %p351, %p352
      %s355 = sadd.s32 %s354, 1
      %p358 = scmp.eq.s32.totalorder %s89, 1
      %p359 = scmp.ne.s32.totalorder %s354, %s356
      %p360 = scmp.eq.s32.totalorder %s89, 0
      %p361 = por %p359, %p360
      %p362 = scmp.ne.s32.totalorder %s354, %s356
      %p363 = scmp.eq.s32.totalorder %s94, 1
      %p364 = por %p362, %p363
      %p365 = scmp.ne.s32.totalorder %s356, %s357
      %p366 = scmp.eq.s32.totalorder %s94, 0
      %p367 = por %p365, %p366
      %p368 = scmp.ne.s32.totalorder %s356, %s357
      %p369 = scmp.eq.s32.totalorder %s95, 1
      %p370 = por %p368, %p369
      %p372 = scmp.ne.s32.totalorder %s357, %s371
      %p373 = scmp.eq.s32.totalorder %s95, 0
      %p374 = por %p372, %p373
      %s376 = sadd.s32 %s375, 1
      %p379 = scmp.eq.s32.totalorder %s89, 1
      %p380 = scmp.ne.s32.totalorder %s375, %s377
      %p381 = scmp.eq.s32.totalorder %s89, 0
      %p382 = por %p380, %p381
      %p383 = scmp.ne.s32.totalorder %s375, %s377
      %p384 = scmp.eq.s32.totalorder %s94, 1
      %p385 = por %p383, %p384
      %p386 = scmp.ne.s32.totalorder %s377, %s378
      %p387 = scmp.eq.s32.totalorder %s94, 0
      %p388 = por %p386, %p387
      %p389 = scmp.ne.s32.totalorder %s377, %s378
      %p390 = scmp.eq.s32.totalorder %s95, 1
      %p391 = por %p389, %p390
      %p393 = scmp.ne.s32.totalorder %s378, %s392
      %p394 = scmp.eq.s32.totalorder %s95, 0
      %p395 = por %p393, %p394
      %s397 = sadd.s32 %s396, 1
      %p400 = scmp.eq.s32.totalorder %s89, 1
      %p401 = scmp.ne.s32.totalorder %s396, %s398
      %p402 = scmp.eq.s32.totalorder %s89, 0
      %p403 = por %p401, %p402
      %p404 = scmp.ne.s32.totalorder %s396, %s398
      %p405 = scmp.eq.s32.totalorder %s94, 1
      %p406 = por %p404, %p405
      %p407 = scmp.ne.s32.totalorder %s398, %s399
      %p408 = scmp.eq.s32.totalorder %s94, 0
      %p409 = por %p407, %p408
      %p410 = scmp.ne.s32.totalorder %s398, %s399
      %p411 = scmp.eq.s32.totalorder %s95, 1
      %p412 = por %p410, %p411
      %p414 = scmp.ne.s32.totalorder %s399, %s413
      %p415 = scmp.eq.s32.totalorder %s95, 0
      %p416 = por %p414, %p415
      %s418 = sadd.s32 %s417, 1
      %p421 = scmp.eq.s32.totalorder %s89, 1
      %p422 = scmp.ne.s32.totalorder %s417, %s419
      %p423 = scmp.eq.s32.totalorder %s89, 0
      %p424 = por %p422, %p423
      %p425 = scmp.ne.s32.totalorder %s417, %s419
      %p426 = scmp.eq.s32.totalorder %s94, 1
      %p427 = por %p425, %p426
      %p428 = scmp.ne.s32.totalorder %s419, %s420
      %p429 = scmp.eq.s32.totalorder %s94, 0
      %p430 = por %p428, %p429
      %p431 = scmp.ne.s32.totalorder %s419, %s420
      %p432 = scmp.eq.s32.totalorder %s95, 1
      %p433 = por %p431, %p432
      %p435 = scmp.ne.s32.totalorder %s420, %s434
      %p436 = scmp.eq.s32.totalorder %s95, 0
      %p437 = por %p435, %p436
      %s439 = sadd.s32 %s438, 1
      %p442 = scmp.eq.s32.totalorder %s89, 1
      %p443 = scmp.ne.s32.totalorder %s438, %s440
      %p444 = scmp.eq.s32.totalorder %s89, 0
      %p445 = por %p443, %p444
      %p446 = scmp.ne.s32.totalorder %s438, %s440
      %p447 = scmp.eq.s32.totalorder %s94, 1
      %p448 = por %p446, %p447
      %p449 = scmp.ne.s32.totalorder %s440, %s441
      %p450 = scmp.eq.s32.totalorder %s94, 0
      %p451 = por %p449, %p450
      %p452 = scmp.ne.s32.totalorder %s440, %s441
      %p453 = scmp.eq.s32.totalorder %s95, 1
      %p454 = por %p452, %p453
      %p456 = scmp.ne.s32.totalorder %s441, %s455
      %p457 = scmp.eq.s32.totalorder %s95, 0
      %p458 = por %p456, %p457
      %s460 = sadd.s32 %s459, 1
      %p463 = scmp.eq.s32.totalorder %s89, 1
      %p464 = scmp.ne.s32.totalorder %s459, %s461
      %p465 = scmp.eq.s32.totalorder %s89, 0
      %p466 = por %p464, %p465
      %p467 = scmp.ne.s32.totalorder %s459, %s461
      %p468 = scmp.eq.s32.totalorder %s94, 1
      %p469 = por %p467, %p468
      %p470 = scmp.ne.s32.totalorder %s461, %s462
      %p471 = scmp.eq.s32.totalorder %s94, 0
      %p472 = por %p470, %p471
      %p473 = scmp.ne.s32.totalorder %s461, %s462
      %p474 = scmp.eq.s32.totalorder %s95, 1
      %p475 = por %p473, %p474
      %p477 = scmp.ne.s32.totalorder %s462, %s476
      %p478 = scmp.eq.s32.totalorder %s95, 0
      %p479 = por %p477, %p478
      %s481 = sadd.s32 %s480, 1
      %p484 = scmp.eq.s32.totalorder %s89, 1
      %p485 = scmp.ne.s32.totalorder %s480, %s482
      %p486 = scmp.eq.s32.totalorder %s89, 0
      %p487 = por %p485, %p486
      %p488 = scmp.ne.s32.totalorder %s480, %s482
      %p489 = scmp.eq.s32.totalorder %s94, 1
      %p490 = por %p488, %p489
      %p491 = scmp.ne.s32.totalorder %s482, %s483
      %p492 = scmp.eq.s32.totalorder %s94, 0
      %p493 = por %p491, %p492
      %p494 = scmp.ne.s32.totalorder %s482, %s483
      %p495 = scmp.eq.s32.totalorder %s95, 1
      %p496 = por %p494, %p495
      %p498 = scmp.ne.s32.totalorder %s483, %s497
      %p499 = scmp.eq.s32.totalorder %s95, 0
      %p500 = por %p498, %p499
      %s502 = sadd.s32 %s501, 1
      %p505 = scmp.eq.s32.totalorder %s89, 1
      %p506 = scmp.ne.s32.totalorder %s501, %s503
      %p507 = scmp.eq.s32.totalorder %s89, 0
      %p508 = por %p506, %p507
      %p509 = scmp.ne.s32.totalorder %s501, %s503
      %p510 = scmp.eq.s32.totalorder %s94, 1
      %p511 = por %p509, %p510
      %p512 = scmp.ne.s32.totalorder %s503, %s504
      %p513 = scmp.eq.s32.totalorder %s94, 0
      %p514 = por %p512, %p513
      %p515 = scmp.ne.s32.totalorder %s503, %s504
      %p516 = scmp.eq.s32.totalorder %s95, 1
      %p517 = por %p515, %p516
      %p519 = scmp.ne.s32.totalorder %s504, %s518
      %p520 = scmp.eq.s32.totalorder %s95, 0
      %p521 = por %p519, %p520
      %s523 = sadd.s32 %s522, 1
      %p526 = scmp.eq.s32.totalorder %s89, 1
      %p527 = scmp.ne.s32.totalorder %s522, %s524
      %p528 = scmp.eq.s32.totalorder %s89, 0
      %p529 = por %p527, %p528
      %p530 = scmp.ne.s32.totalorder %s522, %s524
      %p531 = scmp.eq.s32.totalorder %s94, 1
      %p532 = por %p530, %p531
      %p533 = scmp.ne.s32.totalorder %s524, %s525
      %p534 = scmp.eq.s32.totalorder %s94, 0
      %p535 = por %p533, %p534
      %p536 = scmp.ne.s32.totalorder %s524, %s525
      %p537 = scmp.eq.s32.totalorder %s95, 1
      %p538 = por %p536, %p537
      %p540 = scmp.ne.s32.totalorder %s525, %s539
      %p541 = scmp.eq.s32.totalorder %s95, 0
      %p542 = por %p540, %p541
      %s544 = sadd.s32 %s543, 1
      %p547 = scmp.eq.s32.totalorder %s89, 1
      %p548 = scmp.ne.s32.totalorder %s543, %s545
      %p549 = scmp.eq.s32.totalorder %s89, 0
      %p550 = por %p548, %p549
      %p551 = scmp.ne.s32.totalorder %s543, %s545
      %p552 = scmp.eq.s32.totalorder %s94, 1
      %p553 = por %p551, %p552
      %p554 = scmp.ne.s32.totalorder %s545, %s546
      %p555 = scmp.eq.s32.totalorder %s94, 0
      %p556 = por %p554, %p555
      %p557 = scmp.ne.s32.totalorder %s545, %s546
      %p558 = scmp.eq.s32.totalorder %s95, 1
      %p559 = por %p557, %p558
      %p561 = scmp.ne.s32.totalorder %s546, %s560
      %p562 = scmp.eq.s32.totalorder %s95, 0
      %p563 = por %p561, %p562
      %s565 = sadd.s32 %s564, 1
      %p568 = scmp.eq.s32.totalorder %s89, 1
      %p569 = scmp.ne.s32.totalorder %s564, %s566
      %p570 = scmp.eq.s32.totalorder %s89, 0
      %p571 = por %p569, %p570
      %p572 = scmp.ne.s32.totalorder %s564, %s566
      %p573 = scmp.eq.s32.totalorder %s94, 1
      %p574 = por %p572, %p573
      %p575 = scmp.ne.s32.totalorder %s566, %s567
      %p576 = scmp.eq.s32.totalorder %s94, 0
      %p577 = por %p575, %p576
      %p578 = scmp.ne.s32.totalorder %s566, %s567
      %p579 = scmp.eq.s32.totalorder %s95, 1
      %p580 = por %p578, %p579
      %p582 = scmp.ne.s32.totalorder %s567, %s581
      %p583 = scmp.eq.s32.totalorder %s95, 0
      %p584 = por %p582, %p583
      %s586 = sadd.s32 %s585, 1
      %p589 = scmp.eq.s32.totalorder %s89, 1
      %p590 = scmp.ne.s32.totalorder %s585, %s587
      %p591 = scmp.eq.s32.totalorder %s89, 0
      %p592 = por %p590, %p591
      %p593 = scmp.ne.s32.totalorder %s585, %s587
      %p594 = scmp.eq.s32.totalorder %s94, 1
      %p595 = por %p593, %p594
      %p596 = scmp.ne.s32.totalorder %s587, %s588
      %p597 = scmp.eq.s32.totalorder %s94, 0
      %p598 = por %p596, %p597
      %p599 = scmp.ne.s32.totalorder %s587, %s588
      %p600 = scmp.eq.s32.totalorder %s95, 1
      %p601 = por %p599, %p600
      %p603 = scmp.ne.s32.totalorder %s588, %s602
      %p604 = scmp.eq.s32.totalorder %s95, 0
      %p605 = por %p603, %p604
      %s607 = sadd.s32 %s606, 1
      %p610 = scmp.eq.s32.totalorder %s89, 1
      %p611 = scmp.ne.s32.totalorder %s606, %s608
      %p612 = scmp.eq.s32.totalorder %s89, 0
      %p613 = por %p611, %p612
      %p614 = scmp.ne.s32.totalorder %s606, %s608
      %p615 = scmp.eq.s32.totalorder %s94, 1
      %p616 = por %p614, %p615
      %p617 = scmp.ne.s32.totalorder %s608, %s609
      %p618 = scmp.eq.s32.totalorder %s94, 0
      %p619 = por %p617, %p618
      %p620 = scmp.ne.s32.totalorder %s608, %s609
      %p621 = scmp.eq.s32.totalorder %s95, 1
      %p622 = por %p620, %p621
      %p624 = scmp.ne.s32.totalorder %s609, %s623
      %p625 = scmp.eq.s32.totalorder %s95, 0
      %p626 = por %p624, %p625
      %s628 = sadd.s32 %s627, 1
      %p631 = scmp.eq.s32.totalorder %s89, 1
      %p632 = scmp.ne.s32.totalorder %s627, %s629
      %p633 = scmp.eq.s32.totalorder %s89, 0
      %p634 = por %p632, %p633
      %p635 = scmp.ne.s32.totalorder %s627, %s629
      %p636 = scmp.eq.s32.totalorder %s94, 1
      %p637 = por %p635, %p636
      %p638 = scmp.ne.s32.totalorder %s629, %s630
      %p639 = scmp.eq.s32.totalorder %s94, 0
      %p640 = por %p638, %p639
      %p641 = scmp.ne.s32.totalorder %s629, %s630
      %p642 = scmp.eq.s32.totalorder %s95, 1
      %p643 = por %p641, %p642
      %p645 = scmp.ne.s32.totalorder %s630, %s644
      %p646 = scmp.eq.s32.totalorder %s95, 0
      %p647 = por %p645, %p646
      %s649 = sadd.s32 %s648, 1
      %p652 = scmp.eq.s32.totalorder %s89, 1
      %p653 = scmp.ne.s32.totalorder %s648, %s650
      %p654 = scmp.eq.s32.totalorder %s89, 0
      %p655 = por %p653, %p654
      %p656 = scmp.ne.s32.totalorder %s648, %s650
      %p657 = scmp.eq.s32.totalorder %s94, 1
      %p658 = por %p656, %p657
      %p659 = scmp.ne.s32.totalorder %s650, %s651
      %p660 = scmp.eq.s32.totalorder %s94, 0
      %p661 = por %p659, %p660
      %p662 = scmp.ne.s32.totalorder %s650, %s651
      %p663 = scmp.eq.s32.totalorder %s95, 1
      %p664 = por %p662, %p663
      %p666 = scmp.ne.s32.totalorder %s651, %s665
      %p667 = scmp.eq.s32.totalorder %s95, 0
      %p668 = por %p666, %p667
      %s670 = sadd.s32 %s669, 1
      %p673 = scmp.eq.s32.totalorder %s89, 1
      %p674 = scmp.ne.s32.totalorder %s669, %s671
      %p675 = scmp.eq.s32.totalorder %s89, 0
      %p676 = por %p674, %p675
      %p677 = scmp.ne.s32.totalorder %s669, %s671
      %p678 = scmp.eq.s32.totalorder %s94, 1
      %p679 = por %p677, %p678
      %p680 = scmp.ne.s32.totalorder %s671, %s672
      %p681 = scmp.eq.s32.totalorder %s94, 0
      %p682 = por %p680, %p681
      %p683 = scmp.ne.s32.totalorder %s671, %s672
      %p684 = scmp.eq.s32.totalorder %s95, 1
      %p685 = por %p683, %p684
      %p687 = scmp.ne.s32.totalorder %s672, %s686
      %p688 = scmp.eq.s32.totalorder %s95, 0
      %p689 = por %p687, %p688
      %s691 = sadd.s32 %s690, 1
      %p694 = scmp.eq.s32.totalorder %s89, 1
      %p695 = scmp.ne.s32.totalorder %s690, %s692
      %p696 = scmp.eq.s32.totalorder %s89, 0
      %p697 = por %p695, %p696
      %p698 = scmp.ne.s32.totalorder %s690, %s692
      %p699 = scmp.eq.s32.totalorder %s94, 1
      %p700 = por %p698, %p699
      %p701 = scmp.ne.s32.totalorder %s692, %s693
      %p702 = scmp.eq.s32.totalorder %s94, 0
      %p703 = por %p701, %p702
      %p704 = scmp.ne.s32.totalorder %s692, %s693
      %p705 = scmp.eq.s32.totalorder %s95, 1
      %p706 = por %p704, %p705
      %p708 = scmp.ne.s32.totalorder %s693, %s707
      %p709 = scmp.eq.s32.totalorder %s95, 0
      %p710 = por %p708, %p709
      %s712 = sadd.s32 %s711, 1
      %p715 = scmp.eq.s32.totalorder %s89, 1
      %p716 = scmp.ne.s32.totalorder %s711, %s713
      %p717 = scmp.eq.s32.totalorder %s89, 0
      %p718 = por %p716, %p717
      %p719 = scmp.ne.s32.totalorder %s711, %s713
      %p720 = scmp.eq.s32.totalorder %s94, 1
      %p721 = por %p719, %p720
      %p722 = scmp.ne.s32.totalorder %s713, %s714
      %p723 = scmp.eq.s32.totalorder %s94, 0
      %p724 = por %p722, %p723
      %p725 = scmp.ne.s32.totalorder %s713, %s714
      %p726 = scmp.eq.s32.totalorder %s95, 1
      %p727 = por %p725, %p726
      %p729 = scmp.ne.s32.totalorder %s714, %s728
      %p730 = scmp.eq.s32.totalorder %s95, 0
      %p731 = por %p729, %p730
      %s733 = sadd.s32 %s732, 1
      %p736 = scmp.eq.s32.totalorder %s89, 1
      %p737 = scmp.ne.s32.totalorder %s732, %s734
      %p738 = scmp.eq.s32.totalorder %s89, 0
      %p739 = por %p737, %p738
      %p740 = scmp.ne.s32.totalorder %s732, %s734
      %p741 = scmp.eq.s32.totalorder %s94, 1
      %p742 = por %p740, %p741
      %p743 = scmp.ne.s32.totalorder %s734, %s735
      %p744 = scmp.eq.s32.totalorder %s94, 0
      %p745 = por %p743, %p744
      %p746 = scmp.ne.s32.totalorder %s734, %s735
      %p747 = scmp.eq.s32.totalorder %s95, 1
      %p748 = por %p746, %p747
      %p750 = scmp.ne.s32.totalorder %s735, %s749
      %p751 = scmp.eq.s32.totalorder %s95, 0
      %p752 = por %p750, %p751
      %s754 = sadd.s32 %s753, 1
      %p757 = scmp.eq.s32.totalorder %s89, 1
      %p758 = scmp.ne.s32.totalorder %s753, %s755
      %p759 = scmp.eq.s32.totalorder %s89, 0
      %p760 = por %p758, %p759
      %p761 = scmp.ne.s32.totalorder %s753, %s755
      %p762 = scmp.eq.s32.totalorder %s94, 1
      %p763 = por %p761, %p762
      %p764 = scmp.ne.s32.totalorder %s755, %s756
      %p765 = scmp.eq.s32.totalorder %s94, 0
      %p766 = por %p764, %p765
      %p767 = scmp.ne.s32.totalorder %s755, %s756
      %p768 = scmp.eq.s32.totalorder %s95, 1
      %p769 = por %p767, %p768
      %p771 = scmp.ne.s32.totalorder %s756, %s770
      %p772 = scmp.eq.s32.totalorder %s95, 0
      %p773 = por %p771, %p772
      %s775 = sadd.s32 %s774, 1
      %p778 = scmp.eq.s32.totalorder %s89, 1
      %p779 = scmp.ne.s32.totalorder %s774, %s776
      %p780 = scmp.eq.s32.totalorder %s89, 0
      %p781 = por %p779, %p780
      %p782 = scmp.ne.s32.totalorder %s774, %s776
      %p783 = scmp.eq.s32.totalorder %s94, 1
      %p784 = por %p782, %p783
      %p785 = scmp.ne.s32.totalorder %s776, %s777
      %p786 = scmp.eq.s32.totalorder %s94, 0
      %p787 = por %p785, %p786
      %p788 = scmp.ne.s32.totalorder %s776, %s777
      %p789 = scmp.eq.s32.totalorder %s95, 1
      %p790 = por %p788, %p789
      %p792 = scmp.ne.s32.totalorder %s777, %s791
      %p793 = scmp.eq.s32.totalorder %s95, 0
      %p794 = por %p792, %p793
      %s796 = sadd.s32 %s795, 1
      %p799 = scmp.eq.s32.totalorder %s89, 1
      %p800 = scmp.ne.s32.totalorder %s795, %s797
      %p801 = scmp.eq.s32.totalorder %s89, 0
      %p802 = por %p800, %p801
      %p803 = scmp.ne.s32.totalorder %s795, %s797
      %p804 = scmp.eq.s32.totalorder %s94, 1
      %p805 = por %p803, %p804
      %p806 = scmp.ne.s32.totalorder %s797, %s798
      %p807 = scmp.eq.s32.totalorder %s94, 0
      %p808 = por %p806, %p807
      %p809 = scmp.ne.s32.totalorder %s797, %s798
      %p810 = scmp.eq.s32.totalorder %s95, 1
      %p811 = por %p809, %p810
      %p813 = scmp.ne.s32.totalorder %s798, %s812
      %p814 = scmp.eq.s32.totalorder %s95, 0
      %p815 = por %p813, %p814
      %s817 = sadd.s32 %s816, 1
      %p820 = scmp.eq.s32.totalorder %s89, 1
      %p821 = scmp.ne.s32.totalorder %s816, %s818
      %p822 = scmp.eq.s32.totalorder %s89, 0
      %p823 = por %p821, %p822
      %p824 = scmp.ne.s32.totalorder %s816, %s818
      %p825 = scmp.eq.s32.totalorder %s94, 1
      %p826 = por %p824, %p825
      %p827 = scmp.ne.s32.totalorder %s818, %s819
      %p828 = scmp.eq.s32.totalorder %s94, 0
      %p829 = por %p827, %p828
      %p830 = scmp.ne.s32.totalorder %s818, %s819
      %p831 = scmp.eq.s32.totalorder %s95, 1
      %p832 = por %p830, %p831
      %p834 = scmp.ne.s32.totalorder %s819, %s833
      %p835 = scmp.eq.s32.totalorder %s95, 0
      %p836 = por %p834, %p835
      %s838 = sadd.s32 %s837, 1
      %p841 = scmp.eq.s32.totalorder %s89, 1
      %p842 = scmp.ne.s32.totalorder %s837, %s839
      %p843 = scmp.eq.s32.totalorder %s89, 0
      %p844 = por %p842, %p843
      %p845 = scmp.ne.s32.totalorder %s837, %s839
      %p846 = scmp.eq.s32.totalorder %s94, 1
      %p847 = por %p845, %p846
      %p848 = scmp.ne.s32.totalorder %s839, %s840
      %p849 = scmp.eq.s32.totalorder %s94, 0
      %p850 = por %p848, %p849
      %p851 = scmp.ne.s32.totalorder %s839, %s840
      %p852 = scmp.eq.s32.totalorder %s95, 1
      %p853 = por %p851, %p852
      %p855 = scmp.ne.s32.totalorder %s840, %s854
      %p856 = scmp.eq.s32.totalorder %s95, 0
      %p857 = por %p855, %p856
      %s858 = ssub.s32 %s89, %s96
      %p859 = scmp.eq.s32.totalorder %s858, 0
      %s861 = sadd.s32 %s860, 1
      %s862 = scalar_select %p859, %s860, %s861
      %p865 = pneg %p859
      %p866 = scmp.eq.s32.totalorder %s89, 1
      %p867 = por %p865, %p866
      %p868 = scmp.ne.s32.totalorder %s860, %s863
      %p869 = scmp.eq.s32.totalorder %s89, 0
      %p870 = por %p868, %p869
      %p871 = scmp.ne.s32.totalorder %s860, %s863
      %p872 = scmp.eq.s32.totalorder %s94, 1
      %p873 = por %p871, %p872
      %p874 = scmp.ne.s32.totalorder %s863, %s864
      %p875 = scmp.eq.s32.totalorder %s94, 0
      %p876 = por %p874, %p875
      %p877 = scmp.ne.s32.totalorder %s863, %s864
      %p878 = scmp.eq.s32.totalorder %s95, 1
      %p879 = por %p877, %p878
      %p881 = scmp.ne.s32.totalorder %s864, %s880
      %p882 = scmp.eq.s32.totalorder %s95, 0
      %p883 = por %p881, %p882
      %p884 = scmp.le.s32.totalorder 1, %s89
      %p885 = scmp.lt.s32.totalorder %s89, 3
      %p886 = pnand %p884, %p885
      %p887 = pneg %p886
      // Predicated region
      $region9: #{_lambda_.1} parent=5 // pred_check
        _
      $region10: #{_lambda_.1} parent=5 // pred_check_branch
        %889 = sbr.rel (%p886) target = $region12
      $region11: #{_lambda_.1} parent=5 // pred_region
        %s890 = ssub.s32 %s89, 1
        // Predicated region
        $region13: #{_lambda_.1} parent=11 // pred_check
          %p891 = pneg %p136
        $region14: #{_lambda_.1} parent=11 // pred_check_branch
          %893 = sbr.rel (%p891) target = $region16
        $region15: #{_lambda_.1} parent=11 // pred_region
          %s895 = ssub.s32 16, 16
          %896 = vsyncadd [#allocation4], %s895
          %899 = dma.hbm_to_smem %s3, 16, [#allocation2], [#allocation4]
        $region16: #{_lambda_.1} parent=11 // pred_fallthru
          _
        // Predicated region
        $region17: #{_lambda_.1} parent=11 // pred_check
          %p900 = pneg %p157
        $region18: #{_lambda_.1} parent=11 // pred_check_branch
          %902 = sbr.rel (%p900) target = $region20
        $region19: #{_lambda_.1} parent=11 // pred_region
          %s904 = ssub.s32 2560, 2560
          %905 = vsyncadd [#allocation3], %s904
          %s906 = sshll.u32 [#allocation5], 4
          %s907 = int_to_ptr.vmem [resolvable:$true] %s906
          %912 = dma.hbm_to_vmem [thread:$0]  %s5, 2560, %s907, [#allocation3], 64, 64, 4
        $region20: #{_lambda_.1} parent=11 // pred_fallthru
          _
        // Predicated region
        $region21: #{_lambda_.1} parent=11 // pred_check
          %p913 = pneg %p178
        $region22: #{_lambda_.1} parent=11 // pred_check_branch
          %915 = sbr.rel (%p913) target = $region24
        $region23: #{_lambda_.1} parent=11 // pred_region
          _
        $region24: #{_lambda_.1} parent=11 // pred_fallthru
          _
        // Predicated region
        $region25: #{_lambda_.1} parent=11 // pred_check
          %p916 = pneg %p199
        $region26: #{_lambda_.1} parent=11 // pred_check_branch
          %918 = sbr.rel (%p916) target = $region28
        $region27: #{_lambda_.1} parent=11 // pred_region
          %s920 = ssub.s32 16, 16
          %921 = vsyncadd [#allocation7], %s920
          %s923 = sshll.u32 [#allocation6], 4
          %s924 = int_to_ptr.vmem [resolvable:$true] %s923
          %926 = dma.hbm_to_vmem [thread:$0]  %s9, 16, %s924, [#allocation7]
        $region28: #{_lambda_.1} parent=11 // pred_fallthru
          _
        // Predicated region
        $region29: #{_lambda_.1} parent=11 // pred_check
          %p927 = pneg %p220
        $region30: #{_lambda_.1} parent=11 // pred_check_branch
          %929 = sbr.rel (%p927) target = $region32
        $region31: #{_lambda_.1} parent=11 // pred_region
          %s931 = ssub.s32 16, 16
          %932 = vsyncadd [#allocation7], %s931
          %s934 = sshll.u32 [#allocation8], 4
          %s935 = int_to_ptr.vmem [resolvable:$true] %s934
          %937 = dma.hbm_to_vmem [thread:$0]  %s11, 16, %s935, [#allocation7]
        $region32: #{_lambda_.1} parent=11 // pred_fallthru
          _
        // Predicated region
        $region33: #{_lambda_.1} parent=11 // pred_check
          %p938 = pneg %p241
        $region34: #{_lambda_.1} parent=11 // pred_check_branch
          %940 = sbr.rel (%p938) target = $region36
        $region35: #{_lambda_.1} parent=11 // pred_region
          %s942 = ssub.s32 1280, 1280
          %943 = vsyncadd [#allocation10], %s942
          %s944 = sshll.u32 [#allocation9], 4
          %s945 = int_to_ptr.vmem [resolvable:$true] %s944
          %950 = dma.hbm_to_vmem [thread:$0]  %s13, 1280, %s945, [#allocation10], 64, 64, 4
        $region36: #{_lambda_.1} parent=11 // pred_fallthru
          _
        // Predicated region
        $region37: #{_lambda_.1} parent=11 // pred_check
          %p951 = pneg %p262
        $region38: #{_lambda_.1} parent=11 // pred_check_branch
          %953 = sbr.rel (%p951) target = $region40
        $region39: #{_lambda_.1} parent=11 // pred_region
          %s955 = ssub.s32 5120, 5120
          %956 = vsyncadd [#allocation10], %s955
          %s957 = sshll.u32 [#allocation11], 4
          %s958 = int_to_ptr.vmem [resolvable:$true] %s957
          %963 = dma.hbm_to_vmem [thread:$0]  %s15, 5120, %s958, [#allocation10], 64, 64, 4
        $region40: #{_lambda_.1} parent=11 // pred_fallthru
          _
        // Predicated region
        $region41: #{_lambda_.1} parent=11 // pred_check
          %p964 = pneg %p283
        $region42: #{_lambda_.1} parent=11 // pred_check_branch
          %966 = sbr.rel (%p964) target = $region44
        $region43: #{_lambda_.1} parent=11 // pred_region
          %s968 = ssub.s32 16, 16
          %969 = vsyncadd [#allocation13], %s968
          %s971 = sshll.u32 [#allocation12], 4
          %s972 = int_to_ptr.vmem [resolvable:$true] %s971
          %974 = dma.hbm_to_vmem [thread:$0]  %s17, 16, %s972, [#allocation13]
        $region44: #{_lambda_.1} parent=11 // pred_fallthru
          _
        // Predicated region
        $region45: #{_lambda_.1} parent=11 // pred_check
          %p975 = pneg %p304
        $region46: #{_lambda_.1} parent=11 // pred_check_branch
          %977 = sbr.rel (%p975) target = $region48
        $region47: #{_lambda_.1} parent=11 // pred_region
          %s979 = ssub.s32 16, 16
          %980 = vsyncadd [#allocation13], %s979
          %s982 = sshll.u32 [#allocation14], 4
          %s983 = int_to_ptr.vmem [resolvable:$true] %s982
          %985 = dma.hbm_to_vmem [thread:$0]  %s19, 16, %s983, [#allocation13]
        $region48: #{_lambda_.1} parent=11 // pred_fallthru
          _
        // Predicated region
        $region49: #{_lambda_.1} parent=11 // pred_check
          %p986 = pneg %p325
        $region50: #{_lambda_.1} parent=11 // pred_check_branch
          %988 = sbr.rel (%p986) target = $region52
        $region51: #{_lambda_.1} parent=11 // pred_region
          _
        $region52: #{_lambda_.1} parent=11 // pred_fallthru
          _
        // Predicated region
        $region53: #{_lambda_.1} parent=11 // pred_check
          %p989 = pneg %p346
        $region54: #{_lambda_.1} parent=11 // pred_check_branch
          %991 = sbr.rel (%p989) target = $region56
        $region55: #{_lambda_.1} parent=11 // pred_region
          %s993 = ssub.s32 16, 16
          %994 = vsyncadd [#allocation16], %s993
          %s996 = sshll.u32 [#allocation15], 4
          %s997 = int_to_ptr.vmem [resolvable:$true] %s996
          %999 = dma.hbm_to_vmem [thread:$0]  %s23, 16, %s997, [#allocation16]
        $region56: #{_lambda_.1} parent=11 // pred_fallthru
          _
        // Predicated region
        $region57: #{_lambda_.1} parent=11 // pred_check
          %p1000 = pneg %p367
        $region58: #{_lambda_.1} parent=11 // pred_check_branch
          %1002 = sbr.rel (%p1000) target = $region60
        $region59: #{_lambda_.1} parent=11 // pred_region
          %s1004 = ssub.s32 16, 16
          %1005 = vsyncadd [#allocation16], %s1004
          %s1007 = sshll.u32 [#allocation17], 4
          %s1008 = int_to_ptr.vmem [resolvable:$true] %s1007
          %1010 = dma.hbm_to_vmem [thread:$0]  %s25, 16, %s1008, [#allocation16]
        $region60: #{_lambda_.1} parent=11 // pred_fallthru
          _
        // Predicated region
        $region61: #{_lambda_.1} parent=11 // pred_check
          %p1011 = pneg %p388
        $region62: #{_lambda_.1} parent=11 // pred_check_branch
          %1013 = sbr.rel (%p1011) target = $region64
        $region63: #{_lambda_.1} parent=11 // pred_region
          _
        $region64: #{_lambda_.1} parent=11 // pred_fallthru
          _
        // Predicated region
        $region65: #{_lambda_.1} parent=11 // pred_check
          %p1014 = pneg %p409
        $region66: #{_lambda_.1} parent=11 // pred_check_branch
          %1016 = sbr.rel (%p1014) target = $region68
        $region67: #{_lambda_.1} parent=11 // pred_region
          %s1018 = ssub.s32 16, 16
          %1019 = vsyncadd [#allocation19], %s1018
          %s1021 = sshll.u32 [#allocation18], 4
          %s1022 = int_to_ptr.vmem [resolvable:$true] %s1021
          %1024 = dma.hbm_to_vmem [thread:$0]  %s29, 16, %s1022, [#allocation19]
        $region68: #{_lambda_.1} parent=11 // pred_fallthru
          _
        // Predicated region
        $region69: #{_lambda_.1} parent=11 // pred_check
          %p1025 = pneg %p430
        $region70: #{_lambda_.1} parent=11 // pred_check_branch
          %1027 = sbr.rel (%p1025) target = $region72
        $region71: #{_lambda_.1} parent=11 // pred_region
          %s1029 = ssub.s32 16, 16
          %1030 = vsyncadd [#allocation19], %s1029
          %s1032 = sshll.u32 [#allocation20], 4
          %s1033 = int_to_ptr.vmem [resolvable:$true] %s1032
          %1035 = dma.hbm_to_vmem [thread:$0]  %s31, 16, %s1033, [#allocation19]
        $region72: #{_lambda_.1} parent=11 // pred_fallthru
          _
        // Predicated region
        $region73: #{_lambda_.1} parent=11 // pred_check
          %p1036 = pneg %p451
        $region74: #{_lambda_.1} parent=11 // pred_check_branch
          %1038 = sbr.rel (%p1036) target = $region76
        $region75: #{_lambda_.1} parent=11 // pred_region
          _
        $region76: #{_lambda_.1} parent=11 // pred_fallthru
          _
        // Predicated region
        $region77: #{_lambda_.1} parent=11 // pred_check
          %p1039 = pneg %p472
        $region78: #{_lambda_.1} parent=11 // pred_check_branch
          %1041 = sbr.rel (%p1039) target = $region80
        $region79: #{_lambda_.1} parent=11 // pred_region
          %s1043 = ssub.s32 16, 16
          %1044 = vsyncadd [#allocation22], %s1043
          %s1046 = sshll.u32 [#allocation21], 4
          %s1047 = int_to_ptr.vmem [resolvable:$true] %s1046
          %1049 = dma.hbm_to_vmem [thread:$0]  %s35, 16, %s1047, [#allocation22]
        $region80: #{_lambda_.1} parent=11 // pred_fallthru
          _
        // Predicated region
        $region81: #{_lambda_.1} parent=11 // pred_check
          %p1050 = pneg %p493
        $region82: #{_lambda_.1} parent=11 // pred_check_branch
          %1052 = sbr.rel (%p1050) target = $region84
        $region83: #{_lambda_.1} parent=11 // pred_region
          %s1054 = ssub.s32 16, 16
          %1055 = vsyncadd [#allocation22], %s1054
          %s1057 = sshll.u32 [#allocation23], 4
          %s1058 = int_to_ptr.vmem [resolvable:$true] %s1057
          %1060 = dma.hbm_to_vmem [thread:$0]  %s37, 16, %s1058, [#allocation22]
        $region84: #{_lambda_.1} parent=11 // pred_fallthru
          _
        // Predicated region
        $region85: #{_lambda_.1} parent=11 // pred_check
          %p1061 = pneg %p514
        $region86: #{_lambda_.1} parent=11 // pred_check_branch
          %1063 = sbr.rel (%p1061) target = $region88
        $region87: #{_lambda_.1} parent=11 // pred_region
          %s1065 = ssub.s32 1280, 1280
          %1066 = vsyncadd [#allocation25], %s1065
          %s1067 = sshll.u32 [#allocation24], 4
          %s1068 = int_to_ptr.vmem [resolvable:$true] %s1067
          %1073 = dma.hbm_to_vmem [thread:$0]  %s39, 1280, %s1068, [#allocation25], 64, 64, 4
        $region88: #{_lambda_.1} parent=11 // pred_fallthru
          _
        // Predicated region
        $region89: #{_lambda_.1} parent=11 // pred_check
          %p1074 = pneg %p535
        $region90: #{_lambda_.1} parent=11 // pred_check_branch
          %1076 = sbr.rel (%p1074) target = $region92
        $region91: #{_lambda_.1} parent=11 // pred_region
          %s1078 = ssub.s32 16, 16
          %1079 = vsyncadd [#allocation25], %s1078
          %s1081 = sshll.u32 [#allocation26], 4
          %s1082 = int_to_ptr.vmem [resolvable:$true] %s1081
          %1084 = dma.hbm_to_vmem [thread:$0]  %s41, 16, %s1082, [#allocation25]
        $region92: #{_lambda_.1} parent=11 // pred_fallthru
          _
        // Predicated region
        $region93: #{_lambda_.1} parent=11 // pred_check
          %p1085 = pneg %p556
        $region94: #{_lambda_.1} parent=11 // pred_check_branch
          %1087 = sbr.rel (%p1085) target = $region96
        $region95: #{_lambda_.1} parent=11 // pred_region
          _
        $region96: #{_lambda_.1} parent=11 // pred_fallthru
          _
        // Predicated region
        $region97: #{_lambda_.1} parent=11 // pred_check
          %p1088 = pneg %p577
        $region98: #{_lambda_.1} parent=11 // pred_check_branch
          %1090 = sbr.rel (%p1088) target = $region100
        $region99: #{_lambda_.1} parent=11 // pred_region
          _
        $region100: #{_lambda_.1} parent=11 // pred_fallthru
          _
        // Predicated region
        $region101: #{_lambda_.1} parent=11 // pred_check
          %p1091 = pneg %p598
        $region102: #{_lambda_.1} parent=11 // pred_check_branch
          %1093 = sbr.rel (%p1091) target = $region104
        $region103: #{_lambda_.1} parent=11 // pred_region
          _
        $region104: #{_lambda_.1} parent=11 // pred_fallthru
          _
        // Predicated region
        $region105: #{_lambda_.1} parent=11 // pred_check
          %p1094 = pneg %p619
        $region106: #{_lambda_.1} parent=11 // pred_check_branch
          %1096 = sbr.rel (%p1094) target = $region108
        $region107: #{_lambda_.1} parent=11 // pred_region
          _
        $region108: #{_lambda_.1} parent=11 // pred_fallthru
          _
        // Predicated region
        $region109: #{_lambda_.1} parent=11 // pred_check
          %p1097 = pneg %p640
        $region110: #{_lambda_.1} parent=11 // pred_check_branch
          %1099 = sbr.rel (%p1097) target = $region112
        $region111: #{_lambda_.1} parent=11 // pred_region
          _
        $region112: #{_lambda_.1} parent=11 // pred_fallthru
          _
        // Predicated region
        $region113: #{_lambda_.1} parent=11 // pred_check
          %p1100 = pneg %p661
        $region114: #{_lambda_.1} parent=11 // pred_check_branch
          %1102 = sbr.rel (%p1100) target = $region116
        $region115: #{_lambda_.1} parent=11 // pred_region
          _
        $region116: #{_lambda_.1} parent=11 // pred_fallthru
          _
        // Predicated region
        $region117: #{_lambda_.1} parent=11 // pred_check
          %p1103 = pneg %p682
        $region118: #{_lambda_.1} parent=11 // pred_check_branch
          %1105 = sbr.rel (%p1103) target = $region120
        $region119: #{_lambda_.1} parent=11 // pred_region
          _
        $region120: #{_lambda_.1} parent=11 // pred_fallthru
          _
        // Predicated region
        $region121: #{_lambda_.1} parent=11 // pred_check
          %p1106 = pneg %p703
        $region122: #{_lambda_.1} parent=11 // pred_check_branch
          %1108 = sbr.rel (%p1106) target = $region124
        $region123: #{_lambda_.1} parent=11 // pred_region
          %s1110 = ssub.s32 2560, 2560
          %1111 = vsyncadd [#allocation28], %s1110
          %s1112 = sshll.u32 [#allocation27], 4
          %s1113 = int_to_ptr.vmem [resolvable:$true] %s1112
          %1118 = dma.hbm_to_vmem [thread:$0]  %s57, 2560, %s1113, [#allocation28], 64, 64, 4
        $region124: #{_lambda_.1} parent=11 // pred_fallthru
          _
        // Predicated region
        $region125: #{_lambda_.1} parent=11 // pred_check
          %p1119 = pneg %p724
        $region126: #{_lambda_.1} parent=11 // pred_check_branch
          %1121 = sbr.rel (%p1119) target = $region128
        $region127: #{_lambda_.1} parent=11 // pred_region
          _
        $region128: #{_lambda_.1} parent=11 // pred_fallthru
          _
        // Predicated region
        $region129: #{_lambda_.1} parent=11 // pred_check
          %p1122 = pneg %p745
        $region130: #{_lambda_.1} parent=11 // pred_check_branch
          %1124 = sbr.rel (%p1122) target = $region132
        $region131: #{_lambda_.1} parent=11 // pred_region
          _
        $region132: #{_lambda_.1} parent=11 // pred_fallthru
          _
        // Predicated region
        $region133: #{_lambda_.1} parent=11 // pred_check
          %p1125 = pneg %p766
        $region134: #{_lambda_.1} parent=11 // pred_check_branch
          %1127 = sbr.rel (%p1125) target = $region136
        $region135: #{_lambda_.1} parent=11 // pred_region
          _
        $region136: #{_lambda_.1} parent=11 // pred_fallthru
          _
        // Predicated region
        $region137: #{_lambda_.1} parent=11 // pred_check
          %p1128 = pneg %p787
        $region138: #{_lambda_.1} parent=11 // pred_check_branch
          %1130 = sbr.rel (%p1128) target = $region140
        $region139: #{_lambda_.1} parent=11 // pred_region
          _
        $region140: #{_lambda_.1} parent=11 // pred_fallthru
          _
        // Predicated region
        $region141: #{_lambda_.1} parent=11 // pred_check
          %p1131 = pneg %p808
        $region142: #{_lambda_.1} parent=11 // pred_check_branch
          %1133 = sbr.rel (%p1131) target = $region144
        $region143: #{_lambda_.1} parent=11 // pred_region
          _
        $region144: #{_lambda_.1} parent=11 // pred_fallthru
          _
        // Predicated region
        $region145: #{_lambda_.1} parent=11 // pred_check
          %p1134 = pneg %p829
        $region146: #{_lambda_.1} parent=11 // pred_check_branch
          %1136 = sbr.rel (%p1134) target = $region148
        $region147: #{_lambda_.1} parent=11 // pred_region
          _
        $region148: #{_lambda_.1} parent=11 // pred_fallthru
          _
        // Predicated region
        $region149: #{_lambda_.1} parent=11 // pred_check
          %p1137 = pneg %p850
        $region150: #{_lambda_.1} parent=11 // pred_check_branch
          %1139 = sbr.rel (%p1137) target = $region152
        $region151: #{_lambda_.1} parent=11 // pred_region
          _
        $region152: #{_lambda_.1} parent=11 // pred_fallthru
          _
      $region12: #{_lambda_.1} parent=5 // pred_fallthru
        _
      %p1140 = scmp.lt.s32.totalorder %s89, 2
      // Predicated region
      $region153: #{_lambda_.1} parent=5 // pred_check
        %p1141 = pneg %p1140
      $region154: #{_lambda_.1} parent=5 // pred_check_branch
        %1143 = sbr.rel (%p1141) target = $region156
      $region155: #{_lambda_.1} parent=5 // pred_region
        // Predicated region
        $region157: #{_lambda_.1} parent=155 // pred_check
          %p1144 = pneg %p109
        $region158: #{_lambda_.1} parent=155 // pred_check_branch
          %1146 = sbr.rel (%p1144) target = $region160
        $region159: #{_lambda_.1} parent=155 // pred_region
          %s1147 = smul.u32 8, %s89
          %p1148 = scmp.lt.s32.totalorder %s1147, 15
          %s1149 = scalar_select %p1148, %s1147, 15
          %s1150 = smul.addr %s1149, 2
          %s1151 = smul.addr %s1150, 8
          %s1152 = scalar_lea.vmem %s1, %s1151
          %s1153 = smul.u32 8, %s89
        $region160: #{_lambda_.1} parent=155 // pred_fallthru
          _
      $region156: #{_lambda_.1} parent=5 // pred_fallthru
        _
      %p1154 = scmp.le.s32.totalorder 1, %s89
      %p1155 = scmp.lt.s32.totalorder %s89, 3
      %p1156 = pnand %p1154, %p1155
      %p1157 = pneg %p1156
      // Predicated region
      $region161: #{_lambda_.1} parent=5 // pred_check
        _
      $region162: #{_lambda_.1} parent=5 // pred_check_branch
        %1159 = sbr.rel (%p1156) target = $region164
      $region163: #{_lambda_.1} parent=5 // pred_region
        %s1160 = ssub.s32 %s89, 1
        // Predicated region
        $region165: #{_lambda_.1} parent=163 // pred_check
          %p1161 = pneg %p136
        $region166: #{_lambda_.1} parent=163 // pred_check_branch
          %1163 = sbr.rel (%p1161) target = $region168
        $region167: #{_lambda_.1} parent=163 // pred_region
          %1164 = dma.done [#allocation4], 16
        $region168: #{_lambda_.1} parent=163 // pred_fallthru
          _
        // Predicated region
        $region169: #{_lambda_.1} parent=163 // pred_check
          %p1165 = pneg %p157
        $region170: #{_lambda_.1} parent=163 // pred_check_branch
          %1167 = sbr.rel (%p1165) target = $region172
        $region171: #{_lambda_.1} parent=163 // pred_region
          %1168 = dma.done [#allocation3], 2560
        $region172: #{_lambda_.1} parent=163 // pred_fallthru
          _
        // Predicated region
        $region173: #{_lambda_.1} parent=163 // pred_check
          %p1169 = pneg %p199
        $region174: #{_lambda_.1} parent=163 // pred_check_branch
          %1171 = sbr.rel (%p1169) target = $region176
        $region175: #{_lambda_.1} parent=163 // pred_region
          %1172 = dma.done [#allocation7], 16
        $region176: #{_lambda_.1} parent=163 // pred_fallthru
          _
        // Predicated region
        $region177: #{_lambda_.1} parent=163 // pred_check
          %p1173 = pneg %p220
        $region178: #{_lambda_.1} parent=163 // pred_check_branch
          %1175 = sbr.rel (%p1173) target = $region180
        $region179: #{_lambda_.1} parent=163 // pred_region
          %1176 = dma.done [#allocation7], 16
        $region180: #{_lambda_.1} parent=163 // pred_fallthru
          _
        // Predicated region
        $region181: #{_lambda_.1} parent=163 // pred_check
          %p1177 = pneg %p241
        $region182: #{_lambda_.1} parent=163 // pred_check_branch
          %1179 = sbr.rel (%p1177) target = $region184
        $region183: #{_lambda_.1} parent=163 // pred_region
          %1180 = dma.done [#allocation10], 1280
        $region184: #{_lambda_.1} parent=163 // pred_fallthru
          _
        // Predicated region
        $region185: #{_lambda_.1} parent=163 // pred_check
          %p1181 = pneg %p262
        $region186: #{_lambda_.1} parent=163 // pred_check_branch
          %1183 = sbr.rel (%p1181) target = $region188
        $region187: #{_lambda_.1} parent=163 // pred_region
          %1184 = dma.done [#allocation10], 5120
        $region188: #{_lambda_.1} parent=163 // pred_fallthru
          _
        // Predicated region
        $region189: #{_lambda_.1} parent=163 // pred_check
          %p1185 = pneg %p283
        $region190: #{_lambda_.1} parent=163 // pred_check_branch
          %1187 = sbr.rel (%p1185) target = $region192
        $region191: #{_lambda_.1} parent=163 // pred_region
          %1188 = dma.done [#allocation13], 16
        $region192: #{_lambda_.1} parent=163 // pred_fallthru
          _
        // Predicated region
        $region193: #{_lambda_.1} parent=163 // pred_check
          %p1189 = pneg %p304
        $region194: #{_lambda_.1} parent=163 // pred_check_branch
          %1191 = sbr.rel (%p1189) target = $region196
        $region195: #{_lambda_.1} parent=163 // pred_region
          %1192 = dma.done [#allocation13], 16
        $region196: #{_lambda_.1} parent=163 // pred_fallthru
          _
        // Predicated region
        $region197: #{_lambda_.1} parent=163 // pred_check
          %p1193 = pneg %p346
        $region198: #{_lambda_.1} parent=163 // pred_check_branch
          %1195 = sbr.rel (%p1193) target = $region200
        $region199: #{_lambda_.1} parent=163 // pred_region
          %1196 = dma.done [#allocation16], 16
        $region200: #{_lambda_.1} parent=163 // pred_fallthru
          _
        // Predicated region
        $region201: #{_lambda_.1} parent=163 // pred_check
          %p1197 = pneg %p367
        $region202: #{_lambda_.1} parent=163 // pred_check_branch
          %1199 = sbr.rel (%p1197) target = $region204
        $region203: #{_lambda_.1} parent=163 // pred_region
          %1200 = dma.done [#allocation16], 16
        $region204: #{_lambda_.1} parent=163 // pred_fallthru
          _
        // Predicated region
        $region205: #{_lambda_.1} parent=163 // pred_check
          %p1201 = pneg %p409
        $region206: #{_lambda_.1} parent=163 // pred_check_branch
          %1203 = sbr.rel (%p1201) target = $region208
        $region207: #{_lambda_.1} parent=163 // pred_region
          %1204 = dma.done [#allocation19], 16
        $region208: #{_lambda_.1} parent=163 // pred_fallthru
          _
        // Predicated region
        $region209: #{_lambda_.1} parent=163 // pred_check
          %p1205 = pneg %p430
        $region210: #{_lambda_.1} parent=163 // pred_check_branch
          %1207 = sbr.rel (%p1205) target = $region212
        $region211: #{_lambda_.1} parent=163 // pred_region
          %1208 = dma.done [#allocation19], 16
        $region212: #{_lambda_.1} parent=163 // pred_fallthru
          _
        // Predicated region
        $region213: #{_lambda_.1} parent=163 // pred_check
          %p1209 = pneg %p472
        $region214: #{_lambda_.1} parent=163 // pred_check_branch
          %1211 = sbr.rel (%p1209) target = $region216
        $region215: #{_lambda_.1} parent=163 // pred_region
          %1212 = dma.done [#allocation22], 16
        $region216: #{_lambda_.1} parent=163 // pred_fallthru
          _
        // Predicated region
        $region217: #{_lambda_.1} parent=163 // pred_check
          %p1213 = pneg %p493
        $region218: #{_lambda_.1} parent=163 // pred_check_branch
          %1215 = sbr.rel (%p1213) target = $region220
        $region219: #{_lambda_.1} parent=163 // pred_region
          %1216 = dma.done [#allocation22], 16
        $region220: #{_lambda_.1} parent=163 // pred_fallthru
          _
        // Predicated region
        $region221: #{_lambda_.1} parent=163 // pred_check
          %p1217 = pneg %p514
        $region222: #{_lambda_.1} parent=163 // pred_check_branch
          %1219 = sbr.rel (%p1217) target = $region224
        $region223: #{_lambda_.1} parent=163 // pred_region
          %1220 = dma.done [#allocation25], 1280
        $region224: #{_lambda_.1} parent=163 // pred_fallthru
          _
        // Predicated region
        $region225: #{_lambda_.1} parent=163 // pred_check
          %p1221 = pneg %p535
        $region226: #{_lambda_.1} parent=163 // pred_check_branch
          %1223 = sbr.rel (%p1221) target = $region228
        $region227: #{_lambda_.1} parent=163 // pred_region
          %1224 = dma.done [#allocation25], 16
        $region228: #{_lambda_.1} parent=163 // pred_fallthru
          _
        // Predicated region
        $region229: #{_lambda_.1} parent=163 // pred_check
          %p1225 = pneg %p703
        $region230: #{_lambda_.1} parent=163 // pred_check_branch
          %1227 = sbr.rel (%p1225) target = $region232
        $region231: #{_lambda_.1} parent=163 // pred_region
          %1228 = dma.done [#allocation28], 2560
        $region232: #{_lambda_.1} parent=163 // pred_fallthru
          _
        %1229 = sfence
        %s1230 = smul.u32 8, %s94
        %p1231 = scmp.lt.s32.totalorder %s1230, 15
        %s1232 = scalar_select %p1231, %s1230, 15
        %s1233 = smul.addr %s1232, 2
        %s1234 = smul.addr %s1233, 8
        %s1235 = scalar_lea.vmem %s1, %s1234
        %p1236 = pneg %p115
        %p1237 = pneg %p112
        %p1238 = pneg %p136
        %p1239 = pneg %p133
        %p1240 = pneg %p157
        %p1241 = pneg %p154
        %p1242 = pneg %p178
        %p1243 = pneg %p175
        %p1244 = pneg %p199
        %p1245 = pneg %p196
        %p1246 = pneg %p220
        %p1247 = pneg %p217
        %p1248 = pneg %p241
        %p1249 = pneg %p238
        %p1250 = pneg %p262
        %p1251 = pneg %p259
        %p1252 = pneg %p283
        %p1253 = pneg %p280
        %p1254 = pneg %p304
        %p1255 = pneg %p301
        %p1256 = pneg %p325
        %p1257 = pneg %p322
        %p1258 = pneg %p346
        %p1259 = pneg %p343
        %p1260 = pneg %p367
        %p1261 = pneg %p364
        %p1262 = pneg %p388
        %p1263 = pneg %p385
        %p1264 = pneg %p409
        %p1265 = pneg %p406
        %p1266 = pneg %p430
        %p1267 = pneg %p427
        %p1268 = pneg %p451
        %p1269 = pneg %p448
        %p1270 = pneg %p472
        %p1271 = pneg %p469
        %p1272 = pneg %p493
        %p1273 = pneg %p490
        %p1274 = pneg %p514
        %p1275 = pneg %p511
        %p1276 = pneg %p535
        %p1277 = pneg %p532
        %p1278 = pneg %p556
        %p1279 = pneg %p553
        %p1280 = pneg %p577
        %p1281 = pneg %p574
        %p1282 = pneg %p598
        %p1283 = pneg %p595
        %p1284 = pneg %p619
        %p1285 = pneg %p616
        %p1286 = pneg %p640
        %p1287 = pneg %p637
        %p1288 = pneg %p661
        %p1289 = pneg %p658
        %p1290 = pneg %p682
        %p1291 = pneg %p679
        %p1292 = pneg %p703
        %p1293 = pneg %p700
        %p1294 = pneg %p724
        %p1295 = pneg %p721
        %p1296 = pneg %p745
        %p1297 = pneg %p742
        %p1298 = pneg %p766
        %p1299 = pneg %p763
        %p1300 = pneg %p787
        %p1301 = pneg %p784
        %p1302 = pneg %p808
        %p1303 = pneg %p805
        %p1304 = pneg %p829
        %p1305 = pneg %p826
        %p1306 = pneg %p850
        %p1307 = pneg %p847
        %p1308 = pneg %p876
        %p1309 = pneg %p873
        %s1310 = smul.u32 8, %s94
        %p1311 = scmp.lt.s32.totalorder %s1310, 15
        %s1312 = scalar_select %p1311, %s1310, 15
        %s1313 = smul.addr %s1312, 2
        %s1314 = smul.addr %s1313, 8
        %s1315 = scalar_lea.vmem %s73, %s1314
        %s1316 = smul.u32 8, %s94
        %p1317 = scmp.lt.s32.totalorder %s1316, 15
        %s1318 = scalar_select %p1317, %s1316, 15
        %s1319 = smul.addr %s1318, 2
        %s1320 = smul.addr %s1319, 8
        %s1321 = scalar_lea.vmem %s1, %s1320
        %s1322 = smul.u32 8, %s94
        %s1323 = smul.u32 8, %s94
        %p1324 = scmp.lt.s32.totalorder %s1323, 15
        %s1325 = scalar_select %p1324, %s1323, 15
        %s1326 = smul.addr %s1325, 2
        %s1327 = smul.addr %s1326, 8
        %s1328 = scalar_lea.vmem %s73, %s1327
        %s1329 = smul.u32 8, %s94
        %v1331 = vld [vmem:[%s1321] sm:$0xff]
        %v1332 = vld [vmem:[%s1321 + $0x8] sm:$0xff]
        %v1333 = vld [vmem:[%s1321 + $0x10] sm:$0xff]
        %v1334 = vld [vmem:[%s1321 + $0x18] sm:$0xff]
        %v1335 = vld [vmem:[%s1321 + $0x20] sm:$0xff]
        %v1336 = vld [vmem:[%s1321 + $0x28] sm:$0xff]
        %v1337 = vld [vmem:[%s1321 + $0x30] sm:$0xff]
        %v1338 = vld [vmem:[%s1321 + $0x38] sm:$0xff]
        %v1339 = vld [vmem:[%s1321 + $0x40] sm:$0xff]
        %v1340 = vld [vmem:[%s1321 + $0x48] sm:$0xff]
        %v1341 = vld [vmem:[%s1321 + $0x50] sm:$0xff]
        %v1342 = vld [vmem:[%s1321 + $0x58] sm:$0xff]
        %v1343 = vld [vmem:[%s1321 + $0x60] sm:$0xff]
        %v1344 = vld [vmem:[%s1321 + $0x68] sm:$0xff]
        %v1345 = vld [vmem:[%s1321 + $0x70] sm:$0xff]
        %v1346 = vld [vmem:[%s1321 + $0x78] sm:$0xff]
        %v1347 = vpack.c.bf16 %v1332, %v1331
        %v1348 = vpack.c.bf16 %v1334, %v1333
        %v1349 = vpack.c.bf16 %v1336, %v1335
        %v1350 = vpack.c.bf16 %v1338, %v1337
        %v1351 = vpack.c.bf16 %v1340, %v1339
        %v1352 = vpack.c.bf16 %v1342, %v1341
        %v1353 = vpack.c.bf16 %v1344, %v1343
        %v1354 = vpack.c.bf16 %v1346, %v1345
        %v1355 = vld [vmem:[#allocation5] sm:$0xf]
        %v1356 = vld [vmem:[#allocation5 + $0x4] sm:$0xf]
        %v1357 = vld [vmem:[#allocation5 + $0x8] sm:$0xf]
        %v1358 = vld [vmem:[#allocation5 + $0xc] sm:$0xf]
        %v1359 = vld [vmem:[#allocation5 + $0x10] sm:$0xf]
        %v1360 = vld [vmem:[#allocation5 + $0x14] sm:$0xf]
        %v1361 = vld [vmem:[#allocation5 + $0x18] sm:$0xf]
        %v1362 = vld [vmem:[#allocation5 + $0x1c] sm:$0xf]
        %v1371 = vunpack.c.l.b16 %v1355
        %v1372 = vunpack.c.l.b16 %v1356
        %v1373 = vunpack.c.l.b16 %v1357
        %v1374 = vunpack.c.l.b16 %v1358
        %v1375 = vunpack.c.l.b16 %v1359
        %v1376 = vunpack.c.l.b16 %v1360
        %v1377 = vunpack.c.l.b16 %v1361
        %v1378 = vunpack.c.l.b16 %v1362
        %v1379 = vpack.c.b16 %v1372, %v1371
        %v1380 = vpack.c.b16 %v1374, %v1373
        %v1381 = vpack.c.b16 %v1376, %v1375
        %v1382 = vpack.c.b16 %v1378, %v1377
        %1387 = vmatprep.subr.bf16.mxu0 0
        %1388 = vmatpush1.bf16.msra.mxu0 %v1347
        %1389 = vmatprep.subr.bf16.mxu0 0
        %1390 = vmatpush1.bf16.msra.mxu0 %v1348
        %1391 = vmatprep.subr.bf16.mxu0 0
        %1392 = vmatpush1.bf16.msra.mxu0 %v1349
        %1393 = vmatprep.subr.bf16.mxu0 0
        %1394 = vmatpush1.bf16.msra.mxu0 %v1350
        %1395 = vmatprep.subr.bf16.mxu0 0
        %1396 = vmatpush1.bf16.msra.mxu0 %v1351
        %1397 = vmatprep.subr.bf16.mxu0 0
        %1398 = vmatpush1.bf16.msra.mxu0 %v1352
        %1399 = vmatprep.subr.bf16.mxu0 0
        %1400 = vmatpush1.bf16.msra.mxu0 %v1353
        %1401 = vmatprep.subr.bf16.mxu0 0
        %1402 = vmatpush1.bf16.msra.mxu0 %v1354
        %1403 = vmatprep.subr.bf16.mxu0 0
        %1404 = vmatpush1.bf16.msra.mxu0 0
        %1405 = vmatprep.subr.bf16.mxu0 0
        %1406 = vmatpush1.bf16.msra.mxu0 0
        %1407 = vmatprep.subr.bf16.mxu0 0
        %1408 = vmatpush1.bf16.msra.mxu0 0
        %1409 = vmatprep.subr.bf16.mxu0 0
        %1410 = vmatpush1.bf16.msra.mxu0 0
        %1411 = vmatprep.subr.bf16.mxu0 0
        %1412 = vmatpush1.bf16.msra.mxu0 0
        %1413 = vmatprep.subr.bf16.mxu0 0
        %1414 = vmatpush1.bf16.msra.mxu0 0
        %1415 = vmatprep.subr.bf16.mxu0 0
        %1416 = vmatpush1.bf16.msra.mxu0 0
        %1417 = vmatprep.subr.bf16.mxu0 0
        %1418 = vmatpush1.bf16.msra.mxu0 0
        %1419 = vmatprep.mubr.bf16.mxu0 0
        %1420 = vmatmul.mubr.bf16.gmra.mrb[0].mxu0 %v1379
        %v1421 = vpop.f32.mrb[0].mxu0
        %v1422 = vadd.f32 0.0, %v1421
        %v1423 = vpop.f32.mrb[0].mxu0
        %v1424 = vpop.f32.mrb[0].mxu0
        %v1425 = vadd.f32 0.0, %v1424
        %v1426 = vpop.f32.mrb[0].mxu0
        %1427 = vmatprep.mubr.bf16.mxu0 0
        %1428 = vmatmul.mubr.bf16.gmra.mrb[0].mxu0 %v1380
        %v1429 = vpop.f32.mrb[0].mxu0
        %v1430 = vadd.f32 0.0, %v1429
        %v1431 = vpop.f32.mrb[0].mxu0
        %v1432 = vpop.f32.mrb[0].mxu0
        %v1433 = vadd.f32 0.0, %v1432
        %v1434 = vpop.f32.mrb[0].mxu0
        %1435 = vmatprep.mubr.bf16.mxu0 0
        %1436 = vmatmul.mubr.bf16.gmra.mrb[0].mxu0 %v1381
        %v1437 = vpop.f32.mrb[0].mxu0
        %v1438 = vadd.f32 0.0, %v1437
        %v1439 = vpop.f32.mrb[0].mxu0
        %v1440 = vpop.f32.mrb[0].mxu0
        %v1441 = vadd.f32 0.0, %v1440
        %v1442 = vpop.f32.mrb[0].mxu0
        %1443 = vmatprep.mubr.bf16.mxu0 0
        %1444 = vmatmul.mubr.bf16.gmra.mrb[0].mxu0 %v1382
        %v1445 = vpop.f32.mrb[0].mxu0
        %v1446 = vadd.f32 0.0, %v1445
        %v1447 = vpop.f32.mrb[0].mxu0
        %v1448 = vpop.f32.mrb[0].mxu0
        %v1449 = vadd.f32 0.0, %v1448
        %v1450 = vpop.f32.mrb[0].mxu0
        %1451 = vdwg.mxu0
        %s1452 = scalar_lea.vmem [#allocation5], 32
        %v1453 = vld [vmem:[%s1452] sm:$0xf]
        %v1454 = vld [vmem:[%s1452 + $0x4] sm:$0xf]
        %v1455 = vld [vmem:[%s1452 + $0x8] sm:$0xf]
        %v1456 = vld [vmem:[%s1452 + $0xc] sm:$0xf]
        %v1457 = vld [vmem:[%s1452 + $0x10] sm:$0xf]
        %v1458 = vld [vmem:[%s1452 + $0x14] sm:$0xf]
        %v1459 = vld [vmem:[%s1452 + $0x18] sm:$0xf]
        %v1460 = vld [vmem:[%s1452 + $0x1c] sm:$0xf]
        %v1469 = vunpack.c.l.b16 %v1453
        %v1470 = vunpack.c.l.b16 %v1454
        %v1471 = vunpack.c.l.b16 %v1455
        %v1472 = vunpack.c.l.b16 %v1456
        %v1473 = vunpack.c.l.b16 %v1457
        %v1474 = vunpack.c.l.b16 %v1458
        %v1475 = vunpack.c.l.b16 %v1459
        %v1476 = vunpack.c.l.b16 %v1460
        %v1477 = vpack.c.b16 %v1470, %v1469
        %v1478 = vpack.c.b16 %v1472, %v1471
        %v1479 = vpack.c.b16 %v1474, %v1473
        %v1480 = vpack.c.b16 %v1476, %v1475
        %1485 = vmatprep.subr.bf16.mxu0 0
        %1486 = vmatpush1.bf16.msra.mxu0 %v1347
        %1487 = vmatprep.subr.bf16.mxu0 0
        %1488 = vmatpush1.bf16.msra.mxu0 %v1348
        %1489 = vmatprep.subr.bf16.mxu0 0
        %1490 = vmatpush1.bf16.msra.mxu0 %v1349
        %1491 = vmatprep.subr.bf16.mxu0 0
        %1492 = vmatpush1.bf16.msra.mxu0 %v1350
        %1493 = vmatprep.subr.bf16.mxu0 0
        %1494 = vmatpush1.bf16.msra.mxu0 %v1351
        %1495 = vmatprep.subr.bf16.mxu0 0
        %1496 = vmatpush1.bf16.msra.mxu0 %v1352
        %1497 = vmatprep.subr.bf16.mxu0 0
        %1498 = vmatpush1.bf16.msra.mxu0 %v1353
        %1499 = vmatprep.subr.bf16.mxu0 0
        %1500 = vmatpush1.bf16.msra.mxu0 %v1354
        %1501 = vmatprep.subr.bf16.mxu0 0
        %1502 = vmatpush1.bf16.msra.mxu0 0
        %1503 = vmatprep.subr.bf16.mxu0 0
        %1504 = vmatpush1.bf16.msra.mxu0 0
        %1505 = vmatprep.subr.bf16.mxu0 0
        %1506 = vmatpush1.bf16.msra.mxu0 0
        %1507 = vmatprep.subr.bf16.mxu0 0
        %1508 = vmatpush1.bf16.msra.mxu0 0
        %1509 = vmatprep.subr.bf16.mxu0 0
        %1510 = vmatpush1.bf16.msra.mxu0 0
        %1511 = vmatprep.subr.bf16.mxu0 0
        %1512 = vmatpush1.bf16.msra.mxu0 0
        %1513 = vmatprep.subr.bf16.mxu0 0
        %1514 = vmatpush1.bf16.msra.mxu0 0
        %1515 = vmatprep.subr.bf16.mxu0 0
        %1516 = vmatpush1.bf16.msra.mxu0 0
        %1517 = vmatprep.mubr.bf16.mxu0 0
        %1518 = vmatmul.mubr.bf16.gmra.mrb[0].mxu0 %v1477
        %v1519 = vpop.f32.mrb[0].mxu0
        %v1520 = vadd.f32 0.0, %v1519
        %v1521 = vpop.f32.mrb[0].mxu0
        %v1522 = vpop.f32.mrb[0].mxu0
        %v1523 = vadd.f32 0.0, %v1522
        %v1524 = vpop.f32.mrb[0].mxu0
        %1525 = vmatprep.mubr.bf16.mxu0 0
        %1526 = vmatmul.mubr.bf16.gmra.mrb[0].mxu0 %v1478
        %v1527 = vpop.f32.mrb[0].mxu0
        %v1528 = vadd.f32 0.0, %v1527
        %v1529 = vpop.f32.mrb[0].mxu0
        %v1530 = vpop.f32.mrb[0].mxu0
        %v1531 = vadd.f32 0.0, %v1530
        %v1532 = vpop.f32.mrb[0].mxu0
        %1533 = vmatprep.mubr.bf16.mxu0 0
        %1534 = vmatmul.mubr.bf16.gmra.mrb[0].mxu0 %v1479
        %v1535 = vpop.f32.mrb[0].mxu0
        %v1536 = vadd.f32 0.0, %v1535
        %v1537 = vpop.f32.mrb[0].mxu0
        %v1538 = vpop.f32.mrb[0].mxu0
        %v1539 = vadd.f32 0.0, %v1538
        %v1540 = vpop.f32.mrb[0].mxu0
        %1541 = vmatprep.mubr.bf16.mxu0 0
        %1542 = vmatmul.mubr.bf16.gmra.mrb[0].mxu0 %v1480
        %v1543 = vpop.f32.mrb[0].mxu0
        %v1544 = vadd.f32 0.0, %v1543
        %v1545 = vpop.f32.mrb[0].mxu0
        %v1546 = vpop.f32.mrb[0].mxu0
        %v1547 = vadd.f32 0.0, %v1546
        %v1548 = vpop.f32.mrb[0].mxu0
        %1549 = vdwg.mxu0
        %s1550 = scalar_lea.vmem [#allocation5], 64
        %v1551 = vld [vmem:[%s1550] sm:$0xf]
        %v1552 = vld [vmem:[%s1550 + $0x4] sm:$0xf]
        %v1553 = vld [vmem:[%s1550 + $0x8] sm:$0xf]
        %v1554 = vld [vmem:[%s1550 + $0xc] sm:$0xf]
        %v1555 = vld [vmem:[%s1550 + $0x10] sm:$0xf]
        %v1556 = vld [vmem:[%s1550 + $0x14] sm:$0xf]
        %v1557 = vld [vmem:[%s1550 + $0x18] sm:$0xf]
        %v1558 = vld [vmem:[%s1550 + $0x1c] sm:$0xf]
        %v1567 = vunpack.c.l.b16 %v1551
        %v1568 = vunpack.c.l.b16 %v1552
        %v1569 = vunpack.c.l.b16 %v1553
        %v1570 = vunpack.c.l.b16 %v1554
        %v1571 = vunpack.c.l.b16 %v1555
        %v1572 = vunpack.c.l.b16 %v1556
        %v1573 = vunpack.c.l.b16 %v1557
        %v1574 = vunpack.c.l.b16 %v1558
        %v1575 = vpack.c.b16 %v1568, %v1567
        %v1576 = vpack.c.b16 %v1570, %v1569
        %v1577 = vpack.c.b16 %v1572, %v1571
        %v1578 = vpack.c.b16 %v1574, %v1573
        %1583 = vmatprep.subr.bf16.mxu0 0
        %1584 = vmatpush1.bf16.msra.mxu0 %v1347
        %1585 = vmatprep.subr.bf16.mxu0 0
        %1586 = vmatpush1.bf16.msra.mxu0 %v1348
        %1587 = vmatprep.subr.bf16.mxu0 0
        %1588 = vmatpush1.bf16.msra.mxu0 %v1349
        %1589 = vmatprep.subr.bf16.mxu0 0
        %1590 = vmatpush1.bf16.msra.mxu0 %v1350
        %1591 = vmatprep.subr.bf16.mxu0 0
        %1592 = vmatpush1.bf16.msra.mxu0 %v1351
        %1593 = vmatprep.subr.bf16.mxu0 0
        %1594 = vmatpush1.bf16.msra.mxu0 %v1352
        %1595 = vmatprep.subr.bf16.mxu0 0
        %1596 = vmatpush1.bf16.msra.mxu0 %v1353
        %1597 = vmatprep.subr.bf16.mxu0 0
        %1598 = vmatpush1.bf16.msra.mxu0 %v1354
        %1599 = vmatprep.subr.bf16.mxu0 0
        %1600 = vmatpush1.bf16.msra.mxu0 0
        %1601 = vmatprep.subr.bf16.mxu0 0
        %1602 = vmatpush1.bf16.msra.mxu0 0
        %1603 = vmatprep.subr.bf16.mxu0 0
        %1604 = vmatpush1.bf16.msra.mxu0 0
        %1605 = vmatprep.subr.bf16.mxu0 0
        %1606 = vmatpush1.bf16.msra.mxu0 0
        %1607 = vmatprep.subr.bf16.mxu0 0
        %1608 = vmatpush1.bf16.msra.mxu0 0
        %1609 = vmatprep.subr.bf16.mxu0 0
        %1610 = vmatpush1.bf16.msra.mxu0 0
        %1611 = vmatprep.subr.bf16.mxu0 0
        %1612 = vmatpush1.bf16.msra.mxu0 0
        %1613 = vmatprep.subr.bf16.mxu0 0
        %1614 = vmatpush1.bf16.msra.mxu0 0
        %1615 = vmatprep.mubr.bf16.mxu0 0
        %1616 = vmatmul.mubr.bf16.gmra.mrb[0].mxu0 %v1575
        %v1617 = vpop.f32.mrb[0].mxu0
        %v1618 = vadd.f32 0.0, %v1617
        %v1619 = vpop.f32.mrb[0].mxu0
        %v1620 = vpop.f32.mrb[0].mxu0
        %v1621 = vadd.f32 0.0, %v1620
        %v1622 = vpop.f32.mrb[0].mxu0
        %1623 = vmatprep.mubr.bf16.mxu0 0
        %1624 = vmatmul.mubr.bf16.gmra.mrb[0].mxu0 %v1576
        %v1625 = vpop.f32.mrb[0].mxu0
        %v1626 = vadd.f32 0.0, %v1625
        %v1627 = vpop.f32.mrb[0].mxu0
        %v1628 = vpop.f32.mrb[0].mxu0
        %v1629 = vadd.f32 0.0, %v1628
        %v1630 = vpop.f32.mrb[0].mxu0
        %1631 = vmatprep.mubr.bf16.mxu0 0
        %1632 = vmatmul.mubr.bf16.gmra.mrb[0].mxu0 %v1577
        %v1633 = vpop.f32.mrb[0].mxu0
        %v1634 = vadd.f32 0.0, %v1633
        %v1635 = vpop.f32.mrb[0].mxu0
        %v1636 = vpop.f32.mrb[0].mxu0
        %v1637 = vadd.f32 0.0, %v1636
        %v1638 = vpop.f32.mrb[0].mxu0
        %1639 = vmatprep.mubr.bf16.mxu0 0
        %1640 = vmatmul.mubr.bf16.gmra.mrb[0].mxu0 %v1578
        %v1641 = vpop.f32.mrb[0].mxu0
        %v1642 = vadd.f32 0.0, %v1641
        %v1643 = vpop.f32.mrb[0].mxu0
        %v1644 = vpop.f32.mrb[0].mxu0
        %v1645 = vadd.f32 0.0, %v1644
        %v1646 = vpop.f32.mrb[0].mxu0
        %1647 = vdwg.mxu0
        %s1648 = scalar_lea.vmem [#allocation5], 96
        %v1649 = vld [vmem:[%s1648] sm:$0xf]
        %v1650 = vld [vmem:[%s1648 + $0x4] sm:$0xf]
        %v1651 = vld [vmem:[%s1648 + $0x8] sm:$0xf]
        %v1652 = vld [vmem:[%s1648 + $0xc] sm:$0xf]
        %v1653 = vld [vmem:[%s1648 + $0x10] sm:$0xf]
        %v1654 = vld [vmem:[%s1648 + $0x14] sm:$0xf]
        %v1655 = vld [vmem:[%s1648 + $0x18] sm:$0xf]
        %v1656 = vld [vmem:[%s1648 + $0x1c] sm:$0xf]
        %v1665 = vunpack.c.l.b16 %v1649
        %v1666 = vunpack.c.l.b16 %v1650
        %v1667 = vunpack.c.l.b16 %v1651
        %v1668 = vunpack.c.l.b16 %v1652
        %v1669 = vunpack.c.l.b16 %v1653
        %v1670 = vunpack.c.l.b16 %v1654
        %v1671 = vunpack.c.l.b16 %v1655
        %v1672 = vunpack.c.l.b16 %v1656
        %v1673 = vpack.c.b16 %v1666, %v1665
        %v1674 = vpack.c.b16 %v1668, %v1667
        %v1675 = vpack.c.b16 %v1670, %v1669
        %v1676 = vpack.c.b16 %v1672, %v1671
        %1681 = vmatprep.subr.bf16.mxu0 0
        %1682 = vmatpush1.bf16.msra.mxu0 %v1347
        %1683 = vmatprep.subr.bf16.mxu0 0
        %1684 = vmatpush1.bf16.msra.mxu0 %v1348
        %1685 = vmatprep.subr.bf16.mxu0 0
        %1686 = vmatpush1.bf16.msra.mxu0 %v1349
        %1687 = vmatprep.subr.bf16.mxu0 0
        %1688 = vmatpush1.bf16.msra.mxu0 %v1350
        %1689 = vmatprep.subr.bf16.mxu0 0
        %1690 = vmatpush1.bf16.msra.mxu0 %v1351
        %1691 = vmatprep.subr.bf16.mxu0 0
        %1692 = vmatpush1.bf16.msra.mxu0 %v1352
        %1693 = vmatprep.subr.bf16.mxu0 0
        %1694 = vmatpush1.bf16.msra.mxu0 %v1353
        %1695 = vmatprep.subr.bf16.mxu0 0
        %1696 = vmatpush1.bf16.msra.mxu0 %v1354
        %1697 = vmatprep.subr.bf16.mxu0 0
        %1698 = vmatpush1.bf16.msra.mxu0 0
        %1699 = vmatprep.subr.bf16.mxu0 0
        %1700 = vmatpush1.bf16.msra.mxu0 0
        %1701 = vmatprep.subr.bf16.mxu0 0
        %1702 = vmatpush1.bf16.msra.mxu0 0
        %1703 = vmatprep.subr.bf16.mxu0 0
        %1704 = vmatpush1.bf16.msra.mxu0 0
        %1705 = vmatprep.subr.bf16.mxu0 0
        %1706 = vmatpush1.bf16.msra.mxu0 0
        %1707 = vmatprep.subr.bf16.mxu0 0
        %1708 = vmatpush1.bf16.msra.mxu0 0
        %1709 = vmatprep.subr.bf16.mxu0 0
        %1710 = vmatpush1.bf16.msra.mxu0 0
        %1711 = vmatprep.subr.bf16.mxu0 0
        %1712 = vmatpush1.bf16.msra.mxu0 0
        %1713 = vmatprep.mubr.bf16.mxu0 0
        %1714 = vmatmul.mubr.bf16.gmra.mrb[0].mxu0 %v1673
        %v1715 = vpop.f32.mrb[0].mxu0
        %v1716 = vadd.f32 0.0, %v1715
        %v1717 = vpop.f32.mrb[0].mxu0
        %v1718 = vpop.f32.mrb[0].mxu0
        %v1719 = vadd.f32 0.0, %v1718
        %v1720 = vpop.f32.mrb[0].mxu0
        %1721 = vmatprep.mubr.bf16.mxu0 0
        %1722 = vmatmul.mubr.bf16.gmra.mrb[0].mxu0 %v1674
        %v1723 = vpop.f32.mrb[0].mxu0
        %v1724 = vadd.f32 0.0, %v1723
        %v1725 = vpop.f32.mrb[0].mxu0
        %v1726 = vpop.f32.mrb[0].mxu0
        %v1727 = vadd.f32 0.0, %v1726
        %v1728 = vpop.f32.mrb[0].mxu0
        %1729 = vmatprep.mubr.bf16.mxu0 0
        %1730 = vmatmul.mubr.bf16.gmra.mrb[0].mxu0 %v1675
        %v1731 = vpop.f32.mrb[0].mxu0
        %v1732 = vadd.f32 0.0, %v1731
        %v1733 = vpop.f32.mrb[0].mxu0
        %v1734 = vpop.f32.mrb[0].mxu0
        %v1735 = vadd.f32 0.0, %v1734
        %v1736 = vpop.f32.mrb[0].mxu0
        %1737 = vmatprep.mubr.bf16.mxu0 0
        %1738 = vmatmul.mubr.bf16.gmra.mrb[0].mxu0 %v1676
        %v1739 = vpop.f32.mrb[0].mxu0
        %v1740 = vadd.f32 0.0, %v1739
        %v1741 = vpop.f32.mrb[0].mxu0
        %v1742 = vpop.f32.mrb[0].mxu0
        %v1743 = vadd.f32 0.0, %v1742
        %v1744 = vpop.f32.mrb[0].mxu0
        %1745 = vdwg.mxu0
        %s1746 = scalar_lea.vmem [#allocation5], 128
        %v1747 = vld [vmem:[%s1746] sm:$0xf]
        %v1748 = vld [vmem:[%s1746 + $0x4] sm:$0xf]
        %v1749 = vld [vmem:[%s1746 + $0x8] sm:$0xf]
        %v1750 = vld [vmem:[%s1746 + $0xc] sm:$0xf]
        %v1751 = vld [vmem:[%s1746 + $0x10] sm:$0xf]
        %v1752 = vld [vmem:[%s1746 + $0x14] sm:$0xf]
        %v1753 = vld [vmem:[%s1746 + $0x18] sm:$0xf]
        %v1754 = vld [vmem:[%s1746 + $0x1c] sm:$0xf]
        %v1763 = vunpack.c.l.b16 %v1747
        %v1764 = vunpack.c.l.b16 %v1748
        %v1765 = vunpack.c.l.b16 %v1749
        %v1766 = vunpack.c.l.b16 %v1750
        %v1767 = vunpack.c.l.b16 %v1751
        %v1768 = vunpack.c.l.b16 %v1752
        %v1769 = vunpack.c.l.b16 %v1753
        %v1770 = vunpack.c.l.b16 %v1754
        %v1771 = vpack.c.b16 %v1764, %v1763
        %v1772 = vpack.c.b16 %v1766, %v1765
        %v1773 = vpack.c.b16 %v1768, %v1767
        %v1774 = vpack.c.b16 %v1770, %v1769
        %1779 = vmatprep.subr.bf16.mxu0 0
        %1780 = vmatpush1.bf16.msra.mxu0 %v1347
        %1781 = vmatprep.subr.bf16.mxu0 0
        %1782 = vmatpush1.bf16.msra.mxu0 %v1348
        %1783 = vmatprep.subr.bf16.mxu0 0
        %1784 = vmatpush1.bf16.msra.mxu0 %v1349
        %1785 = vmatprep.subr.bf16.mxu0 0
        %1786 = vmatpush1.bf16.msra.mxu0 %v1350
        %1787 = vmatprep.subr.bf16.mxu0 0
        %1788 = vmatpush1.bf16.msra.mxu0 %v1351
        %1789 = vmatprep.subr.bf16.mxu0 0
        %1790 = vmatpush1.bf16.msra.mxu0 %v1352
        %1791 = vmatprep.subr.bf16.mxu0 0
        %1792 = vmatpush1.bf16.msra.mxu0 %v1353
        %1793 = vmatprep.subr.bf16.mxu0 0
        %1794 = vmatpush1.bf16.msra.mxu0 %v1354
        %1795 = vmatprep.subr.bf16.mxu0 0
        %1796 = vmatpush1.bf16.msra.mxu0 0
        %1797 = vmatprep.subr.bf16.mxu0 0
        %1798 = vmatpush1.bf16.msra.mxu0 0
        %1799 = vmatprep.subr.bf16.mxu0 0
        %1800 = vmatpush1.bf16.msra.mxu0 0
        %1801 = vmatprep.subr.bf16.mxu0 0
        %1802 = vmatpush1.bf16.msra.mxu0 0
        %1803 = vmatprep.subr.bf16.mxu0 0
        %1804 = vmatpush1.bf16.msra.mxu0 0
        %1805 = vmatprep.subr.bf16.mxu0 0
        %1806 = vmatpush1.bf16.msra.mxu0 0
        %1807 = vmatprep.subr.bf16.mxu0 0
        %1808 = vmatpush1.bf16.msra.mxu0 0
        %1809 = vmatprep.subr.bf16.mxu0 0
        %1810 = vmatpush1.bf16.msra.mxu0 0
        %1811 = vmatprep.mubr.bf16.mxu0 0
        %1812 = vmatmul.mubr.bf16.gmra.mrb[0].mxu0 %v1771
        %v1813 = vpop.f32.mrb[0].mxu0
        %v1814 = vadd.f32 0.0, %v1813
        %v1815 = vpop.f32.mrb[0].mxu0
        %v1816 = vpop.f32.mrb[0].mxu0
        %v1817 = vadd.f32 0.0, %v1816
        %v1818 = vpop.f32.mrb[0].mxu0
        %1819 = vmatprep.mubr.bf16.mxu0 0
        %1820 = vmatmul.mubr.bf16.gmra.mrb[0].mxu0 %v1772
        %v1821 = vpop.f32.mrb[0].mxu0
        %v1822 = vadd.f32 0.0, %v1821
        %v1823 = vpop.f32.mrb[0].mxu0
        %v1824 = vpop.f32.mrb[0].mxu0
        %v1825 = vadd.f32 0.0, %v1824
        %v1826 = vpop.f32.mrb[0].mxu0
        %1827 = vmatprep.mubr.bf16.mxu0 0
        %1828 = vmatmul.mubr.bf16.gmra.mrb[0].mxu0 %v1773
        %v1829 = vpop.f32.mrb[0].mxu0
        %v1830 = vadd.f32 0.0, %v1829
        %v1831 = vpop.f32.mrb[0].mxu0
        %v1832 = vpop.f32.mrb[0].mxu0
        %v1833 = vadd.f32 0.0, %v1832
        %v1834 = vpop.f32.mrb[0].mxu0
        %1835 = vmatprep.mubr.bf16.mxu0 0
        %1836 = vmatmul.mubr.bf16.gmra.mrb[0].mxu0 %v1774
        %v1837 = vpop.f32.mrb[0].mxu0
        %v1838 = vadd.f32 0.0, %v1837
        %v1839 = vpop.f32.mrb[0].mxu0
        %v1840 = vpop.f32.mrb[0].mxu0
        %v1841 = vadd.f32 0.0, %v1840
        %v1842 = vpop.f32.mrb[0].mxu0
        %1843 = vdwg.mxu0
        %1852 = vrot.lane.b32.xlu0 %v1520, 48
        %v1853 = vpop.permute.xlu0 %1852
        %1854 = vrot.lane.b32.xlu0 %v1523, 48
        %v1855 = vpop.permute.xlu0 %1854
        %1856 = vrot.lane.b32.xlu0 %v1528, 48
        %v1857 = vpop.permute.xlu0 %1856
        %1858 = vrot.lane.b32.xlu0 %v1531, 48
        %v1859 = vpop.permute.xlu0 %1858
        %1860 = vrot.lane.b32.xlu0 %v1536, 48
        %v1861 = vpop.permute.xlu0 %1860
        %1862 = vrot.lane.b32.xlu0 %v1539, 48
        %v1863 = vpop.permute.xlu0 %1862
        %1864 = vrot.lane.b32.xlu0 %v1544, 48
        %v1865 = vpop.permute.xlu0 %1864
        %1866 = vrot.lane.b32.xlu0 %v1547, 48
        %v1867 = vpop.permute.xlu0 %1866
        %1884 = vrot.lane.b32.xlu0 %v1618, 96
        %v1885 = vpop.permute.xlu0 %1884
        %1886 = vrot.lane.b32.xlu0 %v1621, 96
        %v1887 = vpop.permute.xlu0 %1886
        %1888 = vrot.lane.b32.xlu0 %v1626, 96
        %v1889 = vpop.permute.xlu0 %1888
        %1890 = vrot.lane.b32.xlu0 %v1629, 96
        %v1891 = vpop.permute.xlu0 %1890
        %1892 = vrot.lane.b32.xlu0 %v1634, 96
        %v1893 = vpop.permute.xlu0 %1892
        %1894 = vrot.lane.b32.xlu0 %v1637, 96
        %v1895 = vpop.permute.xlu0 %1894
        %1896 = vrot.lane.b32.xlu0 %v1642, 96
        %v1897 = vpop.permute.xlu0 %1896
        %1898 = vrot.lane.b32.xlu0 %v1645, 96
        %v1899 = vpop.permute.xlu0 %1898
        %1916 = vrot.lane.b32.xlu0 %v1716, 16
        %v1917 = vpop.permute.xlu0 %1916
        %1918 = vrot.lane.b32.xlu0 %v1719, 16
        %v1919 = vpop.permute.xlu0 %1918
        %1920 = vrot.lane.b32.xlu0 %v1724, 16
        %v1921 = vpop.permute.xlu0 %1920
        %1922 = vrot.lane.b32.xlu0 %v1727, 16
        %v1923 = vpop.permute.xlu0 %1922
        %1924 = vrot.lane.b32.xlu0 %v1732, 16
        %v1925 = vpop.permute.xlu0 %1924
        %1926 = vrot.lane.b32.xlu0 %v1735, 16
        %v1927 = vpop.permute.xlu0 %1926
        %1928 = vrot.lane.b32.xlu0 %v1740, 16
        %v1929 = vpop.permute.xlu0 %1928
        %1930 = vrot.lane.b32.xlu0 %v1743, 16
        %v1931 = vpop.permute.xlu0 %1930
        %1948 = vrot.lane.b32.xlu0 %v1814, 64
        %v1949 = vpop.permute.xlu0 %1948
        %1950 = vrot.lane.b32.xlu0 %v1817, 64
        %v1951 = vpop.permute.xlu0 %1950
        %1952 = vrot.lane.b32.xlu0 %v1822, 64
        %v1953 = vpop.permute.xlu0 %1952
        %1954 = vrot.lane.b32.xlu0 %v1825, 64
        %v1955 = vpop.permute.xlu0 %1954
        %1956 = vrot.lane.b32.xlu0 %v1830, 64
        %v1957 = vpop.permute.xlu0 %1956
        %1958 = vrot.lane.b32.xlu0 %v1833, 64
        %v1959 = vpop.permute.xlu0 %1958
        %1960 = vrot.lane.b32.xlu0 %v1838, 64
        %v1961 = vpop.permute.xlu0 %1960
        %1962 = vrot.lane.b32.xlu0 %v1841, 64
        %v1963 = vpop.permute.xlu0 %1962
        %vm1972 = vcmask 392192
        %v1973 = vsel %vm1972, %v1422, %v1853
        %v1974 = vsel %vm1972, %v1425, %v1855
        %v1975 = vsel %vm1972, %v1430, %v1857
        %v1976 = vsel %vm1972, %v1433, %v1859
        %v1977 = vsel %vm1972, %v1438, %v1861
        %v1978 = vsel %vm1972, %v1441, %v1863
        %v1979 = vsel %vm1972, %v1446, %v1865
        %v1980 = vsel %vm1972, %v1449, %v1867
        %vm1981 = vcmask 785408
        %v1982 = vsel %vm1981, %v1973, %v1885
        %v1983 = vsel %vm1981, %v1974, %v1887
        %v1984 = vsel %vm1981, %v1975, %v1889
        %v1985 = vsel %vm1981, %v1976, %v1891
        %v1986 = vsel %vm1981, %v1977, %v1893
        %v1987 = vsel %vm1981, %v1978, %v1895
        %v1988 = vsel %vm1981, %v1979, %v1897
        %v1989 = vsel %vm1981, %v1980, %v1899
        %vm1990 = vcmask 130048
        %v1991 = vsel %vm1990, %v1885, %v1917
        %v1992 = vsel %vm1990, %v1887, %v1919
        %v1993 = vsel %vm1990, %v1889, %v1921
        %v1994 = vsel %vm1990, %v1891, %v1923
        %v1995 = vsel %vm1990, %v1893, %v1925
        %v1996 = vsel %vm1990, %v1895, %v1927
        %v1997 = vsel %vm1990, %v1897, %v1929
        %v1998 = vsel %vm1990, %v1899, %v1931
        %vm1999 = vcmask 523264
        %v2000 = vsel %vm1999, %v1991, %v1949
        %v2001 = vsel %vm1999, %v1992, %v1951
        %v2002 = vsel %vm1999, %v1993, %v1953
        %v2003 = vsel %vm1999, %v1994, %v1955
        %v2004 = vsel %vm1999, %v1995, %v1957
        %v2005 = vsel %vm1999, %v1996, %v1959
        %v2006 = vsel %vm1999, %v1997, %v1961
        %v2007 = vsel %vm1999, %v1998, %v1963
        %v2008 = vpack.c.bf16 %v1983, %v1982
        %v2009 = vpack.c.bf16 %v2001, %v2000
        %v2010 = vpack.c.bf16 %v1985, %v1984
        %v2011 = vpack.c.bf16 %v2003, %v2002
        %v2012 = vpack.c.bf16 %v1987, %v1986
        %v2013 = vpack.c.bf16 %v2005, %v2004
        %v2014 = vpack.c.bf16 %v1989, %v1988
        %v2015 = vpack.c.bf16 %v2007, %v2006
        %v2016 = vld [vmem:[%s7] sm:$0xf]
        %v2017 = vld [vmem:[%s7 + $0x4] sm:$0xf]
        %v2018 = vld [vmem:[%s7 + $0x8] sm:$0xf]
        %v2019 = vld [vmem:[%s7 + $0xc] sm:$0xf]
        %v2020 = vld [vmem:[%s7 + $0x10] sm:$0xf]
        %v2021 = vld [vmem:[%s7 + $0x14] sm:$0xf]
        %v2022 = vld [vmem:[%s7 + $0x18] sm:$0xf]
        %v2023 = vld [vmem:[%s7 + $0x1c] sm:$0xf]
        %v2024 = vld [vmem:[%s7 + $0x20] sm:$0xf]
        %v2025 = vld [vmem:[%s7 + $0x24] sm:$0xf]
        %v2026 = vld [vmem:[%s7 + $0x28] sm:$0xf]
        %v2027 = vld [vmem:[%s7 + $0x2c] sm:$0xf]
        %v2028 = vld [vmem:[%s7 + $0x30] sm:$0xf]
        %v2029 = vld [vmem:[%s7 + $0x34] sm:$0xf]
        %v2030 = vld [vmem:[%s7 + $0x38] sm:$0xf]
        %v2031 = vld [vmem:[%s7 + $0x3c] sm:$0xf]
        %v2032 = vld [vmem:[%s7 + $0x40] sm:$0xf]
        %v2033 = vld [vmem:[%s7 + $0x44] sm:$0xf]
        %v2034 = vld [vmem:[%s7 + $0x48] sm:$0xf]
        %v2035 = vld [vmem:[%s7 + $0x4c] sm:$0xf]
        %v2036 = vld [vmem:[%s7 + $0x50] sm:$0xf]
        %v2037 = vld [vmem:[%s7 + $0x54] sm:$0xf]
        %v2038 = vld [vmem:[%s7 + $0x58] sm:$0xf]
        %v2039 = vld [vmem:[%s7 + $0x5c] sm:$0xf]
        %v2040 = vld [vmem:[%s7 + $0x60] sm:$0xf]
        %v2041 = vld [vmem:[%s7 + $0x64] sm:$0xf]
        %v2042 = vld [vmem:[%s7 + $0x68] sm:$0xf]
        %v2043 = vld [vmem:[%s7 + $0x6c] sm:$0xf]
        %v2044 = vld [vmem:[%s7 + $0x70] sm:$0xf]
        %v2045 = vld [vmem:[%s7 + $0x74] sm:$0xf]
        %v2076 = vunpack.c.l.b16 %v2016
        %v2077 = vunpack.c.l.b16 %v2017
        %v2078 = vunpack.c.l.b16 %v2018
        %v2079 = vunpack.c.l.b16 %v2019
        %v2080 = vunpack.c.l.b16 %v2020
        %v2081 = vunpack.c.l.b16 %v2021
        %v2082 = vunpack.c.l.b16 %v2022
        %v2083 = vunpack.c.l.b16 %v2023
        %v2084 = vunpack.c.l.b16 %v2024
        %v2085 = vunpack.c.l.b16 %v2025
        %v2086 = vunpack.c.l.b16 %v2026
        %v2087 = vunpack.c.l.b16 %v2027
        %v2088 = vunpack.c.l.b16 %v2028
        %v2089 = vunpack.c.l.b16 %v2029
        %v2090 = vunpack.c.l.b16 %v2030
        %v2091 = vunpack.c.l.b16 %v2031
        %v2092 = vunpack.c.l.b16 %v2032
        %v2093 = vunpack.c.l.b16 %v2033
        %v2094 = vunpack.c.l.b16 %v2034
        %v2095 = vunpack.c.l.b16 %v2035
        %v2096 = vunpack.c.l.b16 %v2036
        %v2097 = vunpack.c.l.b16 %v2037
        %v2098 = vunpack.c.l.b16 %v2038
        %v2099 = vunpack.c.l.b16 %v2039
        %v2100 = vunpack.c.l.b16 %v2040
        %v2101 = vunpack.c.l.b16 %v2041
        %v2102 = vunpack.c.l.b16 %v2042
        %v2103 = vunpack.c.l.b16 %v2043
        %v2104 = vunpack.c.l.b16 %v2044
        %v2105 = vunpack.c.l.b16 %v2045
        %v2106 = vpack.c.b16 %v2077, %v2076
        %v2107 = vpack.c.b16 %v2079, %v2078
        %v2108 = vpack.c.b16 %v2081, %v2080
        %v2109 = vpack.c.b16 %v2083, %v2082
        %v2110 = vpack.c.b16 %v2085, %v2084
        %v2111 = vpack.c.b16 %v2087, %v2086
        %v2112 = vpack.c.b16 %v2089, %v2088
        %v2113 = vpack.c.b16 %v2091, %v2090
        %v2114 = vpack.c.b16 %v2093, %v2092
        %v2115 = vpack.c.b16 %v2095, %v2094
        %v2116 = vpack.c.b16 %v2097, %v2096
        %v2117 = vpack.c.b16 %v2099, %v2098
        %v2118 = vpack.c.b16 %v2101, %v2100
        %v2119 = vpack.c.b16 %v2103, %v2102
        %v2120 = vpack.c.b16 %v2105, %v2104
        %vm2136 = vcmask 916480
        %v2138 = vsel %vm2136, %v2009, 0
        %v2141 = vsel %vm2136, %v2011, 0
        %v2144 = vsel %vm2136, %v2013, 0
        %v2147 = vsel %vm2136, %v2015, 0
        %2149 = vmatprep.subr.bf16.mxu0 0
        %2150 = vmatpush1.bf16.msra.mxu0 %v2106
        %2151 = vmatprep.subr.bf16.mxu0 0
        %2152 = vmatpush1.bf16.msra.mxu0 %v2107
        %2153 = vmatprep.subr.bf16.mxu0 0
        %2154 = vmatpush1.bf16.msra.mxu0 %v2108
        %2155 = vmatprep.subr.bf16.mxu0 0
        %2156 = vmatpush1.bf16.msra.mxu0 %v2109
        %2157 = vmatprep.subr.bf16.mxu0 0
        %2158 = vmatpush1.bf16.msra.mxu0 %v2110
        %2159 = vmatprep.subr.bf16.mxu0 0
        %2160 = vmatpush1.bf16.msra.mxu0 %v2111
        %2161 = vmatprep.subr.bf16.mxu0 0
        %2162 = vmatpush1.bf16.msra.mxu0 %v2112
        %2163 = vmatprep.subr.bf16.mxu0 0
        %2164 = vmatpush1.bf16.msra.mxu0 %v2113
        %2165 = vmatprep.subr.bf16.mxu0 0
        %2166 = vmatpush1.bf16.msra.mxu0 %v2114
        %2167 = vmatprep.subr.bf16.mxu0 0
        %2168 = vmatpush1.bf16.msra.mxu0 %v2115
        %2169 = vmatprep.subr.bf16.mxu0 0
        %2170 = vmatpush1.bf16.msra.mxu0 %v2116
        %2171 = vmatprep.subr.bf16.mxu0 0
        %2172 = vmatpush1.bf16.msra.mxu0 %v2117
        %2173 = vmatprep.subr.bf16.mxu0 0
        %2174 = vmatpush1.bf16.msra.mxu0 %v2118
        %2175 = vmatprep.subr.bf16.mxu0 0
        %2176 = vmatpush1.bf16.msra.mxu0 %v2119
        %2177 = vmatprep.subr.bf16.mxu0 0
        %2178 = vmatpush1.bf16.msra.mxu0 %v2120
        %2179 = vmatprep.subr.bf16.mxu0 0
        %2180 = vmatpush1.bf16.msra.mxu0 0
        %2181 = vmatprep.mubr.bf16.mxu0 %v2138
        %2182 = vmatmul.mubr.bf16.gmra.mrb[0].mxu0 %v2008
        %v2183 = vpop.f32.mrb[0].mxu0
        %v2184 = vadd.f32 0.0, %v2183
        %v2185 = vpop.f32.mrb[0].mxu0
        %v2186 = vpop.f32.mrb[0].mxu0
        %v2187 = vadd.f32 0.0, %v2186
        %v2188 = vpop.f32.mrb[0].mxu0
        %2189 = vmatprep.mubr.bf16.mxu0 %v2141
        %2190 = vmatmul.mubr.bf16.gmra.mrb[0].mxu0 %v2010
        %v2191 = vpop.f32.mrb[0].mxu0
        %v2192 = vadd.f32 0.0, %v2191
        %v2193 = vpop.f32.mrb[0].mxu0
        %v2194 = vpop.f32.mrb[0].mxu0
        %v2195 = vadd.f32 0.0, %v2194
        %v2196 = vpop.f32.mrb[0].mxu0
        %2197 = vmatprep.mubr.bf16.mxu0 %v2144
        %2198 = vmatmul.mubr.bf16.gmra.mrb[0].mxu0 %v2012
        %v2199 = vpop.f32.mrb[0].mxu0
        %v2200 = vadd.f32 0.0, %v2199
        %v2201 = vpop.f32.mrb[0].mxu0
        %v2202 = vpop.f32.mrb[0].mxu0
        %v2203 = vadd.f32 0.0, %v2202
        %v2204 = vpop.f32.mrb[0].mxu0
        %2205 = vmatprep.mubr.bf16.mxu0 %v2147
        %2206 = vmatmul.mubr.bf16.gmra.mrb[0].mxu0 %v2014
        %v2207 = vpop.f32.mrb[0].mxu0
        %v2208 = vadd.f32 0.0, %v2207
        %v2209 = vpop.f32.mrb[0].mxu0
        %v2210 = vpop.f32.mrb[0].mxu0
        %v2211 = vadd.f32 0.0, %v2210
        %v2212 = vpop.f32.mrb[0].mxu0
        %2213 = vdwg.mxu0
        %v2214 = vld [vmem:[#allocation6] sm:$0x1]
        %v2216 = vlaneseq
        %v2217 = vshrl.u32 %v2216, 7
        %v2218 = vsub.s32 0, %v2217
        %v2219 = vrot.slane %v2214, %v2218
        %v2221 = vmul.f32 %v2184, %v2219
        %v2222 = vmul.f32 %v2187, %v2219
        %v2223 = vmul.f32 %v2192, %v2219
        %v2224 = vmul.f32 %v2195, %v2219
        %v2225 = vmul.f32 %v2200, %v2219
        %v2226 = vmul.f32 %v2203, %v2219
        %v2227 = vmul.f32 %v2208, %v2219
        %v2228 = vmul.f32 %v2211, %v2219
        %v2229 = vld [vmem:[#allocation8] sm:$0x1]
        %v2231 = vlaneseq
        %v2232 = vshrl.u32 %v2231, 7
        %v2233 = vsub.s32 0, %v2232
        %v2234 = vrot.slane %v2229, %v2233
        %v2236 = vadd.f32 %v2221, %v2234
        %v2237 = vadd.f32 %v2222, %v2234
        %v2238 = vadd.f32 %v2223, %v2234
        %v2239 = vadd.f32 %v2224, %v2234
        %v2240 = vadd.f32 %v2225, %v2234
        %v2241 = vadd.f32 %v2226, %v2234
        %v2242 = vadd.f32 %v2227, %v2234
        %v2243 = vadd.f32 %v2228, %v2234
        %s2244 = sld [smem:[#allocation2]]
        %vm2245 = vcmp.gt.f32.partialorder %v2236, 0.0
        %vm2246 = vcmp.gt.f32.partialorder %v2237, 0.0
        %vm2247 = vcmp.gt.f32.partialorder %v2238, 0.0
        %vm2248 = vcmp.gt.f32.partialorder %v2239, 0.0
        %vm2249 = vcmp.gt.f32.partialorder %v2240, 0.0
        %vm2250 = vcmp.gt.f32.partialorder %v2241, 0.0
        %vm2251 = vcmp.gt.f32.partialorder %v2242, 0.0
        %vm2252 = vcmp.gt.f32.partialorder %v2243, 0.0
        %v2253 = vstv %s2244
        %v2254 = vmul.f32 %v2253, %v2236
        %v2255 = vmul.f32 %v2253, %v2237
        %v2256 = vmul.f32 %v2253, %v2238
        %v2257 = vmul.f32 %v2253, %v2239
        %v2258 = vmul.f32 %v2253, %v2240
        %v2259 = vmul.f32 %v2253, %v2241
        %v2260 = vmul.f32 %v2253, %v2242
        %v2261 = vmul.f32 %v2253, %v2243
        %v2262 = vsel %vm2245, %v2236, %v2254
        %v2263 = vsel %vm2246, %v2237, %v2255
        %v2264 = vsel %vm2247, %v2238, %v2256
        %v2265 = vsel %vm2248, %v2239, %v2257
        %v2266 = vsel %vm2249, %v2240, %v2258
        %v2267 = vsel %vm2250, %v2241, %v2259
        %v2268 = vsel %vm2251, %v2242, %v2260
        %v2269 = vsel %vm2252, %v2243, %v2261
        %v2270 = vpack.c.bf16 %v2263, %v2262
        %v2271 = vpack.c.bf16 %v2265, %v2264
        %v2272 = vpack.c.bf16 %v2267, %v2266
        %v2273 = vpack.c.bf16 %v2269, %v2268
        %v2274 = vld [vmem:[#allocation9] sm:$0xf]
        %v2275 = vld [vmem:[#allocation9 + $0x4] sm:$0xf]
        %v2276 = vld [vmem:[#allocation9 + $0x8] sm:$0xf]
        %v2277 = vld [vmem:[#allocation9 + $0xc] sm:$0xf]
        %v2282 = vunpack.c.l.b16 %v2274
        %v2283 = vunpack.c.l.b16 %v2275
        %v2284 = vunpack.c.l.b16 %v2276
        %v2285 = vunpack.c.l.b16 %v2277
        %v2286 = vpack.c.b16 %v2283, %v2282
        %v2287 = vpack.c.b16 %v2285, %v2284
        %v2289 = vsel %vm1999, %v2286, 0
        %v2292 = vsel %vm1999, %v2287, 0
        %2294 = vmatprep.subr.bf16.mxu0 0
        %2295 = vmatpush1.bf16.msra.mxu0 %v2270
        %2296 = vmatprep.subr.bf16.mxu0 0
        %2297 = vmatpush1.bf16.msra.mxu0 %v2271
        %2298 = vmatprep.subr.bf16.mxu0 0
        %2299 = vmatpush1.bf16.msra.mxu0 %v2272
        %2300 = vmatprep.subr.bf16.mxu0 0
        %2301 = vmatpush1.bf16.msra.mxu0 %v2273
        %2302 = vmatprep.subr.bf16.mxu0 0
        %2303 = vmatpush1.bf16.msra.mxu0 0
        %2304 = vmatprep.subr.bf16.mxu0 0
        %2305 = vmatpush1.bf16.msra.mxu0 0
        %2306 = vmatprep.subr.bf16.mxu0 0
        %2307 = vmatpush1.bf16.msra.mxu0 0
        %2308 = vmatprep.subr.bf16.mxu0 0
        %2309 = vmatpush1.bf16.msra.mxu0 0
        %2310 = vmatprep.subr.bf16.mxu0 0
        %2311 = vmatpush1.bf16.msra.mxu0 0
        %2312 = vmatprep.subr.bf16.mxu0 0
        %2313 = vmatpush1.bf16.msra.mxu0 0
        %2314 = vmatprep.subr.bf16.mxu0 0
        %2315 = vmatpush1.bf16.msra.mxu0 0
        %2316 = vmatprep.subr.bf16.mxu0 0
        %2317 = vmatpush1.bf16.msra.mxu0 0
        %2318 = vmatprep.subr.bf16.mxu0 0
        %2319 = vmatpush1.bf16.msra.mxu0 0
        %2320 = vmatprep.subr.bf16.mxu0 0
        %2321 = vmatpush1.bf16.msra.mxu0 0
        %2322 = vmatprep.subr.bf16.mxu0 0
        %2323 = vmatpush1.bf16.msra.mxu0 0
        %2324 = vmatprep.subr.bf16.mxu0 0
        %2325 = vmatpush1.bf16.msra.mxu0 0
        %2326 = vmatprep.mubr.bf16.mxu0 0
        %2327 = vmatmul.mubr.bf16.gmra.mrb[0].mxu0 %v2289
        %v2328 = vpop.f32.mrb[0].mxu0
        %v2329 = vadd.f32 0.0, %v2328
        %v2330 = vpop.f32.mrb[0].mxu0
        %v2331 = vpop.f32.mrb[0].mxu0
        %v2332 = vadd.f32 0.0, %v2331
        %v2333 = vpop.f32.mrb[0].mxu0
        %2334 = vmatprep.mubr.bf16.mxu0 0
        %2335 = vmatmul.mubr.bf16.gmra.mrb[0].mxu0 %v2292
        %v2336 = vpop.f32.mrb[0].mxu0
        %v2337 = vadd.f32 0.0, %v2336
        %v2338 = vpop.f32.mrb[0].mxu0
        %v2339 = vpop.f32.mrb[0].mxu0
        %v2340 = vadd.f32 0.0, %v2339
        %v2341 = vpop.f32.mrb[0].mxu0
        %2342 = vdwg.mxu0
        %s2343 = scalar_lea.vmem [#allocation9], 16
        %v2344 = vld [vmem:[%s2343] sm:$0xf]
        %v2345 = vld [vmem:[%s2343 + $0x4] sm:$0xf]
        %v2346 = vld [vmem:[%s2343 + $0x8] sm:$0xf]
        %v2347 = vld [vmem:[%s2343 + $0xc] sm:$0xf]
        %v2352 = vunpack.c.l.b16 %v2344
        %v2353 = vunpack.c.l.b16 %v2345
        %v2354 = vunpack.c.l.b16 %v2346
        %v2355 = vunpack.c.l.b16 %v2347
        %v2356 = vpack.c.b16 %v2353, %v2352
        %v2357 = vpack.c.b16 %v2355, %v2354
        %v2359 = vsel %vm1999, %v2356, 0
        %v2362 = vsel %vm1999, %v2357, 0
        %2364 = vmatprep.subr.bf16.mxu0 0
        %2365 = vmatpush1.bf16.msra.mxu0 %v2270
        %2366 = vmatprep.subr.bf16.mxu0 0
        %2367 = vmatpush1.bf16.msra.mxu0 %v2271
        %2368 = vmatprep.subr.bf16.mxu0 0
        %2369 = vmatpush1.bf16.msra.mxu0 %v2272
        %2370 = vmatprep.subr.bf16.mxu0 0
        %2371 = vmatpush1.bf16.msra.mxu0 %v2273
        %2372 = vmatprep.subr.bf16.mxu0 0
        %2373 = vmatpush1.bf16.msra.mxu0 0
        %2374 = vmatprep.subr.bf16.mxu0 0
        %2375 = vmatpush1.bf16.msra.mxu0 0
        %2376 = vmatprep.subr.bf16.mxu0 0
        %2377 = vmatpush1.bf16.msra.mxu0 0
        %2378 = vmatprep.subr.bf16.mxu0 0
        %2379 = vmatpush1.bf16.msra.mxu0 0
        %2380 = vmatprep.subr.bf16.mxu0 0
        %2381 = vmatpush1.bf16.msra.mxu0 0
        %2382 = vmatprep.subr.bf16.mxu0 0
        %2383 = vmatpush1.bf16.msra.mxu0 0
        %2384 = vmatprep.subr.bf16.mxu0 0
        %2385 = vmatpush1.bf16.msra.mxu0 0
        %2386 = vmatprep.subr.bf16.mxu0 0
        %2387 = vmatpush1.bf16.msra.mxu0 0
        %2388 = vmatprep.subr.bf16.mxu0 0
        %2389 = vmatpush1.bf16.msra.mxu0 0
        %2390 = vmatprep.subr.bf16.mxu0 0
        %2391 = vmatpush1.bf16.msra.mxu0 0
        %2392 = vmatprep.subr.bf16.mxu0 0
        %2393 = vmatpush1.bf16.msra.mxu0 0
        %2394 = vmatprep.subr.bf16.mxu0 0
        %2395 = vmatpush1.bf16.msra.mxu0 0
        %2396 = vmatprep.mubr.bf16.mxu0 0
        %2397 = vmatmul.mubr.bf16.gmra.mrb[0].mxu0 %v2359
        %v2398 = vpop.f32.mrb[0].mxu0
        %v2399 = vadd.f32 0.0, %v2398
        %v2400 = vpop.f32.mrb[0].mxu0
        %v2401 = vpop.f32.mrb[0].mxu0
        %v2402 = vadd.f32 0.0, %v2401
        %v2403 = vpop.f32.mrb[0].mxu0
        %2404 = vmatprep.mubr.bf16.mxu0 0
        %2405 = vmatmul.mubr.bf16.gmra.mrb[0].mxu0 %v2362
        %v2406 = vpop.f32.mrb[0].mxu0
        %v2407 = vadd.f32 0.0, %v2406
        %v2408 = vpop.f32.mrb[0].mxu0
        %v2409 = vpop.f32.mrb[0].mxu0
        %v2410 = vadd.f32 0.0, %v2409
        %v2411 = vpop.f32.mrb[0].mxu0
        %2412 = vdwg.mxu0
        %s2413 = scalar_lea.vmem [#allocation9], 32
        %v2414 = vld [vmem:[%s2413] sm:$0xf]
        %v2415 = vld [vmem:[%s2413 + $0x4] sm:$0xf]
        %v2416 = vld [vmem:[%s2413 + $0x8] sm:$0xf]
        %v2417 = vld [vmem:[%s2413 + $0xc] sm:$0xf]
        %v2422 = vunpack.c.l.b16 %v2414
        %v2423 = vunpack.c.l.b16 %v2415
        %v2424 = vunpack.c.l.b16 %v2416
        %v2425 = vunpack.c.l.b16 %v2417
        %v2426 = vpack.c.b16 %v2423, %v2422
        %v2427 = vpack.c.b16 %v2425, %v2424
        %v2429 = vsel %vm1999, %v2426, 0
        %v2432 = vsel %vm1999, %v2427, 0
        %2434 = vmatprep.subr.bf16.mxu0 0
        %2435 = vmatpush1.bf16.msra.mxu0 %v2270
        %2436 = vmatprep.subr.bf16.mxu0 0
        %2437 = vmatpush1.bf16.msra.mxu0 %v2271
        %2438 = vmatprep.subr.bf16.mxu0 0
        %2439 = vmatpush1.bf16.msra.mxu0 %v2272
        %2440 = vmatprep.subr.bf16.mxu0 0
        %2441 = vmatpush1.bf16.msra.mxu0 %v2273
        %2442 = vmatprep.subr.bf16.mxu0 0
        %2443 = vmatpush1.bf16.msra.mxu0 0
        %2444 = vmatprep.subr.bf16.mxu0 0
        %2445 = vmatpush1.bf16.msra.mxu0 0
        %2446 = vmatprep.subr.bf16.mxu0 0
        %2447 = vmatpush1.bf16.msra.mxu0 0
        %2448 = vmatprep.subr.bf16.mxu0 0
        %2449 = vmatpush1.bf16.msra.mxu0 0
        %2450 = vmatprep.subr.bf16.mxu0 0
        %2451 = vmatpush1.bf16.msra.mxu0 0
        %2452 = vmatprep.subr.bf16.mxu0 0
        %2453 = vmatpush1.bf16.msra.mxu0 0
        %2454 = vmatprep.subr.bf16.mxu0 0
        %2455 = vmatpush1.bf16.msra.mxu0 0
        %2456 = vmatprep.subr.bf16.mxu0 0
        %2457 = vmatpush1.bf16.msra.mxu0 0
        %2458 = vmatprep.subr.bf16.mxu0 0
        %2459 = vmatpush1.bf16.msra.mxu0 0
        %2460 = vmatprep.subr.bf16.mxu0 0
        %2461 = vmatpush1.bf16.msra.mxu0 0
        %2462 = vmatprep.subr.bf16.mxu0 0
        %2463 = vmatpush1.bf16.msra.mxu0 0
        %2464 = vmatprep.subr.bf16.mxu0 0
        %2465 = vmatpush1.bf16.msra.mxu0 0
        %2466 = vmatprep.mubr.bf16.mxu0 0
        %2467 = vmatmul.mubr.bf16.gmra.mrb[0].mxu0 %v2429
        %v2468 = vpop.f32.mrb[0].mxu0
        %v2469 = vadd.f32 0.0, %v2468
        %v2470 = vpop.f32.mrb[0].mxu0
        %v2471 = vpop.f32.mrb[0].mxu0
        %v2472 = vadd.f32 0.0, %v2471
        %v2473 = vpop.f32.mrb[0].mxu0
        %2474 = vmatprep.mubr.bf16.mxu0 0
        %2475 = vmatmul.mubr.bf16.gmra.mrb[0].mxu0 %v2432
        %v2476 = vpop.f32.mrb[0].mxu0
        %v2477 = vadd.f32 0.0, %v2476
        %v2478 = vpop.f32.mrb[0].mxu0
        %v2479 = vpop.f32.mrb[0].mxu0
        %v2480 = vadd.f32 0.0, %v2479
        %v2481 = vpop.f32.mrb[0].mxu0
        %2482 = vdwg.mxu0
        %s2483 = scalar_lea.vmem [#allocation9], 48
        %v2484 = vld [vmem:[%s2483] sm:$0xf]
        %v2485 = vld [vmem:[%s2483 + $0x4] sm:$0xf]
        %v2486 = vld [vmem:[%s2483 + $0x8] sm:$0xf]
        %v2487 = vld [vmem:[%s2483 + $0xc] sm:$0xf]
        %v2492 = vunpack.c.l.b16 %v2484
        %v2493 = vunpack.c.l.b16 %v2485
        %v2494 = vunpack.c.l.b16 %v2486
        %v2495 = vunpack.c.l.b16 %v2487
        %v2496 = vpack.c.b16 %v2493, %v2492
        %v2497 = vpack.c.b16 %v2495, %v2494
        %v2499 = vsel %vm1999, %v2496, 0
        %v2502 = vsel %vm1999, %v2497, 0
        %2504 = vmatprep.subr.bf16.mxu0 0
        %2505 = vmatpush1.bf16.msra.mxu0 %v2270
        %2506 = vmatprep.subr.bf16.mxu0 0
        %2507 = vmatpush1.bf16.msra.mxu0 %v2271
        %2508 = vmatprep.subr.bf16.mxu0 0
        %2509 = vmatpush1.bf16.msra.mxu0 %v2272
        %2510 = vmatprep.subr.bf16.mxu0 0
        %2511 = vmatpush1.bf16.msra.mxu0 %v2273
        %2512 = vmatprep.subr.bf16.mxu0 0
        %2513 = vmatpush1.bf16.msra.mxu0 0
        %2514 = vmatprep.subr.bf16.mxu0 0
        %2515 = vmatpush1.bf16.msra.mxu0 0
        %2516 = vmatprep.subr.bf16.mxu0 0
        %2517 = vmatpush1.bf16.msra.mxu0 0
        %2518 = vmatprep.subr.bf16.mxu0 0
        %2519 = vmatpush1.bf16.msra.mxu0 0
        %2520 = vmatprep.subr.bf16.mxu0 0
        %2521 = vmatpush1.bf16.msra.mxu0 0
        %2522 = vmatprep.subr.bf16.mxu0 0
        %2523 = vmatpush1.bf16.msra.mxu0 0
        %2524 = vmatprep.subr.bf16.mxu0 0
        %2525 = vmatpush1.bf16.msra.mxu0 0
        %2526 = vmatprep.subr.bf16.mxu0 0
        %2527 = vmatpush1.bf16.msra.mxu0 0
        %2528 = vmatprep.subr.bf16.mxu0 0
        %2529 = vmatpush1.bf16.msra.mxu0 0
        %2530 = vmatprep.subr.bf16.mxu0 0
        %2531 = vmatpush1.bf16.msra.mxu0 0
        %2532 = vmatprep.subr.bf16.mxu0 0
        %2533 = vmatpush1.bf16.msra.mxu0 0
        %2534 = vmatprep.subr.bf16.mxu0 0
        %2535 = vmatpush1.bf16.msra.mxu0 0
        %2536 = vmatprep.mubr.bf16.mxu0 0
        %2537 = vmatmul.mubr.bf16.gmra.mrb[0].mxu0 %v2499
        %v2538 = vpop.f32.mrb[0].mxu0
        %v2539 = vadd.f32 0.0, %v2538
        %v2540 = vpop.f32.mrb[0].mxu0
        %v2541 = vpop.f32.mrb[0].mxu0
        %v2542 = vadd.f32 0.0, %v2541
        %v2543 = vpop.f32.mrb[0].mxu0
        %2544 = vmatprep.mubr.bf16.mxu0 0
        %2545 = vmatmul.mubr.bf16.gmra.mrb[0].mxu0 %v2502
        %v2546 = vpop.f32.mrb[0].mxu0
        %v2547 = vadd.f32 0.0, %v2546
        %v2548 = vpop.f32.mrb[0].mxu0
        %v2549 = vpop.f32.mrb[0].mxu0
        %v2550 = vadd.f32 0.0, %v2549
        %v2551 = vpop.f32.mrb[0].mxu0
        %2552 = vdwg.mxu0
        %s2553 = scalar_lea.vmem [#allocation9], 64
        %v2554 = vld [vmem:[%s2553] sm:$0xf]
        %v2555 = vld [vmem:[%s2553 + $0x4] sm:$0xf]
        %v2556 = vld [vmem:[%s2553 + $0x8] sm:$0xf]
        %v2557 = vld [vmem:[%s2553 + $0xc] sm:$0xf]
        %v2562 = vunpack.c.l.b16 %v2554
        %v2563 = vunpack.c.l.b16 %v2555
        %v2564 = vunpack.c.l.b16 %v2556
        %v2565 = vunpack.c.l.b16 %v2557
        %v2566 = vpack.c.b16 %v2563, %v2562
        %v2567 = vpack.c.b16 %v2565, %v2564
        %v2569 = vsel %vm1999, %v2566, 0
        %v2572 = vsel %vm1999, %v2567, 0
        %2574 = vmatprep.subr.bf16.mxu0 0
        %2575 = vmatpush1.bf16.msra.mxu0 %v2270
        %2576 = vmatprep.subr.bf16.mxu0 0
        %2577 = vmatpush1.bf16.msra.mxu0 %v2271
        %2578 = vmatprep.subr.bf16.mxu0 0
        %2579 = vmatpush1.bf16.msra.mxu0 %v2272
        %2580 = vmatprep.subr.bf16.mxu0 0
        %2581 = vmatpush1.bf16.msra.mxu0 %v2273
        %2582 = vmatprep.subr.bf16.mxu0 0
        %2583 = vmatpush1.bf16.msra.mxu0 0
        %2584 = vmatprep.subr.bf16.mxu0 0
        %2585 = vmatpush1.bf16.msra.mxu0 0
        %2586 = vmatprep.subr.bf16.mxu0 0
        %2587 = vmatpush1.bf16.msra.mxu0 0
        %2588 = vmatprep.subr.bf16.mxu0 0
        %2589 = vmatpush1.bf16.msra.mxu0 0
        %2590 = vmatprep.subr.bf16.mxu0 0
        %2591 = vmatpush1.bf16.msra.mxu0 0
        %2592 = vmatprep.subr.bf16.mxu0 0
        %2593 = vmatpush1.bf16.msra.mxu0 0
        %2594 = vmatprep.subr.bf16.mxu0 0
        %2595 = vmatpush1.bf16.msra.mxu0 0
        %2596 = vmatprep.subr.bf16.mxu0 0
        %2597 = vmatpush1.bf16.msra.mxu0 0
        %2598 = vmatprep.subr.bf16.mxu0 0
        %2599 = vmatpush1.bf16.msra.mxu0 0
        %2600 = vmatprep.subr.bf16.mxu0 0
        %2601 = vmatpush1.bf16.msra.mxu0 0
        %2602 = vmatprep.subr.bf16.mxu0 0
        %2603 = vmatpush1.bf16.msra.mxu0 0
        %2604 = vmatprep.subr.bf16.mxu0 0
        %2605 = vmatpush1.bf16.msra.mxu0 0
        %2606 = vmatprep.mubr.bf16.mxu0 0
        %2607 = vmatmul.mubr.bf16.gmra.mrb[0].mxu0 %v2569
        %v2608 = vpop.f32.mrb[0].mxu0
        %v2609 = vadd.f32 0.0, %v2608
        %v2610 = vpop.f32.mrb[0].mxu0
        %v2611 = vpop.f32.mrb[0].mxu0
        %v2612 = vadd.f32 0.0, %v2611
        %v2613 = vpop.f32.mrb[0].mxu0
        %2614 = vmatprep.mubr.bf16.mxu0 0
        %2615 = vmatmul.mubr.bf16.gmra.mrb[0].mxu0 %v2572
        %v2616 = vpop.f32.mrb[0].mxu0
        %v2617 = vadd.f32 0.0, %v2616
        %v2618 = vpop.f32.mrb[0].mxu0
        %v2619 = vpop.f32.mrb[0].mxu0
        %v2620 = vadd.f32 0.0, %v2619
        %v2621 = vpop.f32.mrb[0].mxu0
        %2622 = vdwg.mxu0
        %v2623 = vpack.c.bf16 %v2332, %v2329
        %v2624 = vpack.c.bf16 %v2402, %v2399
        %v2625 = vpack.c.bf16 %v2472, %v2469
        %v2626 = vpack.c.bf16 %v2542, %v2539
        %v2627 = vpack.c.bf16 %v2612, %v2609
        %v2628 = vpack.c.bf16 %v2340, %v2337
        %v2629 = vpack.c.bf16 %v2410, %v2407
        %v2630 = vpack.c.bf16 %v2480, %v2477
        %v2631 = vpack.c.bf16 %v2550, %v2547
        %v2632 = vpack.c.bf16 %v2620, %v2617
        %v2633 = vld [vmem:[#allocation11] sm:$0xf]
        %v2634 = vld [vmem:[#allocation11 + $0x4] sm:$0xf]
        %v2635 = vld [vmem:[#allocation11 + $0x8] sm:$0xf]
        %v2636 = vld [vmem:[#allocation11 + $0xc] sm:$0xf]
        %v2637 = vld [vmem:[#allocation11 + $0x10] sm:$0xf]
        %v2638 = vld [vmem:[#allocation11 + $0x14] sm:$0xf]
        %v2639 = vld [vmem:[#allocation11 + $0x18] sm:$0xf]
        %v2640 = vld [vmem:[#allocation11 + $0x1c] sm:$0xf]
        %v2641 = vld [vmem:[#allocation11 + $0x20] sm:$0xf]
        %v2642 = vld [vmem:[#allocation11 + $0x24] sm:$0xf]
        %v2643 = vld [vmem:[#allocation11 + $0x28] sm:$0xf]
        %v2644 = vld [vmem:[#allocation11 + $0x2c] sm:$0xf]
        %v2645 = vld [vmem:[#allocation11 + $0x30] sm:$0xf]
        %v2646 = vld [vmem:[#allocation11 + $0x34] sm:$0xf]
        %v2647 = vld [vmem:[#allocation11 + $0x38] sm:$0xf]
        %v2648 = vld [vmem:[#allocation11 + $0x3c] sm:$0xf]
        %v2649 = vld [vmem:[#allocation11 + $0x40] sm:$0xf]
        %v2650 = vld [vmem:[#allocation11 + $0x44] sm:$0xf]
        %v2651 = vld [vmem:[#allocation11 + $0x48] sm:$0xf]
        %v2652 = vld [vmem:[#allocation11 + $0x4c] sm:$0xf]
        %v2653 = vld [vmem:[#allocation11 + $0x50] sm:$0xf]
        %v2654 = vld [vmem:[#allocation11 + $0x54] sm:$0xf]
        %v2655 = vld [vmem:[#allocation11 + $0x58] sm:$0xf]
        %v2656 = vld [vmem:[#allocation11 + $0x5c] sm:$0xf]
        %v2657 = vld [vmem:[#allocation11 + $0x60] sm:$0xf]
        %v2658 = vld [vmem:[#allocation11 + $0x64] sm:$0xf]
        %v2659 = vld [vmem:[#allocation11 + $0x68] sm:$0xf]
        %v2660 = vld [vmem:[#allocation11 + $0x6c] sm:$0xf]
        %v2661 = vld [vmem:[#allocation11 + $0x70] sm:$0xf]
        %v2662 = vld [vmem:[#allocation11 + $0x74] sm:$0xf]
        %v2663 = vld [vmem:[#allocation11 + $0x78] sm:$0xf]
        %v2664 = vld [vmem:[#allocation11 + $0x7c] sm:$0xf]
        %v2665 = vld [vmem:[#allocation11 + $0x80] sm:$0xf]
        %v2666 = vld [vmem:[#allocation11 + $0x84] sm:$0xf]
        %v2667 = vld [vmem:[#allocation11 + $0x88] sm:$0xf]
        %v2668 = vld [vmem:[#allocation11 + $0x8c] sm:$0xf]
        %v2669 = vld [vmem:[#allocation11 + $0x90] sm:$0xf]
        %v2670 = vld [vmem:[#allocation11 + $0x94] sm:$0xf]
        %v2671 = vld [vmem:[#allocation11 + $0x98] sm:$0xf]
        %v2672 = vld [vmem:[#allocation11 + $0x9c] sm:$0xf]
        %v2673 = vld [vmem:[#allocation11 + $0xa0] sm:$0xf]
        %v2674 = vld [vmem:[#allocation11 + $0xa4] sm:$0xf]
        %v2675 = vld [vmem:[#allocation11 + $0xa8] sm:$0xf]
        %v2676 = vld [vmem:[#allocation11 + $0xac] sm:$0xf]
        %v2677 = vld [vmem:[#allocation11 + $0xb0] sm:$0xf]
        %v2678 = vld [vmem:[#allocation11 + $0xb4] sm:$0xf]
        %v2679 = vld [vmem:[#allocation11 + $0xb8] sm:$0xf]
        %v2680 = vld [vmem:[#allocation11 + $0xbc] sm:$0xf]
        %v2681 = vld [vmem:[#allocation11 + $0xc0] sm:$0xf]
        %v2682 = vld [vmem:[#allocation11 + $0xc4] sm:$0xf]
        %v2683 = vld [vmem:[#allocation11 + $0xc8] sm:$0xf]
        %v2684 = vld [vmem:[#allocation11 + $0xcc] sm:$0xf]
        %v2685 = vld [vmem:[#allocation11 + $0xd0] sm:$0xf]
        %v2686 = vld [vmem:[#allocation11 + $0xd4] sm:$0xf]
        %v2687 = vld [vmem:[#allocation11 + $0xd8] sm:$0xf]
        %v2688 = vld [vmem:[#allocation11 + $0xdc] sm:$0xf]
        %v2689 = vld [vmem:[#allocation11 + $0xe0] sm:$0xf]
        %v2690 = vld [vmem:[#allocation11 + $0xe4] sm:$0xf]
        %v2691 = vld [vmem:[#allocation11 + $0xe8] sm:$0xf]
        %v2692 = vld [vmem:[#allocation11 + $0xec] sm:$0xf]
        %v2693 = vld [vmem:[#allocation11 + $0xf0] sm:$0xf]
        %v2694 = vld [vmem:[#allocation11 + $0xf4] sm:$0xf]
        %v2695 = vld [vmem:[#allocation11 + $0xf8] sm:$0xf]
        %v2696 = vld [vmem:[#allocation11 + $0xfc] sm:$0xf]
        %v2697 = vld [vmem:[#allocation11 + $0x100] sm:$0xf]
        %v2698 = vld [vmem:[#allocation11 + $0x104] sm:$0xf]
        %v2699 = vld [vmem:[#allocation11 + $0x108] sm:$0xf]
        %v2700 = vld [vmem:[#allocation11 + $0x10c] sm:$0xf]
        %v2701 = vld [vmem:[#allocation11 + $0x110] sm:$0xf]
        %v2702 = vld [vmem:[#allocation11 + $0x114] sm:$0xf]
        %v2703 = vld [vmem:[#allocation11 + $0x118] sm:$0xf]
        %v2704 = vld [vmem:[#allocation11 + $0x11c] sm:$0xf]
        %v2705 = vld [vmem:[#allocation11 + $0x120] sm:$0xf]
        %v2706 = vld [vmem:[#allocation11 + $0x124] sm:$0xf]
        %v2707 = vld [vmem:[#allocation11 + $0x128] sm:$0xf]
        %v2708 = vld [vmem:[#allocation11 + $0x12c] sm:$0xf]
        %v2709 = vld [vmem:[#allocation11 + $0x130] sm:$0xf]
        %v2710 = vld [vmem:[#allocation11 + $0x134] sm:$0xf]
        %v2711 = vld [vmem:[#allocation11 + $0x138] sm:$0xf]
        %v2712 = vld [vmem:[#allocation11 + $0x13c] sm:$0xf]
        %v2793 = vunpack.c.l.b16 %v2633
        %v2794 = vunpack.c.l.b16 %v2634
        %v2795 = vunpack.c.l.b16 %v2635
        %v2796 = vunpack.c.l.b16 %v2636
        %v2797 = vunpack.c.l.b16 %v2637
        %v2798 = vunpack.c.l.b16 %v2638
        %v2799 = vunpack.c.l.b16 %v2639
        %v2800 = vunpack.c.l.b16 %v2640
        %v2801 = vunpack.c.l.b16 %v2641
        %v2802 = vunpack.c.l.b16 %v2642
        %v2803 = vunpack.c.l.b16 %v2643
        %v2804 = vunpack.c.l.b16 %v2644
        %v2805 = vunpack.c.l.b16 %v2645
        %v2806 = vunpack.c.l.b16 %v2646
        %v2807 = vunpack.c.l.b16 %v2647
        %v2808 = vunpack.c.l.b16 %v2648
        %v2809 = vunpack.c.l.b16 %v2649
        %v2810 = vunpack.c.l.b16 %v2650
        %v2811 = vunpack.c.l.b16 %v2651
        %v2812 = vunpack.c.l.b16 %v2652
        %v2813 = vunpack.c.l.b16 %v2653
        %v2814 = vunpack.c.l.b16 %v2654
        %v2815 = vunpack.c.l.b16 %v2655
        %v2816 = vunpack.c.l.b16 %v2656
        %v2817 = vunpack.c.l.b16 %v2657
        %v2818 = vunpack.c.l.b16 %v2658
        %v2819 = vunpack.c.l.b16 %v2659
        %v2820 = vunpack.c.l.b16 %v2660
        %v2821 = vunpack.c.l.b16 %v2661
        %v2822 = vunpack.c.l.b16 %v2662
        %v2823 = vunpack.c.l.b16 %v2663
        %v2824 = vunpack.c.l.b16 %v2664
        %v2825 = vunpack.c.l.b16 %v2665
        %v2826 = vunpack.c.l.b16 %v2666
        %v2827 = vunpack.c.l.b16 %v2667
        %v2828 = vunpack.c.l.b16 %v2668
        %v2829 = vunpack.c.l.b16 %v2669
        %v2830 = vunpack.c.l.b16 %v2670
        %v2831 = vunpack.c.l.b16 %v2671
        %v2832 = vunpack.c.l.b16 %v2672
        %v2833 = vunpack.c.l.b16 %v2673
        %v2834 = vunpack.c.l.b16 %v2674
        %v2835 = vunpack.c.l.b16 %v2675
        %v2836 = vunpack.c.l.b16 %v2676
        %v2837 = vunpack.c.l.b16 %v2677
        %v2838 = vunpack.c.l.b16 %v2678
        %v2839 = vunpack.c.l.b16 %v2679
        %v2840 = vunpack.c.l.b16 %v2680
        %v2841 = vunpack.c.l.b16 %v2681
        %v2842 = vunpack.c.l.b16 %v2682
        %v2843 = vunpack.c.l.b16 %v2683
        %v2844 = vunpack.c.l.b16 %v2684
        %v2845 = vunpack.c.l.b16 %v2685
        %v2846 = vunpack.c.l.b16 %v2686
        %v2847 = vunpack.c.l.b16 %v2687
        %v2848 = vunpack.c.l.b16 %v2688
        %v2849 = vunpack.c.l.b16 %v2689
        %v2850 = vunpack.c.l.b16 %v2690
        %v2851 = vunpack.c.l.b16 %v2691
        %v2852 = vunpack.c.l.b16 %v2692
        %v2853 = vunpack.c.l.b16 %v2693
        %v2854 = vunpack.c.l.b16 %v2694
        %v2855 = vunpack.c.l.b16 %v2695
        %v2856 = vunpack.c.l.b16 %v2696
        %v2857 = vunpack.c.l.b16 %v2697
        %v2858 = vunpack.c.l.b16 %v2698
        %v2859 = vunpack.c.l.b16 %v2699
        %v2860 = vunpack.c.l.b16 %v2700
        %v2861 = vunpack.c.l.b16 %v2701
        %v2862 = vunpack.c.l.b16 %v2702
        %v2863 = vunpack.c.l.b16 %v2703
        %v2864 = vunpack.c.l.b16 %v2704
        %v2865 = vunpack.c.l.b16 %v2705
        %v2866 = vunpack.c.l.b16 %v2706
        %v2867 = vunpack.c.l.b16 %v2707
        %v2868 = vunpack.c.l.b16 %v2708
        %v2869 = vunpack.c.l.b16 %v2709
        %v2870 = vunpack.c.l.b16 %v2710
        %v2871 = vunpack.c.l.b16 %v2711
        %v2872 = vunpack.c.l.b16 %v2712
        %v2873 = vpack.c.b16 %v2794, %v2793
        %v2874 = vpack.c.b16 %v2796, %v2795
        %v2875 = vpack.c.b16 %v2798, %v2797
        %v2876 = vpack.c.b16 %v2800, %v2799
        %v2877 = vpack.c.b16 %v2802, %v2801
        %v2878 = vpack.c.b16 %v2804, %v2803
        %v2879 = vpack.c.b16 %v2806, %v2805
        %v2880 = vpack.c.b16 %v2808, %v2807
        %v2881 = vpack.c.b16 %v2810, %v2809
        %v2882 = vpack.c.b16 %v2812, %v2811
        %v2883 = vpack.c.b16 %v2814, %v2813
        %v2884 = vpack.c.b16 %v2816, %v2815
        %v2885 = vpack.c.b16 %v2818, %v2817
        %v2886 = vpack.c.b16 %v2820, %v2819
        %v2887 = vpack.c.b16 %v2822, %v2821
        %v2888 = vpack.c.b16 %v2824, %v2823
        %v2889 = vpack.c.b16 %v2826, %v2825
        %v2890 = vpack.c.b16 %v2828, %v2827
        %v2891 = vpack.c.b16 %v2830, %v2829
        %v2892 = vpack.c.b16 %v2832, %v2831
        %v2893 = vpack.c.b16 %v2834, %v2833
        %v2894 = vpack.c.b16 %v2836, %v2835
        %v2895 = vpack.c.b16 %v2838, %v2837
        %v2896 = vpack.c.b16 %v2840, %v2839
        %v2897 = vpack.c.b16 %v2842, %v2841
        %v2898 = vpack.c.b16 %v2844, %v2843
        %v2899 = vpack.c.b16 %v2846, %v2845
        %v2900 = vpack.c.b16 %v2848, %v2847
        %v2901 = vpack.c.b16 %v2850, %v2849
        %v2902 = vpack.c.b16 %v2852, %v2851
        %v2903 = vpack.c.b16 %v2854, %v2853
        %v2904 = vpack.c.b16 %v2856, %v2855
        %v2905 = vpack.c.b16 %v2858, %v2857
        %v2906 = vpack.c.b16 %v2860, %v2859
        %v2907 = vpack.c.b16 %v2862, %v2861
        %v2908 = vpack.c.b16 %v2864, %v2863
        %v2909 = vpack.c.b16 %v2866, %v2865
        %v2910 = vpack.c.b16 %v2868, %v2867
        %v2911 = vpack.c.b16 %v2870, %v2869
        %v2912 = vpack.c.b16 %v2872, %v2871
        %2953 = vmatprep.subr.bf16.mxu0 0
        %2954 = vmatpush1.bf16.msra.mxu0 %v2873
        %2955 = vmatprep.subr.bf16.mxu0 0
        %2956 = vmatpush1.bf16.msra.mxu0 %v2874
        %2957 = vmatprep.subr.bf16.mxu0 0
        %2958 = vmatpush1.bf16.msra.mxu0 %v2875
        %2959 = vmatprep.subr.bf16.mxu0 0
        %2960 = vmatpush1.bf16.msra.mxu0 %v2876
        %2961 = vmatprep.subr.bf16.mxu0 0
        %2962 = vmatpush1.bf16.msra.mxu0 %v2877
        %2963 = vmatprep.subr.bf16.mxu0 0
        %2964 = vmatpush1.bf16.msra.mxu0 %v2878
        %2965 = vmatprep.subr.bf16.mxu0 0
        %2966 = vmatpush1.bf16.msra.mxu0 %v2879
        %2967 = vmatprep.subr.bf16.mxu0 0
        %2968 = vmatpush1.bf16.msra.mxu0 %v2880
        %2969 = vmatprep.subr.bf16.mxu0 0
        %2970 = vmatpush1.bf16.msra.mxu0 %v2881
        %2971 = vmatprep.subr.bf16.mxu0 0
        %2972 = vmatpush1.bf16.msra.mxu0 %v2882
        %2973 = vmatprep.subr.bf16.mxu0 0
        %2974 = vmatpush1.bf16.msra.mxu0 %v2883
        %2975 = vmatprep.subr.bf16.mxu0 0
        %2976 = vmatpush1.bf16.msra.mxu0 %v2884
        %2977 = vmatprep.subr.bf16.mxu0 0
        %2978 = vmatpush1.bf16.msra.mxu0 %v2885
        %2979 = vmatprep.subr.bf16.mxu0 0
        %2980 = vmatpush1.bf16.msra.mxu0 %v2886
        %2981 = vmatprep.subr.bf16.mxu0 0
        %2982 = vmatpush1.bf16.msra.mxu0 %v2887
        %2983 = vmatprep.subr.bf16.mxu0 0
        %2984 = vmatpush1.bf16.msra.mxu0 %v2888
        %2985 = vmatprep.mubr.bf16.mxu0 %v2624
        %2986 = vmatmul.mubr.bf16.gmra.mrb[0].mxu0 %v2623
        %v2987 = vpop.f32.mrb[0].mxu0
        %v2988 = vadd.f32 0.0, %v2987
        %v2989 = vpop.f32.mrb[0].mxu0
        %v2990 = vpop.f32.mrb[0].mxu0
        %v2991 = vadd.f32 0.0, %v2990
        %v2992 = vpop.f32.mrb[0].mxu0
        %2993 = vmatprep.mubr.bf16.mxu0 %v2629
        %2994 = vmatmul.mubr.bf16.gmra.mrb[0].mxu0 %v2628
        %v2995 = vpop.f32.mrb[0].mxu0
        %v2996 = vadd.f32 0.0, %v2995
        %v2997 = vpop.f32.mrb[0].mxu0
        %v2998 = vpop.f32.mrb[0].mxu0
        %v2999 = vadd.f32 0.0, %v2998
        %v3000 = vpop.f32.mrb[0].mxu0
        %3001 = vdwg.mxu0
        %3002 = vmatprep.subr.bf16.mxu0 0
        %3003 = vmatpush1.bf16.msra.mxu0 %v2889
        %3004 = vmatprep.subr.bf16.mxu0 0
        %3005 = vmatpush1.bf16.msra.mxu0 %v2890
        %3006 = vmatprep.subr.bf16.mxu0 0
        %3007 = vmatpush1.bf16.msra.mxu0 %v2891
        %3008 = vmatprep.subr.bf16.mxu0 0
        %3009 = vmatpush1.bf16.msra.mxu0 %v2892
        %3010 = vmatprep.subr.bf16.mxu0 0
        %3011 = vmatpush1.bf16.msra.mxu0 %v2893
        %3012 = vmatprep.subr.bf16.mxu0 0
        %3013 = vmatpush1.bf16.msra.mxu0 %v2894
        %3014 = vmatprep.subr.bf16.mxu0 0
        %3015 = vmatpush1.bf16.msra.mxu0 %v2895
        %3016 = vmatprep.subr.bf16.mxu0 0
        %3017 = vmatpush1.bf16.msra.mxu0 %v2896
        %3018 = vmatprep.subr.bf16.mxu0 0
        %3019 = vmatpush1.bf16.msra.mxu0 %v2897
        %3020 = vmatprep.subr.bf16.mxu0 0
        %3021 = vmatpush1.bf16.msra.mxu0 %v2898
        %3022 = vmatprep.subr.bf16.mxu0 0
        %3023 = vmatpush1.bf16.msra.mxu0 %v2899
        %3024 = vmatprep.subr.bf16.mxu0 0
        %3025 = vmatpush1.bf16.msra.mxu0 %v2900
        %3026 = vmatprep.subr.bf16.mxu0 0
        %3027 = vmatpush1.bf16.msra.mxu0 %v2901
        %3028 = vmatprep.subr.bf16.mxu0 0
        %3029 = vmatpush1.bf16.msra.mxu0 %v2902
        %3030 = vmatprep.subr.bf16.mxu0 0
        %3031 = vmatpush1.bf16.msra.mxu0 %v2903
        %3032 = vmatprep.subr.bf16.mxu0 0
        %3033 = vmatpush1.bf16.msra.mxu0 %v2904
        %3034 = vmatprep.mubr.bf16.mxu0 %v2626
        %3035 = vmatmul.mubr.bf16.gmra.mrb[0].mxu0 %v2625
        %v3036 = vpop.f32.mrb[0].mxu0
        %v3037 = vadd.f32 %v2988, %v3036
        %v3038 = vpop.f32.mrb[0].mxu0
        %v3039 = vpop.f32.mrb[0].mxu0
        %v3040 = vadd.f32 %v2991, %v3039
        %v3041 = vpop.f32.mrb[0].mxu0
        %3042 = vmatprep.mubr.bf16.mxu0 %v2631
        %3043 = vmatmul.mubr.bf16.gmra.mrb[0].mxu0 %v2630
        %v3044 = vpop.f32.mrb[0].mxu0
        %v3045 = vadd.f32 %v2996, %v3044
        %v3046 = vpop.f32.mrb[0].mxu0
        %v3047 = vpop.f32.mrb[0].mxu0
        %v3048 = vadd.f32 %v2999, %v3047
        %v3049 = vpop.f32.mrb[0].mxu0
        %3050 = vdwg.mxu0
        %3051 = vmatprep.subr.bf16.mxu0 0
        %3052 = vmatpush1.bf16.msra.mxu0 %v2905
        %3053 = vmatprep.subr.bf16.mxu0 0
        %3054 = vmatpush1.bf16.msra.mxu0 %v2906
        %3055 = vmatprep.subr.bf16.mxu0 0
        %3056 = vmatpush1.bf16.msra.mxu0 %v2907
        %3057 = vmatprep.subr.bf16.mxu0 0
        %3058 = vmatpush1.bf16.msra.mxu0 %v2908
        %3059 = vmatprep.subr.bf16.mxu0 0
        %3060 = vmatpush1.bf16.msra.mxu0 %v2909
        %3061 = vmatprep.subr.bf16.mxu0 0
        %3062 = vmatpush1.bf16.msra.mxu0 %v2910
        %3063 = vmatprep.subr.bf16.mxu0 0
        %3064 = vmatpush1.bf16.msra.mxu0 %v2911
        %3065 = vmatprep.subr.bf16.mxu0 0
        %3066 = vmatpush1.bf16.msra.mxu0 %v2912
        %3067 = vmatprep.subr.bf16.mxu0 0
        %3068 = vmatpush1.bf16.msra.mxu0 0
        %3069 = vmatprep.subr.bf16.mxu0 0
        %3070 = vmatpush1.bf16.msra.mxu0 0
        %3071 = vmatprep.subr.bf16.mxu0 0
        %3072 = vmatpush1.bf16.msra.mxu0 0
        %3073 = vmatprep.subr.bf16.mxu0 0
        %3074 = vmatpush1.bf16.msra.mxu0 0
        %3075 = vmatprep.subr.bf16.mxu0 0
        %3076 = vmatpush1.bf16.msra.mxu0 0
        %3077 = vmatprep.subr.bf16.mxu0 0
        %3078 = vmatpush1.bf16.msra.mxu0 0
        %3079 = vmatprep.subr.bf16.mxu0 0
        %3080 = vmatpush1.bf16.msra.mxu0 0
        %3081 = vmatprep.subr.bf16.mxu0 0
        %3082 = vmatpush1.bf16.msra.mxu0 0
        %3083 = vmatprep.mubr.bf16.mxu0 0
        %3084 = vmatmul.mubr.bf16.gmra.mrb[0].mxu0 %v2627
        %v3085 = vpop.f32.mrb[0].mxu0
        %v3086 = vadd.f32 %v3037, %v3085
        %v3087 = vpop.f32.mrb[0].mxu0
        %v3088 = vpop.f32.mrb[0].mxu0
        %v3089 = vadd.f32 %v3040, %v3088
        %v3090 = vpop.f32.mrb[0].mxu0
        %3091 = vmatprep.mubr.bf16.mxu0 0
        %3092 = vmatmul.mubr.bf16.gmra.mrb[0].mxu0 %v2632
        %v3093 = vpop.f32.mrb[0].mxu0
        %v3094 = vadd.f32 %v3045, %v3093
        %v3095 = vpop.f32.mrb[0].mxu0
        %v3096 = vpop.f32.mrb[0].mxu0
        %v3097 = vadd.f32 %v3048, %v3096
        %v3098 = vpop.f32.mrb[0].mxu0
        %3099 = vdwg.mxu0
        %v3100 = vld [vmem:[#allocation12] sm:$0x1]
        %v3102 = vlaneseq
        %v3103 = vshrl.u32 %v3102, 7
        %v3104 = vsub.s32 0, %v3103
        %v3105 = vrot.slane %v3100, %v3104
        %v3107 = vmul.f32 %v3086, %v3105
        %v3108 = vmul.f32 %v3089, %v3105
        %v3109 = vmul.f32 %v3094, %v3105
        %v3110 = vmul.f32 %v3097, %v3105
        %v3111 = vld [vmem:[#allocation14] sm:$0x1]
        %v3113 = vlaneseq
        %v3114 = vshrl.u32 %v3113, 7
        %v3115 = vsub.s32 0, %v3114
        %v3116 = vrot.slane %v3111, %v3115
        %v3118 = vadd.f32 %v3107, %v3116
        %v3119 = vadd.f32 %v3108, %v3116
        %v3120 = vadd.f32 %v3109, %v3116
        %v3121 = vadd.f32 %v3110, %v3116
        %s3122 = sld [smem:[#allocation2 + $0x1]]
        %vm3123 = vcmp.gt.f32.partialorder %v3118, 0.0
        %vm3124 = vcmp.gt.f32.partialorder %v3119, 0.0
        %vm3125 = vcmp.gt.f32.partialorder %v3120, 0.0
        %vm3126 = vcmp.gt.f32.partialorder %v3121, 0.0
        %v3127 = vstv %s3122
        %v3128 = vmul.f32 %v3127, %v3118
        %v3129 = vmul.f32 %v3127, %v3119
        %v3130 = vmul.f32 %v3127, %v3120
        %v3131 = vmul.f32 %v3127, %v3121
        %v3132 = vsel %vm3123, %v3118, %v3128
        %v3133 = vsel %vm3124, %v3119, %v3129
        %v3134 = vsel %vm3125, %v3120, %v3130
        %v3135 = vsel %vm3126, %v3121, %v3131
        %v3140 = vcombine.high %v3132, %v3132
        %v3141 = vcombine.high %v3133, %v3133
        %v3142 = vcombine.high %v3134, %v3134
        %v3143 = vcombine.high %v3135, %v3135
        %v3144 = vrot.slane %v3132, 6
        %v3145 = vrot.slane %v3140, 6
        %v3146 = vrot.slane %v3133, 6
        %v3147 = vrot.slane %v3141, 6
        %v3148 = vrot.slane %v3134, 6
        %v3149 = vrot.slane %v3142, 6
        %v3150 = vrot.slane %v3135, 6
        %v3151 = vrot.slane %v3143, 6
        %vm3160 = vcmask 1041408
        %v3161 = vsel %vm3160, 0.0, %v3144
        %v3162 = vsel %vm3160, 0.0, %v3145
        %v3163 = vsel %vm3160, 0.0, %v3146
        %v3164 = vsel %vm3160, 0.0, %v3147
        %v3165 = vsel %vm3160, 0.0, %v3148
        %v3166 = vsel %vm3160, 0.0, %v3149
        %v3167 = vsel %vm3160, 0.0, %v3150
        %v3168 = vsel %vm3160, 0.0, %v3151
        %vm3169 = vcmask 1045504
        %v3170 = vsel %vm3169, %v3161, 0.0
        %v3171 = vsel %vm3169, %v3162, 0.0
        %v3172 = vsel %vm3169, %v3163, 0.0
        %v3173 = vsel %vm3169, %v3164, 0.0
        %v3174 = vsel %vm3169, %v3165, 0.0
        %v3175 = vsel %vm3169, %v3166, 0.0
        %v3176 = vsel %vm3169, %v3167, 0.0
        %v3177 = vsel %vm3169, %v3168, 0.0
        %v3186 = vrot.slane %v3170, 1
        %v3187 = vrot.slane %v3171, 1
        %v3188 = vrot.slane %v3172, 1
        %v3189 = vrot.slane %v3173, 1
        %v3190 = vrot.slane %v3174, 1
        %v3191 = vrot.slane %v3175, 1
        %v3192 = vrot.slane %v3176, 1
        %v3193 = vrot.slane %v3177, 1
        %v3194 = vrot.slane %v3170, 2
        %v3195 = vrot.slane %v3171, 2
        %v3196 = vrot.slane %v3172, 2
        %v3197 = vrot.slane %v3173, 2
        %v3198 = vrot.slane %v3174, 2
        %v3199 = vrot.slane %v3175, 2
        %v3200 = vrot.slane %v3176, 2
        %v3201 = vrot.slane %v3177, 2
        %v3202 = vrot.slane %v3170, 3
        %v3203 = vrot.slane %v3171, 3
        %v3204 = vrot.slane %v3172, 3
        %v3205 = vrot.slane %v3173, 3
        %v3206 = vrot.slane %v3174, 3
        %v3207 = vrot.slane %v3175, 3
        %v3208 = vrot.slane %v3176, 3
        %v3209 = vrot.slane %v3177, 3
        %v3210 = vrot.slane %v3170, 4
        %v3211 = vrot.slane %v3171, 4
        %v3212 = vrot.slane %v3172, 4
        %v3213 = vrot.slane %v3173, 4
        %v3214 = vrot.slane %v3174, 4
        %v3215 = vrot.slane %v3175, 4
        %v3216 = vrot.slane %v3176, 4
        %v3217 = vrot.slane %v3177, 4
        %v3218 = vcombine.low %v3170, %v3186
        %v3219 = vcombine.low %v3194, %v3202
        %v3220 = vcombine.low %v3171, %v3187
        %v3221 = vcombine.low %v3195, %v3203
        %v3222 = vcombine.low %v3172, %v3188
        %v3223 = vcombine.low %v3196, %v3204
        %v3224 = vcombine.low %v3173, %v3189
        %v3225 = vcombine.low %v3197, %v3205
        %v3226 = vcombine.low %v3174, %v3190
        %v3227 = vcombine.low %v3198, %v3206
        %v3228 = vcombine.low %v3175, %v3191
        %v3229 = vcombine.low %v3199, %v3207
        %v3230 = vcombine.low %v3176, %v3192
        %v3231 = vcombine.low %v3200, %v3208
        %v3232 = vcombine.low %v3177, %v3193
        %v3233 = vcombine.low %v3201, %v3209
        %v3234 = vcombine.low %v3218, %v3220
        %v3235 = vcombine.high %v3218, %v3220
        %v3236 = vcombine.low %v3219, %v3221
        %v3237 = vcombine.high %v3219, %v3221
        %v3238 = vcombine.low %v3210, %v3211
        %v3239 = vcombine.low %v3222, %v3224
        %v3240 = vcombine.high %v3222, %v3224
        %v3241 = vcombine.low %v3223, %v3225
        %v3242 = vcombine.high %v3223, %v3225
        %v3243 = vcombine.low %v3212, %v3213
        %v3244 = vcombine.low %v3226, %v3228
        %v3245 = vcombine.high %v3226, %v3228
        %v3246 = vcombine.low %v3227, %v3229
        %v3247 = vcombine.high %v3227, %v3229
        %v3248 = vcombine.low %v3214, %v3215
        %v3249 = vcombine.low %v3230, %v3232
        %v3250 = vcombine.high %v3230, %v3232
        %v3251 = vcombine.low %v3231, %v3233
        %v3252 = vcombine.high %v3231, %v3233
        %v3253 = vcombine.low %v3216, %v3217
        %v3274 = vpack.c.bf16 %v3239, %v3234
        %v3275 = vpack.c.bf16 %v3240, %v3235
        %v3276 = vpack.c.bf16 %v3241, %v3236
        %v3277 = vpack.c.bf16 %v3242, %v3237
        %v3278 = vpack.c.bf16 %v3243, %v3238
        %v3279 = vpack.c.bf16 %v3249, %v3244
        %v3280 = vpack.c.bf16 %v3250, %v3245
        %v3281 = vpack.c.bf16 %v3251, %v3246
        %v3282 = vpack.c.bf16 %v3252, %v3247
        %v3283 = vpack.c.bf16 %v3253, %v3248
        %v3284 = vld [vmem:[%s21] sm:$0xf]
        %v3285 = vld [vmem:[%s21 + $0x4] sm:$0xf]
        %v3286 = vld [vmem:[%s21 + $0x8] sm:$0xf]
        %v3287 = vld [vmem:[%s21 + $0xc] sm:$0xf]
        %v3288 = vld [vmem:[%s21 + $0x10] sm:$0xf]
        %v3289 = vld [vmem:[%s21 + $0x14] sm:$0xf]
        %v3290 = vld [vmem:[%s21 + $0x18] sm:$0xf]
        %v3291 = vld [vmem:[%s21 + $0x1c] sm:$0xf]
        %v3292 = vld [vmem:[%s21 + $0x20] sm:$0xf]
        %v3293 = vld [vmem:[%s21 + $0x24] sm:$0xf]
        %v3294 = vld [vmem:[%s21 + $0x28] sm:$0xf]
        %v3295 = vld [vmem:[%s21 + $0x2c] sm:$0xf]
        %v3296 = vld [vmem:[%s21 + $0x30] sm:$0xf]
        %v3297 = vld [vmem:[%s21 + $0x34] sm:$0xf]
        %v3298 = vld [vmem:[%s21 + $0x38] sm:$0xf]
        %v3299 = vld [vmem:[%s21 + $0x3c] sm:$0xf]
        %v3300 = vld [vmem:[%s21 + $0x40] sm:$0xf]
        %v3301 = vld [vmem:[%s21 + $0x44] sm:$0xf]
        %v3302 = vld [vmem:[%s21 + $0x48] sm:$0xf]
        %v3303 = vld [vmem:[%s21 + $0x4c] sm:$0xf]
        %v3304 = vld [vmem:[%s21 + $0x50] sm:$0xf]
        %v3305 = vld [vmem:[%s21 + $0x54] sm:$0xf]
        %v3306 = vld [vmem:[%s21 + $0x58] sm:$0xf]
        %v3307 = vld [vmem:[%s21 + $0x5c] sm:$0xf]
        %v3308 = vld [vmem:[%s21 + $0x60] sm:$0xf]
        %v3309 = vld [vmem:[%s21 + $0x64] sm:$0xf]
        %v3310 = vld [vmem:[%s21 + $0x68] sm:$0xf]
        %v3311 = vld [vmem:[%s21 + $0x6c] sm:$0xf]
        %v3312 = vld [vmem:[%s21 + $0x70] sm:$0xf]
        %v3313 = vld [vmem:[%s21 + $0x74] sm:$0xf]
        %v3314 = vld [vmem:[%s21 + $0x78] sm:$0xf]
        %v3315 = vld [vmem:[%s21 + $0x7c] sm:$0xf]
        %v3316 = vld [vmem:[%s21 + $0x80] sm:$0xf]
        %v3317 = vld [vmem:[%s21 + $0x84] sm:$0xf]
        %v3318 = vld [vmem:[%s21 + $0x88] sm:$0xf]
        %v3319 = vld [vmem:[%s21 + $0x8c] sm:$0xf]
        %v3320 = vld [vmem:[%s21 + $0x90] sm:$0xf]
        %v3321 = vld [vmem:[%s21 + $0x94] sm:$0xf]
        %v3322 = vld [vmem:[%s21 + $0x98] sm:$0xf]
        %v3323 = vld [vmem:[%s21 + $0x9c] sm:$0xf]
        %v3324 = vld [vmem:[%s21 + $0xa0] sm:$0xf]
        %v3325 = vld [vmem:[%s21 + $0xa4] sm:$0xf]
        %v3326 = vld [vmem:[%s21 + $0xa8] sm:$0xf]
        %v3327 = vld [vmem:[%s21 + $0xac] sm:$0xf]
        %v3328 = vld [vmem:[%s21 + $0xb0] sm:$0xf]
        %v3329 = vld [vmem:[%s21 + $0xb4] sm:$0xf]
        %v3330 = vld [vmem:[%s21 + $0xb8] sm:$0xf]
        %v3331 = vld [vmem:[%s21 + $0xbc] sm:$0xf]
        %v3332 = vld [vmem:[%s21 + $0xc0] sm:$0xf]
        %v3333 = vld [vmem:[%s21 + $0xc4] sm:$0xf]
        %v3334 = vld [vmem:[%s21 + $0xc8] sm:$0xf]
        %v3335 = vld [vmem:[%s21 + $0xcc] sm:$0xf]
        %v3336 = vld [vmem:[%s21 + $0xd0] sm:$0xf]
        %v3337 = vld [vmem:[%s21 + $0xd4] sm:$0xf]
        %v3338 = vld [vmem:[%s21 + $0xd8] sm:$0xf]
        %v3339 = vld [vmem:[%s21 + $0xdc] sm:$0xf]
        %v3340 = vld [vmem:[%s21 + $0xe0] sm:$0xf]
        %v3341 = vld [vmem:[%s21 + $0xe4] sm:$0xf]
        %v3342 = vld [vmem:[%s21 + $0xe8] sm:$0xf]
        %v3343 = vld [vmem:[%s21 + $0xec] sm:$0xf]
        %v3344 = vld [vmem:[%s21 + $0xf0] sm:$0xf]
        %v3345 = vld [vmem:[%s21 + $0xf4] sm:$0xf]
        %v3346 = vld [vmem:[%s21 + $0xf8] sm:$0xf]
        %v3347 = vld [vmem:[%s21 + $0xfc] sm:$0xf]
        %v3348 = vld [vmem:[%s21 + $0x100] sm:$0xf]
        %v3349 = vld [vmem:[%s21 + $0x104] sm:$0xf]
        %v3350 = vld [vmem:[%s21 + $0x108] sm:$0xf]
        %v3351 = vld [vmem:[%s21 + $0x10c] sm:$0xf]
        %v3352 = vld [vmem:[%s21 + $0x110] sm:$0xf]
        %v3353 = vld [vmem:[%s21 + $0x114] sm:$0xf]
        %v3354 = vld [vmem:[%s21 + $0x118] sm:$0xf]
        %v3355 = vld [vmem:[%s21 + $0x11c] sm:$0xf]
        %v3356 = vld [vmem:[%s21 + $0x120] sm:$0xf]
        %v3357 = vld [vmem:[%s21 + $0x124] sm:$0xf]
        %v3358 = vld [vmem:[%s21 + $0x128] sm:$0xf]
        %v3359 = vld [vmem:[%s21 + $0x12c] sm:$0xf]
        %v3360 = vld [vmem:[%s21 + $0x130] sm:$0xf]
        %v3361 = vld [vmem:[%s21 + $0x134] sm:$0xf]
        %v3362 = vld [vmem:[%s21 + $0x138] sm:$0xf]
        %v3363 = vld [vmem:[%s21 + $0x13c] sm:$0xf]
        %v3444 = vunpack.c.l.b16 %v3284
        %v3445 = vunpack.c.l.b16 %v3285
        %v3446 = vunpack.c.l.b16 %v3286
        %v3447 = vunpack.c.l.b16 %v3287
        %v3448 = vunpack.c.l.b16 %v3288
        %v3449 = vunpack.c.l.b16 %v3289
        %v3450 = vunpack.c.l.b16 %v3290
        %v3451 = vunpack.c.l.b16 %v3291
        %v3452 = vunpack.c.l.b16 %v3292
        %v3453 = vunpack.c.l.b16 %v3293
        %v3454 = vunpack.c.l.b16 %v3294
        %v3455 = vunpack.c.l.b16 %v3295
        %v3456 = vunpack.c.l.b16 %v3296
        %v3457 = vunpack.c.l.b16 %v3297
        %v3458 = vunpack.c.l.b16 %v3298
        %v3459 = vunpack.c.l.b16 %v3299
        %v3460 = vunpack.c.l.b16 %v3300
        %v3461 = vunpack.c.l.b16 %v3301
        %v3462 = vunpack.c.l.b16 %v3302
        %v3463 = vunpack.c.l.b16 %v3303
        %v3464 = vunpack.c.l.b16 %v3304
        %v3465 = vunpack.c.l.b16 %v3305
        %v3466 = vunpack.c.l.b16 %v3306
        %v3467 = vunpack.c.l.b16 %v3307
        %v3468 = vunpack.c.l.b16 %v3308
        %v3469 = vunpack.c.l.b16 %v3309
        %v3470 = vunpack.c.l.b16 %v3310
        %v3471 = vunpack.c.l.b16 %v3311
        %v3472 = vunpack.c.l.b16 %v3312
        %v3473 = vunpack.c.l.b16 %v3313
        %v3474 = vunpack.c.l.b16 %v3314
        %v3475 = vunpack.c.l.b16 %v3315
        %v3476 = vunpack.c.l.b16 %v3316
        %v3477 = vunpack.c.l.b16 %v3317
        %v3478 = vunpack.c.l.b16 %v3318
        %v3479 = vunpack.c.l.b16 %v3319
        %v3480 = vunpack.c.l.b16 %v3320
        %v3481 = vunpack.c.l.b16 %v3321
        %v3482 = vunpack.c.l.b16 %v3322
        %v3483 = vunpack.c.l.b16 %v3323
        %v3484 = vunpack.c.l.b16 %v3324
        %v3485 = vunpack.c.l.b16 %v3325
        %v3486 = vunpack.c.l.b16 %v3326
        %v3487 = vunpack.c.l.b16 %v3327
        %v3488 = vunpack.c.l.b16 %v3328
        %v3489 = vunpack.c.l.b16 %v3329
        %v3490 = vunpack.c.l.b16 %v3330
        %v3491 = vunpack.c.l.b16 %v3331
        %v3492 = vunpack.c.l.b16 %v3332
        %v3493 = vunpack.c.l.b16 %v3333
        %v3494 = vunpack.c.l.b16 %v3334
        %v3495 = vunpack.c.l.b16 %v3335
        %v3496 = vunpack.c.l.b16 %v3336
        %v3497 = vunpack.c.l.b16 %v3337
        %v3498 = vunpack.c.l.b16 %v3338
        %v3499 = vunpack.c.l.b16 %v3339
        %v3500 = vunpack.c.l.b16 %v3340
        %v3501 = vunpack.c.l.b16 %v3341
        %v3502 = vunpack.c.l.b16 %v3342
        %v3503 = vunpack.c.l.b16 %v3343
        %v3504 = vunpack.c.l.b16 %v3344
        %v3505 = vunpack.c.l.b16 %v3345
        %v3506 = vunpack.c.l.b16 %v3346
        %v3507 = vunpack.c.l.b16 %v3347
        %v3508 = vunpack.c.l.b16 %v3348
        %v3509 = vunpack.c.l.b16 %v3349
        %v3510 = vunpack.c.l.b16 %v3350
        %v3511 = vunpack.c.l.b16 %v3351
        %v3512 = vunpack.c.l.b16 %v3352
        %v3513 = vunpack.c.l.b16 %v3353
        %v3514 = vunpack.c.l.b16 %v3354
        %v3515 = vunpack.c.l.b16 %v3355
        %v3516 = vunpack.c.l.b16 %v3356
        %v3517 = vunpack.c.l.b16 %v3357
        %v3518 = vunpack.c.l.b16 %v3358
        %v3519 = vunpack.c.l.b16 %v3359
        %v3520 = vunpack.c.l.b16 %v3360
        %v3521 = vunpack.c.l.b16 %v3361
        %v3522 = vunpack.c.l.b16 %v3362
        %v3523 = vunpack.c.l.b16 %v3363
        %v3524 = vpack.c.b16 %v3445, %v3444
        %v3525 = vpack.c.b16 %v3447, %v3446
        %v3526 = vpack.c.b16 %v3449, %v3448
        %v3527 = vpack.c.b16 %v3451, %v3450
        %v3528 = vpack.c.b16 %v3453, %v3452
        %v3529 = vpack.c.b16 %v3455, %v3454
        %v3530 = vpack.c.b16 %v3457, %v3456
        %v3531 = vpack.c.b16 %v3459, %v3458
        %v3532 = vpack.c.b16 %v3461, %v3460
        %v3533 = vpack.c.b16 %v3463, %v3462
        %v3534 = vpack.c.b16 %v3465, %v3464
        %v3535 = vpack.c.b16 %v3467, %v3466
        %v3536 = vpack.c.b16 %v3469, %v3468
        %v3537 = vpack.c.b16 %v3471, %v3470
        %v3538 = vpack.c.b16 %v3473, %v3472
        %v3539 = vpack.c.b16 %v3475, %v3474
        %v3540 = vpack.c.b16 %v3477, %v3476
        %v3541 = vpack.c.b16 %v3479, %v3478
        %v3542 = vpack.c.b16 %v3481, %v3480
        %v3543 = vpack.c.b16 %v3483, %v3482
        %v3544 = vpack.c.b16 %v3485, %v3484
        %v3545 = vpack.c.b16 %v3487, %v3486
        %v3546 = vpack.c.b16 %v3489, %v3488
        %v3547 = vpack.c.b16 %v3491, %v3490
        %v3548 = vpack.c.b16 %v3493, %v3492
        %v3549 = vpack.c.b16 %v3495, %v3494
        %v3550 = vpack.c.b16 %v3497, %v3496
        %v3551 = vpack.c.b16 %v3499, %v3498
        %v3552 = vpack.c.b16 %v3501, %v3500
        %v3553 = vpack.c.b16 %v3503, %v3502
        %v3554 = vpack.c.b16 %v3505, %v3504
        %v3555 = vpack.c.b16 %v3507, %v3506
        %v3556 = vpack.c.b16 %v3509, %v3508
        %v3557 = vpack.c.b16 %v3511, %v3510
        %v3558 = vpack.c.b16 %v3513, %v3512
        %v3559 = vpack.c.b16 %v3515, %v3514
        %v3560 = vpack.c.b16 %v3517, %v3516
        %v3561 = vpack.c.b16 %v3519, %v3518
        %v3562 = vpack.c.b16 %v3521, %v3520
        %v3563 = vpack.c.b16 %v3523, %v3522
        %3604 = vmatprep.subr.bf16.mxu0 0
        %3605 = vmatpush1.bf16.msra.mxu0 %v3524
        %3606 = vmatprep.subr.bf16.mxu0 0
        %3607 = vmatpush1.bf16.msra.mxu0 %v3525
        %3608 = vmatprep.subr.bf16.mxu0 0
        %3609 = vmatpush1.bf16.msra.mxu0 %v3526
        %3610 = vmatprep.subr.bf16.mxu0 0
        %3611 = vmatpush1.bf16.msra.mxu0 %v3527
        %3612 = vmatprep.subr.bf16.mxu0 0
        %3613 = vmatpush1.bf16.msra.mxu0 %v3528
        %3614 = vmatprep.subr.bf16.mxu0 0
        %3615 = vmatpush1.bf16.msra.mxu0 %v3529
        %3616 = vmatprep.subr.bf16.mxu0 0
        %3617 = vmatpush1.bf16.msra.mxu0 %v3530
        %3618 = vmatprep.subr.bf16.mxu0 0
        %3619 = vmatpush1.bf16.msra.mxu0 %v3531
        %3620 = vmatprep.subr.bf16.mxu0 0
        %3621 = vmatpush1.bf16.msra.mxu0 %v3532
        %3622 = vmatprep.subr.bf16.mxu0 0
        %3623 = vmatpush1.bf16.msra.mxu0 %v3533
        %3624 = vmatprep.subr.bf16.mxu0 0
        %3625 = vmatpush1.bf16.msra.mxu0 %v3534
        %3626 = vmatprep.subr.bf16.mxu0 0
        %3627 = vmatpush1.bf16.msra.mxu0 %v3535
        %3628 = vmatprep.subr.bf16.mxu0 0
        %3629 = vmatpush1.bf16.msra.mxu0 %v3536
        %3630 = vmatprep.subr.bf16.mxu0 0
        %3631 = vmatpush1.bf16.msra.mxu0 %v3537
        %3632 = vmatprep.subr.bf16.mxu0 0
        %3633 = vmatpush1.bf16.msra.mxu0 %v3538
        %3634 = vmatprep.subr.bf16.mxu0 0
        %3635 = vmatpush1.bf16.msra.mxu0 %v3539
        %3636 = vmatprep.mubr.bf16.mxu0 %v3275
        %3637 = vmatmul.mubr.bf16.gmra.mrb[0].mxu0 %v3274
        %v3638 = vpop.f32.mrb[0].mxu0
        %v3639 = vadd.f32 0.0, %v3638
        %v3640 = vpop.f32.mrb[0].mxu0
        %v3641 = vpop.f32.mrb[0].mxu0
        %v3642 = vadd.f32 0.0, %v3641
        %v3643 = vpop.f32.mrb[0].mxu0
        %3644 = vmatprep.mubr.bf16.mxu0 %v3280
        %3645 = vmatmul.mubr.bf16.gmra.mrb[0].mxu0 %v3279
        %v3646 = vpop.f32.mrb[0].mxu0
        %v3647 = vadd.f32 0.0, %v3646
        %v3648 = vpop.f32.mrb[0].mxu0
        %v3649 = vpop.f32.mrb[0].mxu0
        %v3650 = vadd.f32 0.0, %v3649
        %v3651 = vpop.f32.mrb[0].mxu0
        %3652 = vdwg.mxu0
        %3653 = vmatprep.subr.bf16.mxu0 0
        %3654 = vmatpush1.bf16.msra.mxu0 %v3540
        %3655 = vmatprep.subr.bf16.mxu0 0
        %3656 = vmatpush1.bf16.msra.mxu0 %v3541
        %3657 = vmatprep.subr.bf16.mxu0 0
        %3658 = vmatpush1.bf16.msra.mxu0 %v3542
        %3659 = vmatprep.subr.bf16.mxu0 0
        %3660 = vmatpush1.bf16.msra.mxu0 %v3543
        %3661 = vmatprep.subr.bf16.mxu0 0
        %3662 = vmatpush1.bf16.msra.mxu0 %v3544
        %3663 = vmatprep.subr.bf16.mxu0 0
        %3664 = vmatpush1.bf16.msra.mxu0 %v3545
        %3665 = vmatprep.subr.bf16.mxu0 0
        %3666 = vmatpush1.bf16.msra.mxu0 %v3546
        %3667 = vmatprep.subr.bf16.mxu0 0
        %3668 = vmatpush1.bf16.msra.mxu0 %v3547
        %3669 = vmatprep.subr.bf16.mxu0 0
        %3670 = vmatpush1.bf16.msra.mxu0 %v3548
        %3671 = vmatprep.subr.bf16.mxu0 0
        %3672 = vmatpush1.bf16.msra.mxu0 %v3549
        %3673 = vmatprep.subr.bf16.mxu0 0
        %3674 = vmatpush1.bf16.msra.mxu0 %v3550
        %3675 = vmatprep.subr.bf16.mxu0 0
        %3676 = vmatpush1.bf16.msra.mxu0 %v3551
        %3677 = vmatprep.subr.bf16.mxu0 0
        %3678 = vmatpush1.bf16.msra.mxu0 %v3552
        %3679 = vmatprep.subr.bf16.mxu0 0
        %3680 = vmatpush1.bf16.msra.mxu0 %v3553
        %3681 = vmatprep.subr.bf16.mxu0 0
        %3682 = vmatpush1.bf16.msra.mxu0 %v3554
        %3683 = vmatprep.subr.bf16.mxu0 0
        %3684 = vmatpush1.bf16.msra.mxu0 %v3555
        %3685 = vmatprep.mubr.bf16.mxu0 %v3277
        %3686 = vmatmul.mubr.bf16.gmra.mrb[0].mxu0 %v3276
        %v3687 = vpop.f32.mrb[0].mxu0
        %v3688 = vadd.f32 %v3639, %v3687
        %v3689 = vpop.f32.mrb[0].mxu0
        %v3690 = vpop.f32.mrb[0].mxu0
        %v3691 = vadd.f32 %v3642, %v3690
        %v3692 = vpop.f32.mrb[0].mxu0
        %3693 = vmatprep.mubr.bf16.mxu0 %v3282
        %3694 = vmatmul.mubr.bf16.gmra.mrb[0].mxu0 %v3281
        %v3695 = vpop.f32.mrb[0].mxu0
        %v3696 = vadd.f32 %v3647, %v3695
        %v3697 = vpop.f32.mrb[0].mxu0
        %v3698 = vpop.f32.mrb[0].mxu0
        %v3699 = vadd.f32 %v3650, %v3698
        %v3700 = vpop.f32.mrb[0].mxu0
        %3701 = vdwg.mxu0
        %3702 = vmatprep.subr.bf16.mxu0 0
        %3703 = vmatpush1.bf16.msra.mxu0 %v3556
        %3704 = vmatprep.subr.bf16.mxu0 0
        %3705 = vmatpush1.bf16.msra.mxu0 %v3557
        %3706 = vmatprep.subr.bf16.mxu0 0
        %3707 = vmatpush1.bf16.msra.mxu0 %v3558
        %3708 = vmatprep.subr.bf16.mxu0 0
        %3709 = vmatpush1.bf16.msra.mxu0 %v3559
        %3710 = vmatprep.subr.bf16.mxu0 0
        %3711 = vmatpush1.bf16.msra.mxu0 %v3560
        %3712 = vmatprep.subr.bf16.mxu0 0
        %3713 = vmatpush1.bf16.msra.mxu0 %v3561
        %3714 = vmatprep.subr.bf16.mxu0 0
        %3715 = vmatpush1.bf16.msra.mxu0 %v3562
        %3716 = vmatprep.subr.bf16.mxu0 0
        %3717 = vmatpush1.bf16.msra.mxu0 %v3563
        %3718 = vmatprep.subr.bf16.mxu0 0
        %3719 = vmatpush1.bf16.msra.mxu0 0
        %3720 = vmatprep.subr.bf16.mxu0 0
        %3721 = vmatpush1.bf16.msra.mxu0 0
        %3722 = vmatprep.subr.bf16.mxu0 0
        %3723 = vmatpush1.bf16.msra.mxu0 0
        %3724 = vmatprep.subr.bf16.mxu0 0
        %3725 = vmatpush1.bf16.msra.mxu0 0
        %3726 = vmatprep.subr.bf16.mxu0 0
        %3727 = vmatpush1.bf16.msra.mxu0 0
        %3728 = vmatprep.subr.bf16.mxu0 0
        %3729 = vmatpush1.bf16.msra.mxu0 0
        %3730 = vmatprep.subr.bf16.mxu0 0
        %3731 = vmatpush1.bf16.msra.mxu0 0
        %3732 = vmatprep.subr.bf16.mxu0 0
        %3733 = vmatpush1.bf16.msra.mxu0 0
        %3734 = vmatprep.mubr.bf16.mxu0 0
        %3735 = vmatmul.mubr.bf16.gmra.mrb[0].mxu0 %v3278
        %v3736 = vpop.f32.mrb[0].mxu0
        %v3737 = vadd.f32 %v3688, %v3736
        %v3738 = vpop.f32.mrb[0].mxu0
        %v3739 = vpop.f32.mrb[0].mxu0
        %v3740 = vadd.f32 %v3691, %v3739
        %v3741 = vpop.f32.mrb[0].mxu0
        %3742 = vmatprep.mubr.bf16.mxu0 0
        %3743 = vmatmul.mubr.bf16.gmra.mrb[0].mxu0 %v3283
        %v3744 = vpop.f32.mrb[0].mxu0
        %v3745 = vadd.f32 %v3696, %v3744
        %v3746 = vpop.f32.mrb[0].mxu0
        %v3747 = vpop.f32.mrb[0].mxu0
        %v3748 = vadd.f32 %v3699, %v3747
        %v3749 = vpop.f32.mrb[0].mxu0
        %3750 = vdwg.mxu0
        %v3751 = vld [vmem:[#allocation15] sm:$0x1]
        %v3753 = vlaneseq
        %v3754 = vshrl.u32 %v3753, 7
        %v3755 = vsub.s32 0, %v3754
        %v3756 = vrot.slane %v3751, %v3755
        %v3758 = vmul.f32 %v3737, %v3756
        %v3759 = vmul.f32 %v3740, %v3756
        %v3760 = vmul.f32 %v3745, %v3756
        %v3761 = vmul.f32 %v3748, %v3756
        %v3762 = vld [vmem:[#allocation17] sm:$0x1]
        %v3764 = vlaneseq
        %v3765 = vshrl.u32 %v3764, 7
        %v3766 = vsub.s32 0, %v3765
        %v3767 = vrot.slane %v3762, %v3766
        %v3769 = vadd.f32 %v3758, %v3767
        %v3770 = vadd.f32 %v3759, %v3767
        %v3771 = vadd.f32 %v3760, %v3767
        %v3772 = vadd.f32 %v3761, %v3767
        %s3773 = sld [smem:[#allocation2 + $0x2]]
        %vm3774 = vcmp.gt.f32.partialorder %v3769, 0.0
        %vm3775 = vcmp.gt.f32.partialorder %v3770, 0.0
        %vm3776 = vcmp.gt.f32.partialorder %v3771, 0.0
        %vm3777 = vcmp.gt.f32.partialorder %v3772, 0.0
        %v3778 = vstv %s3773
        %v3779 = vmul.f32 %v3778, %v3769
        %v3780 = vmul.f32 %v3778, %v3770
        %v3781 = vmul.f32 %v3778, %v3771
        %v3782 = vmul.f32 %v3778, %v3772
        %v3783 = vsel %vm3774, %v3769, %v3779
        %v3784 = vsel %vm3775, %v3770, %v3780
        %v3785 = vsel %vm3776, %v3771, %v3781
        %v3786 = vsel %vm3777, %v3772, %v3782
        %v3791 = vcombine.high %v3783, %v3783
        %v3792 = vcombine.high %v3784, %v3784
        %v3793 = vcombine.high %v3785, %v3785
        %v3794 = vcombine.high %v3786, %v3786
        %v3795 = vrot.slane %v3783, 6
        %v3796 = vrot.slane %v3791, 6
        %v3797 = vrot.slane %v3784, 6
        %v3798 = vrot.slane %v3792, 6
        %v3799 = vrot.slane %v3785, 6
        %v3800 = vrot.slane %v3793, 6
        %v3801 = vrot.slane %v3786, 6
        %v3802 = vrot.slane %v3794, 6
        %v3811 = vsel %vm3160, 0.0, %v3795
        %v3812 = vsel %vm3160, 0.0, %v3796
        %v3813 = vsel %vm3160, 0.0, %v3797
        %v3814 = vsel %vm3160, 0.0, %v3798
        %v3815 = vsel %vm3160, 0.0, %v3799
        %v3816 = vsel %vm3160, 0.0, %v3800
        %v3817 = vsel %vm3160, 0.0, %v3801
        %v3818 = vsel %vm3160, 0.0, %v3802
        %v3819 = vsel %vm3169, %v3811, 0.0
        %v3820 = vsel %vm3169, %v3812, 0.0
        %v3821 = vsel %vm3169, %v3813, 0.0
        %v3822 = vsel %vm3169, %v3814, 0.0
        %v3823 = vsel %vm3169, %v3815, 0.0
        %v3824 = vsel %vm3169, %v3816, 0.0
        %v3825 = vsel %vm3169, %v3817, 0.0
        %v3826 = vsel %vm3169, %v3818, 0.0
        %v3835 = vrot.slane %v3819, 1
        %v3836 = vrot.slane %v3820, 1
        %v3837 = vrot.slane %v3821, 1
        %v3838 = vrot.slane %v3822, 1
        %v3839 = vrot.slane %v3823, 1
        %v3840 = vrot.slane %v3824, 1
        %v3841 = vrot.slane %v3825, 1
        %v3842 = vrot.slane %v3826, 1
        %v3843 = vrot.slane %v3819, 2
        %v3844 = vrot.slane %v3820, 2
        %v3845 = vrot.slane %v3821, 2
        %v3846 = vrot.slane %v3822, 2
        %v3847 = vrot.slane %v3823, 2
        %v3848 = vrot.slane %v3824, 2
        %v3849 = vrot.slane %v3825, 2
        %v3850 = vrot.slane %v3826, 2
        %v3851 = vrot.slane %v3819, 3
        %v3852 = vrot.slane %v3820, 3
        %v3853 = vrot.slane %v3821, 3
        %v3854 = vrot.slane %v3822, 3
        %v3855 = vrot.slane %v3823, 3
        %v3856 = vrot.slane %v3824, 3
        %v3857 = vrot.slane %v3825, 3
        %v3858 = vrot.slane %v3826, 3
        %v3859 = vrot.slane %v3819, 4
        %v3860 = vrot.slane %v3820, 4
        %v3861 = vrot.slane %v3821, 4
        %v3862 = vrot.slane %v3822, 4
        %v3863 = vrot.slane %v3823, 4
        %v3864 = vrot.slane %v3824, 4
        %v3865 = vrot.slane %v3825, 4
        %v3866 = vrot.slane %v3826, 4
        %v3867 = vcombine.low %v3819, %v3835
        %v3868 = vcombine.low %v3843, %v3851
        %v3869 = vcombine.low %v3820, %v3836
        %v3870 = vcombine.low %v3844, %v3852
        %v3871 = vcombine.low %v3821, %v3837
        %v3872 = vcombine.low %v3845, %v3853
        %v3873 = vcombine.low %v3822, %v3838
        %v3874 = vcombine.low %v3846, %v3854
        %v3875 = vcombine.low %v3823, %v3839
        %v3876 = vcombine.low %v3847, %v3855
        %v3877 = vcombine.low %v3824, %v3840
        %v3878 = vcombine.low %v3848, %v3856
        %v3879 = vcombine.low %v3825, %v3841
        %v3880 = vcombine.low %v3849, %v3857
        %v3881 = vcombine.low %v3826, %v3842
        %v3882 = vcombine.low %v3850, %v3858
        %v3883 = vcombine.low %v3867, %v3869
        %v3884 = vcombine.high %v3867, %v3869
        %v3885 = vcombine.low %v3868, %v3870
        %v3886 = vcombine.high %v3868, %v3870
        %v3887 = vcombine.low %v3859, %v3860
        %v3888 = vcombine.low %v3871, %v3873
        %v3889 = vcombine.high %v3871, %v3873
        %v3890 = vcombine.low %v3872, %v3874
        %v3891 = vcombine.high %v3872, %v3874
        %v3892 = vcombine.low %v3861, %v3862
        %v3893 = vcombine.low %v3875, %v3877
        %v3894 = vcombine.high %v3875, %v3877
        %v3895 = vcombine.low %v3876, %v3878
        %v3896 = vcombine.high %v3876, %v3878
        %v3897 = vcombine.low %v3863, %v3864
        %v3898 = vcombine.low %v3879, %v3881
        %v3899 = vcombine.high %v3879, %v3881
        %v3900 = vcombine.low %v3880, %v3882
        %v3901 = vcombine.high %v3880, %v3882
        %v3902 = vcombine.low %v3865, %v3866
        %v3923 = vpack.c.bf16 %v3888, %v3883
        %v3924 = vpack.c.bf16 %v3889, %v3884
        %v3925 = vpack.c.bf16 %v3890, %v3885
        %v3926 = vpack.c.bf16 %v3891, %v3886
        %v3927 = vpack.c.bf16 %v3892, %v3887
        %v3928 = vpack.c.bf16 %v3898, %v3893
        %v3929 = vpack.c.bf16 %v3899, %v3894
        %v3930 = vpack.c.bf16 %v3900, %v3895
        %v3931 = vpack.c.bf16 %v3901, %v3896
        %v3932 = vpack.c.bf16 %v3902, %v3897
        %v3933 = vld [vmem:[%s27] sm:$0xf]
        %v3934 = vld [vmem:[%s27 + $0x4] sm:$0xf]
        %v3935 = vld [vmem:[%s27 + $0x8] sm:$0xf]
        %v3936 = vld [vmem:[%s27 + $0xc] sm:$0xf]
        %v3937 = vld [vmem:[%s27 + $0x10] sm:$0xf]
        %v3938 = vld [vmem:[%s27 + $0x14] sm:$0xf]
        %v3939 = vld [vmem:[%s27 + $0x18] sm:$0xf]
        %v3940 = vld [vmem:[%s27 + $0x1c] sm:$0xf]
        %v3941 = vld [vmem:[%s27 + $0x20] sm:$0xf]
        %v3942 = vld [vmem:[%s27 + $0x24] sm:$0xf]
        %v3943 = vld [vmem:[%s27 + $0x28] sm:$0xf]
        %v3944 = vld [vmem:[%s27 + $0x2c] sm:$0xf]
        %v3945 = vld [vmem:[%s27 + $0x30] sm:$0xf]
        %v3946 = vld [vmem:[%s27 + $0x34] sm:$0xf]
        %v3947 = vld [vmem:[%s27 + $0x38] sm:$0xf]
        %v3948 = vld [vmem:[%s27 + $0x3c] sm:$0xf]
        %v3949 = vld [vmem:[%s27 + $0x40] sm:$0xf]
        %v3950 = vld [vmem:[%s27 + $0x44] sm:$0xf]
        %v3951 = vld [vmem:[%s27 + $0x48] sm:$0xf]
        %v3952 = vld [vmem:[%s27 + $0x4c] sm:$0xf]
        %v3953 = vld [vmem:[%s27 + $0x50] sm:$0xf]
        %v3954 = vld [vmem:[%s27 + $0x54] sm:$0xf]
        %v3955 = vld [vmem:[%s27 + $0x58] sm:$0xf]
        %v3956 = vld [vmem:[%s27 + $0x5c] sm:$0xf]
        %v3957 = vld [vmem:[%s27 + $0x60] sm:$0xf]
        %v3958 = vld [vmem:[%s27 + $0x64] sm:$0xf]
        %v3959 = vld [vmem:[%s27 + $0x68] sm:$0xf]
        %v3960 = vld [vmem:[%s27 + $0x6c] sm:$0xf]
        %v3961 = vld [vmem:[%s27 + $0x70] sm:$0xf]
        %v3962 = vld [vmem:[%s27 + $0x74] sm:$0xf]
        %v3963 = vld [vmem:[%s27 + $0x78] sm:$0xf]
        %v3964 = vld [vmem:[%s27 + $0x7c] sm:$0xf]
        %v3965 = vld [vmem:[%s27 + $0x80] sm:$0xf]
        %v3966 = vld [vmem:[%s27 + $0x84] sm:$0xf]
        %v3967 = vld [vmem:[%s27 + $0x88] sm:$0xf]
        %v3968 = vld [vmem:[%s27 + $0x8c] sm:$0xf]
        %v3969 = vld [vmem:[%s27 + $0x90] sm:$0xf]
        %v3970 = vld [vmem:[%s27 + $0x94] sm:$0xf]
        %v3971 = vld [vmem:[%s27 + $0x98] sm:$0xf]
        %v3972 = vld [vmem:[%s27 + $0x9c] sm:$0xf]
        %v3973 = vld [vmem:[%s27 + $0xa0] sm:$0xf]
        %v3974 = vld [vmem:[%s27 + $0xa4] sm:$0xf]
        %v3975 = vld [vmem:[%s27 + $0xa8] sm:$0xf]
        %v3976 = vld [vmem:[%s27 + $0xac] sm:$0xf]
        %v3977 = vld [vmem:[%s27 + $0xb0] sm:$0xf]
        %v3978 = vld [vmem:[%s27 + $0xb4] sm:$0xf]
        %v3979 = vld [vmem:[%s27 + $0xb8] sm:$0xf]
        %v3980 = vld [vmem:[%s27 + $0xbc] sm:$0xf]
        %v3981 = vld [vmem:[%s27 + $0xc0] sm:$0xf]
        %v3982 = vld [vmem:[%s27 + $0xc4] sm:$0xf]
        %v3983 = vld [vmem:[%s27 + $0xc8] sm:$0xf]
        %v3984 = vld [vmem:[%s27 + $0xcc] sm:$0xf]
        %v3985 = vld [vmem:[%s27 + $0xd0] sm:$0xf]
        %v3986 = vld [vmem:[%s27 + $0xd4] sm:$0xf]
        %v3987 = vld [vmem:[%s27 + $0xd8] sm:$0xf]
        %v3988 = vld [vmem:[%s27 + $0xdc] sm:$0xf]
        %v3989 = vld [vmem:[%s27 + $0xe0] sm:$0xf]
        %v3990 = vld [vmem:[%s27 + $0xe4] sm:$0xf]
        %v3991 = vld [vmem:[%s27 + $0xe8] sm:$0xf]
        %v3992 = vld [vmem:[%s27 + $0xec] sm:$0xf]
        %v3993 = vld [vmem:[%s27 + $0xf0] sm:$0xf]
        %v3994 = vld [vmem:[%s27 + $0xf4] sm:$0xf]
        %v3995 = vld [vmem:[%s27 + $0xf8] sm:$0xf]
        %v3996 = vld [vmem:[%s27 + $0xfc] sm:$0xf]
        %v3997 = vld [vmem:[%s27 + $0x100] sm:$0xf]
        %v3998 = vld [vmem:[%s27 + $0x104] sm:$0xf]
        %v3999 = vld [vmem:[%s27 + $0x108] sm:$0xf]
        %v4000 = vld [vmem:[%s27 + $0x10c] sm:$0xf]
        %v4001 = vld [vmem:[%s27 + $0x110] sm:$0xf]
        %v4002 = vld [vmem:[%s27 + $0x114] sm:$0xf]
        %v4003 = vld [vmem:[%s27 + $0x118] sm:$0xf]
        %v4004 = vld [vmem:[%s27 + $0x11c] sm:$0xf]
        %v4005 = vld [vmem:[%s27 + $0x120] sm:$0xf]
        %v4006 = vld [vmem:[%s27 + $0x124] sm:$0xf]
        %v4007 = vld [vmem:[%s27 + $0x128] sm:$0xf]
        %v4008 = vld [vmem:[%s27 + $0x12c] sm:$0xf]
        %v4009 = vld [vmem:[%s27 + $0x130] sm:$0xf]
        %v4010 = vld [vmem:[%s27 + $0x134] sm:$0xf]
        %v4011 = vld [vmem:[%s27 + $0x138] sm:$0xf]
        %v4012 = vld [vmem:[%s27 + $0x13c] sm:$0xf]
        %v4093 = vunpack.c.l.b16 %v3933
        %v4094 = vunpack.c.l.b16 %v3934
        %v4095 = vunpack.c.l.b16 %v3935
        %v4096 = vunpack.c.l.b16 %v3936
        %v4097 = vunpack.c.l.b16 %v3937
        %v4098 = vunpack.c.l.b16 %v3938
        %v4099 = vunpack.c.l.b16 %v3939
        %v4100 = vunpack.c.l.b16 %v3940
        %v4101 = vunpack.c.l.b16 %v3941
        %v4102 = vunpack.c.l.b16 %v3942
        %v4103 = vunpack.c.l.b16 %v3943
        %v4104 = vunpack.c.l.b16 %v3944
        %v4105 = vunpack.c.l.b16 %v3945
        %v4106 = vunpack.c.l.b16 %v3946
        %v4107 = vunpack.c.l.b16 %v3947
        %v4108 = vunpack.c.l.b16 %v3948
        %v4109 = vunpack.c.l.b16 %v3949
        %v4110 = vunpack.c.l.b16 %v3950
        %v4111 = vunpack.c.l.b16 %v3951
        %v4112 = vunpack.c.l.b16 %v3952
        %v4113 = vunpack.c.l.b16 %v3953
        %v4114 = vunpack.c.l.b16 %v3954
        %v4115 = vunpack.c.l.b16 %v3955
        %v4116 = vunpack.c.l.b16 %v3956
        %v4117 = vunpack.c.l.b16 %v3957
        %v4118 = vunpack.c.l.b16 %v3958
        %v4119 = vunpack.c.l.b16 %v3959
        %v4120 = vunpack.c.l.b16 %v3960
        %v4121 = vunpack.c.l.b16 %v3961
        %v4122 = vunpack.c.l.b16 %v3962
        %v4123 = vunpack.c.l.b16 %v3963
        %v4124 = vunpack.c.l.b16 %v3964
        %v4125 = vunpack.c.l.b16 %v3965
        %v4126 = vunpack.c.l.b16 %v3966
        %v4127 = vunpack.c.l.b16 %v3967
        %v4128 = vunpack.c.l.b16 %v3968
        %v4129 = vunpack.c.l.b16 %v3969
        %v4130 = vunpack.c.l.b16 %v3970
        %v4131 = vunpack.c.l.b16 %v3971
        %v4132 = vunpack.c.l.b16 %v3972
        %v4133 = vunpack.c.l.b16 %v3973
        %v4134 = vunpack.c.l.b16 %v3974
        %v4135 = vunpack.c.l.b16 %v3975
        %v4136 = vunpack.c.l.b16 %v3976
        %v4137 = vunpack.c.l.b16 %v3977
        %v4138 = vunpack.c.l.b16 %v3978
        %v4139 = vunpack.c.l.b16 %v3979
        %v4140 = vunpack.c.l.b16 %v3980
        %v4141 = vunpack.c.l.b16 %v3981
        %v4142 = vunpack.c.l.b16 %v3982
        %v4143 = vunpack.c.l.b16 %v3983
        %v4144 = vunpack.c.l.b16 %v3984
        %v4145 = vunpack.c.l.b16 %v3985
        %v4146 = vunpack.c.l.b16 %v3986
        %v4147 = vunpack.c.l.b16 %v3987
        %v4148 = vunpack.c.l.b16 %v3988
        %v4149 = vunpack.c.l.b16 %v3989
        %v4150 = vunpack.c.l.b16 %v3990
        %v4151 = vunpack.c.l.b16 %v3991
        %v4152 = vunpack.c.l.b16 %v3992
        %v4153 = vunpack.c.l.b16 %v3993
        %v4154 = vunpack.c.l.b16 %v3994
        %v4155 = vunpack.c.l.b16 %v3995
        %v4156 = vunpack.c.l.b16 %v3996
        %v4157 = vunpack.c.l.b16 %v3997
        %v4158 = vunpack.c.l.b16 %v3998
        %v4159 = vunpack.c.l.b16 %v3999
        %v4160 = vunpack.c.l.b16 %v4000
        %v4161 = vunpack.c.l.b16 %v4001
        %v4162 = vunpack.c.l.b16 %v4002
        %v4163 = vunpack.c.l.b16 %v4003
        %v4164 = vunpack.c.l.b16 %v4004
        %v4165 = vunpack.c.l.b16 %v4005
        %v4166 = vunpack.c.l.b16 %v4006
        %v4167 = vunpack.c.l.b16 %v4007
        %v4168 = vunpack.c.l.b16 %v4008
        %v4169 = vunpack.c.l.b16 %v4009
        %v4170 = vunpack.c.l.b16 %v4010
        %v4171 = vunpack.c.l.b16 %v4011
        %v4172 = vunpack.c.l.b16 %v4012
        %v4173 = vpack.c.b16 %v4094, %v4093
        %v4174 = vpack.c.b16 %v4096, %v4095
        %v4175 = vpack.c.b16 %v4098, %v4097
        %v4176 = vpack.c.b16 %v4100, %v4099
        %v4177 = vpack.c.b16 %v4102, %v4101
        %v4178 = vpack.c.b16 %v4104, %v4103
        %v4179 = vpack.c.b16 %v4106, %v4105
        %v4180 = vpack.c.b16 %v4108, %v4107
        %v4181 = vpack.c.b16 %v4110, %v4109
        %v4182 = vpack.c.b16 %v4112, %v4111
        %v4183 = vpack.c.b16 %v4114, %v4113
        %v4184 = vpack.c.b16 %v4116, %v4115
        %v4185 = vpack.c.b16 %v4118, %v4117
        %v4186 = vpack.c.b16 %v4120, %v4119
        %v4187 = vpack.c.b16 %v4122, %v4121
        %v4188 = vpack.c.b16 %v4124, %v4123
        %v4189 = vpack.c.b16 %v4126, %v4125
        %v4190 = vpack.c.b16 %v4128, %v4127
        %v4191 = vpack.c.b16 %v4130, %v4129
        %v4192 = vpack.c.b16 %v4132, %v4131
        %v4193 = vpack.c.b16 %v4134, %v4133
        %v4194 = vpack.c.b16 %v4136, %v4135
        %v4195 = vpack.c.b16 %v4138, %v4137
        %v4196 = vpack.c.b16 %v4140, %v4139
        %v4197 = vpack.c.b16 %v4142, %v4141
        %v4198 = vpack.c.b16 %v4144, %v4143
        %v4199 = vpack.c.b16 %v4146, %v4145
        %v4200 = vpack.c.b16 %v4148, %v4147
        %v4201 = vpack.c.b16 %v4150, %v4149
        %v4202 = vpack.c.b16 %v4152, %v4151
        %v4203 = vpack.c.b16 %v4154, %v4153
        %v4204 = vpack.c.b16 %v4156, %v4155
        %v4205 = vpack.c.b16 %v4158, %v4157
        %v4206 = vpack.c.b16 %v4160, %v4159
        %v4207 = vpack.c.b16 %v4162, %v4161
        %v4208 = vpack.c.b16 %v4164, %v4163
        %v4209 = vpack.c.b16 %v4166, %v4165
        %v4210 = vpack.c.b16 %v4168, %v4167
        %v4211 = vpack.c.b16 %v4170, %v4169
        %v4212 = vpack.c.b16 %v4172, %v4171
        %4253 = vmatprep.subr.bf16.mxu0 0
        %4254 = vmatpush1.bf16.msra.mxu0 %v4173
        %4255 = vmatprep.subr.bf16.mxu0 0
        %4256 = vmatpush1.bf16.msra.mxu0 %v4174
        %4257 = vmatprep.subr.bf16.mxu0 0
        %4258 = vmatpush1.bf16.msra.mxu0 %v4175
        %4259 = vmatprep.subr.bf16.mxu0 0
        %4260 = vmatpush1.bf16.msra.mxu0 %v4176
        %4261 = vmatprep.subr.bf16.mxu0 0
        %4262 = vmatpush1.bf16.msra.mxu0 %v4177
        %4263 = vmatprep.subr.bf16.mxu0 0
        %4264 = vmatpush1.bf16.msra.mxu0 %v4178
        %4265 = vmatprep.subr.bf16.mxu0 0
        %4266 = vmatpush1.bf16.msra.mxu0 %v4179
        %4267 = vmatprep.subr.bf16.mxu0 0
        %4268 = vmatpush1.bf16.msra.mxu0 %v4180
        %4269 = vmatprep.subr.bf16.mxu0 0
        %4270 = vmatpush1.bf16.msra.mxu0 %v4181
        %4271 = vmatprep.subr.bf16.mxu0 0
        %4272 = vmatpush1.bf16.msra.mxu0 %v4182
        %4273 = vmatprep.subr.bf16.mxu0 0
        %4274 = vmatpush1.bf16.msra.mxu0 %v4183
        %4275 = vmatprep.subr.bf16.mxu0 0
        %4276 = vmatpush1.bf16.msra.mxu0 %v4184
        %4277 = vmatprep.subr.bf16.mxu0 0
        %4278 = vmatpush1.bf16.msra.mxu0 %v4185
        %4279 = vmatprep.subr.bf16.mxu0 0
        %4280 = vmatpush1.bf16.msra.mxu0 %v4186
        %4281 = vmatprep.subr.bf16.mxu0 0
        %4282 = vmatpush1.bf16.msra.mxu0 %v4187
        %4283 = vmatprep.subr.bf16.mxu0 0
        %4284 = vmatpush1.bf16.msra.mxu0 %v4188
        %4285 = vmatprep.mubr.bf16.mxu0 %v3924
        %4286 = vmatmul.mubr.bf16.gmra.mrb[0].mxu0 %v3923
        %v4287 = vpop.f32.mrb[0].mxu0
        %v4288 = vadd.f32 0.0, %v4287
        %v4289 = vpop.f32.mrb[0].mxu0
        %v4290 = vpop.f32.mrb[0].mxu0
        %v4291 = vadd.f32 0.0, %v4290
        %v4292 = vpop.f32.mrb[0].mxu0
        %4293 = vmatprep.mubr.bf16.mxu0 %v3929
        %4294 = vmatmul.mubr.bf16.gmra.mrb[0].mxu0 %v3928
        %v4295 = vpop.f32.mrb[0].mxu0
        %v4296 = vadd.f32 0.0, %v4295
        %v4297 = vpop.f32.mrb[0].mxu0
        %v4298 = vpop.f32.mrb[0].mxu0
        %v4299 = vadd.f32 0.0, %v4298
        %v4300 = vpop.f32.mrb[0].mxu0
        %4301 = vdwg.mxu0
        %4302 = vmatprep.subr.bf16.mxu0 0
        %4303 = vmatpush1.bf16.msra.mxu0 %v4189
        %4304 = vmatprep.subr.bf16.mxu0 0
        %4305 = vmatpush1.bf16.msra.mxu0 %v4190
        %4306 = vmatprep.subr.bf16.mxu0 0
        %4307 = vmatpush1.bf16.msra.mxu0 %v4191
        %4308 = vmatprep.subr.bf16.mxu0 0
        %4309 = vmatpush1.bf16.msra.mxu0 %v4192
        %4310 = vmatprep.subr.bf16.mxu0 0
        %4311 = vmatpush1.bf16.msra.mxu0 %v4193
        %4312 = vmatprep.subr.bf16.mxu0 0
        %4313 = vmatpush1.bf16.msra.mxu0 %v4194
        %4314 = vmatprep.subr.bf16.mxu0 0
        %4315 = vmatpush1.bf16.msra.mxu0 %v4195
        %4316 = vmatprep.subr.bf16.mxu0 0
        %4317 = vmatpush1.bf16.msra.mxu0 %v4196
        %4318 = vmatprep.subr.bf16.mxu0 0
        %4319 = vmatpush1.bf16.msra.mxu0 %v4197
        %4320 = vmatprep.subr.bf16.mxu0 0
        %4321 = vmatpush1.bf16.msra.mxu0 %v4198
        %4322 = vmatprep.subr.bf16.mxu0 0
        %4323 = vmatpush1.bf16.msra.mxu0 %v4199
        %4324 = vmatprep.subr.bf16.mxu0 0
        %4325 = vmatpush1.bf16.msra.mxu0 %v4200
        %4326 = vmatprep.subr.bf16.mxu0 0
        %4327 = vmatpush1.bf16.msra.mxu0 %v4201
        %4328 = vmatprep.subr.bf16.mxu0 0
        %4329 = vmatpush1.bf16.msra.mxu0 %v4202
        %4330 = vmatprep.subr.bf16.mxu0 0
        %4331 = vmatpush1.bf16.msra.mxu0 %v4203
        %4332 = vmatprep.subr.bf16.mxu0 0
        %4333 = vmatpush1.bf16.msra.mxu0 %v4204
        %4334 = vmatprep.mubr.bf16.mxu0 %v3926
        %4335 = vmatmul.mubr.bf16.gmra.mrb[0].mxu0 %v3925
        %v4336 = vpop.f32.mrb[0].mxu0
        %v4337 = vadd.f32 %v4288, %v4336
        %v4338 = vpop.f32.mrb[0].mxu0
        %v4339 = vpop.f32.mrb[0].mxu0
        %v4340 = vadd.f32 %v4291, %v4339
        %v4341 = vpop.f32.mrb[0].mxu0
        %4342 = vmatprep.mubr.bf16.mxu0 %v3931
        %4343 = vmatmul.mubr.bf16.gmra.mrb[0].mxu0 %v3930
        %v4344 = vpop.f32.mrb[0].mxu0
        %v4345 = vadd.f32 %v4296, %v4344
        %v4346 = vpop.f32.mrb[0].mxu0
        %v4347 = vpop.f32.mrb[0].mxu0
        %v4348 = vadd.f32 %v4299, %v4347
        %v4349 = vpop.f32.mrb[0].mxu0
        %4350 = vdwg.mxu0
        %4351 = vmatprep.subr.bf16.mxu0 0
        %4352 = vmatpush1.bf16.msra.mxu0 %v4205
        %4353 = vmatprep.subr.bf16.mxu0 0
        %4354 = vmatpush1.bf16.msra.mxu0 %v4206
        %4355 = vmatprep.subr.bf16.mxu0 0
        %4356 = vmatpush1.bf16.msra.mxu0 %v4207
        %4357 = vmatprep.subr.bf16.mxu0 0
        %4358 = vmatpush1.bf16.msra.mxu0 %v4208
        %4359 = vmatprep.subr.bf16.mxu0 0
        %4360 = vmatpush1.bf16.msra.mxu0 %v4209
        %4361 = vmatprep.subr.bf16.mxu0 0
        %4362 = vmatpush1.bf16.msra.mxu0 %v4210
        %4363 = vmatprep.subr.bf16.mxu0 0
        %4364 = vmatpush1.bf16.msra.mxu0 %v4211
        %4365 = vmatprep.subr.bf16.mxu0 0
        %4366 = vmatpush1.bf16.msra.mxu0 %v4212
        %4367 = vmatprep.subr.bf16.mxu0 0
        %4368 = vmatpush1.bf16.msra.mxu0 0
        %4369 = vmatprep.subr.bf16.mxu0 0
        %4370 = vmatpush1.bf16.msra.mxu0 0
        %4371 = vmatprep.subr.bf16.mxu0 0
        %4372 = vmatpush1.bf16.msra.mxu0 0
        %4373 = vmatprep.subr.bf16.mxu0 0
        %4374 = vmatpush1.bf16.msra.mxu0 0
        %4375 = vmatprep.subr.bf16.mxu0 0
        %4376 = vmatpush1.bf16.msra.mxu0 0
        %4377 = vmatprep.subr.bf16.mxu0 0
        %4378 = vmatpush1.bf16.msra.mxu0 0
        %4379 = vmatprep.subr.bf16.mxu0 0
        %4380 = vmatpush1.bf16.msra.mxu0 0
        %4381 = vmatprep.subr.bf16.mxu0 0
        %4382 = vmatpush1.bf16.msra.mxu0 0
        %4383 = vmatprep.mubr.bf16.mxu0 0
        %4384 = vmatmul.mubr.bf16.gmra.mrb[0].mxu0 %v3927
        %v4385 = vpop.f32.mrb[0].mxu0
        %v4386 = vadd.f32 %v4337, %v4385
        %v4387 = vpop.f32.mrb[0].mxu0
        %v4388 = vpop.f32.mrb[0].mxu0
        %v4389 = vadd.f32 %v4340, %v4388
        %v4390 = vpop.f32.mrb[0].mxu0
        %4391 = vmatprep.mubr.bf16.mxu0 0
        %4392 = vmatmul.mubr.bf16.gmra.mrb[0].mxu0 %v3932
        %v4393 = vpop.f32.mrb[0].mxu0
        %v4394 = vadd.f32 %v4345, %v4393
        %v4395 = vpop.f32.mrb[0].mxu0
        %v4396 = vpop.f32.mrb[0].mxu0
        %v4397 = vadd.f32 %v4348, %v4396
        %v4398 = vpop.f32.mrb[0].mxu0
        %4399 = vdwg.mxu0
        %v4400 = vld [vmem:[#allocation18] sm:$0x1]
        %v4402 = vlaneseq
        %v4403 = vshrl.u32 %v4402, 7
        %v4404 = vsub.s32 0, %v4403
        %v4405 = vrot.slane %v4400, %v4404
        %v4407 = vmul.f32 %v4386, %v4405
        %v4408 = vmul.f32 %v4389, %v4405
        %v4409 = vmul.f32 %v4394, %v4405
        %v4410 = vmul.f32 %v4397, %v4405
        %v4411 = vld [vmem:[#allocation20] sm:$0x1]
        %v4413 = vlaneseq
        %v4414 = vshrl.u32 %v4413, 7
        %v4415 = vsub.s32 0, %v4414
        %v4416 = vrot.slane %v4411, %v4415
        %v4418 = vadd.f32 %v4407, %v4416
        %v4419 = vadd.f32 %v4408, %v4416
        %v4420 = vadd.f32 %v4409, %v4416
        %v4421 = vadd.f32 %v4410, %v4416
        %s4422 = sld [smem:[#allocation2 + $0x3]]
        %vm4423 = vcmp.gt.f32.partialorder %v4418, 0.0
        %vm4424 = vcmp.gt.f32.partialorder %v4419, 0.0
        %vm4425 = vcmp.gt.f32.partialorder %v4420, 0.0
        %vm4426 = vcmp.gt.f32.partialorder %v4421, 0.0
        %v4427 = vstv %s4422
        %v4428 = vmul.f32 %v4427, %v4418
        %v4429 = vmul.f32 %v4427, %v4419
        %v4430 = vmul.f32 %v4427, %v4420
        %v4431 = vmul.f32 %v4427, %v4421
        %v4432 = vsel %vm4423, %v4418, %v4428
        %v4433 = vsel %vm4424, %v4419, %v4429
        %v4434 = vsel %vm4425, %v4420, %v4430
        %v4435 = vsel %vm4426, %v4421, %v4431
        %v4440 = vcombine.high %v4432, %v4432
        %v4441 = vcombine.high %v4433, %v4433
        %v4442 = vcombine.high %v4434, %v4434
        %v4443 = vcombine.high %v4435, %v4435
        %v4444 = vrot.slane %v4432, 6
        %v4445 = vrot.slane %v4440, 6
        %v4446 = vrot.slane %v4433, 6
        %v4447 = vrot.slane %v4441, 6
        %v4448 = vrot.slane %v4434, 6
        %v4449 = vrot.slane %v4442, 6
        %v4450 = vrot.slane %v4435, 6
        %v4451 = vrot.slane %v4443, 6
        %v4460 = vsel %vm3160, 0.0, %v4444
        %v4461 = vsel %vm3160, 0.0, %v4445
        %v4462 = vsel %vm3160, 0.0, %v4446
        %v4463 = vsel %vm3160, 0.0, %v4447
        %v4464 = vsel %vm3160, 0.0, %v4448
        %v4465 = vsel %vm3160, 0.0, %v4449
        %v4466 = vsel %vm3160, 0.0, %v4450
        %v4467 = vsel %vm3160, 0.0, %v4451
        %v4468 = vsel %vm3169, %v4460, 0.0
        %v4469 = vsel %vm3169, %v4461, 0.0
        %v4470 = vsel %vm3169, %v4462, 0.0
        %v4471 = vsel %vm3169, %v4463, 0.0
        %v4472 = vsel %vm3169, %v4464, 0.0
        %v4473 = vsel %vm3169, %v4465, 0.0
        %v4474 = vsel %vm3169, %v4466, 0.0
        %v4475 = vsel %vm3169, %v4467, 0.0
        %v4484 = vrot.slane %v4468, 1
        %v4485 = vrot.slane %v4469, 1
        %v4486 = vrot.slane %v4470, 1
        %v4487 = vrot.slane %v4471, 1
        %v4488 = vrot.slane %v4472, 1
        %v4489 = vrot.slane %v4473, 1
        %v4490 = vrot.slane %v4474, 1
        %v4491 = vrot.slane %v4475, 1
        %v4492 = vrot.slane %v4468, 2
        %v4493 = vrot.slane %v4469, 2
        %v4494 = vrot.slane %v4470, 2
        %v4495 = vrot.slane %v4471, 2
        %v4496 = vrot.slane %v4472, 2
        %v4497 = vrot.slane %v4473, 2
        %v4498 = vrot.slane %v4474, 2
        %v4499 = vrot.slane %v4475, 2
        %v4500 = vrot.slane %v4468, 3
        %v4501 = vrot.slane %v4469, 3
        %v4502 = vrot.slane %v4470, 3
        %v4503 = vrot.slane %v4471, 3
        %v4504 = vrot.slane %v4472, 3
        %v4505 = vrot.slane %v4473, 3
        %v4506 = vrot.slane %v4474, 3
        %v4507 = vrot.slane %v4475, 3
        %v4508 = vrot.slane %v4468, 4
        %v4509 = vrot.slane %v4469, 4
        %v4510 = vrot.slane %v4470, 4
        %v4511 = vrot.slane %v4471, 4
        %v4512 = vrot.slane %v4472, 4
        %v4513 = vrot.slane %v4473, 4
        %v4514 = vrot.slane %v4474, 4
        %v4515 = vrot.slane %v4475, 4
        %v4516 = vcombine.low %v4468, %v4484
        %v4517 = vcombine.low %v4492, %v4500
        %v4518 = vcombine.low %v4469, %v4485
        %v4519 = vcombine.low %v4493, %v4501
        %v4520 = vcombine.low %v4470, %v4486
        %v4521 = vcombine.low %v4494, %v4502
        %v4522 = vcombine.low %v4471, %v4487
        %v4523 = vcombine.low %v4495, %v4503
        %v4524 = vcombine.low %v4472, %v4488
        %v4525 = vcombine.low %v4496, %v4504
        %v4526 = vcombine.low %v4473, %v4489
        %v4527 = vcombine.low %v4497, %v4505
        %v4528 = vcombine.low %v4474, %v4490
        %v4529 = vcombine.low %v4498, %v4506
        %v4530 = vcombine.low %v4475, %v4491
        %v4531 = vcombine.low %v4499, %v4507
        %v4532 = vcombine.low %v4516, %v4518
        %v4533 = vcombine.high %v4516, %v4518
        %v4534 = vcombine.low %v4517, %v4519
        %v4535 = vcombine.high %v4517, %v4519
        %v4536 = vcombine.low %v4508, %v4509
        %v4537 = vcombine.low %v4520, %v4522
        %v4538 = vcombine.high %v4520, %v4522
        %v4539 = vcombine.low %v4521, %v4523
        %v4540 = vcombine.high %v4521, %v4523
        %v4541 = vcombine.low %v4510, %v4511
        %v4542 = vcombine.low %v4524, %v4526
        %v4543 = vcombine.high %v4524, %v4526
        %v4544 = vcombine.low %v4525, %v4527
        %v4545 = vcombine.high %v4525, %v4527
        %v4546 = vcombine.low %v4512, %v4513
        %v4547 = vcombine.low %v4528, %v4530
        %v4548 = vcombine.high %v4528, %v4530
        %v4549 = vcombine.low %v4529, %v4531
        %v4550 = vcombine.high %v4529, %v4531
        %v4551 = vcombine.low %v4514, %v4515
        %v4572 = vpack.c.bf16 %v4537, %v4532
        %v4573 = vpack.c.bf16 %v4538, %v4533
        %v4574 = vpack.c.bf16 %v4539, %v4534
        %v4575 = vpack.c.bf16 %v4540, %v4535
        %v4576 = vpack.c.bf16 %v4541, %v4536
        %v4577 = vpack.c.bf16 %v4547, %v4542
        %v4578 = vpack.c.bf16 %v4548, %v4543
        %v4579 = vpack.c.bf16 %v4549, %v4544
        %v4580 = vpack.c.bf16 %v4550, %v4545
        %v4581 = vpack.c.bf16 %v4551, %v4546
        %v4582 = vld [vmem:[%s33] sm:$0xf]
        %v4583 = vld [vmem:[%s33 + $0x4] sm:$0xf]
        %v4584 = vld [vmem:[%s33 + $0x8] sm:$0xf]
        %v4585 = vld [vmem:[%s33 + $0xc] sm:$0xf]
        %v4586 = vld [vmem:[%s33 + $0x10] sm:$0xf]
        %v4587 = vld [vmem:[%s33 + $0x14] sm:$0xf]
        %v4588 = vld [vmem:[%s33 + $0x18] sm:$0xf]
        %v4589 = vld [vmem:[%s33 + $0x1c] sm:$0xf]
        %v4590 = vld [vmem:[%s33 + $0x20] sm:$0xf]
        %v4591 = vld [vmem:[%s33 + $0x24] sm:$0xf]
        %v4592 = vld [vmem:[%s33 + $0x28] sm:$0xf]
        %v4593 = vld [vmem:[%s33 + $0x2c] sm:$0xf]
        %v4594 = vld [vmem:[%s33 + $0x30] sm:$0xf]
        %v4595 = vld [vmem:[%s33 + $0x34] sm:$0xf]
        %v4596 = vld [vmem:[%s33 + $0x38] sm:$0xf]
        %v4597 = vld [vmem:[%s33 + $0x3c] sm:$0xf]
        %v4598 = vld [vmem:[%s33 + $0x40] sm:$0xf]
        %v4599 = vld [vmem:[%s33 + $0x44] sm:$0xf]
        %v4600 = vld [vmem:[%s33 + $0x48] sm:$0xf]
        %v4601 = vld [vmem:[%s33 + $0x4c] sm:$0xf]
        %v4602 = vld [vmem:[%s33 + $0x50] sm:$0xf]
        %v4603 = vld [vmem:[%s33 + $0x54] sm:$0xf]
        %v4604 = vld [vmem:[%s33 + $0x58] sm:$0xf]
        %v4605 = vld [vmem:[%s33 + $0x5c] sm:$0xf]
        %v4606 = vld [vmem:[%s33 + $0x60] sm:$0xf]
        %v4607 = vld [vmem:[%s33 + $0x64] sm:$0xf]
        %v4608 = vld [vmem:[%s33 + $0x68] sm:$0xf]
        %v4609 = vld [vmem:[%s33 + $0x6c] sm:$0xf]
        %v4610 = vld [vmem:[%s33 + $0x70] sm:$0xf]
        %v4611 = vld [vmem:[%s33 + $0x74] sm:$0xf]
        %v4612 = vld [vmem:[%s33 + $0x78] sm:$0xf]
        %v4613 = vld [vmem:[%s33 + $0x7c] sm:$0xf]
        %v4614 = vld [vmem:[%s33 + $0x80] sm:$0xf]
        %v4615 = vld [vmem:[%s33 + $0x84] sm:$0xf]
        %v4616 = vld [vmem:[%s33 + $0x88] sm:$0xf]
        %v4617 = vld [vmem:[%s33 + $0x8c] sm:$0xf]
        %v4618 = vld [vmem:[%s33 + $0x90] sm:$0xf]
        %v4619 = vld [vmem:[%s33 + $0x94] sm:$0xf]
        %v4620 = vld [vmem:[%s33 + $0x98] sm:$0xf]
        %v4621 = vld [vmem:[%s33 + $0x9c] sm:$0xf]
        %v4622 = vld [vmem:[%s33 + $0xa0] sm:$0xf]
        %v4623 = vld [vmem:[%s33 + $0xa4] sm:$0xf]
        %v4624 = vld [vmem:[%s33 + $0xa8] sm:$0xf]
        %v4625 = vld [vmem:[%s33 + $0xac] sm:$0xf]
        %v4626 = vld [vmem:[%s33 + $0xb0] sm:$0xf]
        %v4627 = vld [vmem:[%s33 + $0xb4] sm:$0xf]
        %v4628 = vld [vmem:[%s33 + $0xb8] sm:$0xf]
        %v4629 = vld [vmem:[%s33 + $0xbc] sm:$0xf]
        %v4630 = vld [vmem:[%s33 + $0xc0] sm:$0xf]
        %v4631 = vld [vmem:[%s33 + $0xc4] sm:$0xf]
        %v4632 = vld [vmem:[%s33 + $0xc8] sm:$0xf]
        %v4633 = vld [vmem:[%s33 + $0xcc] sm:$0xf]
        %v4634 = vld [vmem:[%s33 + $0xd0] sm:$0xf]
        %v4635 = vld [vmem:[%s33 + $0xd4] sm:$0xf]
        %v4636 = vld [vmem:[%s33 + $0xd8] sm:$0xf]
        %v4637 = vld [vmem:[%s33 + $0xdc] sm:$0xf]
        %v4638 = vld [vmem:[%s33 + $0xe0] sm:$0xf]
        %v4639 = vld [vmem:[%s33 + $0xe4] sm:$0xf]
        %v4640 = vld [vmem:[%s33 + $0xe8] sm:$0xf]
        %v4641 = vld [vmem:[%s33 + $0xec] sm:$0xf]
        %v4642 = vld [vmem:[%s33 + $0xf0] sm:$0xf]
        %v4643 = vld [vmem:[%s33 + $0xf4] sm:$0xf]
        %v4644 = vld [vmem:[%s33 + $0xf8] sm:$0xf]
        %v4645 = vld [vmem:[%s33 + $0xfc] sm:$0xf]
        %v4646 = vld [vmem:[%s33 + $0x100] sm:$0xf]
        %v4647 = vld [vmem:[%s33 + $0x104] sm:$0xf]
        %v4648 = vld [vmem:[%s33 + $0x108] sm:$0xf]
        %v4649 = vld [vmem:[%s33 + $0x10c] sm:$0xf]
        %v4650 = vld [vmem:[%s33 + $0x110] sm:$0xf]
        %v4651 = vld [vmem:[%s33 + $0x114] sm:$0xf]
        %v4652 = vld [vmem:[%s33 + $0x118] sm:$0xf]
        %v4653 = vld [vmem:[%s33 + $0x11c] sm:$0xf]
        %v4654 = vld [vmem:[%s33 + $0x120] sm:$0xf]
        %v4655 = vld [vmem:[%s33 + $0x124] sm:$0xf]
        %v4656 = vld [vmem:[%s33 + $0x128] sm:$0xf]
        %v4657 = vld [vmem:[%s33 + $0x12c] sm:$0xf]
        %v4658 = vld [vmem:[%s33 + $0x130] sm:$0xf]
        %v4659 = vld [vmem:[%s33 + $0x134] sm:$0xf]
        %v4660 = vld [vmem:[%s33 + $0x138] sm:$0xf]
        %v4661 = vld [vmem:[%s33 + $0x13c] sm:$0xf]
        %v4742 = vunpack.c.l.b16 %v4582
        %v4743 = vunpack.c.l.b16 %v4583
        %v4744 = vunpack.c.l.b16 %v4584
        %v4745 = vunpack.c.l.b16 %v4585
        %v4746 = vunpack.c.l.b16 %v4586
        %v4747 = vunpack.c.l.b16 %v4587
        %v4748 = vunpack.c.l.b16 %v4588
        %v4749 = vunpack.c.l.b16 %v4589
        %v4750 = vunpack.c.l.b16 %v4590
        %v4751 = vunpack.c.l.b16 %v4591
        %v4752 = vunpack.c.l.b16 %v4592
        %v4753 = vunpack.c.l.b16 %v4593
        %v4754 = vunpack.c.l.b16 %v4594
        %v4755 = vunpack.c.l.b16 %v4595
        %v4756 = vunpack.c.l.b16 %v4596
        %v4757 = vunpack.c.l.b16 %v4597
        %v4758 = vunpack.c.l.b16 %v4598
        %v4759 = vunpack.c.l.b16 %v4599
        %v4760 = vunpack.c.l.b16 %v4600
        %v4761 = vunpack.c.l.b16 %v4601
        %v4762 = vunpack.c.l.b16 %v4602
        %v4763 = vunpack.c.l.b16 %v4603
        %v4764 = vunpack.c.l.b16 %v4604
        %v4765 = vunpack.c.l.b16 %v4605
        %v4766 = vunpack.c.l.b16 %v4606
        %v4767 = vunpack.c.l.b16 %v4607
        %v4768 = vunpack.c.l.b16 %v4608
        %v4769 = vunpack.c.l.b16 %v4609
        %v4770 = vunpack.c.l.b16 %v4610
        %v4771 = vunpack.c.l.b16 %v4611
        %v4772 = vunpack.c.l.b16 %v4612
        %v4773 = vunpack.c.l.b16 %v4613
        %v4774 = vunpack.c.l.b16 %v4614
        %v4775 = vunpack.c.l.b16 %v4615
        %v4776 = vunpack.c.l.b16 %v4616
        %v4777 = vunpack.c.l.b16 %v4617
        %v4778 = vunpack.c.l.b16 %v4618
        %v4779 = vunpack.c.l.b16 %v4619
        %v4780 = vunpack.c.l.b16 %v4620
        %v4781 = vunpack.c.l.b16 %v4621
        %v4782 = vunpack.c.l.b16 %v4622
        %v4783 = vunpack.c.l.b16 %v4623
        %v4784 = vunpack.c.l.b16 %v4624
        %v4785 = vunpack.c.l.b16 %v4625
        %v4786 = vunpack.c.l.b16 %v4626
        %v4787 = vunpack.c.l.b16 %v4627
        %v4788 = vunpack.c.l.b16 %v4628
        %v4789 = vunpack.c.l.b16 %v4629
        %v4790 = vunpack.c.l.b16 %v4630
        %v4791 = vunpack.c.l.b16 %v4631
        %v4792 = vunpack.c.l.b16 %v4632
        %v4793 = vunpack.c.l.b16 %v4633
        %v4794 = vunpack.c.l.b16 %v4634
        %v4795 = vunpack.c.l.b16 %v4635
        %v4796 = vunpack.c.l.b16 %v4636
        %v4797 = vunpack.c.l.b16 %v4637
        %v4798 = vunpack.c.l.b16 %v4638
        %v4799 = vunpack.c.l.b16 %v4639
        %v4800 = vunpack.c.l.b16 %v4640
        %v4801 = vunpack.c.l.b16 %v4641
        %v4802 = vunpack.c.l.b16 %v4642
        %v4803 = vunpack.c.l.b16 %v4643
        %v4804 = vunpack.c.l.b16 %v4644
        %v4805 = vunpack.c.l.b16 %v4645
        %v4806 = vunpack.c.l.b16 %v4646
        %v4807 = vunpack.c.l.b16 %v4647
        %v4808 = vunpack.c.l.b16 %v4648
        %v4809 = vunpack.c.l.b16 %v4649
        %v4810 = vunpack.c.l.b16 %v4650
        %v4811 = vunpack.c.l.b16 %v4651
        %v4812 = vunpack.c.l.b16 %v4652
        %v4813 = vunpack.c.l.b16 %v4653
        %v4814 = vunpack.c.l.b16 %v4654
        %v4815 = vunpack.c.l.b16 %v4655
        %v4816 = vunpack.c.l.b16 %v4656
        %v4817 = vunpack.c.l.b16 %v4657
        %v4818 = vunpack.c.l.b16 %v4658
        %v4819 = vunpack.c.l.b16 %v4659
        %v4820 = vunpack.c.l.b16 %v4660
        %v4821 = vunpack.c.l.b16 %v4661
        %v4822 = vpack.c.b16 %v4743, %v4742
        %v4823 = vpack.c.b16 %v4745, %v4744
        %v4824 = vpack.c.b16 %v4747, %v4746
        %v4825 = vpack.c.b16 %v4749, %v4748
        %v4826 = vpack.c.b16 %v4751, %v4750
        %v4827 = vpack.c.b16 %v4753, %v4752
        %v4828 = vpack.c.b16 %v4755, %v4754
        %v4829 = vpack.c.b16 %v4757, %v4756
        %v4830 = vpack.c.b16 %v4759, %v4758
        %v4831 = vpack.c.b16 %v4761, %v4760
        %v4832 = vpack.c.b16 %v4763, %v4762
        %v4833 = vpack.c.b16 %v4765, %v4764
        %v4834 = vpack.c.b16 %v4767, %v4766
        %v4835 = vpack.c.b16 %v4769, %v4768
        %v4836 = vpack.c.b16 %v4771, %v4770
        %v4837 = vpack.c.b16 %v4773, %v4772
        %v4838 = vpack.c.b16 %v4775, %v4774
        %v4839 = vpack.c.b16 %v4777, %v4776
        %v4840 = vpack.c.b16 %v4779, %v4778
        %v4841 = vpack.c.b16 %v4781, %v4780
        %v4842 = vpack.c.b16 %v4783, %v4782
        %v4843 = vpack.c.b16 %v4785, %v4784
        %v4844 = vpack.c.b16 %v4787, %v4786
        %v4845 = vpack.c.b16 %v4789, %v4788
        %v4846 = vpack.c.b16 %v4791, %v4790
        %v4847 = vpack.c.b16 %v4793, %v4792
        %v4848 = vpack.c.b16 %v4795, %v4794
        %v4849 = vpack.c.b16 %v4797, %v4796
        %v4850 = vpack.c.b16 %v4799, %v4798
        %v4851 = vpack.c.b16 %v4801, %v4800
        %v4852 = vpack.c.b16 %v4803, %v4802
        %v4853 = vpack.c.b16 %v4805, %v4804
        %v4854 = vpack.c.b16 %v4807, %v4806
        %v4855 = vpack.c.b16 %v4809, %v4808
        %v4856 = vpack.c.b16 %v4811, %v4810
        %v4857 = vpack.c.b16 %v4813, %v4812
        %v4858 = vpack.c.b16 %v4815, %v4814
        %v4859 = vpack.c.b16 %v4817, %v4816
        %v4860 = vpack.c.b16 %v4819, %v4818
        %v4861 = vpack.c.b16 %v4821, %v4820
        %4902 = vmatprep.subr.bf16.mxu0 0
        %4903 = vmatpush1.bf16.msra.mxu0 %v4822
        %4904 = vmatprep.subr.bf16.mxu0 0
        %4905 = vmatpush1.bf16.msra.mxu0 %v4823
        %4906 = vmatprep.subr.bf16.mxu0 0
        %4907 = vmatpush1.bf16.msra.mxu0 %v4824
        %4908 = vmatprep.subr.bf16.mxu0 0
        %4909 = vmatpush1.bf16.msra.mxu0 %v4825
        %4910 = vmatprep.subr.bf16.mxu0 0
        %4911 = vmatpush1.bf16.msra.mxu0 %v4826
        %4912 = vmatprep.subr.bf16.mxu0 0
        %4913 = vmatpush1.bf16.msra.mxu0 %v4827
        %4914 = vmatprep.subr.bf16.mxu0 0
        %4915 = vmatpush1.bf16.msra.mxu0 %v4828
        %4916 = vmatprep.subr.bf16.mxu0 0
        %4917 = vmatpush1.bf16.msra.mxu0 %v4829
        %4918 = vmatprep.subr.bf16.mxu0 0
        %4919 = vmatpush1.bf16.msra.mxu0 %v4830
        %4920 = vmatprep.subr.bf16.mxu0 0
        %4921 = vmatpush1.bf16.msra.mxu0 %v4831
        %4922 = vmatprep.subr.bf16.mxu0 0
        %4923 = vmatpush1.bf16.msra.mxu0 %v4832
        %4924 = vmatprep.subr.bf16.mxu0 0
        %4925 = vmatpush1.bf16.msra.mxu0 %v4833
        %4926 = vmatprep.subr.bf16.mxu0 0
        %4927 = vmatpush1.bf16.msra.mxu0 %v4834
        %4928 = vmatprep.subr.bf16.mxu0 0
        %4929 = vmatpush1.bf16.msra.mxu0 %v4835
        %4930 = vmatprep.subr.bf16.mxu0 0
        %4931 = vmatpush1.bf16.msra.mxu0 %v4836
        %4932 = vmatprep.subr.bf16.mxu0 0
        %4933 = vmatpush1.bf16.msra.mxu0 %v4837
        %4934 = vmatprep.mubr.bf16.mxu0 %v4573
        %4935 = vmatmul.mubr.bf16.gmra.mrb[0].mxu0 %v4572
        %v4936 = vpop.f32.mrb[0].mxu0
        %v4937 = vadd.f32 0.0, %v4936
        %v4938 = vpop.f32.mrb[0].mxu0
        %v4939 = vpop.f32.mrb[0].mxu0
        %v4940 = vadd.f32 0.0, %v4939
        %v4941 = vpop.f32.mrb[0].mxu0
        %4942 = vmatprep.mubr.bf16.mxu0 %v4578
        %4943 = vmatmul.mubr.bf16.gmra.mrb[0].mxu0 %v4577
        %v4944 = vpop.f32.mrb[0].mxu0
        %v4945 = vadd.f32 0.0, %v4944
        %v4946 = vpop.f32.mrb[0].mxu0
        %v4947 = vpop.f32.mrb[0].mxu0
        %v4948 = vadd.f32 0.0, %v4947
        %v4949 = vpop.f32.mrb[0].mxu0
        %4950 = vdwg.mxu0
        %4951 = vmatprep.subr.bf16.mxu0 0
        %4952 = vmatpush1.bf16.msra.mxu0 %v4838
        %4953 = vmatprep.subr.bf16.mxu0 0
        %4954 = vmatpush1.bf16.msra.mxu0 %v4839
        %4955 = vmatprep.subr.bf16.mxu0 0
        %4956 = vmatpush1.bf16.msra.mxu0 %v4840
        %4957 = vmatprep.subr.bf16.mxu0 0
        %4958 = vmatpush1.bf16.msra.mxu0 %v4841
        %4959 = vmatprep.subr.bf16.mxu0 0
        %4960 = vmatpush1.bf16.msra.mxu0 %v4842
        %4961 = vmatprep.subr.bf16.mxu0 0
        %4962 = vmatpush1.bf16.msra.mxu0 %v4843
        %4963 = vmatprep.subr.bf16.mxu0 0
        %4964 = vmatpush1.bf16.msra.mxu0 %v4844
        %4965 = vmatprep.subr.bf16.mxu0 0
        %4966 = vmatpush1.bf16.msra.mxu0 %v4845
        %4967 = vmatprep.subr.bf16.mxu0 0
        %4968 = vmatpush1.bf16.msra.mxu0 %v4846
        %4969 = vmatprep.subr.bf16.mxu0 0
        %4970 = vmatpush1.bf16.msra.mxu0 %v4847
        %4971 = vmatprep.subr.bf16.mxu0 0
        %4972 = vmatpush1.bf16.msra.mxu0 %v4848
        %4973 = vmatprep.subr.bf16.mxu0 0
        %4974 = vmatpush1.bf16.msra.mxu0 %v4849
        %4975 = vmatprep.subr.bf16.mxu0 0
        %4976 = vmatpush1.bf16.msra.mxu0 %v4850
        %4977 = vmatprep.subr.bf16.mxu0 0
        %4978 = vmatpush1.bf16.msra.mxu0 %v4851
        %4979 = vmatprep.subr.bf16.mxu0 0
        %4980 = vmatpush1.bf16.msra.mxu0 %v4852
        %4981 = vmatprep.subr.bf16.mxu0 0
        %4982 = vmatpush1.bf16.msra.mxu0 %v4853
        %4983 = vmatprep.mubr.bf16.mxu0 %v4575
        %4984 = vmatmul.mubr.bf16.gmra.mrb[0].mxu0 %v4574
        %v4985 = vpop.f32.mrb[0].mxu0
        %v4986 = vadd.f32 %v4937, %v4985
        %v4987 = vpop.f32.mrb[0].mxu0
        %v4988 = vpop.f32.mrb[0].mxu0
        %v4989 = vadd.f32 %v4940, %v4988
        %v4990 = vpop.f32.mrb[0].mxu0
        %4991 = vmatprep.mubr.bf16.mxu0 %v4580
        %4992 = vmatmul.mubr.bf16.gmra.mrb[0].mxu0 %v4579
        %v4993 = vpop.f32.mrb[0].mxu0
        %v4994 = vadd.f32 %v4945, %v4993
        %v4995 = vpop.f32.mrb[0].mxu0
        %v4996 = vpop.f32.mrb[0].mxu0
        %v4997 = vadd.f32 %v4948, %v4996
        %v4998 = vpop.f32.mrb[0].mxu0
        %4999 = vdwg.mxu0
        %5000 = vmatprep.subr.bf16.mxu0 0
        %5001 = vmatpush1.bf16.msra.mxu0 %v4854
        %5002 = vmatprep.subr.bf16.mxu0 0
        %5003 = vmatpush1.bf16.msra.mxu0 %v4855
        %5004 = vmatprep.subr.bf16.mxu0 0
        %5005 = vmatpush1.bf16.msra.mxu0 %v4856
        %5006 = vmatprep.subr.bf16.mxu0 0
        %5007 = vmatpush1.bf16.msra.mxu0 %v4857
        %5008 = vmatprep.subr.bf16.mxu0 0
        %5009 = vmatpush1.bf16.msra.mxu0 %v4858
        %5010 = vmatprep.subr.bf16.mxu0 0
        %5011 = vmatpush1.bf16.msra.mxu0 %v4859
        %5012 = vmatprep.subr.bf16.mxu0 0
        %5013 = vmatpush1.bf16.msra.mxu0 %v4860
        %5014 = vmatprep.subr.bf16.mxu0 0
        %5015 = vmatpush1.bf16.msra.mxu0 %v4861
        %5016 = vmatprep.subr.bf16.mxu0 0
        %5017 = vmatpush1.bf16.msra.mxu0 0
        %5018 = vmatprep.subr.bf16.mxu0 0
        %5019 = vmatpush1.bf16.msra.mxu0 0
        %5020 = vmatprep.subr.bf16.mxu0 0
        %5021 = vmatpush1.bf16.msra.mxu0 0
        %5022 = vmatprep.subr.bf16.mxu0 0
        %5023 = vmatpush1.bf16.msra.mxu0 0
        %5024 = vmatprep.subr.bf16.mxu0 0
        %5025 = vmatpush1.bf16.msra.mxu0 0
        %5026 = vmatprep.subr.bf16.mxu0 0
        %5027 = vmatpush1.bf16.msra.mxu0 0
        %5028 = vmatprep.subr.bf16.mxu0 0
        %5029 = vmatpush1.bf16.msra.mxu0 0
        %5030 = vmatprep.subr.bf16.mxu0 0
        %5031 = vmatpush1.bf16.msra.mxu0 0
        %5032 = vmatprep.mubr.bf16.mxu0 0
        %5033 = vmatmul.mubr.bf16.gmra.mrb[0].mxu0 %v4576
        %v5034 = vpop.f32.mrb[0].mxu0
        %v5035 = vadd.f32 %v4986, %v5034
        %v5036 = vpop.f32.mrb[0].mxu0
        %v5037 = vpop.f32.mrb[0].mxu0
        %v5038 = vadd.f32 %v4989, %v5037
        %v5039 = vpop.f32.mrb[0].mxu0
        %5040 = vmatprep.mubr.bf16.mxu0 0
        %5041 = vmatmul.mubr.bf16.gmra.mrb[0].mxu0 %v4581
        %v5042 = vpop.f32.mrb[0].mxu0
        %v5043 = vadd.f32 %v4994, %v5042
        %v5044 = vpop.f32.mrb[0].mxu0
        %v5045 = vpop.f32.mrb[0].mxu0
        %v5046 = vadd.f32 %v4997, %v5045
        %v5047 = vpop.f32.mrb[0].mxu0
        %5048 = vdwg.mxu0
        %v5049 = vld [vmem:[#allocation21] sm:$0x1]
        %v5051 = vlaneseq
        %v5052 = vshrl.u32 %v5051, 7
        %v5053 = vsub.s32 0, %v5052
        %v5054 = vrot.slane %v5049, %v5053
        %v5056 = vmul.f32 %v5035, %v5054
        %v5057 = vmul.f32 %v5038, %v5054
        %v5058 = vmul.f32 %v5043, %v5054
        %v5059 = vmul.f32 %v5046, %v5054
        %v5060 = vld [vmem:[#allocation23] sm:$0x1]
        %v5062 = vlaneseq
        %v5063 = vshrl.u32 %v5062, 7
        %v5064 = vsub.s32 0, %v5063
        %v5065 = vrot.slane %v5060, %v5064
        %v5067 = vadd.f32 %v5056, %v5065
        %v5068 = vadd.f32 %v5057, %v5065
        %v5069 = vadd.f32 %v5058, %v5065
        %v5070 = vadd.f32 %v5059, %v5065
        %s5071 = sld [smem:[#allocation2 + $0x4]]
        %vm5072 = vcmp.gt.f32.partialorder %v5067, 0.0
        %vm5073 = vcmp.gt.f32.partialorder %v5068, 0.0
        %vm5074 = vcmp.gt.f32.partialorder %v5069, 0.0
        %vm5075 = vcmp.gt.f32.partialorder %v5070, 0.0
        %v5076 = vstv %s5071
        %v5077 = vmul.f32 %v5076, %v5067
        %v5078 = vmul.f32 %v5076, %v5068
        %v5079 = vmul.f32 %v5076, %v5069
        %v5080 = vmul.f32 %v5076, %v5070
        %v5081 = vsel %vm5072, %v5067, %v5077
        %v5082 = vsel %vm5073, %v5068, %v5078
        %v5083 = vsel %vm5074, %v5069, %v5079
        %v5084 = vsel %vm5075, %v5070, %v5080
        %v5089 = vcombine.high %v5081, %v5081
        %v5090 = vcombine.high %v5082, %v5082
        %v5091 = vcombine.high %v5083, %v5083
        %v5092 = vcombine.high %v5084, %v5084
        %v5093 = vrot.slane %v5081, 6
        %v5094 = vrot.slane %v5089, 6
        %v5095 = vrot.slane %v5082, 6
        %v5096 = vrot.slane %v5090, 6
        %v5097 = vrot.slane %v5083, 6
        %v5098 = vrot.slane %v5091, 6
        %v5099 = vrot.slane %v5084, 6
        %v5100 = vrot.slane %v5092, 6
        %v5109 = vsel %vm3160, 0.0, %v5093
        %v5110 = vsel %vm3160, 0.0, %v5094
        %v5111 = vsel %vm3160, 0.0, %v5095
        %v5112 = vsel %vm3160, 0.0, %v5096
        %v5113 = vsel %vm3160, 0.0, %v5097
        %v5114 = vsel %vm3160, 0.0, %v5098
        %v5115 = vsel %vm3160, 0.0, %v5099
        %v5116 = vsel %vm3160, 0.0, %v5100
        %v5117 = vsel %vm3169, %v5109, 0.0
        %v5118 = vsel %vm3169, %v5110, 0.0
        %v5119 = vsel %vm3169, %v5111, 0.0
        %v5120 = vsel %vm3169, %v5112, 0.0
        %v5121 = vsel %vm3169, %v5113, 0.0
        %v5122 = vsel %vm3169, %v5114, 0.0
        %v5123 = vsel %vm3169, %v5115, 0.0
        %v5124 = vsel %vm3169, %v5116, 0.0
        %v5133 = vrot.slane %v5117, 1
        %v5134 = vrot.slane %v5118, 1
        %v5135 = vrot.slane %v5119, 1
        %v5136 = vrot.slane %v5120, 1
        %v5137 = vrot.slane %v5121, 1
        %v5138 = vrot.slane %v5122, 1
        %v5139 = vrot.slane %v5123, 1
        %v5140 = vrot.slane %v5124, 1
        %5141 = vrot.lane.b32.xlu0 %v5133, 32
        %v5142 = vpop.permute.xlu0 %5141
        %5143 = vrot.lane.b32.xlu0 %v5134, 32
        %v5144 = vpop.permute.xlu0 %5143
        %5145 = vrot.lane.b32.xlu0 %v5135, 32
        %v5146 = vpop.permute.xlu0 %5145
        %5147 = vrot.lane.b32.xlu0 %v5136, 32
        %v5148 = vpop.permute.xlu0 %5147
        %5149 = vrot.lane.b32.xlu0 %v5137, 32
        %v5150 = vpop.permute.xlu0 %5149
        %5151 = vrot.lane.b32.xlu0 %v5138, 32
        %v5152 = vpop.permute.xlu0 %5151
        %5153 = vrot.lane.b32.xlu0 %v5139, 32
        %v5154 = vpop.permute.xlu0 %5153
        %5155 = vrot.lane.b32.xlu0 %v5140, 32
        %v5156 = vpop.permute.xlu0 %5155
        %v5165 = vrot.slane %v5117, 2
        %v5166 = vrot.slane %v5118, 2
        %v5167 = vrot.slane %v5119, 2
        %v5168 = vrot.slane %v5120, 2
        %v5169 = vrot.slane %v5121, 2
        %v5170 = vrot.slane %v5122, 2
        %v5171 = vrot.slane %v5123, 2
        %v5172 = vrot.slane %v5124, 2
        %5173 = vrot.lane.b32.xlu0 %v5165, 64
        %v5174 = vpop.permute.xlu0 %5173
        %5175 = vrot.lane.b32.xlu0 %v5166, 64
        %v5176 = vpop.permute.xlu0 %5175
        %5177 = vrot.lane.b32.xlu0 %v5167, 64
        %v5178 = vpop.permute.xlu0 %5177
        %5179 = vrot.lane.b32.xlu0 %v5168, 64
        %v5180 = vpop.permute.xlu0 %5179
        %5181 = vrot.lane.b32.xlu0 %v5169, 64
        %v5182 = vpop.permute.xlu0 %5181
        %5183 = vrot.lane.b32.xlu0 %v5170, 64
        %v5184 = vpop.permute.xlu0 %5183
        %5185 = vrot.lane.b32.xlu0 %v5171, 64
        %v5186 = vpop.permute.xlu0 %5185
        %5187 = vrot.lane.b32.xlu0 %v5172, 64
        %v5188 = vpop.permute.xlu0 %5187
        %v5197 = vrot.slane %v5117, 3
        %v5198 = vrot.slane %v5118, 3
        %v5199 = vrot.slane %v5119, 3
        %v5200 = vrot.slane %v5120, 3
        %v5201 = vrot.slane %v5121, 3
        %v5202 = vrot.slane %v5122, 3
        %v5203 = vrot.slane %v5123, 3
        %v5204 = vrot.slane %v5124, 3
        %5205 = vrot.lane.b32.xlu0 %v5197, 96
        %v5206 = vpop.permute.xlu0 %5205
        %5207 = vrot.lane.b32.xlu0 %v5198, 96
        %v5208 = vpop.permute.xlu0 %5207
        %5209 = vrot.lane.b32.xlu0 %v5199, 96
        %v5210 = vpop.permute.xlu0 %5209
        %5211 = vrot.lane.b32.xlu0 %v5200, 96
        %v5212 = vpop.permute.xlu0 %5211
        %5213 = vrot.lane.b32.xlu0 %v5201, 96
        %v5214 = vpop.permute.xlu0 %5213
        %5215 = vrot.lane.b32.xlu0 %v5202, 96
        %v5216 = vpop.permute.xlu0 %5215
        %5217 = vrot.lane.b32.xlu0 %v5203, 96
        %v5218 = vpop.permute.xlu0 %5217
        %5219 = vrot.lane.b32.xlu0 %v5204, 96
        %v5220 = vpop.permute.xlu0 %5219
        %v5229 = vrot.slane %v5117, 4
        %v5230 = vrot.slane %v5118, 4
        %v5231 = vrot.slane %v5119, 4
        %v5232 = vrot.slane %v5120, 4
        %v5233 = vrot.slane %v5121, 4
        %v5234 = vrot.slane %v5122, 4
        %v5235 = vrot.slane %v5123, 4
        %v5236 = vrot.slane %v5124, 4
        %vm5237 = vcmask 261120
        %v5238 = vsel %vm5237, %v5117, %v5142
        %v5239 = vsel %vm5237, %v5118, %v5144
        %v5240 = vsel %vm5237, %v5119, %v5146
        %v5241 = vsel %vm5237, %v5120, %v5148
        %v5242 = vsel %vm5237, %v5121, %v5150
        %v5243 = vsel %vm5237, %v5122, %v5152
        %v5244 = vsel %vm5237, %v5123, %v5154
        %v5245 = vsel %vm5237, %v5124, %v5156
        %v5246 = vsel %vm1999, %v5238, %v5174
        %v5247 = vsel %vm1999, %v5239, %v5176
        %v5248 = vsel %vm1999, %v5240, %v5178
        %v5249 = vsel %vm1999, %v5241, %v5180
        %v5250 = vsel %vm1999, %v5242, %v5182
        %v5251 = vsel %vm1999, %v5243, %v5184
        %v5252 = vsel %vm1999, %v5244, %v5186
        %v5253 = vsel %vm1999, %v5245, %v5188
        %v5254 = vsel %vm1981, %v5246, %v5206
        %v5255 = vsel %vm1981, %v5247, %v5208
        %v5256 = vsel %vm1981, %v5248, %v5210
        %v5257 = vsel %vm1981, %v5249, %v5212
        %v5258 = vsel %vm1981, %v5250, %v5214
        %v5259 = vsel %vm1981, %v5251, %v5216
        %v5260 = vsel %vm1981, %v5252, %v5218
        %v5261 = vsel %vm1981, %v5253, %v5220
        %v5270 = vcombine.low %v5254, %v5229
        %v5271 = vcombine.low %v5255, %v5230
        %v5272 = vcombine.low %v5256, %v5231
        %v5273 = vcombine.low %v5257, %v5232
        %v5274 = vcombine.low %v5258, %v5233
        %v5275 = vcombine.low %v5259, %v5234
        %v5276 = vcombine.low %v5260, %v5235
        %v5277 = vcombine.low %v5261, %v5236
        %v5278 = vcombine.low %v5270, %v5271
        %v5279 = vcombine.high %v5270, %v5271
        %v5280 = vcombine.low %v5272, %v5273
        %v5281 = vcombine.high %v5272, %v5273
        %v5282 = vcombine.low %v5274, %v5275
        %v5283 = vcombine.high %v5274, %v5275
        %v5284 = vcombine.low %v5276, %v5277
        %v5285 = vcombine.high %v5276, %v5277
        %v5294 = vpack.c.bf16 %v5280, %v5278
        %v5295 = vpack.c.bf16 %v5281, %v5279
        %v5296 = vpack.c.bf16 %v5284, %v5282
        %v5297 = vpack.c.bf16 %v5285, %v5283
        %v5298 = vld [vmem:[#allocation24] sm:$0xf]
        %v5299 = vld [vmem:[#allocation24 + $0x4] sm:$0xf]
        %v5300 = vld [vmem:[#allocation24 + $0x8] sm:$0xf]
        %v5301 = vld [vmem:[#allocation24 + $0xc] sm:$0xf]
        %v5302 = vld [vmem:[#allocation24 + $0x10] sm:$0xf]
        %v5303 = vld [vmem:[#allocation24 + $0x14] sm:$0xf]
        %v5304 = vld [vmem:[#allocation24 + $0x18] sm:$0xf]
        %v5305 = vld [vmem:[#allocation24 + $0x1c] sm:$0xf]
        %v5306 = vld [vmem:[#allocation24 + $0x20] sm:$0xf]
        %v5307 = vld [vmem:[#allocation24 + $0x24] sm:$0xf]
        %v5308 = vld [vmem:[#allocation24 + $0x28] sm:$0xf]
        %v5309 = vld [vmem:[#allocation24 + $0x2c] sm:$0xf]
        %v5310 = vld [vmem:[#allocation24 + $0x30] sm:$0xf]
        %v5311 = vld [vmem:[#allocation24 + $0x34] sm:$0xf]
        %v5312 = vld [vmem:[#allocation24 + $0x38] sm:$0xf]
        %v5313 = vld [vmem:[#allocation24 + $0x3c] sm:$0xf]
        %v5314 = vld [vmem:[#allocation24 + $0x40] sm:$0xf]
        %v5315 = vld [vmem:[#allocation24 + $0x44] sm:$0xf]
        %v5316 = vld [vmem:[#allocation24 + $0x48] sm:$0xf]
        %v5317 = vld [vmem:[#allocation24 + $0x4c] sm:$0xf]
        %v5338 = vunpack.c.l.b16 %v5298
        %v5339 = vunpack.c.l.b16 %v5299
        %v5340 = vunpack.c.l.b16 %v5300
        %v5341 = vunpack.c.l.b16 %v5301
        %v5342 = vunpack.c.l.b16 %v5302
        %v5343 = vunpack.c.l.b16 %v5303
        %v5344 = vunpack.c.l.b16 %v5304
        %v5345 = vunpack.c.l.b16 %v5305
        %v5346 = vunpack.c.l.b16 %v5306
        %v5347 = vunpack.c.l.b16 %v5307
        %v5348 = vunpack.c.l.b16 %v5308
        %v5349 = vunpack.c.l.b16 %v5309
        %v5350 = vunpack.c.l.b16 %v5310
        %v5351 = vunpack.c.l.b16 %v5311
        %v5352 = vunpack.c.l.b16 %v5312
        %v5353 = vunpack.c.l.b16 %v5313
        %v5354 = vunpack.c.l.b16 %v5314
        %v5355 = vunpack.c.l.b16 %v5315
        %v5356 = vunpack.c.l.b16 %v5316
        %v5357 = vunpack.c.l.b16 %v5317
        %v5358 = vpack.c.b16 %v5339, %v5338
        %v5359 = vpack.c.b16 %v5341, %v5340
        %v5360 = vpack.c.b16 %v5343, %v5342
        %v5361 = vpack.c.b16 %v5345, %v5344
        %v5362 = vpack.c.b16 %v5347, %v5346
        %v5363 = vpack.c.b16 %v5349, %v5348
        %v5364 = vpack.c.b16 %v5351, %v5350
        %v5365 = vpack.c.b16 %v5353, %v5352
        %v5366 = vpack.c.b16 %v5355, %v5354
        %v5367 = vpack.c.b16 %v5357, %v5356
        %v5379 = vsel %vm5237, %v5295, 0
        %v5382 = vsel %vm5237, %v5297, 0
        %5384 = vmatprep.subr.bf16.mxu0 0
        %5385 = vmatpush1.bf16.msra.mxu0 %v5358
        %5386 = vmatprep.subr.bf16.mxu0 0
        %5387 = vmatpush1.bf16.msra.mxu0 %v5359
        %5388 = vmatprep.subr.bf16.mxu0 0
        %5389 = vmatpush1.bf16.msra.mxu0 %v5360
        %5390 = vmatprep.subr.bf16.mxu0 0
        %5391 = vmatpush1.bf16.msra.mxu0 %v5361
        %5392 = vmatprep.subr.bf16.mxu0 0
        %5393 = vmatpush1.bf16.msra.mxu0 %v5362
        %5394 = vmatprep.subr.bf16.mxu0 0
        %5395 = vmatpush1.bf16.msra.mxu0 %v5363
        %5396 = vmatprep.subr.bf16.mxu0 0
        %5397 = vmatpush1.bf16.msra.mxu0 %v5364
        %5398 = vmatprep.subr.bf16.mxu0 0
        %5399 = vmatpush1.bf16.msra.mxu0 %v5365
        %5400 = vmatprep.subr.bf16.mxu0 0
        %5401 = vmatpush1.bf16.msra.mxu0 %v5366
        %5402 = vmatprep.subr.bf16.mxu0 0
        %5403 = vmatpush1.bf16.msra.mxu0 %v5367
        %5404 = vmatprep.subr.bf16.mxu0 0
        %5405 = vmatpush1.bf16.msra.mxu0 0
        %5406 = vmatprep.subr.bf16.mxu0 0
        %5407 = vmatpush1.bf16.msra.mxu0 0
        %5408 = vmatprep.subr.bf16.mxu0 0
        %5409 = vmatpush1.bf16.msra.mxu0 0
        %5410 = vmatprep.subr.bf16.mxu0 0
        %5411 = vmatpush1.bf16.msra.mxu0 0
        %5412 = vmatprep.subr.bf16.mxu0 0
        %5413 = vmatpush1.bf16.msra.mxu0 0
        %5414 = vmatprep.subr.bf16.mxu0 0
        %5415 = vmatpush1.bf16.msra.mxu0 0
        %5416 = vmatprep.mubr.bf16.mxu0 %v5379
        %5417 = vmatmul.mubr.bf16.gmra.mrb[0].mxu0 %v5294
        %v5418 = vpop.f32.mrb[0].mxu0
        %v5419 = vadd.f32 0.0, %v5418
        %v5420 = vpop.f32.mrb[0].mxu0
        %v5421 = vpop.f32.mrb[0].mxu0
        %v5422 = vadd.f32 0.0, %v5421
        %v5423 = vpop.f32.mrb[0].mxu0
        %5424 = vmatprep.mubr.bf16.mxu0 %v5382
        %5425 = vmatmul.mubr.bf16.gmra.mrb[0].mxu0 %v5296
        %v5426 = vpop.f32.mrb[0].mxu0
        %v5427 = vadd.f32 0.0, %v5426
        %v5428 = vpop.f32.mrb[0].mxu0
        %v5429 = vpop.f32.mrb[0].mxu0
        %v5430 = vadd.f32 0.0, %v5429
        %v5431 = vpop.f32.mrb[0].mxu0
        %5432 = vdwg.mxu0
        %v5433 = vld [vmem:[#allocation26] sm:$0x1]
        %v5435 = vlaneseq
        %v5436 = vshrl.u32 %v5435, 7
        %v5437 = vsub.s32 0, %v5436
        %v5438 = vrot.slane %v5433, %v5437
        %v5440 = vmul.f32 %v5419, %v5438
        %v5441 = vmul.f32 %v5422, %v5438
        %v5442 = vmul.f32 %v5427, %v5438
        %v5443 = vmul.f32 %v5430, %v5438
        %v5444 = vld [vmem:[%s43] sm:$0x1]
        %v5446 = vlaneseq
        %v5447 = vshrl.u32 %v5446, 7
        %v5448 = vsub.s32 0, %v5447
        %v5449 = vrot.slane %v5444, %v5448
        %v5451 = vadd.f32 %v5440, %v5449
        %v5452 = vadd.f32 %v5441, %v5449
        %v5453 = vadd.f32 %v5442, %v5449
        %v5454 = vadd.f32 %v5443, %v5449
        %s5455 = sld [smem:[#allocation2 + $0x5]]
        %vm5456 = vcmp.gt.f32.partialorder %v5451, 0.0
        %vm5457 = vcmp.gt.f32.partialorder %v5452, 0.0
        %vm5458 = vcmp.gt.f32.partialorder %v5453, 0.0
        %vm5459 = vcmp.gt.f32.partialorder %v5454, 0.0
        %v5460 = vstv %s5455
        %v5461 = vmul.f32 %v5460, %v5451
        %v5462 = vmul.f32 %v5460, %v5452
        %v5463 = vmul.f32 %v5460, %v5453
        %v5464 = vmul.f32 %v5460, %v5454
        %v5465 = vsel %vm5456, %v5451, %v5461
        %v5466 = vsel %vm5457, %v5452, %v5462
        %v5467 = vsel %vm5458, %v5453, %v5463
        %v5468 = vsel %vm5459, %v5454, %v5464
        %v5473 = vcombine.high %v5465, %v5465
        %v5474 = vcombine.high %v5466, %v5466
        %v5475 = vcombine.high %v5467, %v5467
        %v5476 = vcombine.high %v5468, %v5468
        %v5477 = vrot.slane %v5465, 6
        %v5478 = vrot.slane %v5473, 6
        %v5479 = vrot.slane %v5466, 6
        %v5480 = vrot.slane %v5474, 6
        %v5481 = vrot.slane %v5467, 6
        %v5482 = vrot.slane %v5475, 6
        %v5483 = vrot.slane %v5468, 6
        %v5484 = vrot.slane %v5476, 6
        %v5493 = vsel %vm3160, 0.0, %v5477
        %v5494 = vsel %vm3160, 0.0, %v5478
        %v5495 = vsel %vm3160, 0.0, %v5479
        %v5496 = vsel %vm3160, 0.0, %v5480
        %v5497 = vsel %vm3160, 0.0, %v5481
        %v5498 = vsel %vm3160, 0.0, %v5482
        %v5499 = vsel %vm3160, 0.0, %v5483
        %v5500 = vsel %vm3160, 0.0, %v5484
        %v5501 = vsel %vm3169, %v5493, 0.0
        %v5502 = vsel %vm3169, %v5494, 0.0
        %v5503 = vsel %vm3169, %v5495, 0.0
        %v5504 = vsel %vm3169, %v5496, 0.0
        %v5505 = vsel %vm3169, %v5497, 0.0
        %v5506 = vsel %vm3169, %v5498, 0.0
        %v5507 = vsel %vm3169, %v5499, 0.0
        %v5508 = vsel %vm3169, %v5500, 0.0
        %v5517 = vrot.slane %v5501, 1
        %v5518 = vrot.slane %v5502, 1
        %v5519 = vrot.slane %v5503, 1
        %v5520 = vrot.slane %v5504, 1
        %v5521 = vrot.slane %v5505, 1
        %v5522 = vrot.slane %v5506, 1
        %v5523 = vrot.slane %v5507, 1
        %v5524 = vrot.slane %v5508, 1
        %v5525 = vrot.slane %v5501, 2
        %v5526 = vrot.slane %v5502, 2
        %v5527 = vrot.slane %v5503, 2
        %v5528 = vrot.slane %v5504, 2
        %v5529 = vrot.slane %v5505, 2
        %v5530 = vrot.slane %v5506, 2
        %v5531 = vrot.slane %v5507, 2
        %v5532 = vrot.slane %v5508, 2
        %v5533 = vrot.slane %v5501, 3
        %v5534 = vrot.slane %v5502, 3
        %v5535 = vrot.slane %v5503, 3
        %v5536 = vrot.slane %v5504, 3
        %v5537 = vrot.slane %v5505, 3
        %v5538 = vrot.slane %v5506, 3
        %v5539 = vrot.slane %v5507, 3
        %v5540 = vrot.slane %v5508, 3
        %v5541 = vrot.slane %v5501, 4
        %v5542 = vrot.slane %v5502, 4
        %v5543 = vrot.slane %v5503, 4
        %v5544 = vrot.slane %v5504, 4
        %v5545 = vrot.slane %v5505, 4
        %v5546 = vrot.slane %v5506, 4
        %v5547 = vrot.slane %v5507, 4
        %v5548 = vrot.slane %v5508, 4
        %v5549 = vcombine.low %v5501, %v5517
        %v5550 = vcombine.low %v5525, %v5533
        %v5551 = vcombine.low %v5502, %v5518
        %v5552 = vcombine.low %v5526, %v5534
        %v5553 = vcombine.low %v5503, %v5519
        %v5554 = vcombine.low %v5527, %v5535
        %v5555 = vcombine.low %v5504, %v5520
        %v5556 = vcombine.low %v5528, %v5536
        %v5557 = vcombine.low %v5505, %v5521
        %v5558 = vcombine.low %v5529, %v5537
        %v5559 = vcombine.low %v5506, %v5522
        %v5560 = vcombine.low %v5530, %v5538
        %v5561 = vcombine.low %v5507, %v5523
        %v5562 = vcombine.low %v5531, %v5539
        %v5563 = vcombine.low %v5508, %v5524
        %v5564 = vcombine.low %v5532, %v5540
        %v5565 = vcombine.low %v5549, %v5551
        %v5566 = vcombine.high %v5549, %v5551
        %v5567 = vcombine.low %v5550, %v5552
        %v5568 = vcombine.high %v5550, %v5552
        %v5569 = vcombine.low %v5541, %v5542
        %v5570 = vcombine.low %v5553, %v5555
        %v5571 = vcombine.high %v5553, %v5555
        %v5572 = vcombine.low %v5554, %v5556
        %v5573 = vcombine.high %v5554, %v5556
        %v5574 = vcombine.low %v5543, %v5544
        %v5575 = vcombine.low %v5557, %v5559
        %v5576 = vcombine.high %v5557, %v5559
        %v5577 = vcombine.low %v5558, %v5560
        %v5578 = vcombine.high %v5558, %v5560
        %v5579 = vcombine.low %v5545, %v5546
        %v5580 = vcombine.low %v5561, %v5563
        %v5581 = vcombine.high %v5561, %v5563
        %v5582 = vcombine.low %v5562, %v5564
        %v5583 = vcombine.high %v5562, %v5564
        %v5584 = vcombine.low %v5547, %v5548
        %v5605 = vpack.c.bf16 %v5570, %v5565
        %v5606 = vpack.c.bf16 %v5571, %v5566
        %v5607 = vpack.c.bf16 %v5572, %v5567
        %v5608 = vpack.c.bf16 %v5573, %v5568
        %v5609 = vpack.c.bf16 %v5574, %v5569
        %v5610 = vpack.c.bf16 %v5580, %v5575
        %v5611 = vpack.c.bf16 %v5581, %v5576
        %v5612 = vpack.c.bf16 %v5582, %v5577
        %v5613 = vpack.c.bf16 %v5583, %v5578
        %v5614 = vpack.c.bf16 %v5584, %v5579
        %v5615 = vld [vmem:[%s45] sm:$0xf]
        %v5616 = vld [vmem:[%s45 + $0x4] sm:$0xf]
        %v5617 = vld [vmem:[%s45 + $0x8] sm:$0xf]
        %v5618 = vld [vmem:[%s45 + $0xc] sm:$0xf]
        %v5619 = vld [vmem:[%s45 + $0x10] sm:$0xf]
        %v5620 = vld [vmem:[%s45 + $0x14] sm:$0xf]
        %v5621 = vld [vmem:[%s45 + $0x18] sm:$0xf]
        %v5622 = vld [vmem:[%s45 + $0x1c] sm:$0xf]
        %v5623 = vld [vmem:[%s45 + $0x20] sm:$0xf]
        %v5624 = vld [vmem:[%s45 + $0x24] sm:$0xf]
        %v5625 = vld [vmem:[%s45 + $0x28] sm:$0xf]
        %v5626 = vld [vmem:[%s45 + $0x2c] sm:$0xf]
        %v5627 = vld [vmem:[%s45 + $0x30] sm:$0xf]
        %v5628 = vld [vmem:[%s45 + $0x34] sm:$0xf]
        %v5629 = vld [vmem:[%s45 + $0x38] sm:$0xf]
        %v5630 = vld [vmem:[%s45 + $0x3c] sm:$0xf]
        %v5631 = vld [vmem:[%s45 + $0x40] sm:$0xf]
        %v5632 = vld [vmem:[%s45 + $0x44] sm:$0xf]
        %v5633 = vld [vmem:[%s45 + $0x48] sm:$0xf]
        %v5634 = vld [vmem:[%s45 + $0x4c] sm:$0xf]
        %v5635 = vld [vmem:[%s45 + $0x50] sm:$0xf]
        %v5636 = vld [vmem:[%s45 + $0x54] sm:$0xf]
        %v5637 = vld [vmem:[%s45 + $0x58] sm:$0xf]
        %v5638 = vld [vmem:[%s45 + $0x5c] sm:$0xf]
        %v5639 = vld [vmem:[%s45 + $0x60] sm:$0xf]
        %v5640 = vld [vmem:[%s45 + $0x64] sm:$0xf]
        %v5641 = vld [vmem:[%s45 + $0x68] sm:$0xf]
        %v5642 = vld [vmem:[%s45 + $0x6c] sm:$0xf]
        %v5643 = vld [vmem:[%s45 + $0x70] sm:$0xf]
        %v5644 = vld [vmem:[%s45 + $0x74] sm:$0xf]
        %v5645 = vld [vmem:[%s45 + $0x78] sm:$0xf]
        %v5646 = vld [vmem:[%s45 + $0x7c] sm:$0xf]
        %v5647 = vld [vmem:[%s45 + $0x80] sm:$0xf]
        %v5648 = vld [vmem:[%s45 + $0x84] sm:$0xf]
        %v5649 = vld [vmem:[%s45 + $0x88] sm:$0xf]
        %v5650 = vld [vmem:[%s45 + $0x8c] sm:$0xf]
        %v5651 = vld [vmem:[%s45 + $0x90] sm:$0xf]
        %v5652 = vld [vmem:[%s45 + $0x94] sm:$0xf]
        %v5653 = vld [vmem:[%s45 + $0x98] sm:$0xf]
        %v5654 = vld [vmem:[%s45 + $0x9c] sm:$0xf]
        %v5655 = vld [vmem:[%s45 + $0xa0] sm:$0xf]
        %v5656 = vld [vmem:[%s45 + $0xa4] sm:$0xf]
        %v5657 = vld [vmem:[%s45 + $0xa8] sm:$0xf]
        %v5658 = vld [vmem:[%s45 + $0xac] sm:$0xf]
        %v5659 = vld [vmem:[%s45 + $0xb0] sm:$0xf]
        %v5660 = vld [vmem:[%s45 + $0xb4] sm:$0xf]
        %v5661 = vld [vmem:[%s45 + $0xb8] sm:$0xf]
        %v5662 = vld [vmem:[%s45 + $0xbc] sm:$0xf]
        %v5663 = vld [vmem:[%s45 + $0xc0] sm:$0xf]
        %v5664 = vld [vmem:[%s45 + $0xc4] sm:$0xf]
        %v5665 = vld [vmem:[%s45 + $0xc8] sm:$0xf]
        %v5666 = vld [vmem:[%s45 + $0xcc] sm:$0xf]
        %v5667 = vld [vmem:[%s45 + $0xd0] sm:$0xf]
        %v5668 = vld [vmem:[%s45 + $0xd4] sm:$0xf]
        %v5669 = vld [vmem:[%s45 + $0xd8] sm:$0xf]
        %v5670 = vld [vmem:[%s45 + $0xdc] sm:$0xf]
        %v5671 = vld [vmem:[%s45 + $0xe0] sm:$0xf]
        %v5672 = vld [vmem:[%s45 + $0xe4] sm:$0xf]
        %v5673 = vld [vmem:[%s45 + $0xe8] sm:$0xf]
        %v5674 = vld [vmem:[%s45 + $0xec] sm:$0xf]
        %v5675 = vld [vmem:[%s45 + $0xf0] sm:$0xf]
        %v5676 = vld [vmem:[%s45 + $0xf4] sm:$0xf]
        %v5677 = vld [vmem:[%s45 + $0xf8] sm:$0xf]
        %v5678 = vld [vmem:[%s45 + $0xfc] sm:$0xf]
        %v5679 = vld [vmem:[%s45 + $0x100] sm:$0xf]
        %v5680 = vld [vmem:[%s45 + $0x104] sm:$0xf]
        %v5681 = vld [vmem:[%s45 + $0x108] sm:$0xf]
        %v5682 = vld [vmem:[%s45 + $0x10c] sm:$0xf]
        %v5683 = vld [vmem:[%s45 + $0x110] sm:$0xf]
        %v5684 = vld [vmem:[%s45 + $0x114] sm:$0xf]
        %v5685 = vld [vmem:[%s45 + $0x118] sm:$0xf]
        %v5686 = vld [vmem:[%s45 + $0x11c] sm:$0xf]
        %v5687 = vld [vmem:[%s45 + $0x120] sm:$0xf]
        %v5688 = vld [vmem:[%s45 + $0x124] sm:$0xf]
        %v5689 = vld [vmem:[%s45 + $0x128] sm:$0xf]
        %v5690 = vld [vmem:[%s45 + $0x12c] sm:$0xf]
        %v5691 = vld [vmem:[%s45 + $0x130] sm:$0xf]
        %v5692 = vld [vmem:[%s45 + $0x134] sm:$0xf]
        %v5693 = vld [vmem:[%s45 + $0x138] sm:$0xf]
        %v5694 = vld [vmem:[%s45 + $0x13c] sm:$0xf]
        %v5775 = vunpack.c.l.b16 %v5615
        %v5776 = vunpack.c.l.b16 %v5616
        %v5777 = vunpack.c.l.b16 %v5617
        %v5778 = vunpack.c.l.b16 %v5618
        %v5779 = vunpack.c.l.b16 %v5619
        %v5780 = vunpack.c.l.b16 %v5620
        %v5781 = vunpack.c.l.b16 %v5621
        %v5782 = vunpack.c.l.b16 %v5622
        %v5783 = vunpack.c.l.b16 %v5623
        %v5784 = vunpack.c.l.b16 %v5624
        %v5785 = vunpack.c.l.b16 %v5625
        %v5786 = vunpack.c.l.b16 %v5626
        %v5787 = vunpack.c.l.b16 %v5627
        %v5788 = vunpack.c.l.b16 %v5628
        %v5789 = vunpack.c.l.b16 %v5629
        %v5790 = vunpack.c.l.b16 %v5630
        %v5791 = vunpack.c.l.b16 %v5631
        %v5792 = vunpack.c.l.b16 %v5632
        %v5793 = vunpack.c.l.b16 %v5633
        %v5794 = vunpack.c.l.b16 %v5634
        %v5795 = vunpack.c.l.b16 %v5635
        %v5796 = vunpack.c.l.b16 %v5636
        %v5797 = vunpack.c.l.b16 %v5637
        %v5798 = vunpack.c.l.b16 %v5638
        %v5799 = vunpack.c.l.b16 %v5639
        %v5800 = vunpack.c.l.b16 %v5640
        %v5801 = vunpack.c.l.b16 %v5641
        %v5802 = vunpack.c.l.b16 %v5642
        %v5803 = vunpack.c.l.b16 %v5643
        %v5804 = vunpack.c.l.b16 %v5644
        %v5805 = vunpack.c.l.b16 %v5645
        %v5806 = vunpack.c.l.b16 %v5646
        %v5807 = vunpack.c.l.b16 %v5647
        %v5808 = vunpack.c.l.b16 %v5648
        %v5809 = vunpack.c.l.b16 %v5649
        %v5810 = vunpack.c.l.b16 %v5650
        %v5811 = vunpack.c.l.b16 %v5651
        %v5812 = vunpack.c.l.b16 %v5652
        %v5813 = vunpack.c.l.b16 %v5653
        %v5814 = vunpack.c.l.b16 %v5654
        %v5815 = vunpack.c.l.b16 %v5655
        %v5816 = vunpack.c.l.b16 %v5656
        %v5817 = vunpack.c.l.b16 %v5657
        %v5818 = vunpack.c.l.b16 %v5658
        %v5819 = vunpack.c.l.b16 %v5659
        %v5820 = vunpack.c.l.b16 %v5660
        %v5821 = vunpack.c.l.b16 %v5661
        %v5822 = vunpack.c.l.b16 %v5662
        %v5823 = vunpack.c.l.b16 %v5663
        %v5824 = vunpack.c.l.b16 %v5664
        %v5825 = vunpack.c.l.b16 %v5665
        %v5826 = vunpack.c.l.b16 %v5666
        %v5827 = vunpack.c.l.b16 %v5667
        %v5828 = vunpack.c.l.b16 %v5668
        %v5829 = vunpack.c.l.b16 %v5669
        %v5830 = vunpack.c.l.b16 %v5670
        %v5831 = vunpack.c.l.b16 %v5671
        %v5832 = vunpack.c.l.b16 %v5672
        %v5833 = vunpack.c.l.b16 %v5673
        %v5834 = vunpack.c.l.b16 %v5674
        %v5835 = vunpack.c.l.b16 %v5675
        %v5836 = vunpack.c.l.b16 %v5676
        %v5837 = vunpack.c.l.b16 %v5677
        %v5838 = vunpack.c.l.b16 %v5678
        %v5839 = vunpack.c.l.b16 %v5679
        %v5840 = vunpack.c.l.b16 %v5680
        %v5841 = vunpack.c.l.b16 %v5681
        %v5842 = vunpack.c.l.b16 %v5682
        %v5843 = vunpack.c.l.b16 %v5683
        %v5844 = vunpack.c.l.b16 %v5684
        %v5845 = vunpack.c.l.b16 %v5685
        %v5846 = vunpack.c.l.b16 %v5686
        %v5847 = vunpack.c.l.b16 %v5687
        %v5848 = vunpack.c.l.b16 %v5688
        %v5849 = vunpack.c.l.b16 %v5689
        %v5850 = vunpack.c.l.b16 %v5690
        %v5851 = vunpack.c.l.b16 %v5691
        %v5852 = vunpack.c.l.b16 %v5692
        %v5853 = vunpack.c.l.b16 %v5693
        %v5854 = vunpack.c.l.b16 %v5694
        %v5855 = vpack.c.b16 %v5776, %v5775
        %v5856 = vpack.c.b16 %v5778, %v5777
        %v5857 = vpack.c.b16 %v5780, %v5779
        %v5858 = vpack.c.b16 %v5782, %v5781
        %v5859 = vpack.c.b16 %v5784, %v5783
        %v5860 = vpack.c.b16 %v5786, %v5785
        %v5861 = vpack.c.b16 %v5788, %v5787
        %v5862 = vpack.c.b16 %v5790, %v5789
        %v5863 = vpack.c.b16 %v5792, %v5791
        %v5864 = vpack.c.b16 %v5794, %v5793
        %v5865 = vpack.c.b16 %v5796, %v5795
        %v5866 = vpack.c.b16 %v5798, %v5797
        %v5867 = vpack.c.b16 %v5800, %v5799
        %v5868 = vpack.c.b16 %v5802, %v5801
        %v5869 = vpack.c.b16 %v5804, %v5803
        %v5870 = vpack.c.b16 %v5806, %v5805
        %v5871 = vpack.c.b16 %v5808, %v5807
        %v5872 = vpack.c.b16 %v5810, %v5809
        %v5873 = vpack.c.b16 %v5812, %v5811
        %v5874 = vpack.c.b16 %v5814, %v5813
        %v5875 = vpack.c.b16 %v5816, %v5815
        %v5876 = vpack.c.b16 %v5818, %v5817
        %v5877 = vpack.c.b16 %v5820, %v5819
        %v5878 = vpack.c.b16 %v5822, %v5821
        %v5879 = vpack.c.b16 %v5824, %v5823
        %v5880 = vpack.c.b16 %v5826, %v5825
        %v5881 = vpack.c.b16 %v5828, %v5827
        %v5882 = vpack.c.b16 %v5830, %v5829
        %v5883 = vpack.c.b16 %v5832, %v5831
        %v5884 = vpack.c.b16 %v5834, %v5833
        %v5885 = vpack.c.b16 %v5836, %v5835
        %v5886 = vpack.c.b16 %v5838, %v5837
        %v5887 = vpack.c.b16 %v5840, %v5839
        %v5888 = vpack.c.b16 %v5842, %v5841
        %v5889 = vpack.c.b16 %v5844, %v5843
        %v5890 = vpack.c.b16 %v5846, %v5845
        %v5891 = vpack.c.b16 %v5848, %v5847
        %v5892 = vpack.c.b16 %v5850, %v5849
        %v5893 = vpack.c.b16 %v5852, %v5851
        %v5894 = vpack.c.b16 %v5854, %v5853
        %5935 = vmatprep.subr.bf16.mxu0 0
        %5936 = vmatpush1.bf16.msra.mxu0 %v5855
        %5937 = vmatprep.subr.bf16.mxu0 0
        %5938 = vmatpush1.bf16.msra.mxu0 %v5856
        %5939 = vmatprep.subr.bf16.mxu0 0
        %5940 = vmatpush1.bf16.msra.mxu0 %v5857
        %5941 = vmatprep.subr.bf16.mxu0 0
        %5942 = vmatpush1.bf16.msra.mxu0 %v5858
        %5943 = vmatprep.subr.bf16.mxu0 0
        %5944 = vmatpush1.bf16.msra.mxu0 %v5859
        %5945 = vmatprep.subr.bf16.mxu0 0
        %5946 = vmatpush1.bf16.msra.mxu0 %v5860
        %5947 = vmatprep.subr.bf16.mxu0 0
        %5948 = vmatpush1.bf16.msra.mxu0 %v5861
        %5949 = vmatprep.subr.bf16.mxu0 0
        %5950 = vmatpush1.bf16.msra.mxu0 %v5862
        %5951 = vmatprep.subr.bf16.mxu0 0
        %5952 = vmatpush1.bf16.msra.mxu0 %v5863
        %5953 = vmatprep.subr.bf16.mxu0 0
        %5954 = vmatpush1.bf16.msra.mxu0 %v5864
        %5955 = vmatprep.subr.bf16.mxu0 0
        %5956 = vmatpush1.bf16.msra.mxu0 %v5865
        %5957 = vmatprep.subr.bf16.mxu0 0
        %5958 = vmatpush1.bf16.msra.mxu0 %v5866
        %5959 = vmatprep.subr.bf16.mxu0 0
        %5960 = vmatpush1.bf16.msra.mxu0 %v5867
        %5961 = vmatprep.subr.bf16.mxu0 0
        %5962 = vmatpush1.bf16.msra.mxu0 %v5868
        %5963 = vmatprep.subr.bf16.mxu0 0
        %5964 = vmatpush1.bf16.msra.mxu0 %v5869
        %5965 = vmatprep.subr.bf16.mxu0 0
        %5966 = vmatpush1.bf16.msra.mxu0 %v5870
        %5967 = vmatprep.mubr.bf16.mxu0 %v5606
        %5968 = vmatmul.mubr.bf16.gmra.mrb[0].mxu0 %v5605
        %v5969 = vpop.f32.mrb[0].mxu0
        %v5970 = vadd.f32 0.0, %v5969
        %v5971 = vpop.f32.mrb[0].mxu0
        %v5972 = vpop.f32.mrb[0].mxu0
        %v5973 = vadd.f32 0.0, %v5972
        %v5974 = vpop.f32.mrb[0].mxu0
        %5975 = vmatprep.mubr.bf16.mxu0 %v5611
        %5976 = vmatmul.mubr.bf16.gmra.mrb[0].mxu0 %v5610
        %v5977 = vpop.f32.mrb[0].mxu0
        %v5978 = vadd.f32 0.0, %v5977
        %v5979 = vpop.f32.mrb[0].mxu0
        %v5980 = vpop.f32.mrb[0].mxu0
        %v5981 = vadd.f32 0.0, %v5980
        %v5982 = vpop.f32.mrb[0].mxu0
        %5983 = vdwg.mxu0
        %5984 = vmatprep.subr.bf16.mxu0 0
        %5985 = vmatpush1.bf16.msra.mxu0 %v5871
        %5986 = vmatprep.subr.bf16.mxu0 0
        %5987 = vmatpush1.bf16.msra.mxu0 %v5872
        %5988 = vmatprep.subr.bf16.mxu0 0
        %5989 = vmatpush1.bf16.msra.mxu0 %v5873
        %5990 = vmatprep.subr.bf16.mxu0 0
        %5991 = vmatpush1.bf16.msra.mxu0 %v5874
        %5992 = vmatprep.subr.bf16.mxu0 0
        %5993 = vmatpush1.bf16.msra.mxu0 %v5875
        %5994 = vmatprep.subr.bf16.mxu0 0
        %5995 = vmatpush1.bf16.msra.mxu0 %v5876
        %5996 = vmatprep.subr.bf16.mxu0 0
        %5997 = vmatpush1.bf16.msra.mxu0 %v5877
        %5998 = vmatprep.subr.bf16.mxu0 0
        %5999 = vmatpush1.bf16.msra.mxu0 %v5878
        %6000 = vmatprep.subr.bf16.mxu0 0
        %6001 = vmatpush1.bf16.msra.mxu0 %v5879
        %6002 = vmatprep.subr.bf16.mxu0 0
        %6003 = vmatpush1.bf16.msra.mxu0 %v5880
        %6004 = vmatprep.subr.bf16.mxu0 0
        %6005 = vmatpush1.bf16.msra.mxu0 %v5881
        %6006 = vmatprep.subr.bf16.mxu0 0
        %6007 = vmatpush1.bf16.msra.mxu0 %v5882
        %6008 = vmatprep.subr.bf16.mxu0 0
        %6009 = vmatpush1.bf16.msra.mxu0 %v5883
        %6010 = vmatprep.subr.bf16.mxu0 0
        %6011 = vmatpush1.bf16.msra.mxu0 %v5884
        %6012 = vmatprep.subr.bf16.mxu0 0
        %6013 = vmatpush1.bf16.msra.mxu0 %v5885
        %6014 = vmatprep.subr.bf16.mxu0 0
        %6015 = vmatpush1.bf16.msra.mxu0 %v5886
        %6016 = vmatprep.mubr.bf16.mxu0 %v5608
        %6017 = vmatmul.mubr.bf16.gmra.mrb[0].mxu0 %v5607
        %v6018 = vpop.f32.mrb[0].mxu0
        %v6019 = vadd.f32 %v5970, %v6018
        %v6020 = vpop.f32.mrb[0].mxu0
        %v6021 = vpop.f32.mrb[0].mxu0
        %v6022 = vadd.f32 %v5973, %v6021
        %v6023 = vpop.f32.mrb[0].mxu0
        %6024 = vmatprep.mubr.bf16.mxu0 %v5613
        %6025 = vmatmul.mubr.bf16.gmra.mrb[0].mxu0 %v5612
        %v6026 = vpop.f32.mrb[0].mxu0
        %v6027 = vadd.f32 %v5978, %v6026
        %v6028 = vpop.f32.mrb[0].mxu0
        %v6029 = vpop.f32.mrb[0].mxu0
        %v6030 = vadd.f32 %v5981, %v6029
        %v6031 = vpop.f32.mrb[0].mxu0
        %6032 = vdwg.mxu0
        %6033 = vmatprep.subr.bf16.mxu0 0
        %6034 = vmatpush1.bf16.msra.mxu0 %v5887
        %6035 = vmatprep.subr.bf16.mxu0 0
        %6036 = vmatpush1.bf16.msra.mxu0 %v5888
        %6037 = vmatprep.subr.bf16.mxu0 0
        %6038 = vmatpush1.bf16.msra.mxu0 %v5889
        %6039 = vmatprep.subr.bf16.mxu0 0
        %6040 = vmatpush1.bf16.msra.mxu0 %v5890
        %6041 = vmatprep.subr.bf16.mxu0 0
        %6042 = vmatpush1.bf16.msra.mxu0 %v5891
        %6043 = vmatprep.subr.bf16.mxu0 0
        %6044 = vmatpush1.bf16.msra.mxu0 %v5892
        %6045 = vmatprep.subr.bf16.mxu0 0
        %6046 = vmatpush1.bf16.msra.mxu0 %v5893
        %6047 = vmatprep.subr.bf16.mxu0 0
        %6048 = vmatpush1.bf16.msra.mxu0 %v5894
        %6049 = vmatprep.subr.bf16.mxu0 0
        %6050 = vmatpush1.bf16.msra.mxu0 0
        %6051 = vmatprep.subr.bf16.mxu0 0
        %6052 = vmatpush1.bf16.msra.mxu0 0
        %6053 = vmatprep.subr.bf16.mxu0 0
        %6054 = vmatpush1.bf16.msra.mxu0 0
        %6055 = vmatprep.subr.bf16.mxu0 0
        %6056 = vmatpush1.bf16.msra.mxu0 0
        %6057 = vmatprep.subr.bf16.mxu0 0
        %6058 = vmatpush1.bf16.msra.mxu0 0
        %6059 = vmatprep.subr.bf16.mxu0 0
        %6060 = vmatpush1.bf16.msra.mxu0 0
        %6061 = vmatprep.subr.bf16.mxu0 0
        %6062 = vmatpush1.bf16.msra.mxu0 0
        %6063 = vmatprep.subr.bf16.mxu0 0
        %6064 = vmatpush1.bf16.msra.mxu0 0
        %6065 = vmatprep.mubr.bf16.mxu0 0
        %6066 = vmatmul.mubr.bf16.gmra.mrb[0].mxu0 %v5609
        %v6067 = vpop.f32.mrb[0].mxu0
        %v6068 = vadd.f32 %v6019, %v6067
        %v6069 = vpop.f32.mrb[0].mxu0
        %v6070 = vpop.f32.mrb[0].mxu0
        %v6071 = vadd.f32 %v6022, %v6070
        %v6072 = vpop.f32.mrb[0].mxu0
        %6073 = vmatprep.mubr.bf16.mxu0 0
        %6074 = vmatmul.mubr.bf16.gmra.mrb[0].mxu0 %v5614
        %v6075 = vpop.f32.mrb[0].mxu0
        %v6076 = vadd.f32 %v6027, %v6075
        %v6077 = vpop.f32.mrb[0].mxu0
        %v6078 = vpop.f32.mrb[0].mxu0
        %v6079 = vadd.f32 %v6030, %v6078
        %v6080 = vpop.f32.mrb[0].mxu0
        %6081 = vdwg.mxu0
        %v6082 = vld [vmem:[%s47] sm:$0x1]
        %v6084 = vlaneseq
        %v6085 = vshrl.u32 %v6084, 7
        %v6086 = vsub.s32 0, %v6085
        %v6087 = vrot.slane %v6082, %v6086
        %v6089 = vmul.f32 %v6068, %v6087
        %v6090 = vmul.f32 %v6071, %v6087
        %v6091 = vmul.f32 %v6076, %v6087
        %v6092 = vmul.f32 %v6079, %v6087
        %v6093 = vld [vmem:[%s49] sm:$0x1]
        %v6095 = vlaneseq
        %v6096 = vshrl.u32 %v6095, 7
        %v6097 = vsub.s32 0, %v6096
        %v6098 = vrot.slane %v6093, %v6097
        %v6100 = vadd.f32 %v6089, %v6098
        %v6101 = vadd.f32 %v6090, %v6098
        %v6102 = vadd.f32 %v6091, %v6098
        %v6103 = vadd.f32 %v6092, %v6098
        %s6104 = sld [smem:[#allocation2 + $0x6]]
        %vm6105 = vcmp.gt.f32.partialorder %v6100, 0.0
        %vm6106 = vcmp.gt.f32.partialorder %v6101, 0.0
        %vm6107 = vcmp.gt.f32.partialorder %v6102, 0.0
        %vm6108 = vcmp.gt.f32.partialorder %v6103, 0.0
        %v6109 = vstv %s6104
        %v6110 = vmul.f32 %v6109, %v6100
        %v6111 = vmul.f32 %v6109, %v6101
        %v6112 = vmul.f32 %v6109, %v6102
        %v6113 = vmul.f32 %v6109, %v6103
        %v6114 = vsel %vm6105, %v6100, %v6110
        %v6115 = vsel %vm6106, %v6101, %v6111
        %v6116 = vsel %vm6107, %v6102, %v6112
        %v6117 = vsel %vm6108, %v6103, %v6113
        %v6122 = vcombine.high %v6114, %v6114
        %v6123 = vcombine.high %v6115, %v6115
        %v6124 = vcombine.high %v6116, %v6116
        %v6125 = vcombine.high %v6117, %v6117
        %v6126 = vrot.slane %v6114, 6
        %v6127 = vrot.slane %v6122, 6
        %v6128 = vrot.slane %v6115, 6
        %v6129 = vrot.slane %v6123, 6
        %v6130 = vrot.slane %v6116, 6
        %v6131 = vrot.slane %v6124, 6
        %v6132 = vrot.slane %v6117, 6
        %v6133 = vrot.slane %v6125, 6
        %v6142 = vsel %vm3160, 0.0, %v6126
        %v6143 = vsel %vm3160, 0.0, %v6127
        %v6144 = vsel %vm3160, 0.0, %v6128
        %v6145 = vsel %vm3160, 0.0, %v6129
        %v6146 = vsel %vm3160, 0.0, %v6130
        %v6147 = vsel %vm3160, 0.0, %v6131
        %v6148 = vsel %vm3160, 0.0, %v6132
        %v6149 = vsel %vm3160, 0.0, %v6133
        %v6150 = vsel %vm3169, %v6142, 0.0
        %v6151 = vsel %vm3169, %v6143, 0.0
        %v6152 = vsel %vm3169, %v6144, 0.0
        %v6153 = vsel %vm3169, %v6145, 0.0
        %v6154 = vsel %vm3169, %v6146, 0.0
        %v6155 = vsel %vm3169, %v6147, 0.0
        %v6156 = vsel %vm3169, %v6148, 0.0
        %v6157 = vsel %vm3169, %v6149, 0.0
        %v6166 = vrot.slane %v6150, 1
        %v6167 = vrot.slane %v6151, 1
        %v6168 = vrot.slane %v6152, 1
        %v6169 = vrot.slane %v6153, 1
        %v6170 = vrot.slane %v6154, 1
        %v6171 = vrot.slane %v6155, 1
        %v6172 = vrot.slane %v6156, 1
        %v6173 = vrot.slane %v6157, 1
        %v6174 = vrot.slane %v6150, 2
        %v6175 = vrot.slane %v6151, 2
        %v6176 = vrot.slane %v6152, 2
        %v6177 = vrot.slane %v6153, 2
        %v6178 = vrot.slane %v6154, 2
        %v6179 = vrot.slane %v6155, 2
        %v6180 = vrot.slane %v6156, 2
        %v6181 = vrot.slane %v6157, 2
        %v6182 = vrot.slane %v6150, 3
        %v6183 = vrot.slane %v6151, 3
        %v6184 = vrot.slane %v6152, 3
        %v6185 = vrot.slane %v6153, 3
        %v6186 = vrot.slane %v6154, 3
        %v6187 = vrot.slane %v6155, 3
        %v6188 = vrot.slane %v6156, 3
        %v6189 = vrot.slane %v6157, 3
        %v6190 = vrot.slane %v6150, 4
        %v6191 = vrot.slane %v6151, 4
        %v6192 = vrot.slane %v6152, 4
        %v6193 = vrot.slane %v6153, 4
        %v6194 = vrot.slane %v6154, 4
        %v6195 = vrot.slane %v6155, 4
        %v6196 = vrot.slane %v6156, 4
        %v6197 = vrot.slane %v6157, 4
        %v6198 = vcombine.low %v6150, %v6166
        %v6199 = vcombine.low %v6174, %v6182
        %v6200 = vcombine.low %v6151, %v6167
        %v6201 = vcombine.low %v6175, %v6183
        %v6202 = vcombine.low %v6152, %v6168
        %v6203 = vcombine.low %v6176, %v6184
        %v6204 = vcombine.low %v6153, %v6169
        %v6205 = vcombine.low %v6177, %v6185
        %v6206 = vcombine.low %v6154, %v6170
        %v6207 = vcombine.low %v6178, %v6186
        %v6208 = vcombine.low %v6155, %v6171
        %v6209 = vcombine.low %v6179, %v6187
        %v6210 = vcombine.low %v6156, %v6172
        %v6211 = vcombine.low %v6180, %v6188
        %v6212 = vcombine.low %v6157, %v6173
        %v6213 = vcombine.low %v6181, %v6189
        %v6214 = vcombine.low %v6198, %v6200
        %v6215 = vcombine.high %v6198, %v6200
        %v6216 = vcombine.low %v6199, %v6201
        %v6217 = vcombine.high %v6199, %v6201
        %v6218 = vcombine.low %v6190, %v6191
        %v6219 = vcombine.low %v6202, %v6204
        %v6220 = vcombine.high %v6202, %v6204
        %v6221 = vcombine.low %v6203, %v6205
        %v6222 = vcombine.high %v6203, %v6205
        %v6223 = vcombine.low %v6192, %v6193
        %v6224 = vcombine.low %v6206, %v6208
        %v6225 = vcombine.high %v6206, %v6208
        %v6226 = vcombine.low %v6207, %v6209
        %v6227 = vcombine.high %v6207, %v6209
        %v6228 = vcombine.low %v6194, %v6195
        %v6229 = vcombine.low %v6210, %v6212
        %v6230 = vcombine.high %v6210, %v6212
        %v6231 = vcombine.low %v6211, %v6213
        %v6232 = vcombine.high %v6211, %v6213
        %v6233 = vcombine.low %v6196, %v6197
        %v6254 = vpack.c.bf16 %v6219, %v6214
        %v6255 = vpack.c.bf16 %v6220, %v6215
        %v6256 = vpack.c.bf16 %v6221, %v6216
        %v6257 = vpack.c.bf16 %v6222, %v6217
        %v6258 = vpack.c.bf16 %v6223, %v6218
        %v6259 = vpack.c.bf16 %v6229, %v6224
        %v6260 = vpack.c.bf16 %v6230, %v6225
        %v6261 = vpack.c.bf16 %v6231, %v6226
        %v6262 = vpack.c.bf16 %v6232, %v6227
        %v6263 = vpack.c.bf16 %v6233, %v6228
        %v6264 = vld [vmem:[%s51] sm:$0xf]
        %v6265 = vld [vmem:[%s51 + $0x4] sm:$0xf]
        %v6266 = vld [vmem:[%s51 + $0x8] sm:$0xf]
        %v6267 = vld [vmem:[%s51 + $0xc] sm:$0xf]
        %v6268 = vld [vmem:[%s51 + $0x10] sm:$0xf]
        %v6269 = vld [vmem:[%s51 + $0x14] sm:$0xf]
        %v6270 = vld [vmem:[%s51 + $0x18] sm:$0xf]
        %v6271 = vld [vmem:[%s51 + $0x1c] sm:$0xf]
        %v6272 = vld [vmem:[%s51 + $0x20] sm:$0xf]
        %v6273 = vld [vmem:[%s51 + $0x24] sm:$0xf]
        %v6274 = vld [vmem:[%s51 + $0x28] sm:$0xf]
        %v6275 = vld [vmem:[%s51 + $0x2c] sm:$0xf]
        %v6276 = vld [vmem:[%s51 + $0x30] sm:$0xf]
        %v6277 = vld [vmem:[%s51 + $0x34] sm:$0xf]
        %v6278 = vld [vmem:[%s51 + $0x38] sm:$0xf]
        %v6279 = vld [vmem:[%s51 + $0x3c] sm:$0xf]
        %v6280 = vld [vmem:[%s51 + $0x40] sm:$0xf]
        %v6281 = vld [vmem:[%s51 + $0x44] sm:$0xf]
        %v6282 = vld [vmem:[%s51 + $0x48] sm:$0xf]
        %v6283 = vld [vmem:[%s51 + $0x4c] sm:$0xf]
        %v6284 = vld [vmem:[%s51 + $0x50] sm:$0xf]
        %v6285 = vld [vmem:[%s51 + $0x54] sm:$0xf]
        %v6286 = vld [vmem:[%s51 + $0x58] sm:$0xf]
        %v6287 = vld [vmem:[%s51 + $0x5c] sm:$0xf]
        %v6288 = vld [vmem:[%s51 + $0x60] sm:$0xf]
        %v6289 = vld [vmem:[%s51 + $0x64] sm:$0xf]
        %v6290 = vld [vmem:[%s51 + $0x68] sm:$0xf]
        %v6291 = vld [vmem:[%s51 + $0x6c] sm:$0xf]
        %v6292 = vld [vmem:[%s51 + $0x70] sm:$0xf]
        %v6293 = vld [vmem:[%s51 + $0x74] sm:$0xf]
        %v6294 = vld [vmem:[%s51 + $0x78] sm:$0xf]
        %v6295 = vld [vmem:[%s51 + $0x7c] sm:$0xf]
        %v6296 = vld [vmem:[%s51 + $0x80] sm:$0xf]
        %v6297 = vld [vmem:[%s51 + $0x84] sm:$0xf]
        %v6298 = vld [vmem:[%s51 + $0x88] sm:$0xf]
        %v6299 = vld [vmem:[%s51 + $0x8c] sm:$0xf]
        %v6300 = vld [vmem:[%s51 + $0x90] sm:$0xf]
        %v6301 = vld [vmem:[%s51 + $0x94] sm:$0xf]
        %v6302 = vld [vmem:[%s51 + $0x98] sm:$0xf]
        %v6303 = vld [vmem:[%s51 + $0x9c] sm:$0xf]
        %v6304 = vld [vmem:[%s51 + $0xa0] sm:$0xf]
        %v6305 = vld [vmem:[%s51 + $0xa4] sm:$0xf]
        %v6306 = vld [vmem:[%s51 + $0xa8] sm:$0xf]
        %v6307 = vld [vmem:[%s51 + $0xac] sm:$0xf]
        %v6308 = vld [vmem:[%s51 + $0xb0] sm:$0xf]
        %v6309 = vld [vmem:[%s51 + $0xb4] sm:$0xf]
        %v6310 = vld [vmem:[%s51 + $0xb8] sm:$0xf]
        %v6311 = vld [vmem:[%s51 + $0xbc] sm:$0xf]
        %v6312 = vld [vmem:[%s51 + $0xc0] sm:$0xf]
        %v6313 = vld [vmem:[%s51 + $0xc4] sm:$0xf]
        %v6314 = vld [vmem:[%s51 + $0xc8] sm:$0xf]
        %v6315 = vld [vmem:[%s51 + $0xcc] sm:$0xf]
        %v6316 = vld [vmem:[%s51 + $0xd0] sm:$0xf]
        %v6317 = vld [vmem:[%s51 + $0xd4] sm:$0xf]
        %v6318 = vld [vmem:[%s51 + $0xd8] sm:$0xf]
        %v6319 = vld [vmem:[%s51 + $0xdc] sm:$0xf]
        %v6320 = vld [vmem:[%s51 + $0xe0] sm:$0xf]
        %v6321 = vld [vmem:[%s51 + $0xe4] sm:$0xf]
        %v6322 = vld [vmem:[%s51 + $0xe8] sm:$0xf]
        %v6323 = vld [vmem:[%s51 + $0xec] sm:$0xf]
        %v6324 = vld [vmem:[%s51 + $0xf0] sm:$0xf]
        %v6325 = vld [vmem:[%s51 + $0xf4] sm:$0xf]
        %v6326 = vld [vmem:[%s51 + $0xf8] sm:$0xf]
        %v6327 = vld [vmem:[%s51 + $0xfc] sm:$0xf]
        %v6328 = vld [vmem:[%s51 + $0x100] sm:$0xf]
        %v6329 = vld [vmem:[%s51 + $0x104] sm:$0xf]
        %v6330 = vld [vmem:[%s51 + $0x108] sm:$0xf]
        %v6331 = vld [vmem:[%s51 + $0x10c] sm:$0xf]
        %v6332 = vld [vmem:[%s51 + $0x110] sm:$0xf]
        %v6333 = vld [vmem:[%s51 + $0x114] sm:$0xf]
        %v6334 = vld [vmem:[%s51 + $0x118] sm:$0xf]
        %v6335 = vld [vmem:[%s51 + $0x11c] sm:$0xf]
        %v6336 = vld [vmem:[%s51 + $0x120] sm:$0xf]
        %v6337 = vld [vmem:[%s51 + $0x124] sm:$0xf]
        %v6338 = vld [vmem:[%s51 + $0x128] sm:$0xf]
        %v6339 = vld [vmem:[%s51 + $0x12c] sm:$0xf]
        %v6340 = vld [vmem:[%s51 + $0x130] sm:$0xf]
        %v6341 = vld [vmem:[%s51 + $0x134] sm:$0xf]
        %v6342 = vld [vmem:[%s51 + $0x138] sm:$0xf]
        %v6343 = vld [vmem:[%s51 + $0x13c] sm:$0xf]
        %v6424 = vunpack.c.l.b16 %v6264
        %v6425 = vunpack.c.l.b16 %v6265
        %v6426 = vunpack.c.l.b16 %v6266
        %v6427 = vunpack.c.l.b16 %v6267
        %v6428 = vunpack.c.l.b16 %v6268
        %v6429 = vunpack.c.l.b16 %v6269
        %v6430 = vunpack.c.l.b16 %v6270
        %v6431 = vunpack.c.l.b16 %v6271
        %v6432 = vunpack.c.l.b16 %v6272
        %v6433 = vunpack.c.l.b16 %v6273
        %v6434 = vunpack.c.l.b16 %v6274
        %v6435 = vunpack.c.l.b16 %v6275
        %v6436 = vunpack.c.l.b16 %v6276
        %v6437 = vunpack.c.l.b16 %v6277
        %v6438 = vunpack.c.l.b16 %v6278
        %v6439 = vunpack.c.l.b16 %v6279
        %v6440 = vunpack.c.l.b16 %v6280
        %v6441 = vunpack.c.l.b16 %v6281
        %v6442 = vunpack.c.l.b16 %v6282
        %v6443 = vunpack.c.l.b16 %v6283
        %v6444 = vunpack.c.l.b16 %v6284
        %v6445 = vunpack.c.l.b16 %v6285
        %v6446 = vunpack.c.l.b16 %v6286
        %v6447 = vunpack.c.l.b16 %v6287
        %v6448 = vunpack.c.l.b16 %v6288
        %v6449 = vunpack.c.l.b16 %v6289
        %v6450 = vunpack.c.l.b16 %v6290
        %v6451 = vunpack.c.l.b16 %v6291
        %v6452 = vunpack.c.l.b16 %v6292
        %v6453 = vunpack.c.l.b16 %v6293
        %v6454 = vunpack.c.l.b16 %v6294
        %v6455 = vunpack.c.l.b16 %v6295
        %v6456 = vunpack.c.l.b16 %v6296
        %v6457 = vunpack.c.l.b16 %v6297
        %v6458 = vunpack.c.l.b16 %v6298
        %v6459 = vunpack.c.l.b16 %v6299
        %v6460 = vunpack.c.l.b16 %v6300
        %v6461 = vunpack.c.l.b16 %v6301
        %v6462 = vunpack.c.l.b16 %v6302
        %v6463 = vunpack.c.l.b16 %v6303
        %v6464 = vunpack.c.l.b16 %v6304
        %v6465 = vunpack.c.l.b16 %v6305
        %v6466 = vunpack.c.l.b16 %v6306
        %v6467 = vunpack.c.l.b16 %v6307
        %v6468 = vunpack.c.l.b16 %v6308
        %v6469 = vunpack.c.l.b16 %v6309
        %v6470 = vunpack.c.l.b16 %v6310
        %v6471 = vunpack.c.l.b16 %v6311
        %v6472 = vunpack.c.l.b16 %v6312
        %v6473 = vunpack.c.l.b16 %v6313
        %v6474 = vunpack.c.l.b16 %v6314
        %v6475 = vunpack.c.l.b16 %v6315
        %v6476 = vunpack.c.l.b16 %v6316
        %v6477 = vunpack.c.l.b16 %v6317
        %v6478 = vunpack.c.l.b16 %v6318
        %v6479 = vunpack.c.l.b16 %v6319
        %v6480 = vunpack.c.l.b16 %v6320
        %v6481 = vunpack.c.l.b16 %v6321
        %v6482 = vunpack.c.l.b16 %v6322
        %v6483 = vunpack.c.l.b16 %v6323
        %v6484 = vunpack.c.l.b16 %v6324
        %v6485 = vunpack.c.l.b16 %v6325
        %v6486 = vunpack.c.l.b16 %v6326
        %v6487 = vunpack.c.l.b16 %v6327
        %v6488 = vunpack.c.l.b16 %v6328
        %v6489 = vunpack.c.l.b16 %v6329
        %v6490 = vunpack.c.l.b16 %v6330
        %v6491 = vunpack.c.l.b16 %v6331
        %v6492 = vunpack.c.l.b16 %v6332
        %v6493 = vunpack.c.l.b16 %v6333
        %v6494 = vunpack.c.l.b16 %v6334
        %v6495 = vunpack.c.l.b16 %v6335
        %v6496 = vunpack.c.l.b16 %v6336
        %v6497 = vunpack.c.l.b16 %v6337
        %v6498 = vunpack.c.l.b16 %v6338
        %v6499 = vunpack.c.l.b16 %v6339
        %v6500 = vunpack.c.l.b16 %v6340
        %v6501 = vunpack.c.l.b16 %v6341
        %v6502 = vunpack.c.l.b16 %v6342
        %v6503 = vunpack.c.l.b16 %v6343
        %v6504 = vpack.c.b16 %v6425, %v6424
        %v6505 = vpack.c.b16 %v6427, %v6426
        %v6506 = vpack.c.b16 %v6429, %v6428
        %v6507 = vpack.c.b16 %v6431, %v6430
        %v6508 = vpack.c.b16 %v6433, %v6432
        %v6509 = vpack.c.b16 %v6435, %v6434
        %v6510 = vpack.c.b16 %v6437, %v6436
        %v6511 = vpack.c.b16 %v6439, %v6438
        %v6512 = vpack.c.b16 %v6441, %v6440
        %v6513 = vpack.c.b16 %v6443, %v6442
        %v6514 = vpack.c.b16 %v6445, %v6444
        %v6515 = vpack.c.b16 %v6447, %v6446
        %v6516 = vpack.c.b16 %v6449, %v6448
        %v6517 = vpack.c.b16 %v6451, %v6450
        %v6518 = vpack.c.b16 %v6453, %v6452
        %v6519 = vpack.c.b16 %v6455, %v6454
        %v6520 = vpack.c.b16 %v6457, %v6456
        %v6521 = vpack.c.b16 %v6459, %v6458
        %v6522 = vpack.c.b16 %v6461, %v6460
        %v6523 = vpack.c.b16 %v6463, %v6462
        %v6524 = vpack.c.b16 %v6465, %v6464
        %v6525 = vpack.c.b16 %v6467, %v6466
        %v6526 = vpack.c.b16 %v6469, %v6468
        %v6527 = vpack.c.b16 %v6471, %v6470
        %v6528 = vpack.c.b16 %v6473, %v6472
        %v6529 = vpack.c.b16 %v6475, %v6474
        %v6530 = vpack.c.b16 %v6477, %v6476
        %v6531 = vpack.c.b16 %v6479, %v6478
        %v6532 = vpack.c.b16 %v6481, %v6480
        %v6533 = vpack.c.b16 %v6483, %v6482
        %v6534 = vpack.c.b16 %v6485, %v6484
        %v6535 = vpack.c.b16 %v6487, %v6486
        %v6536 = vpack.c.b16 %v6489, %v6488
        %v6537 = vpack.c.b16 %v6491, %v6490
        %v6538 = vpack.c.b16 %v6493, %v6492
        %v6539 = vpack.c.b16 %v6495, %v6494
        %v6540 = vpack.c.b16 %v6497, %v6496
        %v6541 = vpack.c.b16 %v6499, %v6498
        %v6542 = vpack.c.b16 %v6501, %v6500
        %v6543 = vpack.c.b16 %v6503, %v6502
        %6584 = vmatprep.subr.bf16.mxu0 0
        %6585 = vmatpush1.bf16.msra.mxu0 %v6504
        %6586 = vmatprep.subr.bf16.mxu0 0
        %6587 = vmatpush1.bf16.msra.mxu0 %v6505
        %6588 = vmatprep.subr.bf16.mxu0 0
        %6589 = vmatpush1.bf16.msra.mxu0 %v6506
        %6590 = vmatprep.subr.bf16.mxu0 0
        %6591 = vmatpush1.bf16.msra.mxu0 %v6507
        %6592 = vmatprep.subr.bf16.mxu0 0
        %6593 = vmatpush1.bf16.msra.mxu0 %v6508
        %6594 = vmatprep.subr.bf16.mxu0 0
        %6595 = vmatpush1.bf16.msra.mxu0 %v6509
        %6596 = vmatprep.subr.bf16.mxu0 0
        %6597 = vmatpush1.bf16.msra.mxu0 %v6510
        %6598 = vmatprep.subr.bf16.mxu0 0
        %6599 = vmatpush1.bf16.msra.mxu0 %v6511
        %6600 = vmatprep.subr.bf16.mxu0 0
        %6601 = vmatpush1.bf16.msra.mxu0 %v6512
        %6602 = vmatprep.subr.bf16.mxu0 0
        %6603 = vmatpush1.bf16.msra.mxu0 %v6513
        %6604 = vmatprep.subr.bf16.mxu0 0
        %6605 = vmatpush1.bf16.msra.mxu0 %v6514
        %6606 = vmatprep.subr.bf16.mxu0 0
        %6607 = vmatpush1.bf16.msra.mxu0 %v6515
        %6608 = vmatprep.subr.bf16.mxu0 0
        %6609 = vmatpush1.bf16.msra.mxu0 %v6516
        %6610 = vmatprep.subr.bf16.mxu0 0
        %6611 = vmatpush1.bf16.msra.mxu0 %v6517
        %6612 = vmatprep.subr.bf16.mxu0 0
        %6613 = vmatpush1.bf16.msra.mxu0 %v6518
        %6614 = vmatprep.subr.bf16.mxu0 0
        %6615 = vmatpush1.bf16.msra.mxu0 %v6519
        %6616 = vmatprep.mubr.bf16.mxu0 %v6255
        %6617 = vmatmul.mubr.bf16.gmra.mrb[0].mxu0 %v6254
        %v6618 = vpop.f32.mrb[0].mxu0
        %v6619 = vadd.f32 0.0, %v6618
        %v6620 = vpop.f32.mrb[0].mxu0
        %v6621 = vpop.f32.mrb[0].mxu0
        %v6622 = vadd.f32 0.0, %v6621
        %v6623 = vpop.f32.mrb[0].mxu0
        %6624 = vmatprep.mubr.bf16.mxu0 %v6260
        %6625 = vmatmul.mubr.bf16.gmra.mrb[0].mxu0 %v6259
        %v6626 = vpop.f32.mrb[0].mxu0
        %v6627 = vadd.f32 0.0, %v6626
        %v6628 = vpop.f32.mrb[0].mxu0
        %v6629 = vpop.f32.mrb[0].mxu0
        %v6630 = vadd.f32 0.0, %v6629
        %v6631 = vpop.f32.mrb[0].mxu0
        %6632 = vdwg.mxu0
        %6633 = vmatprep.subr.bf16.mxu0 0
        %6634 = vmatpush1.bf16.msra.mxu0 %v6520
        %6635 = vmatprep.subr.bf16.mxu0 0
        %6636 = vmatpush1.bf16.msra.mxu0 %v6521
        %6637 = vmatprep.subr.bf16.mxu0 0
        %6638 = vmatpush1.bf16.msra.mxu0 %v6522
        %6639 = vmatprep.subr.bf16.mxu0 0
        %6640 = vmatpush1.bf16.msra.mxu0 %v6523
        %6641 = vmatprep.subr.bf16.mxu0 0
        %6642 = vmatpush1.bf16.msra.mxu0 %v6524
        %6643 = vmatprep.subr.bf16.mxu0 0
        %6644 = vmatpush1.bf16.msra.mxu0 %v6525
        %6645 = vmatprep.subr.bf16.mxu0 0
        %6646 = vmatpush1.bf16.msra.mxu0 %v6526
        %6647 = vmatprep.subr.bf16.mxu0 0
        %6648 = vmatpush1.bf16.msra.mxu0 %v6527
        %6649 = vmatprep.subr.bf16.mxu0 0
        %6650 = vmatpush1.bf16.msra.mxu0 %v6528
        %6651 = vmatprep.subr.bf16.mxu0 0
        %6652 = vmatpush1.bf16.msra.mxu0 %v6529
        %6653 = vmatprep.subr.bf16.mxu0 0
        %6654 = vmatpush1.bf16.msra.mxu0 %v6530
        %6655 = vmatprep.subr.bf16.mxu0 0
        %6656 = vmatpush1.bf16.msra.mxu0 %v6531
        %6657 = vmatprep.subr.bf16.mxu0 0
        %6658 = vmatpush1.bf16.msra.mxu0 %v6532
        %6659 = vmatprep.subr.bf16.mxu0 0
        %6660 = vmatpush1.bf16.msra.mxu0 %v6533
        %6661 = vmatprep.subr.bf16.mxu0 0
        %6662 = vmatpush1.bf16.msra.mxu0 %v6534
        %6663 = vmatprep.subr.bf16.mxu0 0
        %6664 = vmatpush1.bf16.msra.mxu0 %v6535
        %6665 = vmatprep.mubr.bf16.mxu0 %v6257
        %6666 = vmatmul.mubr.bf16.gmra.mrb[0].mxu0 %v6256
        %v6667 = vpop.f32.mrb[0].mxu0
        %v6668 = vadd.f32 %v6619, %v6667
        %v6669 = vpop.f32.mrb[0].mxu0
        %v6670 = vpop.f32.mrb[0].mxu0
        %v6671 = vadd.f32 %v6622, %v6670
        %v6672 = vpop.f32.mrb[0].mxu0
        %6673 = vmatprep.mubr.bf16.mxu0 %v6262
        %6674 = vmatmul.mubr.bf16.gmra.mrb[0].mxu0 %v6261
        %v6675 = vpop.f32.mrb[0].mxu0
        %v6676 = vadd.f32 %v6627, %v6675
        %v6677 = vpop.f32.mrb[0].mxu0
        %v6678 = vpop.f32.mrb[0].mxu0
        %v6679 = vadd.f32 %v6630, %v6678
        %v6680 = vpop.f32.mrb[0].mxu0
        %6681 = vdwg.mxu0
        %6682 = vmatprep.subr.bf16.mxu0 0
        %6683 = vmatpush1.bf16.msra.mxu0 %v6536
        %6684 = vmatprep.subr.bf16.mxu0 0
        %6685 = vmatpush1.bf16.msra.mxu0 %v6537
        %6686 = vmatprep.subr.bf16.mxu0 0
        %6687 = vmatpush1.bf16.msra.mxu0 %v6538
        %6688 = vmatprep.subr.bf16.mxu0 0
        %6689 = vmatpush1.bf16.msra.mxu0 %v6539
        %6690 = vmatprep.subr.bf16.mxu0 0
        %6691 = vmatpush1.bf16.msra.mxu0 %v6540
        %6692 = vmatprep.subr.bf16.mxu0 0
        %6693 = vmatpush1.bf16.msra.mxu0 %v6541
        %6694 = vmatprep.subr.bf16.mxu0 0
        %6695 = vmatpush1.bf16.msra.mxu0 %v6542
        %6696 = vmatprep.subr.bf16.mxu0 0
        %6697 = vmatpush1.bf16.msra.mxu0 %v6543
        %6698 = vmatprep.subr.bf16.mxu0 0
        %6699 = vmatpush1.bf16.msra.mxu0 0
        %6700 = vmatprep.subr.bf16.mxu0 0
        %6701 = vmatpush1.bf16.msra.mxu0 0
        %6702 = vmatprep.subr.bf16.mxu0 0
        %6703 = vmatpush1.bf16.msra.mxu0 0
        %6704 = vmatprep.subr.bf16.mxu0 0
        %6705 = vmatpush1.bf16.msra.mxu0 0
        %6706 = vmatprep.subr.bf16.mxu0 0
        %6707 = vmatpush1.bf16.msra.mxu0 0
        %6708 = vmatprep.subr.bf16.mxu0 0
        %6709 = vmatpush1.bf16.msra.mxu0 0
        %6710 = vmatprep.subr.bf16.mxu0 0
        %6711 = vmatpush1.bf16.msra.mxu0 0
        %6712 = vmatprep.subr.bf16.mxu0 0
        %6713 = vmatpush1.bf16.msra.mxu0 0
        %6714 = vmatprep.mubr.bf16.mxu0 0
        %6715 = vmatmul.mubr.bf16.gmra.mrb[0].mxu0 %v6258
        %v6716 = vpop.f32.mrb[0].mxu0
        %v6717 = vadd.f32 %v6668, %v6716
        %v6718 = vpop.f32.mrb[0].mxu0
        %v6719 = vpop.f32.mrb[0].mxu0
        %v6720 = vadd.f32 %v6671, %v6719
        %v6721 = vpop.f32.mrb[0].mxu0
        %6722 = vmatprep.mubr.bf16.mxu0 0
        %6723 = vmatmul.mubr.bf16.gmra.mrb[0].mxu0 %v6263
        %v6724 = vpop.f32.mrb[0].mxu0
        %v6725 = vadd.f32 %v6676, %v6724
        %v6726 = vpop.f32.mrb[0].mxu0
        %v6727 = vpop.f32.mrb[0].mxu0
        %v6728 = vadd.f32 %v6679, %v6727
        %v6729 = vpop.f32.mrb[0].mxu0
        %6730 = vdwg.mxu0
        %v6731 = vld [vmem:[%s53] sm:$0x1]
        %v6733 = vlaneseq
        %v6734 = vshrl.u32 %v6733, 7
        %v6735 = vsub.s32 0, %v6734
        %v6736 = vrot.slane %v6731, %v6735
        %v6738 = vmul.f32 %v6717, %v6736
        %v6739 = vmul.f32 %v6720, %v6736
        %v6740 = vmul.f32 %v6725, %v6736
        %v6741 = vmul.f32 %v6728, %v6736
        %v6742 = vld [vmem:[%s55] sm:$0x1]
        %v6744 = vlaneseq
        %v6745 = vshrl.u32 %v6744, 7
        %v6746 = vsub.s32 0, %v6745
        %v6747 = vrot.slane %v6742, %v6746
        %v6749 = vadd.f32 %v6738, %v6747
        %v6750 = vadd.f32 %v6739, %v6747
        %v6751 = vadd.f32 %v6740, %v6747
        %v6752 = vadd.f32 %v6741, %v6747
        %s6753 = sld [smem:[#allocation2 + $0x7]]
        %vm6754 = vcmp.gt.f32.partialorder %v6749, 0.0
        %vm6755 = vcmp.gt.f32.partialorder %v6750, 0.0
        %vm6756 = vcmp.gt.f32.partialorder %v6751, 0.0
        %vm6757 = vcmp.gt.f32.partialorder %v6752, 0.0
        %v6758 = vstv %s6753
        %v6759 = vmul.f32 %v6758, %v6749
        %v6760 = vmul.f32 %v6758, %v6750
        %v6761 = vmul.f32 %v6758, %v6751
        %v6762 = vmul.f32 %v6758, %v6752
        %v6763 = vsel %vm6754, %v6749, %v6759
        %v6764 = vsel %vm6755, %v6750, %v6760
        %v6765 = vsel %vm6756, %v6751, %v6761
        %v6766 = vsel %vm6757, %v6752, %v6762
        %v6767 = vpack.c.bf16 %v6764, %v6763
        %v6768 = vpack.c.bf16 %v6766, %v6765
        %v6769 = vld [vmem:[#allocation27] sm:$0xf]
        %v6770 = vld [vmem:[#allocation27 + $0x4] sm:$0xf]
        %v6771 = vld [vmem:[#allocation27 + $0x8] sm:$0xf]
        %v6772 = vld [vmem:[#allocation27 + $0xc] sm:$0xf]
        %v6773 = vld [vmem:[#allocation27 + $0x10] sm:$0xf]
        %v6774 = vld [vmem:[#allocation27 + $0x14] sm:$0xf]
        %v6775 = vld [vmem:[#allocation27 + $0x18] sm:$0xf]
        %v6776 = vld [vmem:[#allocation27 + $0x1c] sm:$0xf]
        %v6785 = vunpack.c.l.b16 %v6769
        %v6786 = vunpack.c.l.b16 %v6770
        %v6787 = vunpack.c.l.b16 %v6771
        %v6788 = vunpack.c.l.b16 %v6772
        %v6789 = vunpack.c.l.b16 %v6773
        %v6790 = vunpack.c.l.b16 %v6774
        %v6791 = vunpack.c.l.b16 %v6775
        %v6792 = vunpack.c.l.b16 %v6776
        %v6793 = vpack.c.b16 %v6786, %v6785
        %v6794 = vpack.c.b16 %v6788, %v6787
        %v6795 = vpack.c.b16 %v6790, %v6789
        %v6796 = vpack.c.b16 %v6792, %v6791
        %v6798 = vsel %vm5237, %v6793, 0
        %v6801 = vsel %vm5237, %v6794, 0
        %v6804 = vsel %vm5237, %v6795, 0
        %v6807 = vsel %vm5237, %v6796, 0
        %6809 = vmatprep.subr.bf16.mxu0 0
        %6810 = vmatpush1.bf16.msra.mxu0 %v6767
        %6811 = vmatprep.subr.bf16.mxu0 0
        %6812 = vmatpush1.bf16.msra.mxu0 %v6768
        %6813 = vmatprep.subr.bf16.mxu0 0
        %6814 = vmatpush1.bf16.msra.mxu0 0
        %6815 = vmatprep.subr.bf16.mxu0 0
        %6816 = vmatpush1.bf16.msra.mxu0 0
        %6817 = vmatprep.subr.bf16.mxu0 0
        %6818 = vmatpush1.bf16.msra.mxu0 0
        %6819 = vmatprep.subr.bf16.mxu0 0
        %6820 = vmatpush1.bf16.msra.mxu0 0
        %6821 = vmatprep.subr.bf16.mxu0 0
        %6822 = vmatpush1.bf16.msra.mxu0 0
        %6823 = vmatprep.subr.bf16.mxu0 0
        %6824 = vmatpush1.bf16.msra.mxu0 0
        %6825 = vmatprep.subr.bf16.mxu0 0
        %6826 = vmatpush1.bf16.msra.mxu0 0
        %6827 = vmatprep.subr.bf16.mxu0 0
        %6828 = vmatpush1.bf16.msra.mxu0 0
        %6829 = vmatprep.subr.bf16.mxu0 0
        %6830 = vmatpush1.bf16.msra.mxu0 0
        %6831 = vmatprep.subr.bf16.mxu0 0
        %6832 = vmatpush1.bf16.msra.mxu0 0
        %6833 = vmatprep.subr.bf16.mxu0 0
        %6834 = vmatpush1.bf16.msra.mxu0 0
        %6835 = vmatprep.subr.bf16.mxu0 0
        %6836 = vmatpush1.bf16.msra.mxu0 0
        %6837 = vmatprep.subr.bf16.mxu0 0
        %6838 = vmatpush1.bf16.msra.mxu0 0
        %6839 = vmatprep.subr.bf16.mxu0 0
        %6840 = vmatpush1.bf16.msra.mxu0 0
        %6841 = vmatprep.mubr.bf16.mxu0 0
        %6842 = vmatmul.mubr.bf16.gmra.mrb[0].mxu0 %v6798
        %v6843 = vpop.f32.mrb[0].mxu0
        %v6844 = vadd.f32 0.0, %v6843
        %v6845 = vpop.f32.mrb[0].mxu0
        %v6846 = vpop.f32.mrb[0].mxu0
        %v6847 = vadd.f32 0.0, %v6846
        %v6848 = vpop.f32.mrb[0].mxu0
        %6849 = vmatprep.mubr.bf16.mxu0 0
        %6850 = vmatmul.mubr.bf16.gmra.mrb[0].mxu0 %v6801
        %v6851 = vpop.f32.mrb[0].mxu0
        %v6852 = vadd.f32 0.0, %v6851
        %v6853 = vpop.f32.mrb[0].mxu0
        %v6854 = vpop.f32.mrb[0].mxu0
        %v6855 = vadd.f32 0.0, %v6854
        %v6856 = vpop.f32.mrb[0].mxu0
        %6857 = vmatprep.mubr.bf16.mxu0 0
        %6858 = vmatmul.mubr.bf16.gmra.mrb[0].mxu0 %v6804
        %v6859 = vpop.f32.mrb[0].mxu0
        %v6860 = vadd.f32 0.0, %v6859
        %v6861 = vpop.f32.mrb[0].mxu0
        %v6862 = vpop.f32.mrb[0].mxu0
        %v6863 = vadd.f32 0.0, %v6862
        %v6864 = vpop.f32.mrb[0].mxu0
        %6865 = vmatprep.mubr.bf16.mxu0 0
        %6866 = vmatmul.mubr.bf16.gmra.mrb[0].mxu0 %v6807
        %v6867 = vpop.f32.mrb[0].mxu0
        %v6868 = vadd.f32 0.0, %v6867
        %v6869 = vpop.f32.mrb[0].mxu0
        %v6870 = vpop.f32.mrb[0].mxu0
        %v6871 = vadd.f32 0.0, %v6870
        %v6872 = vpop.f32.mrb[0].mxu0
        %6873 = vdwg.mxu0
        %s6874 = scalar_lea.vmem [#allocation27], 32
        %v6875 = vld [vmem:[%s6874] sm:$0xf]
        %v6876 = vld [vmem:[%s6874 + $0x4] sm:$0xf]
        %v6877 = vld [vmem:[%s6874 + $0x8] sm:$0xf]
        %v6878 = vld [vmem:[%s6874 + $0xc] sm:$0xf]
        %v6879 = vld [vmem:[%s6874 + $0x10] sm:$0xf]
        %v6880 = vld [vmem:[%s6874 + $0x14] sm:$0xf]
        %v6881 = vld [vmem:[%s6874 + $0x18] sm:$0xf]
        %v6882 = vld [vmem:[%s6874 + $0x1c] sm:$0xf]
        %v6891 = vunpack.c.l.b16 %v6875
        %v6892 = vunpack.c.l.b16 %v6876
        %v6893 = vunpack.c.l.b16 %v6877
        %v6894 = vunpack.c.l.b16 %v6878
        %v6895 = vunpack.c.l.b16 %v6879
        %v6896 = vunpack.c.l.b16 %v6880
        %v6897 = vunpack.c.l.b16 %v6881
        %v6898 = vunpack.c.l.b16 %v6882
        %v6899 = vpack.c.b16 %v6892, %v6891
        %v6900 = vpack.c.b16 %v6894, %v6893
        %v6901 = vpack.c.b16 %v6896, %v6895
        %v6902 = vpack.c.b16 %v6898, %v6897
        %v6904 = vsel %vm5237, %v6899, 0
        %v6907 = vsel %vm5237, %v6900, 0
        %v6910 = vsel %vm5237, %v6901, 0
        %v6913 = vsel %vm5237, %v6902, 0
        %6915 = vmatprep.subr.bf16.mxu0 0
        %6916 = vmatpush1.bf16.msra.mxu0 %v6767
        %6917 = vmatprep.subr.bf16.mxu0 0
        %6918 = vmatpush1.bf16.msra.mxu0 %v6768
        %6919 = vmatprep.subr.bf16.mxu0 0
        %6920 = vmatpush1.bf16.msra.mxu0 0
        %6921 = vmatprep.subr.bf16.mxu0 0
        %6922 = vmatpush1.bf16.msra.mxu0 0
        %6923 = vmatprep.subr.bf16.mxu0 0
        %6924 = vmatpush1.bf16.msra.mxu0 0
        %6925 = vmatprep.subr.bf16.mxu0 0
        %6926 = vmatpush1.bf16.msra.mxu0 0
        %6927 = vmatprep.subr.bf16.mxu0 0
        %6928 = vmatpush1.bf16.msra.mxu0 0
        %6929 = vmatprep.subr.bf16.mxu0 0
        %6930 = vmatpush1.bf16.msra.mxu0 0
        %6931 = vmatprep.subr.bf16.mxu0 0
        %6932 = vmatpush1.bf16.msra.mxu0 0
        %6933 = vmatprep.subr.bf16.mxu0 0
        %6934 = vmatpush1.bf16.msra.mxu0 0
        %6935 = vmatprep.subr.bf16.mxu0 0
        %6936 = vmatpush1.bf16.msra.mxu0 0
        %6937 = vmatprep.subr.bf16.mxu0 0
        %6938 = vmatpush1.bf16.msra.mxu0 0
        %6939 = vmatprep.subr.bf16.mxu0 0
        %6940 = vmatpush1.bf16.msra.mxu0 0
        %6941 = vmatprep.subr.bf16.mxu0 0
        %6942 = vmatpush1.bf16.msra.mxu0 0
        %6943 = vmatprep.subr.bf16.mxu0 0
        %6944 = vmatpush1.bf16.msra.mxu0 0
        %6945 = vmatprep.subr.bf16.mxu0 0
        %6946 = vmatpush1.bf16.msra.mxu0 0
        %6947 = vmatprep.mubr.bf16.mxu0 0
        %6948 = vmatmul.mubr.bf16.gmra.mrb[0].mxu0 %v6904
        %v6949 = vpop.f32.mrb[0].mxu0
        %v6950 = vadd.f32 0.0, %v6949
        %v6951 = vpop.f32.mrb[0].mxu0
        %v6952 = vpop.f32.mrb[0].mxu0
        %v6953 = vadd.f32 0.0, %v6952
        %v6954 = vpop.f32.mrb[0].mxu0
        %6955 = vmatprep.mubr.bf16.mxu0 0
        %6956 = vmatmul.mubr.bf16.gmra.mrb[0].mxu0 %v6907
        %v6957 = vpop.f32.mrb[0].mxu0
        %v6958 = vadd.f32 0.0, %v6957
        %v6959 = vpop.f32.mrb[0].mxu0
        %v6960 = vpop.f32.mrb[0].mxu0
        %v6961 = vadd.f32 0.0, %v6960
        %v6962 = vpop.f32.mrb[0].mxu0
        %6963 = vmatprep.mubr.bf16.mxu0 0
        %6964 = vmatmul.mubr.bf16.gmra.mrb[0].mxu0 %v6910
        %v6965 = vpop.f32.mrb[0].mxu0
        %v6966 = vadd.f32 0.0, %v6965
        %v6967 = vpop.f32.mrb[0].mxu0
        %v6968 = vpop.f32.mrb[0].mxu0
        %v6969 = vadd.f32 0.0, %v6968
        %v6970 = vpop.f32.mrb[0].mxu0
        %6971 = vmatprep.mubr.bf16.mxu0 0
        %6972 = vmatmul.mubr.bf16.gmra.mrb[0].mxu0 %v6913
        %v6973 = vpop.f32.mrb[0].mxu0
        %v6974 = vadd.f32 0.0, %v6973
        %v6975 = vpop.f32.mrb[0].mxu0
        %v6976 = vpop.f32.mrb[0].mxu0
        %v6977 = vadd.f32 0.0, %v6976
        %v6978 = vpop.f32.mrb[0].mxu0
        %6979 = vdwg.mxu0
        %s6980 = scalar_lea.vmem [#allocation27], 64
        %v6981 = vld [vmem:[%s6980] sm:$0xf]
        %v6982 = vld [vmem:[%s6980 + $0x4] sm:$0xf]
        %v6983 = vld [vmem:[%s6980 + $0x8] sm:$0xf]
        %v6984 = vld [vmem:[%s6980 + $0xc] sm:$0xf]
        %v6985 = vld [vmem:[%s6980 + $0x10] sm:$0xf]
        %v6986 = vld [vmem:[%s6980 + $0x14] sm:$0xf]
        %v6987 = vld [vmem:[%s6980 + $0x18] sm:$0xf]
        %v6988 = vld [vmem:[%s6980 + $0x1c] sm:$0xf]
        %v6997 = vunpack.c.l.b16 %v6981
        %v6998 = vunpack.c.l.b16 %v6982
        %v6999 = vunpack.c.l.b16 %v6983
        %v7000 = vunpack.c.l.b16 %v6984
        %v7001 = vunpack.c.l.b16 %v6985
        %v7002 = vunpack.c.l.b16 %v6986
        %v7003 = vunpack.c.l.b16 %v6987
        %v7004 = vunpack.c.l.b16 %v6988
        %v7005 = vpack.c.b16 %v6998, %v6997
        %v7006 = vpack.c.b16 %v7000, %v6999
        %v7007 = vpack.c.b16 %v7002, %v7001
        %v7008 = vpack.c.b16 %v7004, %v7003
        %v7010 = vsel %vm5237, %v7005, 0
        %v7013 = vsel %vm5237, %v7006, 0
        %v7016 = vsel %vm5237, %v7007, 0
        %v7019 = vsel %vm5237, %v7008, 0
        %7021 = vmatprep.subr.bf16.mxu0 0
        %7022 = vmatpush1.bf16.msra.mxu0 %v6767
        %7023 = vmatprep.subr.bf16.mxu0 0
        %7024 = vmatpush1.bf16.msra.mxu0 %v6768
        %7025 = vmatprep.subr.bf16.mxu0 0
        %7026 = vmatpush1.bf16.msra.mxu0 0
        %7027 = vmatprep.subr.bf16.mxu0 0
        %7028 = vmatpush1.bf16.msra.mxu0 0
        %7029 = vmatprep.subr.bf16.mxu0 0
        %7030 = vmatpush1.bf16.msra.mxu0 0
        %7031 = vmatprep.subr.bf16.mxu0 0
        %7032 = vmatpush1.bf16.msra.mxu0 0
        %7033 = vmatprep.subr.bf16.mxu0 0
        %7034 = vmatpush1.bf16.msra.mxu0 0
        %7035 = vmatprep.subr.bf16.mxu0 0
        %7036 = vmatpush1.bf16.msra.mxu0 0
        %7037 = vmatprep.subr.bf16.mxu0 0
        %7038 = vmatpush1.bf16.msra.mxu0 0
        %7039 = vmatprep.subr.bf16.mxu0 0
        %7040 = vmatpush1.bf16.msra.mxu0 0
        %7041 = vmatprep.subr.bf16.mxu0 0
        %7042 = vmatpush1.bf16.msra.mxu0 0
        %7043 = vmatprep.subr.bf16.mxu0 0
        %7044 = vmatpush1.bf16.msra.mxu0 0
        %7045 = vmatprep.subr.bf16.mxu0 0
        %7046 = vmatpush1.bf16.msra.mxu0 0
        %7047 = vmatprep.subr.bf16.mxu0 0
        %7048 = vmatpush1.bf16.msra.mxu0 0
        %7049 = vmatprep.subr.bf16.mxu0 0
        %7050 = vmatpush1.bf16.msra.mxu0 0
        %7051 = vmatprep.subr.bf16.mxu0 0
        %7052 = vmatpush1.bf16.msra.mxu0 0
        %7053 = vmatprep.mubr.bf16.mxu0 0
        %7054 = vmatmul.mubr.bf16.gmra.mrb[0].mxu0 %v7010
        %v7055 = vpop.f32.mrb[0].mxu0
        %v7056 = vadd.f32 0.0, %v7055
        %v7057 = vpop.f32.mrb[0].mxu0
        %v7058 = vpop.f32.mrb[0].mxu0
        %v7059 = vadd.f32 0.0, %v7058
        %v7060 = vpop.f32.mrb[0].mxu0
        %7061 = vmatprep.mubr.bf16.mxu0 0
        %7062 = vmatmul.mubr.bf16.gmra.mrb[0].mxu0 %v7013
        %v7063 = vpop.f32.mrb[0].mxu0
        %v7064 = vadd.f32 0.0, %v7063
        %v7065 = vpop.f32.mrb[0].mxu0
        %v7066 = vpop.f32.mrb[0].mxu0
        %v7067 = vadd.f32 0.0, %v7066
        %v7068 = vpop.f32.mrb[0].mxu0
        %7069 = vmatprep.mubr.bf16.mxu0 0
        %7070 = vmatmul.mubr.bf16.gmra.mrb[0].mxu0 %v7016
        %v7071 = vpop.f32.mrb[0].mxu0
        %v7072 = vadd.f32 0.0, %v7071
        %v7073 = vpop.f32.mrb[0].mxu0
        %v7074 = vpop.f32.mrb[0].mxu0
        %v7075 = vadd.f32 0.0, %v7074
        %v7076 = vpop.f32.mrb[0].mxu0
        %7077 = vmatprep.mubr.bf16.mxu0 0
        %7078 = vmatmul.mubr.bf16.gmra.mrb[0].mxu0 %v7019
        %v7079 = vpop.f32.mrb[0].mxu0
        %v7080 = vadd.f32 0.0, %v7079
        %v7081 = vpop.f32.mrb[0].mxu0
        %v7082 = vpop.f32.mrb[0].mxu0
        %v7083 = vadd.f32 0.0, %v7082
        %v7084 = vpop.f32.mrb[0].mxu0
        %7085 = vdwg.mxu0
        %s7086 = scalar_lea.vmem [#allocation27], 96
        %v7087 = vld [vmem:[%s7086] sm:$0xf]
        %v7088 = vld [vmem:[%s7086 + $0x4] sm:$0xf]
        %v7089 = vld [vmem:[%s7086 + $0x8] sm:$0xf]
        %v7090 = vld [vmem:[%s7086 + $0xc] sm:$0xf]
        %v7091 = vld [vmem:[%s7086 + $0x10] sm:$0xf]
        %v7092 = vld [vmem:[%s7086 + $0x14] sm:$0xf]
        %v7093 = vld [vmem:[%s7086 + $0x18] sm:$0xf]
        %v7094 = vld [vmem:[%s7086 + $0x1c] sm:$0xf]
        %v7103 = vunpack.c.l.b16 %v7087
        %v7104 = vunpack.c.l.b16 %v7088
        %v7105 = vunpack.c.l.b16 %v7089
        %v7106 = vunpack.c.l.b16 %v7090
        %v7107 = vunpack.c.l.b16 %v7091
        %v7108 = vunpack.c.l.b16 %v7092
        %v7109 = vunpack.c.l.b16 %v7093
        %v7110 = vunpack.c.l.b16 %v7094
        %v7111 = vpack.c.b16 %v7104, %v7103
        %v7112 = vpack.c.b16 %v7106, %v7105
        %v7113 = vpack.c.b16 %v7108, %v7107
        %v7114 = vpack.c.b16 %v7110, %v7109
        %v7116 = vsel %vm5237, %v7111, 0
        %v7119 = vsel %vm5237, %v7112, 0
        %v7122 = vsel %vm5237, %v7113, 0
        %v7125 = vsel %vm5237, %v7114, 0
        %7127 = vmatprep.subr.bf16.mxu0 0
        %7128 = vmatpush1.bf16.msra.mxu0 %v6767
        %7129 = vmatprep.subr.bf16.mxu0 0
        %7130 = vmatpush1.bf16.msra.mxu0 %v6768
        %7131 = vmatprep.subr.bf16.mxu0 0
        %7132 = vmatpush1.bf16.msra.mxu0 0
        %7133 = vmatprep.subr.bf16.mxu0 0
        %7134 = vmatpush1.bf16.msra.mxu0 0
        %7135 = vmatprep.subr.bf16.mxu0 0
        %7136 = vmatpush1.bf16.msra.mxu0 0
        %7137 = vmatprep.subr.bf16.mxu0 0
        %7138 = vmatpush1.bf16.msra.mxu0 0
        %7139 = vmatprep.subr.bf16.mxu0 0
        %7140 = vmatpush1.bf16.msra.mxu0 0
        %7141 = vmatprep.subr.bf16.mxu0 0
        %7142 = vmatpush1.bf16.msra.mxu0 0
        %7143 = vmatprep.subr.bf16.mxu0 0
        %7144 = vmatpush1.bf16.msra.mxu0 0
        %7145 = vmatprep.subr.bf16.mxu0 0
        %7146 = vmatpush1.bf16.msra.mxu0 0
        %7147 = vmatprep.subr.bf16.mxu0 0
        %7148 = vmatpush1.bf16.msra.mxu0 0
        %7149 = vmatprep.subr.bf16.mxu0 0
        %7150 = vmatpush1.bf16.msra.mxu0 0
        %7151 = vmatprep.subr.bf16.mxu0 0
        %7152 = vmatpush1.bf16.msra.mxu0 0
        %7153 = vmatprep.subr.bf16.mxu0 0
        %7154 = vmatpush1.bf16.msra.mxu0 0
        %7155 = vmatprep.subr.bf16.mxu0 0
        %7156 = vmatpush1.bf16.msra.mxu0 0
        %7157 = vmatprep.subr.bf16.mxu0 0
        %7158 = vmatpush1.bf16.msra.mxu0 0
        %7159 = vmatprep.mubr.bf16.mxu0 0
        %7160 = vmatmul.mubr.bf16.gmra.mrb[0].mxu0 %v7116
        %v7161 = vpop.f32.mrb[0].mxu0
        %v7162 = vadd.f32 0.0, %v7161
        %v7163 = vpop.f32.mrb[0].mxu0
        %v7164 = vpop.f32.mrb[0].mxu0
        %v7165 = vadd.f32 0.0, %v7164
        %v7166 = vpop.f32.mrb[0].mxu0
        %7167 = vmatprep.mubr.bf16.mxu0 0
        %7168 = vmatmul.mubr.bf16.gmra.mrb[0].mxu0 %v7119
        %v7169 = vpop.f32.mrb[0].mxu0
        %v7170 = vadd.f32 0.0, %v7169
        %v7171 = vpop.f32.mrb[0].mxu0
        %v7172 = vpop.f32.mrb[0].mxu0
        %v7173 = vadd.f32 0.0, %v7172
        %v7174 = vpop.f32.mrb[0].mxu0
        %7175 = vmatprep.mubr.bf16.mxu0 0
        %7176 = vmatmul.mubr.bf16.gmra.mrb[0].mxu0 %v7122
        %v7177 = vpop.f32.mrb[0].mxu0
        %v7178 = vadd.f32 0.0, %v7177
        %v7179 = vpop.f32.mrb[0].mxu0
        %v7180 = vpop.f32.mrb[0].mxu0
        %v7181 = vadd.f32 0.0, %v7180
        %v7182 = vpop.f32.mrb[0].mxu0
        %7183 = vmatprep.mubr.bf16.mxu0 0
        %7184 = vmatmul.mubr.bf16.gmra.mrb[0].mxu0 %v7125
        %v7185 = vpop.f32.mrb[0].mxu0
        %v7186 = vadd.f32 0.0, %v7185
        %v7187 = vpop.f32.mrb[0].mxu0
        %v7188 = vpop.f32.mrb[0].mxu0
        %v7189 = vadd.f32 0.0, %v7188
        %v7190 = vpop.f32.mrb[0].mxu0
        %7191 = vdwg.mxu0
        %s7192 = scalar_lea.vmem [#allocation27], 128
        %v7193 = vld [vmem:[%s7192] sm:$0xf]
        %v7194 = vld [vmem:[%s7192 + $0x4] sm:$0xf]
        %v7195 = vld [vmem:[%s7192 + $0x8] sm:$0xf]
        %v7196 = vld [vmem:[%s7192 + $0xc] sm:$0xf]
        %v7197 = vld [vmem:[%s7192 + $0x10] sm:$0xf]
        %v7198 = vld [vmem:[%s7192 + $0x14] sm:$0xf]
        %v7199 = vld [vmem:[%s7192 + $0x18] sm:$0xf]
        %v7200 = vld [vmem:[%s7192 + $0x1c] sm:$0xf]
        %v7209 = vunpack.c.l.b16 %v7193
        %v7210 = vunpack.c.l.b16 %v7194
        %v7211 = vunpack.c.l.b16 %v7195
        %v7212 = vunpack.c.l.b16 %v7196
        %v7213 = vunpack.c.l.b16 %v7197
        %v7214 = vunpack.c.l.b16 %v7198
        %v7215 = vunpack.c.l.b16 %v7199
        %v7216 = vunpack.c.l.b16 %v7200
        %v7217 = vpack.c.b16 %v7210, %v7209
        %v7218 = vpack.c.b16 %v7212, %v7211
        %v7219 = vpack.c.b16 %v7214, %v7213
        %v7220 = vpack.c.b16 %v7216, %v7215
        %v7222 = vsel %vm5237, %v7217, 0
        %v7225 = vsel %vm5237, %v7218, 0
        %v7228 = vsel %vm5237, %v7219, 0
        %v7231 = vsel %vm5237, %v7220, 0
        %7233 = vmatprep.subr.bf16.mxu0 0
        %7234 = vmatpush1.bf16.msra.mxu0 %v6767
        %7235 = vmatprep.subr.bf16.mxu0 0
        %7236 = vmatpush1.bf16.msra.mxu0 %v6768
        %7237 = vmatprep.subr.bf16.mxu0 0
        %7238 = vmatpush1.bf16.msra.mxu0 0
        %7239 = vmatprep.subr.bf16.mxu0 0
        %7240 = vmatpush1.bf16.msra.mxu0 0
        %7241 = vmatprep.subr.bf16.mxu0 0
        %7242 = vmatpush1.bf16.msra.mxu0 0
        %7243 = vmatprep.subr.bf16.mxu0 0
        %7244 = vmatpush1.bf16.msra.mxu0 0
        %7245 = vmatprep.subr.bf16.mxu0 0
        %7246 = vmatpush1.bf16.msra.mxu0 0
        %7247 = vmatprep.subr.bf16.mxu0 0
        %7248 = vmatpush1.bf16.msra.mxu0 0
        %7249 = vmatprep.subr.bf16.mxu0 0
        %7250 = vmatpush1.bf16.msra.mxu0 0
        %7251 = vmatprep.subr.bf16.mxu0 0
        %7252 = vmatpush1.bf16.msra.mxu0 0
        %7253 = vmatprep.subr.bf16.mxu0 0
        %7254 = vmatpush1.bf16.msra.mxu0 0
        %7255 = vmatprep.subr.bf16.mxu0 0
        %7256 = vmatpush1.bf16.msra.mxu0 0
        %7257 = vmatprep.subr.bf16.mxu0 0
        %7258 = vmatpush1.bf16.msra.mxu0 0
        %7259 = vmatprep.subr.bf16.mxu0 0
        %7260 = vmatpush1.bf16.msra.mxu0 0
        %7261 = vmatprep.subr.bf16.mxu0 0
        %7262 = vmatpush1.bf16.msra.mxu0 0
        %7263 = vmatprep.subr.bf16.mxu0 0
        %7264 = vmatpush1.bf16.msra.mxu0 0
        %7265 = vmatprep.mubr.bf16.mxu0 0
        %7266 = vmatmul.mubr.bf16.gmra.mrb[0].mxu0 %v7222
        %v7267 = vpop.f32.mrb[0].mxu0
        %v7268 = vadd.f32 0.0, %v7267
        %v7269 = vpop.f32.mrb[0].mxu0
        %v7270 = vpop.f32.mrb[0].mxu0
        %v7271 = vadd.f32 0.0, %v7270
        %v7272 = vpop.f32.mrb[0].mxu0
        %7273 = vmatprep.mubr.bf16.mxu0 0
        %7274 = vmatmul.mubr.bf16.gmra.mrb[0].mxu0 %v7225
        %v7275 = vpop.f32.mrb[0].mxu0
        %v7276 = vadd.f32 0.0, %v7275
        %v7277 = vpop.f32.mrb[0].mxu0
        %v7278 = vpop.f32.mrb[0].mxu0
        %v7279 = vadd.f32 0.0, %v7278
        %v7280 = vpop.f32.mrb[0].mxu0
        %7281 = vmatprep.mubr.bf16.mxu0 0
        %7282 = vmatmul.mubr.bf16.gmra.mrb[0].mxu0 %v7228
        %v7283 = vpop.f32.mrb[0].mxu0
        %v7284 = vadd.f32 0.0, %v7283
        %v7285 = vpop.f32.mrb[0].mxu0
        %v7286 = vpop.f32.mrb[0].mxu0
        %v7287 = vadd.f32 0.0, %v7286
        %v7288 = vpop.f32.mrb[0].mxu0
        %7289 = vmatprep.mubr.bf16.mxu0 0
        %7290 = vmatmul.mubr.bf16.gmra.mrb[0].mxu0 %v7231
        %v7291 = vpop.f32.mrb[0].mxu0
        %v7292 = vadd.f32 0.0, %v7291
        %v7293 = vpop.f32.mrb[0].mxu0
        %v7294 = vpop.f32.mrb[0].mxu0
        %v7295 = vadd.f32 0.0, %v7294
        %v7296 = vpop.f32.mrb[0].mxu0
        %7297 = vdwg.mxu0
        %v7298 = vpack.c.bf16 %v6847, %v6844
        %v7299 = vpack.c.bf16 %v6953, %v6950
        %v7300 = vpack.c.bf16 %v7059, %v7056
        %v7301 = vpack.c.bf16 %v7165, %v7162
        %v7302 = vpack.c.bf16 %v7271, %v7268
        %v7303 = vpack.c.bf16 %v6855, %v6852
        %v7304 = vpack.c.bf16 %v6961, %v6958
        %v7305 = vpack.c.bf16 %v7067, %v7064
        %v7306 = vpack.c.bf16 %v7173, %v7170
        %v7307 = vpack.c.bf16 %v7279, %v7276
        %v7308 = vpack.c.bf16 %v6863, %v6860
        %v7309 = vpack.c.bf16 %v6969, %v6966
        %v7310 = vpack.c.bf16 %v7075, %v7072
        %v7311 = vpack.c.bf16 %v7181, %v7178
        %v7312 = vpack.c.bf16 %v7287, %v7284
        %v7313 = vpack.c.bf16 %v6871, %v6868
        %v7314 = vpack.c.bf16 %v6977, %v6974
        %v7315 = vpack.c.bf16 %v7083, %v7080
        %v7316 = vpack.c.bf16 %v7189, %v7186
        %v7317 = vpack.c.bf16 %v7295, %v7292
        %v7318 = vld [vmem:[%s59] sm:$0xf]
        %v7319 = vld [vmem:[%s59 + $0x4] sm:$0xf]
        %v7320 = vld [vmem:[%s59 + $0x8] sm:$0xf]
        %v7321 = vld [vmem:[%s59 + $0xc] sm:$0xf]
        %v7322 = vld [vmem:[%s59 + $0x10] sm:$0xf]
        %v7323 = vld [vmem:[%s59 + $0x14] sm:$0xf]
        %v7324 = vld [vmem:[%s59 + $0x18] sm:$0xf]
        %v7325 = vld [vmem:[%s59 + $0x1c] sm:$0xf]
        %v7326 = vld [vmem:[%s59 + $0x20] sm:$0xf]
        %v7327 = vld [vmem:[%s59 + $0x24] sm:$0xf]
        %v7328 = vld [vmem:[%s59 + $0x28] sm:$0xf]
        %v7329 = vld [vmem:[%s59 + $0x2c] sm:$0xf]
        %v7330 = vld [vmem:[%s59 + $0x30] sm:$0xf]
        %v7331 = vld [vmem:[%s59 + $0x34] sm:$0xf]
        %v7332 = vld [vmem:[%s59 + $0x38] sm:$0xf]
        %v7333 = vld [vmem:[%s59 + $0x3c] sm:$0xf]
        %v7334 = vld [vmem:[%s59 + $0x40] sm:$0xf]
        %v7335 = vld [vmem:[%s59 + $0x44] sm:$0xf]
        %v7336 = vld [vmem:[%s59 + $0x48] sm:$0xf]
        %v7337 = vld [vmem:[%s59 + $0x4c] sm:$0xf]
        %v7338 = vld [vmem:[%s59 + $0x50] sm:$0xf]
        %v7339 = vld [vmem:[%s59 + $0x54] sm:$0xf]
        %v7340 = vld [vmem:[%s59 + $0x58] sm:$0xf]
        %v7341 = vld [vmem:[%s59 + $0x5c] sm:$0xf]
        %v7342 = vld [vmem:[%s59 + $0x60] sm:$0xf]
        %v7343 = vld [vmem:[%s59 + $0x64] sm:$0xf]
        %v7344 = vld [vmem:[%s59 + $0x68] sm:$0xf]
        %v7345 = vld [vmem:[%s59 + $0x6c] sm:$0xf]
        %v7346 = vld [vmem:[%s59 + $0x70] sm:$0xf]
        %v7347 = vld [vmem:[%s59 + $0x74] sm:$0xf]
        %v7348 = vld [vmem:[%s59 + $0x78] sm:$0xf]
        %v7349 = vld [vmem:[%s59 + $0x7c] sm:$0xf]
        %v7350 = vld [vmem:[%s59 + $0x80] sm:$0xf]
        %v7351 = vld [vmem:[%s59 + $0x84] sm:$0xf]
        %v7352 = vld [vmem:[%s59 + $0x88] sm:$0xf]
        %v7353 = vld [vmem:[%s59 + $0x8c] sm:$0xf]
        %v7354 = vld [vmem:[%s59 + $0x90] sm:$0xf]
        %v7355 = vld [vmem:[%s59 + $0x94] sm:$0xf]
        %v7356 = vld [vmem:[%s59 + $0x98] sm:$0xf]
        %v7357 = vld [vmem:[%s59 + $0x9c] sm:$0xf]
        %v7358 = vld [vmem:[%s59 + $0xa0] sm:$0xf]
        %v7359 = vld [vmem:[%s59 + $0xa4] sm:$0xf]
        %v7360 = vld [vmem:[%s59 + $0xa8] sm:$0xf]
        %v7361 = vld [vmem:[%s59 + $0xac] sm:$0xf]
        %v7362 = vld [vmem:[%s59 + $0xb0] sm:$0xf]
        %v7363 = vld [vmem:[%s59 + $0xb4] sm:$0xf]
        %v7364 = vld [vmem:[%s59 + $0xb8] sm:$0xf]
        %v7365 = vld [vmem:[%s59 + $0xbc] sm:$0xf]
        %v7366 = vld [vmem:[%s59 + $0xc0] sm:$0xf]
        %v7367 = vld [vmem:[%s59 + $0xc4] sm:$0xf]
        %v7368 = vld [vmem:[%s59 + $0xc8] sm:$0xf]
        %v7369 = vld [vmem:[%s59 + $0xcc] sm:$0xf]
        %v7370 = vld [vmem:[%s59 + $0xd0] sm:$0xf]
        %v7371 = vld [vmem:[%s59 + $0xd4] sm:$0xf]
        %v7372 = vld [vmem:[%s59 + $0xd8] sm:$0xf]
        %v7373 = vld [vmem:[%s59 + $0xdc] sm:$0xf]
        %v7374 = vld [vmem:[%s59 + $0xe0] sm:$0xf]
        %v7375 = vld [vmem:[%s59 + $0xe4] sm:$0xf]
        %v7376 = vld [vmem:[%s59 + $0xe8] sm:$0xf]
        %v7377 = vld [vmem:[%s59 + $0xec] sm:$0xf]
        %v7378 = vld [vmem:[%s59 + $0xf0] sm:$0xf]
        %v7379 = vld [vmem:[%s59 + $0xf4] sm:$0xf]
        %v7380 = vld [vmem:[%s59 + $0xf8] sm:$0xf]
        %v7381 = vld [vmem:[%s59 + $0xfc] sm:$0xf]
        %v7382 = vld [vmem:[%s59 + $0x100] sm:$0xf]
        %v7383 = vld [vmem:[%s59 + $0x104] sm:$0xf]
        %v7384 = vld [vmem:[%s59 + $0x108] sm:$0xf]
        %v7385 = vld [vmem:[%s59 + $0x10c] sm:$0xf]
        %v7386 = vld [vmem:[%s59 + $0x110] sm:$0xf]
        %v7387 = vld [vmem:[%s59 + $0x114] sm:$0xf]
        %v7388 = vld [vmem:[%s59 + $0x118] sm:$0xf]
        %v7389 = vld [vmem:[%s59 + $0x11c] sm:$0xf]
        %v7390 = vld [vmem:[%s59 + $0x120] sm:$0xf]
        %v7391 = vld [vmem:[%s59 + $0x124] sm:$0xf]
        %v7392 = vld [vmem:[%s59 + $0x128] sm:$0xf]
        %v7393 = vld [vmem:[%s59 + $0x12c] sm:$0xf]
        %v7394 = vld [vmem:[%s59 + $0x130] sm:$0xf]
        %v7395 = vld [vmem:[%s59 + $0x134] sm:$0xf]
        %v7396 = vld [vmem:[%s59 + $0x138] sm:$0xf]
        %v7397 = vld [vmem:[%s59 + $0x13c] sm:$0xf]
        %v7478 = vunpack.c.l.b16 %v7318
        %v7479 = vunpack.c.l.b16 %v7319
        %v7480 = vunpack.c.l.b16 %v7320
        %v7481 = vunpack.c.l.b16 %v7321
        %v7482 = vunpack.c.l.b16 %v7322
        %v7483 = vunpack.c.l.b16 %v7323
        %v7484 = vunpack.c.l.b16 %v7324
        %v7485 = vunpack.c.l.b16 %v7325
        %v7486 = vunpack.c.l.b16 %v7326
        %v7487 = vunpack.c.l.b16 %v7327
        %v7488 = vunpack.c.l.b16 %v7328
        %v7489 = vunpack.c.l.b16 %v7329
        %v7490 = vunpack.c.l.b16 %v7330
        %v7491 = vunpack.c.l.b16 %v7331
        %v7492 = vunpack.c.l.b16 %v7332
        %v7493 = vunpack.c.l.b16 %v7333
        %v7494 = vunpack.c.l.b16 %v7334
        %v7495 = vunpack.c.l.b16 %v7335
        %v7496 = vunpack.c.l.b16 %v7336
        %v7497 = vunpack.c.l.b16 %v7337
        %v7498 = vunpack.c.l.b16 %v7338
        %v7499 = vunpack.c.l.b16 %v7339
        %v7500 = vunpack.c.l.b16 %v7340
        %v7501 = vunpack.c.l.b16 %v7341
        %v7502 = vunpack.c.l.b16 %v7342
        %v7503 = vunpack.c.l.b16 %v7343
        %v7504 = vunpack.c.l.b16 %v7344
        %v7505 = vunpack.c.l.b16 %v7345
        %v7506 = vunpack.c.l.b16 %v7346
        %v7507 = vunpack.c.l.b16 %v7347
        %v7508 = vunpack.c.l.b16 %v7348
        %v7509 = vunpack.c.l.b16 %v7349
        %v7510 = vunpack.c.l.b16 %v7350
        %v7511 = vunpack.c.l.b16 %v7351
        %v7512 = vunpack.c.l.b16 %v7352
        %v7513 = vunpack.c.l.b16 %v7353
        %v7514 = vunpack.c.l.b16 %v7354
        %v7515 = vunpack.c.l.b16 %v7355
        %v7516 = vunpack.c.l.b16 %v7356
        %v7517 = vunpack.c.l.b16 %v7357
        %v7518 = vunpack.c.l.b16 %v7358
        %v7519 = vunpack.c.l.b16 %v7359
        %v7520 = vunpack.c.l.b16 %v7360
        %v7521 = vunpack.c.l.b16 %v7361
        %v7522 = vunpack.c.l.b16 %v7362
        %v7523 = vunpack.c.l.b16 %v7363
        %v7524 = vunpack.c.l.b16 %v7364
        %v7525 = vunpack.c.l.b16 %v7365
        %v7526 = vunpack.c.l.b16 %v7366
        %v7527 = vunpack.c.l.b16 %v7367
        %v7528 = vunpack.c.l.b16 %v7368
        %v7529 = vunpack.c.l.b16 %v7369
        %v7530 = vunpack.c.l.b16 %v7370
        %v7531 = vunpack.c.l.b16 %v7371
        %v7532 = vunpack.c.l.b16 %v7372
        %v7533 = vunpack.c.l.b16 %v7373
        %v7534 = vunpack.c.l.b16 %v7374
        %v7535 = vunpack.c.l.b16 %v7375
        %v7536 = vunpack.c.l.b16 %v7376
        %v7537 = vunpack.c.l.b16 %v7377
        %v7538 = vunpack.c.l.b16 %v7378
        %v7539 = vunpack.c.l.b16 %v7379
        %v7540 = vunpack.c.l.b16 %v7380
        %v7541 = vunpack.c.l.b16 %v7381
        %v7542 = vunpack.c.l.b16 %v7382
        %v7543 = vunpack.c.l.b16 %v7383
        %v7544 = vunpack.c.l.b16 %v7384
        %v7545 = vunpack.c.l.b16 %v7385
        %v7546 = vunpack.c.l.b16 %v7386
        %v7547 = vunpack.c.l.b16 %v7387
        %v7548 = vunpack.c.l.b16 %v7388
        %v7549 = vunpack.c.l.b16 %v7389
        %v7550 = vunpack.c.l.b16 %v7390
        %v7551 = vunpack.c.l.b16 %v7391
        %v7552 = vunpack.c.l.b16 %v7392
        %v7553 = vunpack.c.l.b16 %v7393
        %v7554 = vunpack.c.l.b16 %v7394
        %v7555 = vunpack.c.l.b16 %v7395
        %v7556 = vunpack.c.l.b16 %v7396
        %v7557 = vunpack.c.l.b16 %v7397
        %v7558 = vpack.c.b16 %v7479, %v7478
        %v7559 = vpack.c.b16 %v7481, %v7480
        %v7560 = vpack.c.b16 %v7483, %v7482
        %v7561 = vpack.c.b16 %v7485, %v7484
        %v7562 = vpack.c.b16 %v7487, %v7486
        %v7563 = vpack.c.b16 %v7489, %v7488
        %v7564 = vpack.c.b16 %v7491, %v7490
        %v7565 = vpack.c.b16 %v7493, %v7492
        %v7566 = vpack.c.b16 %v7495, %v7494
        %v7567 = vpack.c.b16 %v7497, %v7496
        %v7568 = vpack.c.b16 %v7499, %v7498
        %v7569 = vpack.c.b16 %v7501, %v7500
        %v7570 = vpack.c.b16 %v7503, %v7502
        %v7571 = vpack.c.b16 %v7505, %v7504
        %v7572 = vpack.c.b16 %v7507, %v7506
        %v7573 = vpack.c.b16 %v7509, %v7508
        %v7574 = vpack.c.b16 %v7511, %v7510
        %v7575 = vpack.c.b16 %v7513, %v7512
        %v7576 = vpack.c.b16 %v7515, %v7514
        %v7577 = vpack.c.b16 %v7517, %v7516
        %v7578 = vpack.c.b16 %v7519, %v7518
        %v7579 = vpack.c.b16 %v7521, %v7520
        %v7580 = vpack.c.b16 %v7523, %v7522
        %v7581 = vpack.c.b16 %v7525, %v7524
        %v7582 = vpack.c.b16 %v7527, %v7526
        %v7583 = vpack.c.b16 %v7529, %v7528
        %v7584 = vpack.c.b16 %v7531, %v7530
        %v7585 = vpack.c.b16 %v7533, %v7532
        %v7586 = vpack.c.b16 %v7535, %v7534
        %v7587 = vpack.c.b16 %v7537, %v7536
        %v7588 = vpack.c.b16 %v7539, %v7538
        %v7589 = vpack.c.b16 %v7541, %v7540
        %v7590 = vpack.c.b16 %v7543, %v7542
        %v7591 = vpack.c.b16 %v7545, %v7544
        %v7592 = vpack.c.b16 %v7547, %v7546
        %v7593 = vpack.c.b16 %v7549, %v7548
        %v7594 = vpack.c.b16 %v7551, %v7550
        %v7595 = vpack.c.b16 %v7553, %v7552
        %v7596 = vpack.c.b16 %v7555, %v7554
        %v7597 = vpack.c.b16 %v7557, %v7556
        %7638 = vmatprep.subr.bf16.mxu0 0
        %7639 = vmatpush1.bf16.msra.mxu0 %v7558
        %7640 = vmatprep.subr.bf16.mxu0 0
        %7641 = vmatpush1.bf16.msra.mxu0 %v7559
        %7642 = vmatprep.subr.bf16.mxu0 0
        %7643 = vmatpush1.bf16.msra.mxu0 %v7560
        %7644 = vmatprep.subr.bf16.mxu0 0
        %7645 = vmatpush1.bf16.msra.mxu0 %v7561
        %7646 = vmatprep.subr.bf16.mxu0 0
        %7647 = vmatpush1.bf16.msra.mxu0 %v7562
        %7648 = vmatprep.subr.bf16.mxu0 0
        %7649 = vmatpush1.bf16.msra.mxu0 %v7563
        %7650 = vmatprep.subr.bf16.mxu0 0
        %7651 = vmatpush1.bf16.msra.mxu0 %v7564
        %7652 = vmatprep.subr.bf16.mxu0 0
        %7653 = vmatpush1.bf16.msra.mxu0 %v7565
        %7654 = vmatprep.subr.bf16.mxu0 0
        %7655 = vmatpush1.bf16.msra.mxu0 %v7566
        %7656 = vmatprep.subr.bf16.mxu0 0
        %7657 = vmatpush1.bf16.msra.mxu0 %v7567
        %7658 = vmatprep.subr.bf16.mxu0 0
        %7659 = vmatpush1.bf16.msra.mxu0 %v7568
        %7660 = vmatprep.subr.bf16.mxu0 0
        %7661 = vmatpush1.bf16.msra.mxu0 %v7569
        %7662 = vmatprep.subr.bf16.mxu0 0
        %7663 = vmatpush1.bf16.msra.mxu0 %v7570
        %7664 = vmatprep.subr.bf16.mxu0 0
        %7665 = vmatpush1.bf16.msra.mxu0 %v7571
        %7666 = vmatprep.subr.bf16.mxu0 0
        %7667 = vmatpush1.bf16.msra.mxu0 %v7572
        %7668 = vmatprep.subr.bf16.mxu0 0
        %7669 = vmatpush1.bf16.msra.mxu0 %v7573
        %7670 = vmatprep.mubr.bf16.mxu0 %v7299
        %7671 = vmatmul.mubr.bf16.gmra.mrb[0].mxu0 %v7298
        %v7672 = vpop.f32.mrb[0].mxu0
        %v7673 = vadd.f32 0.0, %v7672
        %v7674 = vpop.f32.mrb[0].mxu0
        %v7675 = vpop.f32.mrb[0].mxu0
        %v7676 = vadd.f32 0.0, %v7675
        %v7677 = vpop.f32.mrb[0].mxu0
        %7678 = vmatprep.mubr.bf16.mxu0 %v7304
        %7679 = vmatmul.mubr.bf16.gmra.mrb[0].mxu0 %v7303
        %v7680 = vpop.f32.mrb[0].mxu0
        %v7681 = vadd.f32 0.0, %v7680
        %v7682 = vpop.f32.mrb[0].mxu0
        %v7683 = vpop.f32.mrb[0].mxu0
        %v7684 = vadd.f32 0.0, %v7683
        %v7685 = vpop.f32.mrb[0].mxu0
        %7686 = vmatprep.mubr.bf16.mxu0 %v7309
        %7687 = vmatmul.mubr.bf16.gmra.mrb[0].mxu0 %v7308
        %v7688 = vpop.f32.mrb[0].mxu0
        %v7689 = vadd.f32 0.0, %v7688
        %v7690 = vpop.f32.mrb[0].mxu0
        %v7691 = vpop.f32.mrb[0].mxu0
        %v7692 = vadd.f32 0.0, %v7691
        %v7693 = vpop.f32.mrb[0].mxu0
        %7694 = vmatprep.mubr.bf16.mxu0 %v7314
        %7695 = vmatmul.mubr.bf16.gmra.mrb[0].mxu0 %v7313
        %v7696 = vpop.f32.mrb[0].mxu0
        %v7697 = vadd.f32 0.0, %v7696
        %v7698 = vpop.f32.mrb[0].mxu0
        %v7699 = vpop.f32.mrb[0].mxu0
        %v7700 = vadd.f32 0.0, %v7699
        %v7701 = vpop.f32.mrb[0].mxu0
        %7702 = vdwg.mxu0
        %7703 = vmatprep.subr.bf16.mxu0 0
        %7704 = vmatpush1.bf16.msra.mxu0 %v7574
        %7705 = vmatprep.subr.bf16.mxu0 0
        %7706 = vmatpush1.bf16.msra.mxu0 %v7575
        %7707 = vmatprep.subr.bf16.mxu0 0
        %7708 = vmatpush1.bf16.msra.mxu0 %v7576
        %7709 = vmatprep.subr.bf16.mxu0 0
        %7710 = vmatpush1.bf16.msra.mxu0 %v7577
        %7711 = vmatprep.subr.bf16.mxu0 0
        %7712 = vmatpush1.bf16.msra.mxu0 %v7578
        %7713 = vmatprep.subr.bf16.mxu0 0
        %7714 = vmatpush1.bf16.msra.mxu0 %v7579
        %7715 = vmatprep.subr.bf16.mxu0 0
        %7716 = vmatpush1.bf16.msra.mxu0 %v7580
        %7717 = vmatprep.subr.bf16.mxu0 0
        %7718 = vmatpush1.bf16.msra.mxu0 %v7581
        %7719 = vmatprep.subr.bf16.mxu0 0
        %7720 = vmatpush1.bf16.msra.mxu0 %v7582
        %7721 = vmatprep.subr.bf16.mxu0 0
        %7722 = vmatpush1.bf16.msra.mxu0 %v7583
        %7723 = vmatprep.subr.bf16.mxu0 0
        %7724 = vmatpush1.bf16.msra.mxu0 %v7584
        %7725 = vmatprep.subr.bf16.mxu0 0
        %7726 = vmatpush1.bf16.msra.mxu0 %v7585
        %7727 = vmatprep.subr.bf16.mxu0 0
        %7728 = vmatpush1.bf16.msra.mxu0 %v7586
        %7729 = vmatprep.subr.bf16.mxu0 0
        %7730 = vmatpush1.bf16.msra.mxu0 %v7587
        %7731 = vmatprep.subr.bf16.mxu0 0
        %7732 = vmatpush1.bf16.msra.mxu0 %v7588
        %7733 = vmatprep.subr.bf16.mxu0 0
        %7734 = vmatpush1.bf16.msra.mxu0 %v7589
        %7735 = vmatprep.mubr.bf16.mxu0 %v7301
        %7736 = vmatmul.mubr.bf16.gmra.mrb[0].mxu0 %v7300
        %v7737 = vpop.f32.mrb[0].mxu0
        %v7738 = vadd.f32 %v7673, %v7737
        %v7739 = vpop.f32.mrb[0].mxu0
        %v7740 = vpop.f32.mrb[0].mxu0
        %v7741 = vadd.f32 %v7676, %v7740
        %v7742 = vpop.f32.mrb[0].mxu0
        %7743 = vmatprep.mubr.bf16.mxu0 %v7306
        %7744 = vmatmul.mubr.bf16.gmra.mrb[0].mxu0 %v7305
        %v7745 = vpop.f32.mrb[0].mxu0
        %v7746 = vadd.f32 %v7681, %v7745
        %v7747 = vpop.f32.mrb[0].mxu0
        %v7748 = vpop.f32.mrb[0].mxu0
        %v7749 = vadd.f32 %v7684, %v7748
        %v7750 = vpop.f32.mrb[0].mxu0
        %7751 = vmatprep.mubr.bf16.mxu0 %v7311
        %7752 = vmatmul.mubr.bf16.gmra.mrb[0].mxu0 %v7310
        %v7753 = vpop.f32.mrb[0].mxu0
        %v7754 = vadd.f32 %v7689, %v7753
        %v7755 = vpop.f32.mrb[0].mxu0
        %v7756 = vpop.f32.mrb[0].mxu0
        %v7757 = vadd.f32 %v7692, %v7756
        %v7758 = vpop.f32.mrb[0].mxu0
        %7759 = vmatprep.mubr.bf16.mxu0 %v7316
        %7760 = vmatmul.mubr.bf16.gmra.mrb[0].mxu0 %v7315
        %v7761 = vpop.f32.mrb[0].mxu0
        %v7762 = vadd.f32 %v7697, %v7761
        %v7763 = vpop.f32.mrb[0].mxu0
        %v7764 = vpop.f32.mrb[0].mxu0
        %v7765 = vadd.f32 %v7700, %v7764
        %v7766 = vpop.f32.mrb[0].mxu0
        %7767 = vdwg.mxu0
        %7768 = vmatprep.subr.bf16.mxu0 0
        %7769 = vmatpush1.bf16.msra.mxu0 %v7590
        %7770 = vmatprep.subr.bf16.mxu0 0
        %7771 = vmatpush1.bf16.msra.mxu0 %v7591
        %7772 = vmatprep.subr.bf16.mxu0 0
        %7773 = vmatpush1.bf16.msra.mxu0 %v7592
        %7774 = vmatprep.subr.bf16.mxu0 0
        %7775 = vmatpush1.bf16.msra.mxu0 %v7593
        %7776 = vmatprep.subr.bf16.mxu0 0
        %7777 = vmatpush1.bf16.msra.mxu0 %v7594
        %7778 = vmatprep.subr.bf16.mxu0 0
        %7779 = vmatpush1.bf16.msra.mxu0 %v7595
        %7780 = vmatprep.subr.bf16.mxu0 0
        %7781 = vmatpush1.bf16.msra.mxu0 %v7596
        %7782 = vmatprep.subr.bf16.mxu0 0
        %7783 = vmatpush1.bf16.msra.mxu0 %v7597
        %7784 = vmatprep.subr.bf16.mxu0 0
        %7785 = vmatpush1.bf16.msra.mxu0 0
        %7786 = vmatprep.subr.bf16.mxu0 0
        %7787 = vmatpush1.bf16.msra.mxu0 0
        %7788 = vmatprep.subr.bf16.mxu0 0
        %7789 = vmatpush1.bf16.msra.mxu0 0
        %7790 = vmatprep.subr.bf16.mxu0 0
        %7791 = vmatpush1.bf16.msra.mxu0 0
        %7792 = vmatprep.subr.bf16.mxu0 0
        %7793 = vmatpush1.bf16.msra.mxu0 0
        %7794 = vmatprep.subr.bf16.mxu0 0
        %7795 = vmatpush1.bf16.msra.mxu0 0
        %7796 = vmatprep.subr.bf16.mxu0 0
        %7797 = vmatpush1.bf16.msra.mxu0 0
        %7798 = vmatprep.subr.bf16.mxu0 0
        %7799 = vmatpush1.bf16.msra.mxu0 0
        %7800 = vmatprep.mubr.bf16.mxu0 0
        %7801 = vmatmul.mubr.bf16.gmra.mrb[0].mxu0 %v7302
        %v7802 = vpop.f32.mrb[0].mxu0
        %v7803 = vadd.f32 %v7738, %v7802
        %v7804 = vpop.f32.mrb[0].mxu0
        %v7805 = vpop.f32.mrb[0].mxu0
        %v7806 = vadd.f32 %v7741, %v7805
        %v7807 = vpop.f32.mrb[0].mxu0
        %7808 = vmatprep.mubr.bf16.mxu0 0
        %7809 = vmatmul.mubr.bf16.gmra.mrb[0].mxu0 %v7307
        %v7810 = vpop.f32.mrb[0].mxu0
        %v7811 = vadd.f32 %v7746, %v7810
        %v7812 = vpop.f32.mrb[0].mxu0
        %v7813 = vpop.f32.mrb[0].mxu0
        %v7814 = vadd.f32 %v7749, %v7813
        %v7815 = vpop.f32.mrb[0].mxu0
        %7816 = vmatprep.mubr.bf16.mxu0 0
        %7817 = vmatmul.mubr.bf16.gmra.mrb[0].mxu0 %v7312
        %v7818 = vpop.f32.mrb[0].mxu0
        %v7819 = vadd.f32 %v7754, %v7818
        %v7820 = vpop.f32.mrb[0].mxu0
        %v7821 = vpop.f32.mrb[0].mxu0
        %v7822 = vadd.f32 %v7757, %v7821
        %v7823 = vpop.f32.mrb[0].mxu0
        %7824 = vmatprep.mubr.bf16.mxu0 0
        %7825 = vmatmul.mubr.bf16.gmra.mrb[0].mxu0 %v7317
        %v7826 = vpop.f32.mrb[0].mxu0
        %v7827 = vadd.f32 %v7762, %v7826
        %v7828 = vpop.f32.mrb[0].mxu0
        %v7829 = vpop.f32.mrb[0].mxu0
        %v7830 = vadd.f32 %v7765, %v7829
        %v7831 = vpop.f32.mrb[0].mxu0
        %7832 = vdwg.mxu0
        %v7833 = vld [vmem:[%s61] sm:$0x1]
        %v7835 = vlaneseq
        %v7836 = vshrl.u32 %v7835, 7
        %v7837 = vsub.s32 0, %v7836
        %v7838 = vrot.slane %v7833, %v7837
        %v7840 = vmul.f32 %v7803, %v7838
        %v7841 = vmul.f32 %v7806, %v7838
        %v7842 = vmul.f32 %v7811, %v7838
        %v7843 = vmul.f32 %v7814, %v7838
        %v7844 = vmul.f32 %v7819, %v7838
        %v7845 = vmul.f32 %v7822, %v7838
        %v7846 = vmul.f32 %v7827, %v7838
        %v7847 = vmul.f32 %v7830, %v7838
        %v7848 = vld [vmem:[%s63] sm:$0x1]
        %v7850 = vlaneseq
        %v7851 = vshrl.u32 %v7850, 7
        %v7852 = vsub.s32 0, %v7851
        %v7853 = vrot.slane %v7848, %v7852
        %v7855 = vadd.f32 %v7840, %v7853
        %v7856 = vadd.f32 %v7841, %v7853
        %v7857 = vadd.f32 %v7842, %v7853
        %v7858 = vadd.f32 %v7843, %v7853
        %v7859 = vadd.f32 %v7844, %v7853
        %v7860 = vadd.f32 %v7845, %v7853
        %v7861 = vadd.f32 %v7846, %v7853
        %v7862 = vadd.f32 %v7847, %v7853
        %s7863 = sld [smem:[#allocation2 + $0x8]]
        %vm7864 = vcmp.gt.f32.partialorder %v7855, 0.0
        %vm7865 = vcmp.gt.f32.partialorder %v7856, 0.0
        %vm7866 = vcmp.gt.f32.partialorder %v7857, 0.0
        %vm7867 = vcmp.gt.f32.partialorder %v7858, 0.0
        %vm7868 = vcmp.gt.f32.partialorder %v7859, 0.0
        %vm7869 = vcmp.gt.f32.partialorder %v7860, 0.0
        %vm7870 = vcmp.gt.f32.partialorder %v7861, 0.0
        %vm7871 = vcmp.gt.f32.partialorder %v7862, 0.0
        %v7872 = vstv %s7863
        %v7873 = vmul.f32 %v7872, %v7855
        %v7874 = vmul.f32 %v7872, %v7856
        %v7875 = vmul.f32 %v7872, %v7857
        %v7876 = vmul.f32 %v7872, %v7858
        %v7877 = vmul.f32 %v7872, %v7859
        %v7878 = vmul.f32 %v7872, %v7860
        %v7879 = vmul.f32 %v7872, %v7861
        %v7880 = vmul.f32 %v7872, %v7862
        %v7881 = vsel %vm7864, %v7855, %v7873
        %v7882 = vsel %vm7865, %v7856, %v7874
        %v7883 = vsel %vm7866, %v7857, %v7875
        %v7884 = vsel %vm7867, %v7858, %v7876
        %v7885 = vsel %vm7868, %v7859, %v7877
        %v7886 = vsel %vm7869, %v7860, %v7878
        %v7887 = vsel %vm7870, %v7861, %v7879
        %v7888 = vsel %vm7871, %v7862, %v7880
        %v7889 = vpack.c.bf16 %v7882, %v7881
        %v7890 = vpack.c.bf16 %v7884, %v7883
        %v7891 = vpack.c.bf16 %v7886, %v7885
        %v7892 = vpack.c.bf16 %v7888, %v7887
        %v7893 = vld [vmem:[%s65] sm:$0xf]
        %v7894 = vld [vmem:[%s65 + $0x4] sm:$0xf]
        %v7895 = vld [vmem:[%s65 + $0x8] sm:$0xf]
        %v7896 = vld [vmem:[%s65 + $0xc] sm:$0xf]
        %v7897 = vld [vmem:[%s65 + $0x10] sm:$0xf]
        %v7898 = vld [vmem:[%s65 + $0x14] sm:$0xf]
        %v7899 = vld [vmem:[%s65 + $0x18] sm:$0xf]
        %v7900 = vld [vmem:[%s65 + $0x1c] sm:$0xf]
        %v7901 = vld [vmem:[%s65 + $0x20] sm:$0xf]
        %v7902 = vld [vmem:[%s65 + $0x24] sm:$0xf]
        %v7903 = vld [vmem:[%s65 + $0x28] sm:$0xf]
        %v7904 = vld [vmem:[%s65 + $0x2c] sm:$0xf]
        %v7905 = vld [vmem:[%s65 + $0x30] sm:$0xf]
        %v7906 = vld [vmem:[%s65 + $0x34] sm:$0xf]
        %v7907 = vld [vmem:[%s65 + $0x38] sm:$0xf]
        %v7908 = vld [vmem:[%s65 + $0x3c] sm:$0xf]
        %v7925 = vunpack.c.l.b16 %v7893
        %v7926 = vunpack.c.l.b16 %v7894
        %v7927 = vunpack.c.l.b16 %v7895
        %v7928 = vunpack.c.l.b16 %v7896
        %v7929 = vunpack.c.l.b16 %v7897
        %v7930 = vunpack.c.l.b16 %v7898
        %v7931 = vunpack.c.l.b16 %v7899
        %v7932 = vunpack.c.l.b16 %v7900
        %v7933 = vunpack.c.l.b16 %v7901
        %v7934 = vunpack.c.l.b16 %v7902
        %v7935 = vunpack.c.l.b16 %v7903
        %v7936 = vunpack.c.l.b16 %v7904
        %v7937 = vunpack.c.l.b16 %v7905
        %v7938 = vunpack.c.l.b16 %v7906
        %v7939 = vunpack.c.l.b16 %v7907
        %v7940 = vunpack.c.l.b16 %v7908
        %v7941 = vpack.c.b16 %v7926, %v7925
        %v7942 = vpack.c.b16 %v7928, %v7927
        %v7943 = vpack.c.b16 %v7930, %v7929
        %v7944 = vpack.c.b16 %v7932, %v7931
        %v7945 = vpack.c.b16 %v7934, %v7933
        %v7946 = vpack.c.b16 %v7936, %v7935
        %v7947 = vpack.c.b16 %v7938, %v7937
        %v7948 = vpack.c.b16 %v7940, %v7939
        %v7950 = vsel %vm1999, %v7941, 0
        %v7953 = vsel %vm1999, %v7942, 0
        %v7956 = vsel %vm1999, %v7943, 0
        %v7959 = vsel %vm1999, %v7944, 0
        %v7962 = vsel %vm1999, %v7945, 0
        %v7965 = vsel %vm1999, %v7946, 0
        %v7968 = vsel %vm1999, %v7947, 0
        %v7971 = vsel %vm1999, %v7948, 0
        %7973 = vmatprep.subr.bf16.mxu0 0
        %7974 = vmatpush1.bf16.msra.mxu0 %v7889
        %7975 = vmatprep.subr.bf16.mxu0 0
        %7976 = vmatpush1.bf16.msra.mxu0 %v7890
        %7977 = vmatprep.subr.bf16.mxu0 0
        %7978 = vmatpush1.bf16.msra.mxu0 %v7891
        %7979 = vmatprep.subr.bf16.mxu0 0
        %7980 = vmatpush1.bf16.msra.mxu0 %v7892
        %7981 = vmatprep.subr.bf16.mxu0 0
        %7982 = vmatpush1.bf16.msra.mxu0 0
        %7983 = vmatprep.subr.bf16.mxu0 0
        %7984 = vmatpush1.bf16.msra.mxu0 0
        %7985 = vmatprep.subr.bf16.mxu0 0
        %7986 = vmatpush1.bf16.msra.mxu0 0
        %7987 = vmatprep.subr.bf16.mxu0 0
        %7988 = vmatpush1.bf16.msra.mxu0 0
        %7989 = vmatprep.subr.bf16.mxu0 0
        %7990 = vmatpush1.bf16.msra.mxu0 0
        %7991 = vmatprep.subr.bf16.mxu0 0
        %7992 = vmatpush1.bf16.msra.mxu0 0
        %7993 = vmatprep.subr.bf16.mxu0 0
        %7994 = vmatpush1.bf16.msra.mxu0 0
        %7995 = vmatprep.subr.bf16.mxu0 0
        %7996 = vmatpush1.bf16.msra.mxu0 0
        %7997 = vmatprep.subr.bf16.mxu0 0
        %7998 = vmatpush1.bf16.msra.mxu0 0
        %7999 = vmatprep.subr.bf16.mxu0 0
        %8000 = vmatpush1.bf16.msra.mxu0 0
        %8001 = vmatprep.subr.bf16.mxu0 0
        %8002 = vmatpush1.bf16.msra.mxu0 0
        %8003 = vmatprep.subr.bf16.mxu0 0
        %8004 = vmatpush1.bf16.msra.mxu0 0
        %8005 = vmatprep.mubr.bf16.mxu0 0
        %8006 = vmatmul.mubr.bf16.gmra.mrb[0].mxu0 %v7950
        %v8007 = vpop.f32.mrb[0].mxu0
        %v8008 = vadd.f32 0.0, %v8007
        %v8009 = vpop.f32.mrb[0].mxu0
        %v8010 = vpop.f32.mrb[0].mxu0
        %v8011 = vadd.f32 0.0, %v8010
        %v8012 = vpop.f32.mrb[0].mxu0
        %8013 = vmatprep.mubr.bf16.mxu0 0
        %8014 = vmatmul.mubr.bf16.gmra.mrb[0].mxu0 %v7953
        %v8015 = vpop.f32.mrb[0].mxu0
        %v8016 = vadd.f32 0.0, %v8015
        %v8017 = vpop.f32.mrb[0].mxu0
        %v8018 = vpop.f32.mrb[0].mxu0
        %v8019 = vadd.f32 0.0, %v8018
        %v8020 = vpop.f32.mrb[0].mxu0
        %8021 = vmatprep.mubr.bf16.mxu0 0
        %8022 = vmatmul.mubr.bf16.gmra.mrb[0].mxu0 %v7956
        %v8023 = vpop.f32.mrb[0].mxu0
        %v8024 = vadd.f32 0.0, %v8023
        %v8025 = vpop.f32.mrb[0].mxu0
        %v8026 = vpop.f32.mrb[0].mxu0
        %v8027 = vadd.f32 0.0, %v8026
        %v8028 = vpop.f32.mrb[0].mxu0
        %8029 = vmatprep.mubr.bf16.mxu0 0
        %8030 = vmatmul.mubr.bf16.gmra.mrb[0].mxu0 %v7959
        %v8031 = vpop.f32.mrb[0].mxu0
        %v8032 = vadd.f32 0.0, %v8031
        %v8033 = vpop.f32.mrb[0].mxu0
        %v8034 = vpop.f32.mrb[0].mxu0
        %v8035 = vadd.f32 0.0, %v8034
        %v8036 = vpop.f32.mrb[0].mxu0
        %8037 = vmatprep.mubr.bf16.mxu0 0
        %8038 = vmatmul.mubr.bf16.gmra.mrb[0].mxu0 %v7962
        %v8039 = vpop.f32.mrb[0].mxu0
        %v8040 = vadd.f32 0.0, %v8039
        %v8041 = vpop.f32.mrb[0].mxu0
        %v8042 = vpop.f32.mrb[0].mxu0
        %v8043 = vadd.f32 0.0, %v8042
        %v8044 = vpop.f32.mrb[0].mxu0
        %8045 = vmatprep.mubr.bf16.mxu0 0
        %8046 = vmatmul.mubr.bf16.gmra.mrb[0].mxu0 %v7965
        %v8047 = vpop.f32.mrb[0].mxu0
        %v8048 = vadd.f32 0.0, %v8047
        %v8049 = vpop.f32.mrb[0].mxu0
        %v8050 = vpop.f32.mrb[0].mxu0
        %v8051 = vadd.f32 0.0, %v8050
        %v8052 = vpop.f32.mrb[0].mxu0
        %8053 = vmatprep.mubr.bf16.mxu0 0
        %8054 = vmatmul.mubr.bf16.gmra.mrb[0].mxu0 %v7968
        %v8055 = vpop.f32.mrb[0].mxu0
        %v8056 = vadd.f32 0.0, %v8055
        %v8057 = vpop.f32.mrb[0].mxu0
        %v8058 = vpop.f32.mrb[0].mxu0
        %v8059 = vadd.f32 0.0, %v8058
        %v8060 = vpop.f32.mrb[0].mxu0
        %8061 = vmatprep.mubr.bf16.mxu0 0
        %8062 = vmatmul.mubr.bf16.gmra.mrb[0].mxu0 %v7971
        %v8063 = vpop.f32.mrb[0].mxu0
        %v8064 = vadd.f32 0.0, %v8063
        %v8065 = vpop.f32.mrb[0].mxu0
        %v8066 = vpop.f32.mrb[0].mxu0
        %v8067 = vadd.f32 0.0, %v8066
        %v8068 = vpop.f32.mrb[0].mxu0
        %8069 = vdwg.mxu0
        %s8070 = scalar_lea.vmem %s65, 64
        %v8071 = vld [vmem:[%s8070] sm:$0xf]
        %v8072 = vld [vmem:[%s8070 + $0x4] sm:$0xf]
        %v8073 = vld [vmem:[%s8070 + $0x8] sm:$0xf]
        %v8074 = vld [vmem:[%s8070 + $0xc] sm:$0xf]
        %v8075 = vld [vmem:[%s8070 + $0x10] sm:$0xf]
        %v8076 = vld [vmem:[%s8070 + $0x14] sm:$0xf]
        %v8077 = vld [vmem:[%s8070 + $0x18] sm:$0xf]
        %v8078 = vld [vmem:[%s8070 + $0x1c] sm:$0xf]
        %v8079 = vld [vmem:[%s8070 + $0x20] sm:$0xf]
        %v8080 = vld [vmem:[%s8070 + $0x24] sm:$0xf]
        %v8081 = vld [vmem:[%s8070 + $0x28] sm:$0xf]
        %v8082 = vld [vmem:[%s8070 + $0x2c] sm:$0xf]
        %v8083 = vld [vmem:[%s8070 + $0x30] sm:$0xf]
        %v8084 = vld [vmem:[%s8070 + $0x34] sm:$0xf]
        %v8085 = vld [vmem:[%s8070 + $0x38] sm:$0xf]
        %v8086 = vld [vmem:[%s8070 + $0x3c] sm:$0xf]
        %v8103 = vunpack.c.l.b16 %v8071
        %v8104 = vunpack.c.l.b16 %v8072
        %v8105 = vunpack.c.l.b16 %v8073
        %v8106 = vunpack.c.l.b16 %v8074
        %v8107 = vunpack.c.l.b16 %v8075
        %v8108 = vunpack.c.l.b16 %v8076
        %v8109 = vunpack.c.l.b16 %v8077
        %v8110 = vunpack.c.l.b16 %v8078
        %v8111 = vunpack.c.l.b16 %v8079
        %v8112 = vunpack.c.l.b16 %v8080
        %v8113 = vunpack.c.l.b16 %v8081
        %v8114 = vunpack.c.l.b16 %v8082
        %v8115 = vunpack.c.l.b16 %v8083
        %v8116 = vunpack.c.l.b16 %v8084
        %v8117 = vunpack.c.l.b16 %v8085
        %v8118 = vunpack.c.l.b16 %v8086
        %v8119 = vpack.c.b16 %v8104, %v8103
        %v8120 = vpack.c.b16 %v8106, %v8105
        %v8121 = vpack.c.b16 %v8108, %v8107
        %v8122 = vpack.c.b16 %v8110, %v8109
        %v8123 = vpack.c.b16 %v8112, %v8111
        %v8124 = vpack.c.b16 %v8114, %v8113
        %v8125 = vpack.c.b16 %v8116, %v8115
        %v8126 = vpack.c.b16 %v8118, %v8117
        %v8128 = vsel %vm1999, %v8119, 0
        %v8131 = vsel %vm1999, %v8120, 0
        %v8134 = vsel %vm1999, %v8121, 0
        %v8137 = vsel %vm1999, %v8122, 0
        %v8140 = vsel %vm1999, %v8123, 0
        %v8143 = vsel %vm1999, %v8124, 0
        %v8146 = vsel %vm1999, %v8125, 0
        %v8149 = vsel %vm1999, %v8126, 0
        %8151 = vmatprep.subr.bf16.mxu0 0
        %8152 = vmatpush1.bf16.msra.mxu0 %v7889
        %8153 = vmatprep.subr.bf16.mxu0 0
        %8154 = vmatpush1.bf16.msra.mxu0 %v7890
        %8155 = vmatprep.subr.bf16.mxu0 0
        %8156 = vmatpush1.bf16.msra.mxu0 %v7891
        %8157 = vmatprep.subr.bf16.mxu0 0
        %8158 = vmatpush1.bf16.msra.mxu0 %v7892
        %8159 = vmatprep.subr.bf16.mxu0 0
        %8160 = vmatpush1.bf16.msra.mxu0 0
        %8161 = vmatprep.subr.bf16.mxu0 0
        %8162 = vmatpush1.bf16.msra.mxu0 0
        %8163 = vmatprep.subr.bf16.mxu0 0
        %8164 = vmatpush1.bf16.msra.mxu0 0
        %8165 = vmatprep.subr.bf16.mxu0 0
        %8166 = vmatpush1.bf16.msra.mxu0 0
        %8167 = vmatprep.subr.bf16.mxu0 0
        %8168 = vmatpush1.bf16.msra.mxu0 0
        %8169 = vmatprep.subr.bf16.mxu0 0
        %8170 = vmatpush1.bf16.msra.mxu0 0
        %8171 = vmatprep.subr.bf16.mxu0 0
        %8172 = vmatpush1.bf16.msra.mxu0 0
        %8173 = vmatprep.subr.bf16.mxu0 0
        %8174 = vmatpush1.bf16.msra.mxu0 0
        %8175 = vmatprep.subr.bf16.mxu0 0
        %8176 = vmatpush1.bf16.msra.mxu0 0
        %8177 = vmatprep.subr.bf16.mxu0 0
        %8178 = vmatpush1.bf16.msra.mxu0 0
        %8179 = vmatprep.subr.bf16.mxu0 0
        %8180 = vmatpush1.bf16.msra.mxu0 0
        %8181 = vmatprep.subr.bf16.mxu0 0
        %8182 = vmatpush1.bf16.msra.mxu0 0
        %8183 = vmatprep.mubr.bf16.mxu0 0
        %8184 = vmatmul.mubr.bf16.gmra.mrb[0].mxu0 %v8128
        %v8185 = vpop.f32.mrb[0].mxu0
        %v8186 = vadd.f32 0.0, %v8185
        %v8187 = vpop.f32.mrb[0].mxu0
        %v8188 = vpop.f32.mrb[0].mxu0
        %v8189 = vadd.f32 0.0, %v8188
        %v8190 = vpop.f32.mrb[0].mxu0
        %8191 = vmatprep.mubr.bf16.mxu0 0
        %8192 = vmatmul.mubr.bf16.gmra.mrb[0].mxu0 %v8131
        %v8193 = vpop.f32.mrb[0].mxu0
        %v8194 = vadd.f32 0.0, %v8193
        %v8195 = vpop.f32.mrb[0].mxu0
        %v8196 = vpop.f32.mrb[0].mxu0
        %v8197 = vadd.f32 0.0, %v8196
        %v8198 = vpop.f32.mrb[0].mxu0
        %8199 = vmatprep.mubr.bf16.mxu0 0
        %8200 = vmatmul.mubr.bf16.gmra.mrb[0].mxu0 %v8134
        %v8201 = vpop.f32.mrb[0].mxu0
        %v8202 = vadd.f32 0.0, %v8201
        %v8203 = vpop.f32.mrb[0].mxu0
        %v8204 = vpop.f32.mrb[0].mxu0
        %v8205 = vadd.f32 0.0, %v8204
        %v8206 = vpop.f32.mrb[0].mxu0
        %8207 = vmatprep.mubr.bf16.mxu0 0
        %8208 = vmatmul.mubr.bf16.gmra.mrb[0].mxu0 %v8137
        %v8209 = vpop.f32.mrb[0].mxu0
        %v8210 = vadd.f32 0.0, %v8209
        %v8211 = vpop.f32.mrb[0].mxu0
        %v8212 = vpop.f32.mrb[0].mxu0
        %v8213 = vadd.f32 0.0, %v8212
        %v8214 = vpop.f32.mrb[0].mxu0
        %8215 = vmatprep.mubr.bf16.mxu0 0
        %8216 = vmatmul.mubr.bf16.gmra.mrb[0].mxu0 %v8140
        %v8217 = vpop.f32.mrb[0].mxu0
        %v8218 = vadd.f32 0.0, %v8217
        %v8219 = vpop.f32.mrb[0].mxu0
        %v8220 = vpop.f32.mrb[0].mxu0
        %v8221 = vadd.f32 0.0, %v8220
        %v8222 = vpop.f32.mrb[0].mxu0
        %8223 = vmatprep.mubr.bf16.mxu0 0
        %8224 = vmatmul.mubr.bf16.gmra.mrb[0].mxu0 %v8143
        %v8225 = vpop.f32.mrb[0].mxu0
        %v8226 = vadd.f32 0.0, %v8225
        %v8227 = vpop.f32.mrb[0].mxu0
        %v8228 = vpop.f32.mrb[0].mxu0
        %v8229 = vadd.f32 0.0, %v8228
        %v8230 = vpop.f32.mrb[0].mxu0
        %8231 = vmatprep.mubr.bf16.mxu0 0
        %8232 = vmatmul.mubr.bf16.gmra.mrb[0].mxu0 %v8146
        %v8233 = vpop.f32.mrb[0].mxu0
        %v8234 = vadd.f32 0.0, %v8233
        %v8235 = vpop.f32.mrb[0].mxu0
        %v8236 = vpop.f32.mrb[0].mxu0
        %v8237 = vadd.f32 0.0, %v8236
        %v8238 = vpop.f32.mrb[0].mxu0
        %8239 = vmatprep.mubr.bf16.mxu0 0
        %8240 = vmatmul.mubr.bf16.gmra.mrb[0].mxu0 %v8149
        %v8241 = vpop.f32.mrb[0].mxu0
        %v8242 = vadd.f32 0.0, %v8241
        %v8243 = vpop.f32.mrb[0].mxu0
        %v8244 = vpop.f32.mrb[0].mxu0
        %v8245 = vadd.f32 0.0, %v8244
        %v8246 = vpop.f32.mrb[0].mxu0
        %8247 = vdwg.mxu0
        %s8248 = scalar_lea.vmem %s65, 128
        %v8249 = vld [vmem:[%s8248] sm:$0xf]
        %v8250 = vld [vmem:[%s8248 + $0x4] sm:$0xf]
        %v8251 = vld [vmem:[%s8248 + $0x8] sm:$0xf]
        %v8252 = vld [vmem:[%s8248 + $0xc] sm:$0xf]
        %v8253 = vld [vmem:[%s8248 + $0x10] sm:$0xf]
        %v8254 = vld [vmem:[%s8248 + $0x14] sm:$0xf]
        %v8255 = vld [vmem:[%s8248 + $0x18] sm:$0xf]
        %v8256 = vld [vmem:[%s8248 + $0x1c] sm:$0xf]
        %v8257 = vld [vmem:[%s8248 + $0x20] sm:$0xf]
        %v8258 = vld [vmem:[%s8248 + $0x24] sm:$0xf]
        %v8259 = vld [vmem:[%s8248 + $0x28] sm:$0xf]
        %v8260 = vld [vmem:[%s8248 + $0x2c] sm:$0xf]
        %v8261 = vld [vmem:[%s8248 + $0x30] sm:$0xf]
        %v8262 = vld [vmem:[%s8248 + $0x34] sm:$0xf]
        %v8263 = vld [vmem:[%s8248 + $0x38] sm:$0xf]
        %v8264 = vld [vmem:[%s8248 + $0x3c] sm:$0xf]
        %v8281 = vunpack.c.l.b16 %v8249
        %v8282 = vunpack.c.l.b16 %v8250
        %v8283 = vunpack.c.l.b16 %v8251
        %v8284 = vunpack.c.l.b16 %v8252
        %v8285 = vunpack.c.l.b16 %v8253
        %v8286 = vunpack.c.l.b16 %v8254
        %v8287 = vunpack.c.l.b16 %v8255
        %v8288 = vunpack.c.l.b16 %v8256
        %v8289 = vunpack.c.l.b16 %v8257
        %v8290 = vunpack.c.l.b16 %v8258
        %v8291 = vunpack.c.l.b16 %v8259
        %v8292 = vunpack.c.l.b16 %v8260
        %v8293 = vunpack.c.l.b16 %v8261
        %v8294 = vunpack.c.l.b16 %v8262
        %v8295 = vunpack.c.l.b16 %v8263
        %v8296 = vunpack.c.l.b16 %v8264
        %v8297 = vpack.c.b16 %v8282, %v8281
        %v8298 = vpack.c.b16 %v8284, %v8283
        %v8299 = vpack.c.b16 %v8286, %v8285
        %v8300 = vpack.c.b16 %v8288, %v8287
        %v8301 = vpack.c.b16 %v8290, %v8289
        %v8302 = vpack.c.b16 %v8292, %v8291
        %v8303 = vpack.c.b16 %v8294, %v8293
        %v8304 = vpack.c.b16 %v8296, %v8295
        %v8306 = vsel %vm1999, %v8297, 0
        %v8309 = vsel %vm1999, %v8298, 0
        %v8312 = vsel %vm1999, %v8299, 0
        %v8315 = vsel %vm1999, %v8300, 0
        %v8318 = vsel %vm1999, %v8301, 0
        %v8321 = vsel %vm1999, %v8302, 0
        %v8324 = vsel %vm1999, %v8303, 0
        %v8327 = vsel %vm1999, %v8304, 0
        %8329 = vmatprep.subr.bf16.mxu0 0
        %8330 = vmatpush1.bf16.msra.mxu0 %v7889
        %8331 = vmatprep.subr.bf16.mxu0 0
        %8332 = vmatpush1.bf16.msra.mxu0 %v7890
        %8333 = vmatprep.subr.bf16.mxu0 0
        %8334 = vmatpush1.bf16.msra.mxu0 %v7891
        %8335 = vmatprep.subr.bf16.mxu0 0
        %8336 = vmatpush1.bf16.msra.mxu0 %v7892
        %8337 = vmatprep.subr.bf16.mxu0 0
        %8338 = vmatpush1.bf16.msra.mxu0 0
        %8339 = vmatprep.subr.bf16.mxu0 0
        %8340 = vmatpush1.bf16.msra.mxu0 0
        %8341 = vmatprep.subr.bf16.mxu0 0
        %8342 = vmatpush1.bf16.msra.mxu0 0
        %8343 = vmatprep.subr.bf16.mxu0 0
        %8344 = vmatpush1.bf16.msra.mxu0 0
        %8345 = vmatprep.subr.bf16.mxu0 0
        %8346 = vmatpush1.bf16.msra.mxu0 0
        %8347 = vmatprep.subr.bf16.mxu0 0
        %8348 = vmatpush1.bf16.msra.mxu0 0
        %8349 = vmatprep.subr.bf16.mxu0 0
        %8350 = vmatpush1.bf16.msra.mxu0 0
        %8351 = vmatprep.subr.bf16.mxu0 0
        %8352 = vmatpush1.bf16.msra.mxu0 0
        %8353 = vmatprep.subr.bf16.mxu0 0
        %8354 = vmatpush1.bf16.msra.mxu0 0
        %8355 = vmatprep.subr.bf16.mxu0 0
        %8356 = vmatpush1.bf16.msra.mxu0 0
        %8357 = vmatprep.subr.bf16.mxu0 0
        %8358 = vmatpush1.bf16.msra.mxu0 0
        %8359 = vmatprep.subr.bf16.mxu0 0
        %8360 = vmatpush1.bf16.msra.mxu0 0
        %8361 = vmatprep.mubr.bf16.mxu0 0
        %8362 = vmatmul.mubr.bf16.gmra.mrb[0].mxu0 %v8306
        %v8363 = vpop.f32.mrb[0].mxu0
        %v8364 = vadd.f32 0.0, %v8363
        %v8365 = vpop.f32.mrb[0].mxu0
        %v8366 = vpop.f32.mrb[0].mxu0
        %v8367 = vadd.f32 0.0, %v8366
        %v8368 = vpop.f32.mrb[0].mxu0
        %8369 = vmatprep.mubr.bf16.mxu0 0
        %8370 = vmatmul.mubr.bf16.gmra.mrb[0].mxu0 %v8309
        %v8371 = vpop.f32.mrb[0].mxu0
        %v8372 = vadd.f32 0.0, %v8371
        %v8373 = vpop.f32.mrb[0].mxu0
        %v8374 = vpop.f32.mrb[0].mxu0
        %v8375 = vadd.f32 0.0, %v8374
        %v8376 = vpop.f32.mrb[0].mxu0
        %8377 = vmatprep.mubr.bf16.mxu0 0
        %8378 = vmatmul.mubr.bf16.gmra.mrb[0].mxu0 %v8312
        %v8379 = vpop.f32.mrb[0].mxu0
        %v8380 = vadd.f32 0.0, %v8379
        %v8381 = vpop.f32.mrb[0].mxu0
        %v8382 = vpop.f32.mrb[0].mxu0
        %v8383 = vadd.f32 0.0, %v8382
        %v8384 = vpop.f32.mrb[0].mxu0
        %8385 = vmatprep.mubr.bf16.mxu0 0
        %8386 = vmatmul.mubr.bf16.gmra.mrb[0].mxu0 %v8315
        %v8387 = vpop.f32.mrb[0].mxu0
        %v8388 = vadd.f32 0.0, %v8387
        %v8389 = vpop.f32.mrb[0].mxu0
        %v8390 = vpop.f32.mrb[0].mxu0
        %v8391 = vadd.f32 0.0, %v8390
        %v8392 = vpop.f32.mrb[0].mxu0
        %8393 = vmatprep.mubr.bf16.mxu0 0
        %8394 = vmatmul.mubr.bf16.gmra.mrb[0].mxu0 %v8318
        %v8395 = vpop.f32.mrb[0].mxu0
        %v8396 = vadd.f32 0.0, %v8395
        %v8397 = vpop.f32.mrb[0].mxu0
        %v8398 = vpop.f32.mrb[0].mxu0
        %v8399 = vadd.f32 0.0, %v8398
        %v8400 = vpop.f32.mrb[0].mxu0
        %8401 = vmatprep.mubr.bf16.mxu0 0
        %8402 = vmatmul.mubr.bf16.gmra.mrb[0].mxu0 %v8321
        %v8403 = vpop.f32.mrb[0].mxu0
        %v8404 = vadd.f32 0.0, %v8403
        %v8405 = vpop.f32.mrb[0].mxu0
        %v8406 = vpop.f32.mrb[0].mxu0
        %v8407 = vadd.f32 0.0, %v8406
        %v8408 = vpop.f32.mrb[0].mxu0
        %8409 = vmatprep.mubr.bf16.mxu0 0
        %8410 = vmatmul.mubr.bf16.gmra.mrb[0].mxu0 %v8324
        %v8411 = vpop.f32.mrb[0].mxu0
        %v8412 = vadd.f32 0.0, %v8411
        %v8413 = vpop.f32.mrb[0].mxu0
        %v8414 = vpop.f32.mrb[0].mxu0
        %v8415 = vadd.f32 0.0, %v8414
        %v8416 = vpop.f32.mrb[0].mxu0
        %8417 = vmatprep.mubr.bf16.mxu0 0
        %8418 = vmatmul.mubr.bf16.gmra.mrb[0].mxu0 %v8327
        %v8419 = vpop.f32.mrb[0].mxu0
        %v8420 = vadd.f32 0.0, %v8419
        %v8421 = vpop.f32.mrb[0].mxu0
        %v8422 = vpop.f32.mrb[0].mxu0
        %v8423 = vadd.f32 0.0, %v8422
        %v8424 = vpop.f32.mrb[0].mxu0
        %8425 = vdwg.mxu0
        %s8426 = scalar_lea.vmem %s65, 192
        %v8427 = vld [vmem:[%s8426] sm:$0xf]
        %v8428 = vld [vmem:[%s8426 + $0x4] sm:$0xf]
        %v8429 = vld [vmem:[%s8426 + $0x8] sm:$0xf]
        %v8430 = vld [vmem:[%s8426 + $0xc] sm:$0xf]
        %v8431 = vld [vmem:[%s8426 + $0x10] sm:$0xf]
        %v8432 = vld [vmem:[%s8426 + $0x14] sm:$0xf]
        %v8433 = vld [vmem:[%s8426 + $0x18] sm:$0xf]
        %v8434 = vld [vmem:[%s8426 + $0x1c] sm:$0xf]
        %v8435 = vld [vmem:[%s8426 + $0x20] sm:$0xf]
        %v8436 = vld [vmem:[%s8426 + $0x24] sm:$0xf]
        %v8437 = vld [vmem:[%s8426 + $0x28] sm:$0xf]
        %v8438 = vld [vmem:[%s8426 + $0x2c] sm:$0xf]
        %v8439 = vld [vmem:[%s8426 + $0x30] sm:$0xf]
        %v8440 = vld [vmem:[%s8426 + $0x34] sm:$0xf]
        %v8441 = vld [vmem:[%s8426 + $0x38] sm:$0xf]
        %v8442 = vld [vmem:[%s8426 + $0x3c] sm:$0xf]
        %v8459 = vunpack.c.l.b16 %v8427
        %v8460 = vunpack.c.l.b16 %v8428
        %v8461 = vunpack.c.l.b16 %v8429
        %v8462 = vunpack.c.l.b16 %v8430
        %v8463 = vunpack.c.l.b16 %v8431
        %v8464 = vunpack.c.l.b16 %v8432
        %v8465 = vunpack.c.l.b16 %v8433
        %v8466 = vunpack.c.l.b16 %v8434
        %v8467 = vunpack.c.l.b16 %v8435
        %v8468 = vunpack.c.l.b16 %v8436
        %v8469 = vunpack.c.l.b16 %v8437
        %v8470 = vunpack.c.l.b16 %v8438
        %v8471 = vunpack.c.l.b16 %v8439
        %v8472 = vunpack.c.l.b16 %v8440
        %v8473 = vunpack.c.l.b16 %v8441
        %v8474 = vunpack.c.l.b16 %v8442
        %v8475 = vpack.c.b16 %v8460, %v8459
        %v8476 = vpack.c.b16 %v8462, %v8461
        %v8477 = vpack.c.b16 %v8464, %v8463
        %v8478 = vpack.c.b16 %v8466, %v8465
        %v8479 = vpack.c.b16 %v8468, %v8467
        %v8480 = vpack.c.b16 %v8470, %v8469
        %v8481 = vpack.c.b16 %v8472, %v8471
        %v8482 = vpack.c.b16 %v8474, %v8473
        %v8484 = vsel %vm1999, %v8475, 0
        %v8487 = vsel %vm1999, %v8476, 0
        %v8490 = vsel %vm1999, %v8477, 0
        %v8493 = vsel %vm1999, %v8478, 0
        %v8496 = vsel %vm1999, %v8479, 0
        %v8499 = vsel %vm1999, %v8480, 0
        %v8502 = vsel %vm1999, %v8481, 0
        %v8505 = vsel %vm1999, %v8482, 0
        %8507 = vmatprep.subr.bf16.mxu0 0
        %8508 = vmatpush1.bf16.msra.mxu0 %v7889
        %8509 = vmatprep.subr.bf16.mxu0 0
        %8510 = vmatpush1.bf16.msra.mxu0 %v7890
        %8511 = vmatprep.subr.bf16.mxu0 0
        %8512 = vmatpush1.bf16.msra.mxu0 %v7891
        %8513 = vmatprep.subr.bf16.mxu0 0
        %8514 = vmatpush1.bf16.msra.mxu0 %v7892
        %8515 = vmatprep.subr.bf16.mxu0 0
        %8516 = vmatpush1.bf16.msra.mxu0 0
        %8517 = vmatprep.subr.bf16.mxu0 0
        %8518 = vmatpush1.bf16.msra.mxu0 0
        %8519 = vmatprep.subr.bf16.mxu0 0
        %8520 = vmatpush1.bf16.msra.mxu0 0
        %8521 = vmatprep.subr.bf16.mxu0 0
        %8522 = vmatpush1.bf16.msra.mxu0 0
        %8523 = vmatprep.subr.bf16.mxu0 0
        %8524 = vmatpush1.bf16.msra.mxu0 0
        %8525 = vmatprep.subr.bf16.mxu0 0
        %8526 = vmatpush1.bf16.msra.mxu0 0
        %8527 = vmatprep.subr.bf16.mxu0 0
        %8528 = vmatpush1.bf16.msra.mxu0 0
        %8529 = vmatprep.subr.bf16.mxu0 0
        %8530 = vmatpush1.bf16.msra.mxu0 0
        %8531 = vmatprep.subr.bf16.mxu0 0
        %8532 = vmatpush1.bf16.msra.mxu0 0
        %8533 = vmatprep.subr.bf16.mxu0 0
        %8534 = vmatpush1.bf16.msra.mxu0 0
        %8535 = vmatprep.subr.bf16.mxu0 0
        %8536 = vmatpush1.bf16.msra.mxu0 0
        %8537 = vmatprep.subr.bf16.mxu0 0
        %8538 = vmatpush1.bf16.msra.mxu0 0
        %8539 = vmatprep.mubr.bf16.mxu0 0
        %8540 = vmatmul.mubr.bf16.gmra.mrb[0].mxu0 %v8484
        %v8541 = vpop.f32.mrb[0].mxu0
        %v8542 = vadd.f32 0.0, %v8541
        %v8543 = vpop.f32.mrb[0].mxu0
        %v8544 = vpop.f32.mrb[0].mxu0
        %v8545 = vadd.f32 0.0, %v8544
        %v8546 = vpop.f32.mrb[0].mxu0
        %8547 = vmatprep.mubr.bf16.mxu0 0
        %8548 = vmatmul.mubr.bf16.gmra.mrb[0].mxu0 %v8487
        %v8549 = vpop.f32.mrb[0].mxu0
        %v8550 = vadd.f32 0.0, %v8549
        %v8551 = vpop.f32.mrb[0].mxu0
        %v8552 = vpop.f32.mrb[0].mxu0
        %v8553 = vadd.f32 0.0, %v8552
        %v8554 = vpop.f32.mrb[0].mxu0
        %8555 = vmatprep.mubr.bf16.mxu0 0
        %8556 = vmatmul.mubr.bf16.gmra.mrb[0].mxu0 %v8490
        %v8557 = vpop.f32.mrb[0].mxu0
        %v8558 = vadd.f32 0.0, %v8557
        %v8559 = vpop.f32.mrb[0].mxu0
        %v8560 = vpop.f32.mrb[0].mxu0
        %v8561 = vadd.f32 0.0, %v8560
        %v8562 = vpop.f32.mrb[0].mxu0
        %8563 = vmatprep.mubr.bf16.mxu0 0
        %8564 = vmatmul.mubr.bf16.gmra.mrb[0].mxu0 %v8493
        %v8565 = vpop.f32.mrb[0].mxu0
        %v8566 = vadd.f32 0.0, %v8565
        %v8567 = vpop.f32.mrb[0].mxu0
        %v8568 = vpop.f32.mrb[0].mxu0
        %v8569 = vadd.f32 0.0, %v8568
        %v8570 = vpop.f32.mrb[0].mxu0
        %8571 = vmatprep.mubr.bf16.mxu0 0
        %8572 = vmatmul.mubr.bf16.gmra.mrb[0].mxu0 %v8496
        %v8573 = vpop.f32.mrb[0].mxu0
        %v8574 = vadd.f32 0.0, %v8573
        %v8575 = vpop.f32.mrb[0].mxu0
        %v8576 = vpop.f32.mrb[0].mxu0
        %v8577 = vadd.f32 0.0, %v8576
        %v8578 = vpop.f32.mrb[0].mxu0
        %8579 = vmatprep.mubr.bf16.mxu0 0
        %8580 = vmatmul.mubr.bf16.gmra.mrb[0].mxu0 %v8499
        %v8581 = vpop.f32.mrb[0].mxu0
        %v8582 = vadd.f32 0.0, %v8581
        %v8583 = vpop.f32.mrb[0].mxu0
        %v8584 = vpop.f32.mrb[0].mxu0
        %v8585 = vadd.f32 0.0, %v8584
        %v8586 = vpop.f32.mrb[0].mxu0
        %8587 = vmatprep.mubr.bf16.mxu0 0
        %8588 = vmatmul.mubr.bf16.gmra.mrb[0].mxu0 %v8502
        %v8589 = vpop.f32.mrb[0].mxu0
        %v8590 = vadd.f32 0.0, %v8589
        %v8591 = vpop.f32.mrb[0].mxu0
        %v8592 = vpop.f32.mrb[0].mxu0
        %v8593 = vadd.f32 0.0, %v8592
        %v8594 = vpop.f32.mrb[0].mxu0
        %8595 = vmatprep.mubr.bf16.mxu0 0
        %8596 = vmatmul.mubr.bf16.gmra.mrb[0].mxu0 %v8505
        %v8597 = vpop.f32.mrb[0].mxu0
        %v8598 = vadd.f32 0.0, %v8597
        %v8599 = vpop.f32.mrb[0].mxu0
        %v8600 = vpop.f32.mrb[0].mxu0
        %v8601 = vadd.f32 0.0, %v8600
        %v8602 = vpop.f32.mrb[0].mxu0
        %8603 = vdwg.mxu0
        %s8604 = scalar_lea.vmem %s65, 256
        %v8605 = vld [vmem:[%s8604] sm:$0xf]
        %v8606 = vld [vmem:[%s8604 + $0x4] sm:$0xf]
        %v8607 = vld [vmem:[%s8604 + $0x8] sm:$0xf]
        %v8608 = vld [vmem:[%s8604 + $0xc] sm:$0xf]
        %v8609 = vld [vmem:[%s8604 + $0x10] sm:$0xf]
        %v8610 = vld [vmem:[%s8604 + $0x14] sm:$0xf]
        %v8611 = vld [vmem:[%s8604 + $0x18] sm:$0xf]
        %v8612 = vld [vmem:[%s8604 + $0x1c] sm:$0xf]
        %v8613 = vld [vmem:[%s8604 + $0x20] sm:$0xf]
        %v8614 = vld [vmem:[%s8604 + $0x24] sm:$0xf]
        %v8615 = vld [vmem:[%s8604 + $0x28] sm:$0xf]
        %v8616 = vld [vmem:[%s8604 + $0x2c] sm:$0xf]
        %v8617 = vld [vmem:[%s8604 + $0x30] sm:$0xf]
        %v8618 = vld [vmem:[%s8604 + $0x34] sm:$0xf]
        %v8619 = vld [vmem:[%s8604 + $0x38] sm:$0xf]
        %v8620 = vld [vmem:[%s8604 + $0x3c] sm:$0xf]
        %v8637 = vunpack.c.l.b16 %v8605
        %v8638 = vunpack.c.l.b16 %v8606
        %v8639 = vunpack.c.l.b16 %v8607
        %v8640 = vunpack.c.l.b16 %v8608
        %v8641 = vunpack.c.l.b16 %v8609
        %v8642 = vunpack.c.l.b16 %v8610
        %v8643 = vunpack.c.l.b16 %v8611
        %v8644 = vunpack.c.l.b16 %v8612
        %v8645 = vunpack.c.l.b16 %v8613
        %v8646 = vunpack.c.l.b16 %v8614
        %v8647 = vunpack.c.l.b16 %v8615
        %v8648 = vunpack.c.l.b16 %v8616
        %v8649 = vunpack.c.l.b16 %v8617
        %v8650 = vunpack.c.l.b16 %v8618
        %v8651 = vunpack.c.l.b16 %v8619
        %v8652 = vunpack.c.l.b16 %v8620
        %v8653 = vpack.c.b16 %v8638, %v8637
        %v8654 = vpack.c.b16 %v8640, %v8639
        %v8655 = vpack.c.b16 %v8642, %v8641
        %v8656 = vpack.c.b16 %v8644, %v8643
        %v8657 = vpack.c.b16 %v8646, %v8645
        %v8658 = vpack.c.b16 %v8648, %v8647
        %v8659 = vpack.c.b16 %v8650, %v8649
        %v8660 = vpack.c.b16 %v8652, %v8651
        %v8662 = vsel %vm1999, %v8653, 0
        %v8665 = vsel %vm1999, %v8654, 0
        %v8668 = vsel %vm1999, %v8655, 0
        %v8671 = vsel %vm1999, %v8656, 0
        %v8674 = vsel %vm1999, %v8657, 0
        %v8677 = vsel %vm1999, %v8658, 0
        %v8680 = vsel %vm1999, %v8659, 0
        %v8683 = vsel %vm1999, %v8660, 0
        %8685 = vmatprep.subr.bf16.mxu0 0
        %8686 = vmatpush1.bf16.msra.mxu0 %v7889
        %8687 = vmatprep.subr.bf16.mxu0 0
        %8688 = vmatpush1.bf16.msra.mxu0 %v7890
        %8689 = vmatprep.subr.bf16.mxu0 0
        %8690 = vmatpush1.bf16.msra.mxu0 %v7891
        %8691 = vmatprep.subr.bf16.mxu0 0
        %8692 = vmatpush1.bf16.msra.mxu0 %v7892
        %8693 = vmatprep.subr.bf16.mxu0 0
        %8694 = vmatpush1.bf16.msra.mxu0 0
        %8695 = vmatprep.subr.bf16.mxu0 0
        %8696 = vmatpush1.bf16.msra.mxu0 0
        %8697 = vmatprep.subr.bf16.mxu0 0
        %8698 = vmatpush1.bf16.msra.mxu0 0
        %8699 = vmatprep.subr.bf16.mxu0 0
        %8700 = vmatpush1.bf16.msra.mxu0 0
        %8701 = vmatprep.subr.bf16.mxu0 0
        %8702 = vmatpush1.bf16.msra.mxu0 0
        %8703 = vmatprep.subr.bf16.mxu0 0
        %8704 = vmatpush1.bf16.msra.mxu0 0
        %8705 = vmatprep.subr.bf16.mxu0 0
        %8706 = vmatpush1.bf16.msra.mxu0 0
        %8707 = vmatprep.subr.bf16.mxu0 0
        %8708 = vmatpush1.bf16.msra.mxu0 0
        %8709 = vmatprep.subr.bf16.mxu0 0
        %8710 = vmatpush1.bf16.msra.mxu0 0
        %8711 = vmatprep.subr.bf16.mxu0 0
        %8712 = vmatpush1.bf16.msra.mxu0 0
        %8713 = vmatprep.subr.bf16.mxu0 0
        %8714 = vmatpush1.bf16.msra.mxu0 0
        %8715 = vmatprep.subr.bf16.mxu0 0
        %8716 = vmatpush1.bf16.msra.mxu0 0
        %8717 = vmatprep.mubr.bf16.mxu0 0
        %8718 = vmatmul.mubr.bf16.gmra.mrb[0].mxu0 %v8662
        %v8719 = vpop.f32.mrb[0].mxu0
        %v8720 = vadd.f32 0.0, %v8719
        %v8721 = vpop.f32.mrb[0].mxu0
        %v8722 = vpop.f32.mrb[0].mxu0
        %v8723 = vadd.f32 0.0, %v8722
        %v8724 = vpop.f32.mrb[0].mxu0
        %8725 = vmatprep.mubr.bf16.mxu0 0
        %8726 = vmatmul.mubr.bf16.gmra.mrb[0].mxu0 %v8665
        %v8727 = vpop.f32.mrb[0].mxu0
        %v8728 = vadd.f32 0.0, %v8727
        %v8729 = vpop.f32.mrb[0].mxu0
        %v8730 = vpop.f32.mrb[0].mxu0
        %v8731 = vadd.f32 0.0, %v8730
        %v8732 = vpop.f32.mrb[0].mxu0
        %8733 = vmatprep.mubr.bf16.mxu0 0
        %8734 = vmatmul.mubr.bf16.gmra.mrb[0].mxu0 %v8668
        %v8735 = vpop.f32.mrb[0].mxu0
        %v8736 = vadd.f32 0.0, %v8735
        %v8737 = vpop.f32.mrb[0].mxu0
        %v8738 = vpop.f32.mrb[0].mxu0
        %v8739 = vadd.f32 0.0, %v8738
        %v8740 = vpop.f32.mrb[0].mxu0
        %8741 = vmatprep.mubr.bf16.mxu0 0
        %8742 = vmatmul.mubr.bf16.gmra.mrb[0].mxu0 %v8671
        %v8743 = vpop.f32.mrb[0].mxu0
        %v8744 = vadd.f32 0.0, %v8743
        %v8745 = vpop.f32.mrb[0].mxu0
        %v8746 = vpop.f32.mrb[0].mxu0
        %v8747 = vadd.f32 0.0, %v8746
        %v8748 = vpop.f32.mrb[0].mxu0
        %8749 = vmatprep.mubr.bf16.mxu0 0
        %8750 = vmatmul.mubr.bf16.gmra.mrb[0].mxu0 %v8674
        %v8751 = vpop.f32.mrb[0].mxu0
        %v8752 = vadd.f32 0.0, %v8751
        %v8753 = vpop.f32.mrb[0].mxu0
        %v8754 = vpop.f32.mrb[0].mxu0
        %v8755 = vadd.f32 0.0, %v8754
        %v8756 = vpop.f32.mrb[0].mxu0
        %8757 = vmatprep.mubr.bf16.mxu0 0
        %8758 = vmatmul.mubr.bf16.gmra.mrb[0].mxu0 %v8677
        %v8759 = vpop.f32.mrb[0].mxu0
        %v8760 = vadd.f32 0.0, %v8759
        %v8761 = vpop.f32.mrb[0].mxu0
        %v8762 = vpop.f32.mrb[0].mxu0
        %v8763 = vadd.f32 0.0, %v8762
        %v8764 = vpop.f32.mrb[0].mxu0
        %8765 = vmatprep.mubr.bf16.mxu0 0
        %8766 = vmatmul.mubr.bf16.gmra.mrb[0].mxu0 %v8680
        %v8767 = vpop.f32.mrb[0].mxu0
        %v8768 = vadd.f32 0.0, %v8767
        %v8769 = vpop.f32.mrb[0].mxu0
        %v8770 = vpop.f32.mrb[0].mxu0
        %v8771 = vadd.f32 0.0, %v8770
        %v8772 = vpop.f32.mrb[0].mxu0
        %8773 = vmatprep.mubr.bf16.mxu0 0
        %8774 = vmatmul.mubr.bf16.gmra.mrb[0].mxu0 %v8683
        %v8775 = vpop.f32.mrb[0].mxu0
        %v8776 = vadd.f32 0.0, %v8775
        %v8777 = vpop.f32.mrb[0].mxu0
        %v8778 = vpop.f32.mrb[0].mxu0
        %v8779 = vadd.f32 0.0, %v8778
        %v8780 = vpop.f32.mrb[0].mxu0
        %8781 = vdwg.mxu0
        %v8782 = vpack.c.bf16 %v8011, %v8008
        %v8783 = vpack.c.bf16 %v8189, %v8186
        %v8784 = vpack.c.bf16 %v8367, %v8364
        %v8785 = vpack.c.bf16 %v8545, %v8542
        %v8786 = vpack.c.bf16 %v8723, %v8720
        %v8787 = vpack.c.bf16 %v8019, %v8016
        %v8788 = vpack.c.bf16 %v8197, %v8194
        %v8789 = vpack.c.bf16 %v8375, %v8372
        %v8790 = vpack.c.bf16 %v8553, %v8550
        %v8791 = vpack.c.bf16 %v8731, %v8728
        %v8792 = vpack.c.bf16 %v8027, %v8024
        %v8793 = vpack.c.bf16 %v8205, %v8202
        %v8794 = vpack.c.bf16 %v8383, %v8380
        %v8795 = vpack.c.bf16 %v8561, %v8558
        %v8796 = vpack.c.bf16 %v8739, %v8736
        %v8797 = vpack.c.bf16 %v8035, %v8032
        %v8798 = vpack.c.bf16 %v8213, %v8210
        %v8799 = vpack.c.bf16 %v8391, %v8388
        %v8800 = vpack.c.bf16 %v8569, %v8566
        %v8801 = vpack.c.bf16 %v8747, %v8744
        %v8802 = vpack.c.bf16 %v8043, %v8040
        %v8803 = vpack.c.bf16 %v8221, %v8218
        %v8804 = vpack.c.bf16 %v8399, %v8396
        %v8805 = vpack.c.bf16 %v8577, %v8574
        %v8806 = vpack.c.bf16 %v8755, %v8752
        %v8807 = vpack.c.bf16 %v8051, %v8048
        %v8808 = vpack.c.bf16 %v8229, %v8226
        %v8809 = vpack.c.bf16 %v8407, %v8404
        %v8810 = vpack.c.bf16 %v8585, %v8582
        %v8811 = vpack.c.bf16 %v8763, %v8760
        %v8812 = vpack.c.bf16 %v8059, %v8056
        %v8813 = vpack.c.bf16 %v8237, %v8234
        %v8814 = vpack.c.bf16 %v8415, %v8412
        %v8815 = vpack.c.bf16 %v8593, %v8590
        %v8816 = vpack.c.bf16 %v8771, %v8768
        %v8817 = vpack.c.bf16 %v8067, %v8064
        %v8818 = vpack.c.bf16 %v8245, %v8242
        %v8819 = vpack.c.bf16 %v8423, %v8420
        %v8820 = vpack.c.bf16 %v8601, %v8598
        %v8821 = vpack.c.bf16 %v8779, %v8776
        %v8822 = vld [vmem:[%s67] sm:$0xf]
        %v8823 = vld [vmem:[%s67 + $0x4] sm:$0xf]
        %v8824 = vld [vmem:[%s67 + $0x8] sm:$0xf]
        %v8825 = vld [vmem:[%s67 + $0xc] sm:$0xf]
        %v8826 = vld [vmem:[%s67 + $0x10] sm:$0xf]
        %v8827 = vld [vmem:[%s67 + $0x14] sm:$0xf]
        %v8828 = vld [vmem:[%s67 + $0x18] sm:$0xf]
        %v8829 = vld [vmem:[%s67 + $0x1c] sm:$0xf]
        %v8830 = vld [vmem:[%s67 + $0x20] sm:$0xf]
        %v8831 = vld [vmem:[%s67 + $0x24] sm:$0xf]
        %v8832 = vld [vmem:[%s67 + $0x28] sm:$0xf]
        %v8833 = vld [vmem:[%s67 + $0x2c] sm:$0xf]
        %v8834 = vld [vmem:[%s67 + $0x30] sm:$0xf]
        %v8835 = vld [vmem:[%s67 + $0x34] sm:$0xf]
        %v8836 = vld [vmem:[%s67 + $0x38] sm:$0xf]
        %v8837 = vld [vmem:[%s67 + $0x3c] sm:$0xf]
        %v8838 = vld [vmem:[%s67 + $0x40] sm:$0xf]
        %v8839 = vld [vmem:[%s67 + $0x44] sm:$0xf]
        %v8840 = vld [vmem:[%s67 + $0x48] sm:$0xf]
        %v8841 = vld [vmem:[%s67 + $0x4c] sm:$0xf]
        %v8842 = vld [vmem:[%s67 + $0x50] sm:$0xf]
        %v8843 = vld [vmem:[%s67 + $0x54] sm:$0xf]
        %v8844 = vld [vmem:[%s67 + $0x58] sm:$0xf]
        %v8845 = vld [vmem:[%s67 + $0x5c] sm:$0xf]
        %v8846 = vld [vmem:[%s67 + $0x60] sm:$0xf]
        %v8847 = vld [vmem:[%s67 + $0x64] sm:$0xf]
        %v8848 = vld [vmem:[%s67 + $0x68] sm:$0xf]
        %v8849 = vld [vmem:[%s67 + $0x6c] sm:$0xf]
        %v8850 = vld [vmem:[%s67 + $0x70] sm:$0xf]
        %v8851 = vld [vmem:[%s67 + $0x74] sm:$0xf]
        %v8852 = vld [vmem:[%s67 + $0x78] sm:$0xf]
        %v8853 = vld [vmem:[%s67 + $0x7c] sm:$0xf]
        %v8854 = vld [vmem:[%s67 + $0x80] sm:$0xf]
        %v8855 = vld [vmem:[%s67 + $0x84] sm:$0xf]
        %v8856 = vld [vmem:[%s67 + $0x88] sm:$0xf]
        %v8857 = vld [vmem:[%s67 + $0x8c] sm:$0xf]
        %v8858 = vld [vmem:[%s67 + $0x90] sm:$0xf]
        %v8859 = vld [vmem:[%s67 + $0x94] sm:$0xf]
        %v8860 = vld [vmem:[%s67 + $0x98] sm:$0xf]
        %v8861 = vld [vmem:[%s67 + $0x9c] sm:$0xf]
        %v8862 = vld [vmem:[%s67 + $0xa0] sm:$0xf]
        %v8863 = vld [vmem:[%s67 + $0xa4] sm:$0xf]
        %v8864 = vld [vmem:[%s67 + $0xa8] sm:$0xf]
        %v8865 = vld [vmem:[%s67 + $0xac] sm:$0xf]
        %v8866 = vld [vmem:[%s67 + $0xb0] sm:$0xf]
        %v8867 = vld [vmem:[%s67 + $0xb4] sm:$0xf]
        %v8868 = vld [vmem:[%s67 + $0xb8] sm:$0xf]
        %v8869 = vld [vmem:[%s67 + $0xbc] sm:$0xf]
        %v8870 = vld [vmem:[%s67 + $0xc0] sm:$0xf]
        %v8871 = vld [vmem:[%s67 + $0xc4] sm:$0xf]
        %v8872 = vld [vmem:[%s67 + $0xc8] sm:$0xf]
        %v8873 = vld [vmem:[%s67 + $0xcc] sm:$0xf]
        %v8874 = vld [vmem:[%s67 + $0xd0] sm:$0xf]
        %v8875 = vld [vmem:[%s67 + $0xd4] sm:$0xf]
        %v8876 = vld [vmem:[%s67 + $0xd8] sm:$0xf]
        %v8877 = vld [vmem:[%s67 + $0xdc] sm:$0xf]
        %v8878 = vld [vmem:[%s67 + $0xe0] sm:$0xf]
        %v8879 = vld [vmem:[%s67 + $0xe4] sm:$0xf]
        %v8880 = vld [vmem:[%s67 + $0xe8] sm:$0xf]
        %v8881 = vld [vmem:[%s67 + $0xec] sm:$0xf]
        %v8882 = vld [vmem:[%s67 + $0xf0] sm:$0xf]
        %v8883 = vld [vmem:[%s67 + $0xf4] sm:$0xf]
        %v8884 = vld [vmem:[%s67 + $0xf8] sm:$0xf]
        %v8885 = vld [vmem:[%s67 + $0xfc] sm:$0xf]
        %v8886 = vld [vmem:[%s67 + $0x100] sm:$0xf]
        %v8887 = vld [vmem:[%s67 + $0x104] sm:$0xf]
        %v8888 = vld [vmem:[%s67 + $0x108] sm:$0xf]
        %v8889 = vld [vmem:[%s67 + $0x10c] sm:$0xf]
        %v8890 = vld [vmem:[%s67 + $0x110] sm:$0xf]
        %v8891 = vld [vmem:[%s67 + $0x114] sm:$0xf]
        %v8892 = vld [vmem:[%s67 + $0x118] sm:$0xf]
        %v8893 = vld [vmem:[%s67 + $0x11c] sm:$0xf]
        %v8894 = vld [vmem:[%s67 + $0x120] sm:$0xf]
        %v8895 = vld [vmem:[%s67 + $0x124] sm:$0xf]
        %v8896 = vld [vmem:[%s67 + $0x128] sm:$0xf]
        %v8897 = vld [vmem:[%s67 + $0x12c] sm:$0xf]
        %v8898 = vld [vmem:[%s67 + $0x130] sm:$0xf]
        %v8899 = vld [vmem:[%s67 + $0x134] sm:$0xf]
        %v8900 = vld [vmem:[%s67 + $0x138] sm:$0xf]
        %v8901 = vld [vmem:[%s67 + $0x13c] sm:$0xf]
        %v8982 = vunpack.c.l.b16 %v8822
        %v8983 = vunpack.c.l.b16 %v8823
        %v8984 = vunpack.c.l.b16 %v8824
        %v8985 = vunpack.c.l.b16 %v8825
        %v8986 = vunpack.c.l.b16 %v8826
        %v8987 = vunpack.c.l.b16 %v8827
        %v8988 = vunpack.c.l.b16 %v8828
        %v8989 = vunpack.c.l.b16 %v8829
        %v8990 = vunpack.c.l.b16 %v8830
        %v8991 = vunpack.c.l.b16 %v8831
        %v8992 = vunpack.c.l.b16 %v8832
        %v8993 = vunpack.c.l.b16 %v8833
        %v8994 = vunpack.c.l.b16 %v8834
        %v8995 = vunpack.c.l.b16 %v8835
        %v8996 = vunpack.c.l.b16 %v8836
        %v8997 = vunpack.c.l.b16 %v8837
        %v8998 = vunpack.c.l.b16 %v8838
        %v8999 = vunpack.c.l.b16 %v8839
        %v9000 = vunpack.c.l.b16 %v8840
        %v9001 = vunpack.c.l.b16 %v8841
        %v9002 = vunpack.c.l.b16 %v8842
        %v9003 = vunpack.c.l.b16 %v8843
        %v9004 = vunpack.c.l.b16 %v8844
        %v9005 = vunpack.c.l.b16 %v8845
        %v9006 = vunpack.c.l.b16 %v8846
        %v9007 = vunpack.c.l.b16 %v8847
        %v9008 = vunpack.c.l.b16 %v8848
        %v9009 = vunpack.c.l.b16 %v8849
        %v9010 = vunpack.c.l.b16 %v8850
        %v9011 = vunpack.c.l.b16 %v8851
        %v9012 = vunpack.c.l.b16 %v8852
        %v9013 = vunpack.c.l.b16 %v8853
        %v9014 = vunpack.c.l.b16 %v8854
        %v9015 = vunpack.c.l.b16 %v8855
        %v9016 = vunpack.c.l.b16 %v8856
        %v9017 = vunpack.c.l.b16 %v8857
        %v9018 = vunpack.c.l.b16 %v8858
        %v9019 = vunpack.c.l.b16 %v8859
        %v9020 = vunpack.c.l.b16 %v8860
        %v9021 = vunpack.c.l.b16 %v8861
        %v9022 = vunpack.c.l.b16 %v8862
        %v9023 = vunpack.c.l.b16 %v8863
        %v9024 = vunpack.c.l.b16 %v8864
        %v9025 = vunpack.c.l.b16 %v8865
        %v9026 = vunpack.c.l.b16 %v8866
        %v9027 = vunpack.c.l.b16 %v8867
        %v9028 = vunpack.c.l.b16 %v8868
        %v9029 = vunpack.c.l.b16 %v8869
        %v9030 = vunpack.c.l.b16 %v8870
        %v9031 = vunpack.c.l.b16 %v8871
        %v9032 = vunpack.c.l.b16 %v8872
        %v9033 = vunpack.c.l.b16 %v8873
        %v9034 = vunpack.c.l.b16 %v8874
        %v9035 = vunpack.c.l.b16 %v8875
        %v9036 = vunpack.c.l.b16 %v8876
        %v9037 = vunpack.c.l.b16 %v8877
        %v9038 = vunpack.c.l.b16 %v8878
        %v9039 = vunpack.c.l.b16 %v8879
        %v9040 = vunpack.c.l.b16 %v8880
        %v9041 = vunpack.c.l.b16 %v8881
        %v9042 = vunpack.c.l.b16 %v8882
        %v9043 = vunpack.c.l.b16 %v8883
        %v9044 = vunpack.c.l.b16 %v8884
        %v9045 = vunpack.c.l.b16 %v8885
        %v9046 = vunpack.c.l.b16 %v8886
        %v9047 = vunpack.c.l.b16 %v8887
        %v9048 = vunpack.c.l.b16 %v8888
        %v9049 = vunpack.c.l.b16 %v8889
        %v9050 = vunpack.c.l.b16 %v8890
        %v9051 = vunpack.c.l.b16 %v8891
        %v9052 = vunpack.c.l.b16 %v8892
        %v9053 = vunpack.c.l.b16 %v8893
        %v9054 = vunpack.c.l.b16 %v8894
        %v9055 = vunpack.c.l.b16 %v8895
        %v9056 = vunpack.c.l.b16 %v8896
        %v9057 = vunpack.c.l.b16 %v8897
        %v9058 = vunpack.c.l.b16 %v8898
        %v9059 = vunpack.c.l.b16 %v8899
        %v9060 = vunpack.c.l.b16 %v8900
        %v9061 = vunpack.c.l.b16 %v8901
        %v9062 = vpack.c.b16 %v8983, %v8982
        %v9063 = vpack.c.b16 %v8985, %v8984
        %v9064 = vpack.c.b16 %v8987, %v8986
        %v9065 = vpack.c.b16 %v8989, %v8988
        %v9066 = vpack.c.b16 %v8991, %v8990
        %v9067 = vpack.c.b16 %v8993, %v8992
        %v9068 = vpack.c.b16 %v8995, %v8994
        %v9069 = vpack.c.b16 %v8997, %v8996
        %v9070 = vpack.c.b16 %v8999, %v8998
        %v9071 = vpack.c.b16 %v9001, %v9000
        %v9072 = vpack.c.b16 %v9003, %v9002
        %v9073 = vpack.c.b16 %v9005, %v9004
        %v9074 = vpack.c.b16 %v9007, %v9006
        %v9075 = vpack.c.b16 %v9009, %v9008
        %v9076 = vpack.c.b16 %v9011, %v9010
        %v9077 = vpack.c.b16 %v9013, %v9012
        %v9078 = vpack.c.b16 %v9015, %v9014
        %v9079 = vpack.c.b16 %v9017, %v9016
        %v9080 = vpack.c.b16 %v9019, %v9018
        %v9081 = vpack.c.b16 %v9021, %v9020
        %v9082 = vpack.c.b16 %v9023, %v9022
        %v9083 = vpack.c.b16 %v9025, %v9024
        %v9084 = vpack.c.b16 %v9027, %v9026
        %v9085 = vpack.c.b16 %v9029, %v9028
        %v9086 = vpack.c.b16 %v9031, %v9030
        %v9087 = vpack.c.b16 %v9033, %v9032
        %v9088 = vpack.c.b16 %v9035, %v9034
        %v9089 = vpack.c.b16 %v9037, %v9036
        %v9090 = vpack.c.b16 %v9039, %v9038
        %v9091 = vpack.c.b16 %v9041, %v9040
        %v9092 = vpack.c.b16 %v9043, %v9042
        %v9093 = vpack.c.b16 %v9045, %v9044
        %v9094 = vpack.c.b16 %v9047, %v9046
        %v9095 = vpack.c.b16 %v9049, %v9048
        %v9096 = vpack.c.b16 %v9051, %v9050
        %v9097 = vpack.c.b16 %v9053, %v9052
        %v9098 = vpack.c.b16 %v9055, %v9054
        %v9099 = vpack.c.b16 %v9057, %v9056
        %v9100 = vpack.c.b16 %v9059, %v9058
        %v9101 = vpack.c.b16 %v9061, %v9060
        %9142 = vmatprep.subr.bf16.mxu0 0
        %9143 = vmatpush1.bf16.msra.mxu0 %v9062
        %9144 = vmatprep.subr.bf16.mxu0 0
        %9145 = vmatpush1.bf16.msra.mxu0 %v9063
        %9146 = vmatprep.subr.bf16.mxu0 0
        %9147 = vmatpush1.bf16.msra.mxu0 %v9064
        %9148 = vmatprep.subr.bf16.mxu0 0
        %9149 = vmatpush1.bf16.msra.mxu0 %v9065
        %9150 = vmatprep.subr.bf16.mxu0 0
        %9151 = vmatpush1.bf16.msra.mxu0 %v9066
        %9152 = vmatprep.subr.bf16.mxu0 0
        %9153 = vmatpush1.bf16.msra.mxu0 %v9067
        %9154 = vmatprep.subr.bf16.mxu0 0
        %9155 = vmatpush1.bf16.msra.mxu0 %v9068
        %9156 = vmatprep.subr.bf16.mxu0 0
        %9157 = vmatpush1.bf16.msra.mxu0 %v9069
        %9158 = vmatprep.subr.bf16.mxu0 0
        %9159 = vmatpush1.bf16.msra.mxu0 %v9070
        %9160 = vmatprep.subr.bf16.mxu0 0
        %9161 = vmatpush1.bf16.msra.mxu0 %v9071
        %9162 = vmatprep.subr.bf16.mxu0 0
        %9163 = vmatpush1.bf16.msra.mxu0 %v9072
        %9164 = vmatprep.subr.bf16.mxu0 0
        %9165 = vmatpush1.bf16.msra.mxu0 %v9073
        %9166 = vmatprep.subr.bf16.mxu0 0
        %9167 = vmatpush1.bf16.msra.mxu0 %v9074
        %9168 = vmatprep.subr.bf16.mxu0 0
        %9169 = vmatpush1.bf16.msra.mxu0 %v9075
        %9170 = vmatprep.subr.bf16.mxu0 0
        %9171 = vmatpush1.bf16.msra.mxu0 %v9076
        %9172 = vmatprep.subr.bf16.mxu0 0
        %9173 = vmatpush1.bf16.msra.mxu0 %v9077
        %9174 = vmatprep.mubr.bf16.mxu0 %v8783
        %9175 = vmatmul.mubr.bf16.gmra.mrb[0].mxu0 %v8782
        %v9176 = vpop.f32.mrb[0].mxu0
        %v9177 = vadd.f32 0.0, %v9176
        %v9178 = vpop.f32.mrb[0].mxu0
        %v9179 = vpop.f32.mrb[0].mxu0
        %v9180 = vadd.f32 0.0, %v9179
        %v9181 = vpop.f32.mrb[0].mxu0
        %9182 = vmatprep.mubr.bf16.mxu0 %v8788
        %9183 = vmatmul.mubr.bf16.gmra.mrb[0].mxu0 %v8787
        %v9184 = vpop.f32.mrb[0].mxu0
        %v9185 = vadd.f32 0.0, %v9184
        %v9186 = vpop.f32.mrb[0].mxu0
        %v9187 = vpop.f32.mrb[0].mxu0
        %v9188 = vadd.f32 0.0, %v9187
        %v9189 = vpop.f32.mrb[0].mxu0
        %9190 = vmatprep.mubr.bf16.mxu0 %v8793
        %9191 = vmatmul.mubr.bf16.gmra.mrb[0].mxu0 %v8792
        %v9192 = vpop.f32.mrb[0].mxu0
        %v9193 = vadd.f32 0.0, %v9192
        %v9194 = vpop.f32.mrb[0].mxu0
        %v9195 = vpop.f32.mrb[0].mxu0
        %v9196 = vadd.f32 0.0, %v9195
        %v9197 = vpop.f32.mrb[0].mxu0
        %9198 = vmatprep.mubr.bf16.mxu0 %v8798
        %9199 = vmatmul.mubr.bf16.gmra.mrb[0].mxu0 %v8797
        %v9200 = vpop.f32.mrb[0].mxu0
        %v9201 = vadd.f32 0.0, %v9200
        %v9202 = vpop.f32.mrb[0].mxu0
        %v9203 = vpop.f32.mrb[0].mxu0
        %v9204 = vadd.f32 0.0, %v9203
        %v9205 = vpop.f32.mrb[0].mxu0
        %9206 = vmatprep.mubr.bf16.mxu0 %v8803
        %9207 = vmatmul.mubr.bf16.gmra.mrb[0].mxu0 %v8802
        %v9208 = vpop.f32.mrb[0].mxu0
        %v9209 = vadd.f32 0.0, %v9208
        %v9210 = vpop.f32.mrb[0].mxu0
        %v9211 = vpop.f32.mrb[0].mxu0
        %v9212 = vadd.f32 0.0, %v9211
        %v9213 = vpop.f32.mrb[0].mxu0
        %9214 = vmatprep.mubr.bf16.mxu0 %v8808
        %9215 = vmatmul.mubr.bf16.gmra.mrb[0].mxu0 %v8807
        %v9216 = vpop.f32.mrb[0].mxu0
        %v9217 = vadd.f32 0.0, %v9216
        %v9218 = vpop.f32.mrb[0].mxu0
        %v9219 = vpop.f32.mrb[0].mxu0
        %v9220 = vadd.f32 0.0, %v9219
        %v9221 = vpop.f32.mrb[0].mxu0
        %9222 = vmatprep.mubr.bf16.mxu0 %v8813
        %9223 = vmatmul.mubr.bf16.gmra.mrb[0].mxu0 %v8812
        %v9224 = vpop.f32.mrb[0].mxu0
        %v9225 = vadd.f32 0.0, %v9224
        %v9226 = vpop.f32.mrb[0].mxu0
        %v9227 = vpop.f32.mrb[0].mxu0
        %v9228 = vadd.f32 0.0, %v9227
        %v9229 = vpop.f32.mrb[0].mxu0
        %9230 = vmatprep.mubr.bf16.mxu0 %v8818
        %9231 = vmatmul.mubr.bf16.gmra.mrb[0].mxu0 %v8817
        %v9232 = vpop.f32.mrb[0].mxu0
        %v9233 = vadd.f32 0.0, %v9232
        %v9234 = vpop.f32.mrb[0].mxu0
        %v9235 = vpop.f32.mrb[0].mxu0
        %v9236 = vadd.f32 0.0, %v9235
        %v9237 = vpop.f32.mrb[0].mxu0
        %9238 = vdwg.mxu0
        %9239 = vmatprep.subr.bf16.mxu0 0
        %9240 = vmatpush1.bf16.msra.mxu0 %v9078
        %9241 = vmatprep.subr.bf16.mxu0 0
        %9242 = vmatpush1.bf16.msra.mxu0 %v9079
        %9243 = vmatprep.subr.bf16.mxu0 0
        %9244 = vmatpush1.bf16.msra.mxu0 %v9080
        %9245 = vmatprep.subr.bf16.mxu0 0
        %9246 = vmatpush1.bf16.msra.mxu0 %v9081
        %9247 = vmatprep.subr.bf16.mxu0 0
        %9248 = vmatpush1.bf16.msra.mxu0 %v9082
        %9249 = vmatprep.subr.bf16.mxu0 0
        %9250 = vmatpush1.bf16.msra.mxu0 %v9083
        %9251 = vmatprep.subr.bf16.mxu0 0
        %9252 = vmatpush1.bf16.msra.mxu0 %v9084
        %9253 = vmatprep.subr.bf16.mxu0 0
        %9254 = vmatpush1.bf16.msra.mxu0 %v9085
        %9255 = vmatprep.subr.bf16.mxu0 0
        %9256 = vmatpush1.bf16.msra.mxu0 %v9086
        %9257 = vmatprep.subr.bf16.mxu0 0
        %9258 = vmatpush1.bf16.msra.mxu0 %v9087
        %9259 = vmatprep.subr.bf16.mxu0 0
        %9260 = vmatpush1.bf16.msra.mxu0 %v9088
        %9261 = vmatprep.subr.bf16.mxu0 0
        %9262 = vmatpush1.bf16.msra.mxu0 %v9089
        %9263 = vmatprep.subr.bf16.mxu0 0
        %9264 = vmatpush1.bf16.msra.mxu0 %v9090
        %9265 = vmatprep.subr.bf16.mxu0 0
        %9266 = vmatpush1.bf16.msra.mxu0 %v9091
        %9267 = vmatprep.subr.bf16.mxu0 0
        %9268 = vmatpush1.bf16.msra.mxu0 %v9092
        %9269 = vmatprep.subr.bf16.mxu0 0
        %9270 = vmatpush1.bf16.msra.mxu0 %v9093
        %9271 = vmatprep.mubr.bf16.mxu0 %v8785
        %9272 = vmatmul.mubr.bf16.gmra.mrb[0].mxu0 %v8784
        %v9273 = vpop.f32.mrb[0].mxu0
        %v9274 = vadd.f32 %v9177, %v9273
        %v9275 = vpop.f32.mrb[0].mxu0
        %v9276 = vpop.f32.mrb[0].mxu0
        %v9277 = vadd.f32 %v9180, %v9276
        %v9278 = vpop.f32.mrb[0].mxu0
        %9279 = vmatprep.mubr.bf16.mxu0 %v8790
        %9280 = vmatmul.mubr.bf16.gmra.mrb[0].mxu0 %v8789
        %v9281 = vpop.f32.mrb[0].mxu0
        %v9282 = vadd.f32 %v9185, %v9281
        %v9283 = vpop.f32.mrb[0].mxu0
        %v9284 = vpop.f32.mrb[0].mxu0
        %v9285 = vadd.f32 %v9188, %v9284
        %v9286 = vpop.f32.mrb[0].mxu0
        %9287 = vmatprep.mubr.bf16.mxu0 %v8795
        %9288 = vmatmul.mubr.bf16.gmra.mrb[0].mxu0 %v8794
        %v9289 = vpop.f32.mrb[0].mxu0
        %v9290 = vadd.f32 %v9193, %v9289
        %v9291 = vpop.f32.mrb[0].mxu0
        %v9292 = vpop.f32.mrb[0].mxu0
        %v9293 = vadd.f32 %v9196, %v9292
        %v9294 = vpop.f32.mrb[0].mxu0
        %9295 = vmatprep.mubr.bf16.mxu0 %v8800
        %9296 = vmatmul.mubr.bf16.gmra.mrb[0].mxu0 %v8799
        %v9297 = vpop.f32.mrb[0].mxu0
        %v9298 = vadd.f32 %v9201, %v9297
        %v9299 = vpop.f32.mrb[0].mxu0
        %v9300 = vpop.f32.mrb[0].mxu0
        %v9301 = vadd.f32 %v9204, %v9300
        %v9302 = vpop.f32.mrb[0].mxu0
        %9303 = vmatprep.mubr.bf16.mxu0 %v8805
        %9304 = vmatmul.mubr.bf16.gmra.mrb[0].mxu0 %v8804
        %v9305 = vpop.f32.mrb[0].mxu0
        %v9306 = vadd.f32 %v9209, %v9305
        %v9307 = vpop.f32.mrb[0].mxu0
        %v9308 = vpop.f32.mrb[0].mxu0
        %v9309 = vadd.f32 %v9212, %v9308
        %v9310 = vpop.f32.mrb[0].mxu0
        %9311 = vmatprep.mubr.bf16.mxu0 %v8810
        %9312 = vmatmul.mubr.bf16.gmra.mrb[0].mxu0 %v8809
        %v9313 = vpop.f32.mrb[0].mxu0
        %v9314 = vadd.f32 %v9217, %v9313
        %v9315 = vpop.f32.mrb[0].mxu0
        %v9316 = vpop.f32.mrb[0].mxu0
        %v9317 = vadd.f32 %v9220, %v9316
        %v9318 = vpop.f32.mrb[0].mxu0
        %9319 = vmatprep.mubr.bf16.mxu0 %v8815
        %9320 = vmatmul.mubr.bf16.gmra.mrb[0].mxu0 %v8814
        %v9321 = vpop.f32.mrb[0].mxu0
        %v9322 = vadd.f32 %v9225, %v9321
        %v9323 = vpop.f32.mrb[0].mxu0
        %v9324 = vpop.f32.mrb[0].mxu0
        %v9325 = vadd.f32 %v9228, %v9324
        %v9326 = vpop.f32.mrb[0].mxu0
        %9327 = vmatprep.mubr.bf16.mxu0 %v8820
        %9328 = vmatmul.mubr.bf16.gmra.mrb[0].mxu0 %v8819
        %v9329 = vpop.f32.mrb[0].mxu0
        %v9330 = vadd.f32 %v9233, %v9329
        %v9331 = vpop.f32.mrb[0].mxu0
        %v9332 = vpop.f32.mrb[0].mxu0
        %v9333 = vadd.f32 %v9236, %v9332
        %v9334 = vpop.f32.mrb[0].mxu0
        %9335 = vdwg.mxu0
        %9336 = vmatprep.subr.bf16.mxu0 0
        %9337 = vmatpush1.bf16.msra.mxu0 %v9094
        %9338 = vmatprep.subr.bf16.mxu0 0
        %9339 = vmatpush1.bf16.msra.mxu0 %v9095
        %9340 = vmatprep.subr.bf16.mxu0 0
        %9341 = vmatpush1.bf16.msra.mxu0 %v9096
        %9342 = vmatprep.subr.bf16.mxu0 0
        %9343 = vmatpush1.bf16.msra.mxu0 %v9097
        %9344 = vmatprep.subr.bf16.mxu0 0
        %9345 = vmatpush1.bf16.msra.mxu0 %v9098
        %9346 = vmatprep.subr.bf16.mxu0 0
        %9347 = vmatpush1.bf16.msra.mxu0 %v9099
        %9348 = vmatprep.subr.bf16.mxu0 0
        %9349 = vmatpush1.bf16.msra.mxu0 %v9100
        %9350 = vmatprep.subr.bf16.mxu0 0
        %9351 = vmatpush1.bf16.msra.mxu0 %v9101
        %9352 = vmatprep.subr.bf16.mxu0 0
        %9353 = vmatpush1.bf16.msra.mxu0 0
        %9354 = vmatprep.subr.bf16.mxu0 0
        %9355 = vmatpush1.bf16.msra.mxu0 0
        %9356 = vmatprep.subr.bf16.mxu0 0
        %9357 = vmatpush1.bf16.msra.mxu0 0
        %9358 = vmatprep.subr.bf16.mxu0 0
        %9359 = vmatpush1.bf16.msra.mxu0 0
        %9360 = vmatprep.subr.bf16.mxu0 0
        %9361 = vmatpush1.bf16.msra.mxu0 0
        %9362 = vmatprep.subr.bf16.mxu0 0
        %9363 = vmatpush1.bf16.msra.mxu0 0
        %9364 = vmatprep.subr.bf16.mxu0 0
        %9365 = vmatpush1.bf16.msra.mxu0 0
        %9366 = vmatprep.subr.bf16.mxu0 0
        %9367 = vmatpush1.bf16.msra.mxu0 0
        %9368 = vmatprep.mubr.bf16.mxu0 0
        %9369 = vmatmul.mubr.bf16.gmra.mrb[0].mxu0 %v8786
        %v9370 = vpop.f32.mrb[0].mxu0
        %v9371 = vadd.f32 %v9274, %v9370
        %v9372 = vpop.f32.mrb[0].mxu0
        %v9373 = vpop.f32.mrb[0].mxu0
        %v9374 = vadd.f32 %v9277, %v9373
        %v9375 = vpop.f32.mrb[0].mxu0
        %9376 = vmatprep.mubr.bf16.mxu0 0
        %9377 = vmatmul.mubr.bf16.gmra.mrb[0].mxu0 %v8791
        %v9378 = vpop.f32.mrb[0].mxu0
        %v9379 = vadd.f32 %v9282, %v9378
        %v9380 = vpop.f32.mrb[0].mxu0
        %v9381 = vpop.f32.mrb[0].mxu0
        %v9382 = vadd.f32 %v9285, %v9381
        %v9383 = vpop.f32.mrb[0].mxu0
        %9384 = vmatprep.mubr.bf16.mxu0 0
        %9385 = vmatmul.mubr.bf16.gmra.mrb[0].mxu0 %v8796
        %v9386 = vpop.f32.mrb[0].mxu0
        %v9387 = vadd.f32 %v9290, %v9386
        %v9388 = vpop.f32.mrb[0].mxu0
        %v9389 = vpop.f32.mrb[0].mxu0
        %v9390 = vadd.f32 %v9293, %v9389
        %v9391 = vpop.f32.mrb[0].mxu0
        %9392 = vmatprep.mubr.bf16.mxu0 0
        %9393 = vmatmul.mubr.bf16.gmra.mrb[0].mxu0 %v8801
        %v9394 = vpop.f32.mrb[0].mxu0
        %v9395 = vadd.f32 %v9298, %v9394
        %v9396 = vpop.f32.mrb[0].mxu0
        %v9397 = vpop.f32.mrb[0].mxu0
        %v9398 = vadd.f32 %v9301, %v9397
        %v9399 = vpop.f32.mrb[0].mxu0
        %9400 = vmatprep.mubr.bf16.mxu0 0
        %9401 = vmatmul.mubr.bf16.gmra.mrb[0].mxu0 %v8806
        %v9402 = vpop.f32.mrb[0].mxu0
        %v9403 = vadd.f32 %v9306, %v9402
        %v9404 = vpop.f32.mrb[0].mxu0
        %v9405 = vpop.f32.mrb[0].mxu0
        %v9406 = vadd.f32 %v9309, %v9405
        %v9407 = vpop.f32.mrb[0].mxu0
        %9408 = vmatprep.mubr.bf16.mxu0 0
        %9409 = vmatmul.mubr.bf16.gmra.mrb[0].mxu0 %v8811
        %v9410 = vpop.f32.mrb[0].mxu0
        %v9411 = vadd.f32 %v9314, %v9410
        %v9412 = vpop.f32.mrb[0].mxu0
        %v9413 = vpop.f32.mrb[0].mxu0
        %v9414 = vadd.f32 %v9317, %v9413
        %v9415 = vpop.f32.mrb[0].mxu0
        %9416 = vmatprep.mubr.bf16.mxu0 0
        %9417 = vmatmul.mubr.bf16.gmra.mrb[0].mxu0 %v8816
        %v9418 = vpop.f32.mrb[0].mxu0
        %v9419 = vadd.f32 %v9322, %v9418
        %v9420 = vpop.f32.mrb[0].mxu0
        %v9421 = vpop.f32.mrb[0].mxu0
        %v9422 = vadd.f32 %v9325, %v9421
        %v9423 = vpop.f32.mrb[0].mxu0
        %9424 = vmatprep.mubr.bf16.mxu0 0
        %9425 = vmatmul.mubr.bf16.gmra.mrb[0].mxu0 %v8821
        %v9426 = vpop.f32.mrb[0].mxu0
        %v9427 = vadd.f32 %v9330, %v9426
        %v9428 = vpop.f32.mrb[0].mxu0
        %v9429 = vpop.f32.mrb[0].mxu0
        %v9430 = vadd.f32 %v9333, %v9429
        %v9431 = vpop.f32.mrb[0].mxu0
        %9432 = vdwg.mxu0
        %v9433 = vld [vmem:[%s69] sm:$0x1]
        %v9435 = vlaneseq
        %v9436 = vshrl.u32 %v9435, 7
        %v9437 = vsub.s32 0, %v9436
        %v9438 = vrot.slane %v9433, %v9437
        %v9440 = vmul.f32 %v9371, %v9438
        %v9441 = vmul.f32 %v9374, %v9438
        %v9442 = vmul.f32 %v9379, %v9438
        %v9443 = vmul.f32 %v9382, %v9438
        %v9444 = vmul.f32 %v9387, %v9438
        %v9445 = vmul.f32 %v9390, %v9438
        %v9446 = vmul.f32 %v9395, %v9438
        %v9447 = vmul.f32 %v9398, %v9438
        %v9448 = vmul.f32 %v9403, %v9438
        %v9449 = vmul.f32 %v9406, %v9438
        %v9450 = vmul.f32 %v9411, %v9438
        %v9451 = vmul.f32 %v9414, %v9438
        %v9452 = vmul.f32 %v9419, %v9438
        %v9453 = vmul.f32 %v9422, %v9438
        %v9454 = vmul.f32 %v9427, %v9438
        %v9455 = vmul.f32 %v9430, %v9438
        %v9456 = vld [vmem:[%s71] sm:$0x1]
        %v9458 = vlaneseq
        %v9459 = vshrl.u32 %v9458, 7
        %v9460 = vsub.s32 0, %v9459
        %v9461 = vrot.slane %v9456, %v9460
        %v9463 = vadd.f32 %v9440, %v9461
        %v9464 = vadd.f32 %v9441, %v9461
        %v9465 = vadd.f32 %v9442, %v9461
        %v9466 = vadd.f32 %v9443, %v9461
        %v9467 = vadd.f32 %v9444, %v9461
        %v9468 = vadd.f32 %v9445, %v9461
        %v9469 = vadd.f32 %v9446, %v9461
        %v9470 = vadd.f32 %v9447, %v9461
        %v9471 = vadd.f32 %v9448, %v9461
        %v9472 = vadd.f32 %v9449, %v9461
        %v9473 = vadd.f32 %v9450, %v9461
        %v9474 = vadd.f32 %v9451, %v9461
        %v9475 = vadd.f32 %v9452, %v9461
        %v9476 = vadd.f32 %v9453, %v9461
        %v9477 = vadd.f32 %v9454, %v9461
        %v9478 = vadd.f32 %v9455, %v9461
        %v9479 = vxor.u32 %v9463, 2147483648
        %v9480 = vxor.u32 %v9464, 2147483648
        %v9481 = vxor.u32 %v9465, 2147483648
        %v9482 = vxor.u32 %v9466, 2147483648
        %v9483 = vxor.u32 %v9467, 2147483648
        %v9484 = vxor.u32 %v9468, 2147483648
        %v9485 = vxor.u32 %v9469, 2147483648
        %v9486 = vxor.u32 %v9470, 2147483648
        %v9487 = vxor.u32 %v9471, 2147483648
        %v9488 = vxor.u32 %v9472, 2147483648
        %v9489 = vxor.u32 %v9473, 2147483648
        %v9490 = vxor.u32 %v9474, 2147483648
        %v9491 = vxor.u32 %v9475, 2147483648
        %v9492 = vxor.u32 %v9476, 2147483648
        %v9493 = vxor.u32 %v9477, 2147483648
        %v9494 = vxor.u32 %v9478, 2147483648
        %v9495 = vmul.f32 %v9479, 1.442695
        %v9496 = vpow.pop %v9495
        %v9497 = vmul.f32 %v9480, 1.442695
        %v9498 = vpow.pop %v9497
        %v9499 = vmul.f32 %v9481, 1.442695
        %v9500 = vpow.pop %v9499
        %v9501 = vmul.f32 %v9482, 1.442695
        %v9502 = vpow.pop %v9501
        %v9503 = vmul.f32 %v9483, 1.442695
        %v9504 = vpow.pop %v9503
        %v9505 = vmul.f32 %v9484, 1.442695
        %v9506 = vpow.pop %v9505
        %v9507 = vmul.f32 %v9485, 1.442695
        %v9508 = vpow.pop %v9507
        %v9509 = vmul.f32 %v9486, 1.442695
        %v9510 = vpow.pop %v9509
        %v9511 = vmul.f32 %v9487, 1.442695
        %v9512 = vpow.pop %v9511
        %v9513 = vmul.f32 %v9488, 1.442695
        %v9514 = vpow.pop %v9513
        %v9515 = vmul.f32 %v9489, 1.442695
        %v9516 = vpow.pop %v9515
        %v9517 = vmul.f32 %v9490, 1.442695
        %v9518 = vpow.pop %v9517
        %v9519 = vmul.f32 %v9491, 1.442695
        %v9520 = vpow.pop %v9519
        %v9521 = vmul.f32 %v9492, 1.442695
        %v9522 = vpow.pop %v9521
        %v9523 = vmul.f32 %v9493, 1.442695
        %v9524 = vpow.pop %v9523
        %v9525 = vmul.f32 %v9494, 1.442695
        %v9526 = vpow.pop %v9525
        %v9527 = vadd.f32 %v9496, 1.0
        %v9528 = vadd.f32 %v9498, 1.0
        %v9529 = vadd.f32 %v9500, 1.0
        %v9530 = vadd.f32 %v9502, 1.0
        %v9531 = vadd.f32 %v9504, 1.0
        %v9532 = vadd.f32 %v9506, 1.0
        %v9533 = vadd.f32 %v9508, 1.0
        %v9534 = vadd.f32 %v9510, 1.0
        %v9535 = vadd.f32 %v9512, 1.0
        %v9536 = vadd.f32 %v9514, 1.0
        %v9537 = vadd.f32 %v9516, 1.0
        %v9538 = vadd.f32 %v9518, 1.0
        %v9539 = vadd.f32 %v9520, 1.0
        %v9540 = vadd.f32 %v9522, 1.0
        %v9541 = vadd.f32 %v9524, 1.0
        %v9542 = vadd.f32 %v9526, 1.0
        %v9543 = vrcp.pop %v9527
        %v9544 = vmul.f32 1.0, %v9543
        %v9545 = vrcp.pop %v9528
        %v9546 = vmul.f32 1.0, %v9545
        %v9547 = vrcp.pop %v9529
        %v9548 = vmul.f32 1.0, %v9547
        %v9549 = vrcp.pop %v9530
        %v9550 = vmul.f32 1.0, %v9549
        %v9551 = vrcp.pop %v9531
        %v9552 = vmul.f32 1.0, %v9551
        %v9553 = vrcp.pop %v9532
        %v9554 = vmul.f32 1.0, %v9553
        %v9555 = vrcp.pop %v9533
        %v9556 = vmul.f32 1.0, %v9555
        %v9557 = vrcp.pop %v9534
        %v9558 = vmul.f32 1.0, %v9557
        %v9559 = vrcp.pop %v9535
        %v9560 = vmul.f32 1.0, %v9559
        %v9561 = vrcp.pop %v9536
        %v9562 = vmul.f32 1.0, %v9561
        %v9563 = vrcp.pop %v9537
        %v9564 = vmul.f32 1.0, %v9563
        %v9565 = vrcp.pop %v9538
        %v9566 = vmul.f32 1.0, %v9565
        %v9567 = vrcp.pop %v9539
        %v9568 = vmul.f32 1.0, %v9567
        %v9569 = vrcp.pop %v9540
        %v9570 = vmul.f32 1.0, %v9569
        %v9571 = vrcp.pop %v9541
        %v9572 = vmul.f32 1.0, %v9571
        %v9573 = vrcp.pop %v9542
        %v9574 = vmul.f32 1.0, %v9573
        %9575 = vst [vmem:[%s1328] sm:$0xff] %v9544
        %9576 = vst [vmem:[%s1328 + $0x8] sm:$0xff] %v9546
        %9577 = vst [vmem:[%s1328 + $0x10] sm:$0xff] %v9548
        %9578 = vst [vmem:[%s1328 + $0x18] sm:$0xff] %v9550
        %9579 = vst [vmem:[%s1328 + $0x20] sm:$0xff] %v9552
        %9580 = vst [vmem:[%s1328 + $0x28] sm:$0xff] %v9554
        %9581 = vst [vmem:[%s1328 + $0x30] sm:$0xff] %v9556
        %9582 = vst [vmem:[%s1328 + $0x38] sm:$0xff] %v9558
        %9583 = vst [vmem:[%s1328 + $0x40] sm:$0xff] %v9560
        %9584 = vst [vmem:[%s1328 + $0x48] sm:$0xff] %v9562
        %9585 = vst [vmem:[%s1328 + $0x50] sm:$0xff] %v9564
        %9586 = vst [vmem:[%s1328 + $0x58] sm:$0xff] %v9566
        %9587 = vst [vmem:[%s1328 + $0x60] sm:$0xff] %v9568
        %9588 = vst [vmem:[%s1328 + $0x68] sm:$0xff] %v9570
        %9589 = vst [vmem:[%s1328 + $0x70] sm:$0xff] %v9572
        %9590 = vst [vmem:[%s1328 + $0x78] sm:$0xff] %v9574
        %s9591 = smul.u32 8, %s94
        %p9592 = scmp.lt.s32.totalorder %s9591, 15
        %s9593 = scalar_select %p9592, %s9591, 15
        %s9594 = smul.addr %s9593, 2
        %s9595 = smul.addr %s9594, 8
        %s9596 = scalar_lea.vmem %s73, %s9595
        // Predicated region
        $region233: #{_lambda_.1} parent=163 // pred_check
          %p9597 = pneg %p873
        $region234: #{_lambda_.1} parent=163 // pred_check_branch
          %9599 = sbr.rel (%p9597) target = $region236
        $region235: #{_lambda_.1} parent=163 // pred_region
          %s9600 = smul.u32 8, %s94
        $region236: #{_lambda_.1} parent=163 // pred_fallthru
          _
      $region164: #{_lambda_.1} parent=5 // pred_fallthru
        _
      %p9601 = scmp.le.s32.totalorder 2, %s89
      // Predicated region
      $region237: #{_lambda_.1} parent=5 // pred_check
        %p9602 = pneg %p9601
      $region238: #{_lambda_.1} parent=5 // pred_check_branch
        %9604 = sbr.rel (%p9602) target = $region240
      $region239: #{_lambda_.1} parent=5 // pred_region
        %s9605 = ssub.s32 %s89, 2
        // Predicated region
        $region241: #{_lambda_.1} parent=239 // pred_check
          %p9606 = pneg %p879
        $region242: #{_lambda_.1} parent=239 // pred_check_branch
          %9608 = sbr.rel (%p9606) target = $region244
        $region243: #{_lambda_.1} parent=239 // pred_region
          %s9609 = smul.u32 8, %s95
          %p9610 = scmp.lt.s32.totalorder %s9609, 15
          %s9611 = scalar_select %p9610, %s9609, 15
          %s9612 = smul.addr %s9611, 2
          %s9613 = smul.addr %s9612, 8
          %s9614 = scalar_lea.vmem %s73, %s9613
        $region244: #{_lambda_.1} parent=239 // pred_fallthru
          _
      $region240: #{_lambda_.1} parent=5 // pred_fallthru
        _
    $region6: #{_lambda_.1} parent=1 // loop_footer
      %s93 = sadd.s32 1, %s89
    $region7: #{_lambda_.1} parent=1 // loop_footer_branch
      %88 = sbr.rel target = $region3
    $region8: #{_lambda_.1} parent=1 // loop_exit
      _
    %9615 = vsyncpa [#allocation3], 1
    %s9616 = scalar_lea.sflag [#allocation3], 1
    %9617 = vsyncpa %s9616, 1
    %9618 = vsyncpa [#allocation7], 1
    %9619 = vsyncpa [#allocation10], 1
    %9620 = vsyncpa [#allocation13], 1
    %9621 = vsyncpa [#allocation16], 1
    %9622 = vsyncpa [#allocation19], 1
    %9623 = vsyncpa [#allocation22], 1
    %9624 = vsyncpa [#allocation25], 1
    %9625 = vsyncpa [#allocation28], 1
    %9626 = vsyncpa [#allocation4], 1
    %s9627 = scalar_lea.sflag [#allocation4], 1
    %9628 = vsyncpa %s9627, 1

</llo_original>
